<compile_context>
chip_gen: v7x
topology: tpu7x:2x2x1
jax: 0.10.0
libtpu: 0.0.40
codegen_flags: <defaults>
</compile_context>

<pallas_src>
import functools

import jax
import jax.numpy as jnp
from jax.experimental import pallas as pl
from jax.experimental.pallas import tpu as pltpu


_CP = pltpu.CompilerParams(
    dimension_semantics=("parallel", "parallel"),
    vmem_limit_bytes=48 * 1024 * 1024,
)


# ---------------------------------------------------------------------------
# Pallas kernels — all work on (C, HW_tile) tiles (HW on the lane axis)
# ---------------------------------------------------------------------------
def _conv_kernel(x_ref, w_ref, *rest, act, has_bias):
    """out = act(W @ X [+ b]);  X:(K, T), W:(Cout, K), b:(Cout, 1)."""
    if has_bias:
        b_ref, o_ref = rest
    else:
        (o_ref,) = rest
    acc = jnp.dot(w_ref[...], x_ref[0], preferred_element_type=jnp.float32)
    if has_bias:
        acc = acc + b_ref[...]
    if act == "relu":
        acc = jnp.maximum(acc, 0.0)
    o_ref[0] = acc.astype(o_ref.dtype)


def _dwconv_kernel(x_ref, w_ref, o_ref, *, taps):
    """Depthwise 3x3 + ReLU: out = relu(sum_t w[t] * x_tap[t])."""
    acc = w_ref[0] * x_ref[0, 0]
    for t in range(1, taps):
        acc = acc + w_ref[t] * x_ref[0, t]
    o_ref[0] = jnp.maximum(acc, 0.0).astype(o_ref.dtype)


def _dgate_kernel(x_ref, d_ref, w_ref, b_ref, o_ref):
    """Fused 1x1 conv (Cin=1) + gate: xg = x * sigmoid(w * d + b)."""
    dh = w_ref[...] * d_ref[0] + b_ref[...]            # (C,1)*(1,T)+(C,1)
    o_ref[0] = (x_ref[0] * jax.nn.sigmoid(dh)).astype(o_ref.dtype)


def _g(h):
    """g(x) = where(x >= 0, x + 0.5, sigmoid(x)) — matches the PyTorch g()."""
    return jnp.where(h >= 0, h + 0.5, jax.nn.sigmoid(h))


def _fuse_gru_kernel(ag_ref, wg_ref, bg_ref, ah_ref, wh_ref, bh_ref, o_ref):
    """DepthConvGRU2d tail (no prev): out = g(hid_conv) * sigmoid(gate_conv)."""
    gate = jax.nn.sigmoid(
        jnp.dot(wg_ref[...], ag_ref[0], preferred_element_type=jnp.float32)
        + bg_ref[...])
    hid = _g(jnp.dot(wh_ref[...], ah_ref[0], preferred_element_type=jnp.float32)
             + bh_ref[...])
    o_ref[0] = (hid * gate).astype(o_ref.dtype)


def _fuse_gru_prev_kernel(ag_ref, wg_ref, bg_ref, ah_ref, wh_ref, bh_ref,
                          prev_ref, o_ref):
    """DepthConvGRU2d tail with prev: out = lerp(prev, g(hid), sigmoid(gate))."""
    gate = jax.nn.sigmoid(
        jnp.dot(wg_ref[...], ag_ref[0], preferred_element_type=jnp.float32)
        + bg_ref[...])
    hid = _g(jnp.dot(wh_ref[...], ah_ref[0], preferred_element_type=jnp.float32)
             + bh_ref[...])
    p = prev_ref[0]
    o_ref[0] = (p + gate * (hid - p)).astype(o_ref.dtype)


def _conv_gru_kernel(a_ref, x_ref, wg_ref, bg_ref, wh_ref, bh_ref, o_ref):
    """ConvGRU2d (no prev): gate = 3x3 conv (im2col), hid = 1x1 conv (x)."""
    gate = jax.nn.sigmoid(
        jnp.dot(wg_ref[...], a_ref[0], preferred_element_type=jnp.float32)
        + bg_ref[...])
    hid = _g(jnp.dot(wh_ref[...], x_ref[0], preferred_element_type=jnp.float32)
             + bh_ref[...])
    o_ref[0] = (hid * gate).astype(o_ref.dtype)


def _conv_gru_prev_kernel(a_ref, x_ref, wg_ref, bg_ref, wh_ref, bh_ref,
                          prev_ref, o_ref):
    gate = jax.nn.sigmoid(
        jnp.dot(wg_ref[...], a_ref[0], preferred_element_type=jnp.float32)
        + bg_ref[...])
    hid = _g(jnp.dot(wh_ref[...], x_ref[0], preferred_element_type=jnp.float32)
             + bh_ref[...])
    p = prev_ref[0]
    o_ref[0] = (p + gate * (hid - p)).astype(o_ref.dtype)


def _conf_fuse_kernel(v_ref, a_ref, w_ref, b_ref, o_ref, *, n_views):
    """Per-view conf 3x3 conv + softmax over views + weighted sum of views."""
    confs = []
    for v in range(n_views):
        confs.append(
            jnp.dot(w_ref[...], a_ref[0, v], preferred_element_type=jnp.float32)
            + b_ref[...])
    m = confs[0]
    for v in range(1, n_views):
        m = jnp.maximum(m, confs[v])
    es = [jnp.exp(c - m) for c in confs]
    denom = es[0]
    for v in range(1, n_views):
        denom = denom + es[v]
    acc = v_ref[0, 0] * es[0]
    for v in range(1, n_views):
        acc = acc + v_ref[0, v] * es[v]
    o_ref[0] = (acc / denom).astype(o_ref.dtype)


# ---------------------------------------------------------------------------
# JAX-side helpers (data movement only)
# ---------------------------------------------------------------------------
def _pick_hw_tile(hw, rows):
    """Largest lane tile (multiple of 128 dividing hw, <=8192) such that the
    double-buffered f32 blocks (~`rows` sublane rows total) fit ~24 MiB."""
    budget = 24 * 1024 * 1024
    candidates = [t for t in (8192, 4096, 2048, 1024, 512, 256, 128)
                  if t < hw and hw % t == 0 and rows * t * 4 * 2 <= budget]
    if not candidates:
        return hw
    if hw <= 8192 and rows * hw * 4 * 2 <= budget:
        return hw                       # small images: one full-HW tile
    return candidates[0]


def _im2col(x, kh, kw, stride, pad):
    """(B, C, H, W) -> ((B, kh*kw, C, Ho*Wo), Ho, Wo): packed tap windows."""
    B, C, H, W = x.shape
    Ho = (H + 2 * pad - kh) // stride + 1
    Wo = (W + 2 * pad - kw) // stride + 1
    xp = jnp.pad(x, ((0, 0), (0, 0), (pad, pad), (pad, pad)))
    taps = []
    for ky in range(kh):
        for kx in range(kw):
            taps.append(xp[:, :, ky:ky + stride * (Ho - 1) + 1:stride,
                              kx:kx + stride * (Wo - 1) + 1:stride])
    t = jnp.stack(taps, axis=1)                         # (B, T, C, Ho, Wo)
    return t.reshape(B, kh * kw, C, Ho * Wo), Ho, Wo


def interp_nearest(x, out_h, out_w):
    """F.interpolate(mode='nearest') equivalent on NCHW (gather glue)."""
    B, C, H, W = x.shape
    if (H, W) == (out_h, out_w):
        return x
    ih = (jnp.arange(out_h) * H) // out_h
    iw = (jnp.arange(out_w) * W) // out_w
    return jnp.take(jnp.take(x, ih, axis=2), iw, axis=3)


# ---------------------------------------------------------------------------
# Pallas-call wrappers
# ---------------------------------------------------------------------------
def conv2d(x, w, b=None, *, kh=3, kw=3, stride=1, pad=1, act="none"):
    """Dense conv; x:(B,Cin,H,W), w:(Cout, kh*kw*Cin), b:(Cout,1) or None."""
    B, Cin, H, W = x.shape
    Cout = w.shape[0]
    if kh == 1 and kw == 1 and stride == 1 and pad == 0:
        a, Ho, Wo = x.reshape(B, Cin, H * W), H, W
    else:
        a, Ho, Wo = _im2col(x, kh, kw, stride, pad)
        a = a.reshape(B, kh * kw * Cin, Ho * Wo)
    K, HW = a.shape[1], Ho * Wo
    tile = _pick_hw_tile(HW, K + Cout)
    nt = HW // tile
    in_specs = [pl.BlockSpec((1, K, tile), lambda bb, tt: (bb, 0, tt)),
                pl.BlockSpec((Cout, K), lambda bb, tt: (0, 0))]
    args = [a, w]
    if b is not None:
        in_specs.append(pl.BlockSpec((Cout, 1), lambda bb, tt: (0, 0)))
        args.append(b)
    out = pl.pallas_call(
        functools.partial(_conv_kernel, act=act, has_bias=b is not None),
        out_shape=jax.ShapeDtypeStruct((B, Cout, HW), jnp.float32),
        grid=(B, nt),
        in_specs=in_specs,
        out_specs=pl.BlockSpec((1, Cout, tile), lambda bb, tt: (bb, 0, tt)),
        compiler_params=_CP,
    )(*args)
    return out.reshape(B, Cout, Ho, Wo)


def depthwise_conv2d(x, w):
    """Depthwise 3x3 + ReLU (groups=C, no bias); w:(9, C, 1)."""
    B, C, H, W = x.shape
    a, Ho, Wo = _im2col(x, 3, 3, 1, 1)                  # (B, 9, C, HW)
    HW = Ho * Wo
    tile = _pick_hw_tile(HW, 10 * C)
    nt = HW // tile
    out = pl.pallas_call(
        functools.partial(_dwconv_kernel, taps=9),
        out_shape=jax.ShapeDtypeStruct((B, C, HW), jnp.float32),
        grid=(B, nt),
        in_specs=[pl.BlockSpec((1, 9, C, tile), lambda bb, tt: (bb, 0, 0, tt)),
                  pl.BlockSpec((9, C, 1), lambda bb, tt: (0, 0, 0))],
        out_specs=pl.BlockSpec((1, C, tile), lambda bb, tt: (bb, 0, tt)),
        compiler_params=_CP,
    )(a, w)
    return out.reshape(B, C, Ho, Wo)


def dgate(x, d, w, b):
    """Fused:  x * sigmoid(conv1x1(d));  x:(B,C,H,W), d:(B,1,H,W), w:(C,1)."""
    B, C, H, W = x.shape
    assert w.shape[0] == C, "DepthConvGRU2d requires channels_x == channels_out"
    HW = H * W
    tile = _pick_hw_tile(HW, 2 * C + 1)
    nt = HW // tile
    out = pl.pallas_call(
        _dgate_kernel,
        out_shape=jax.ShapeDtypeStruct((B, C, HW), jnp.float32),
        grid=(B, nt),
        in_specs=[pl.BlockSpec((1, C, tile), lambda bb, tt: (bb, 0, tt)),
                  pl.BlockSpec((1, 1, tile), lambda bb, tt: (bb, 0, tt)),
                  pl.BlockSpec((C, 1), lambda bb, tt: (0, 0)),
                  pl.BlockSpec((C, 1), lambda bb, tt: (0, 0))],
        out_specs=pl.BlockSpec((1, C, tile), lambda bb, tt: (bb, 0, tt)),
        compiler_params=_CP,
    )(x.reshape(B, C, HW), d.reshape(B, 1, HW), w, b)
    return out.reshape(B, C, H, W)


def depth_conv_gru2d(p, x, d, prev_h):
    """DepthConvGRU2d: gate conv + hidden conv + GRU gating in one kernel."""
    B, Cx, H, W = x.shape
    Cout = p["gate_w"].shape[0]
    HW = H * W
    xg = dgate(x, d, p["dh_w"], p["dh_b"])              # x * sigmoid(conv1x1(d))
    ag, _, _ = _im2col(jnp.concatenate([x, d], axis=1), 3, 3, 1, 1)
    ah, _, _ = _im2col(xg, 3, 3, 1, 1)
    Kg, Kh = 9 * (Cx + 1), 9 * Cx
    ag = ag.reshape(B, Kg, HW)
    ah = ah.reshape(B, Kh, HW)
    tile = _pick_hw_tile(HW, Kg + Kh + 2 * Cout)
    nt = HW // tile
    in_specs = [pl.BlockSpec((1, Kg, tile), lambda bb, tt: (bb, 0, tt)),
                pl.BlockSpec((Cout, Kg), lambda bb, tt: (0, 0)),
                pl.BlockSpec((Cout, 1), lambda bb, tt: (0, 0)),
                pl.BlockSpec((1, Kh, tile), lambda bb, tt: (bb, 0, tt)),
                pl.BlockSpec((Cout, Kh), lambda bb, tt: (0, 0)),
                pl.BlockSpec((Cout, 1), lambda bb, tt: (0, 0))]
    args = [ag, p["gate_w"], p["gate_b"], ah, p["hid_w"], p["hid_b"]]
    if prev_h is None:
        kern = _fuse_gru_kernel
    else:
        kern = _fuse_gru_prev_kernel
        in_specs.append(pl.BlockSpec((1, Cout, tile), lambda bb, tt: (bb, 0, tt)))
        args.append(prev_h.reshape(B, Cout, HW))
    out = pl.pallas_call(
        kern,
        out_shape=jax.ShapeDtypeStruct((B, Cout, HW), jnp.float32),
        grid=(B, nt),
        in_specs=in_specs,
        out_specs=pl.BlockSpec((1, Cout, tile), lambda bb, tt: (bb, 0, tt)),
        compiler_params=_CP,
    )(*args)
    return out.reshape(B, Cout, H, W)


def conv_gru2d(p, x, prev_h):
    """ConvGRU2d: 3x3 gate conv + 1x1 hidden conv + gating fused in one kernel."""
    B, Cin, H, W = x.shape
    Cout = p["gate_w"].shape[0]
    HW = H * W
    a, _, _ = _im2col(x, 3, 3, 1, 1)
    K = 9 * Cin
    a = a.reshape(B, K, HW)
    xf = x.reshape(B, Cin, HW)
    tile = _pick_hw_tile(HW, K + Cin + 2 * Cout)
    nt = HW // tile
    in_specs = [pl.BlockSpec((1, K, tile), lambda bb, tt: (bb, 0, tt)),
                pl.BlockSpec((1, Cin, tile), lambda bb, tt: (bb, 0, tt)),
                pl.BlockSpec((Cout, K), lambda bb, tt: (0, 0)),
                pl.BlockSpec((Cout, 1), lambda bb, tt: (0, 0)),
                pl.BlockSpec((Cout, Cin), lambda bb, tt: (0, 0)),
                pl.BlockSpec((Cout, 1), lambda bb, tt: (0, 0))]
    args = [a, xf, p["gate_w"], p["gate_b"], p["hid_w"], p["hid_b"]]
    if prev_h is None:
        kern = _conv_gru_kernel
    else:
        kern = _conv_gru_prev_kernel
        in_specs.append(pl.BlockSpec((1, Cout, tile), lambda bb, tt: (bb, 0, tt)))
        args.append(prev_h.reshape(B, Cout, HW))
    out = pl.pallas_call(
        kern,
        out_shape=jax.ShapeDtypeStruct((B, Cout, HW), jnp.float32),
        grid=(B, nt),
        in_specs=in_specs,
        out_specs=pl.BlockSpec((1, Cout, tile), lambda bb, tt: (bb, 0, tt)),
        compiler_params=_CP,
    )(*args)
    return out.reshape(B, Cout, H, W)


def conf_view_fusion(views, w, b):
    """Fused: per-view conf 3x3 conv, softmax over views, weighted view sum."""
    V = len(views)
    B, C0, H, W = views[0].shape
    HW = H * W
    vstack = jnp.stack(views, axis=1)                   # (B, V, C0, H, W)
    a, _, _ = _im2col(vstack.reshape(B * V, C0, H, W), 3, 3, 1, 1)
    K = 9 * C0
    a = a.reshape(B, V, K, HW)
    vflat = vstack.reshape(B, V, C0, HW)
    tile = _pick_hw_tile(HW, V * (K + C0) + C0)
    nt = HW // tile
    out = pl.pallas_call(
        functools.partial(_conf_fuse_kernel, n_views=V),
        out_shape=jax.ShapeDtypeStruct((B, C0, HW), jnp.float32),
        grid=(B, nt),
        in_specs=[pl.BlockSpec((1, V, C0, tile), lambda bb, tt: (bb, 0, 0, tt)),
                  pl.BlockSpec((1, V, K, tile), lambda bb, tt: (bb, 0, 0, tt)),
                  pl.BlockSpec((C0, K), lambda bb, tt: (0, 0)),
                  pl.BlockSpec((C0, 1), lambda bb, tt: (0, 0))],
        out_specs=pl.BlockSpec((1, C0, tile), lambda bb, tt: (bb, 0, tt)),
        compiler_params=_CP,
    )(vflat, a, w, b)
    return out.reshape(B, C0, H, W)


# ---------------------------------------------------------------------------
# Module forward functions (mirror the PyTorch classes)
# ---------------------------------------------------------------------------
def fuse_gru_block(p, x, d, h, stride):
    if stride == 2:
        x = conv2d(x, p["down_w"], None, kh=3, kw=3, stride=2, pad=1, act="relu")
        d = interp_nearest(d, x.shape[2], x.shape[3])
    return depth_conv_gru2d(p["gru"], x, d, h)


def gru_block(p, x, h, prev):
    x = interp_nearest(x, prev.shape[2], prev.shape[3])
    x = conv2d(jnp.concatenate([x, prev], axis=1), p["fuse1_w"], None,
               kh=1, kw=1, pad=0, act="relu")
    x = depthwise_conv2d(x, p["fuse2_w"])
    return conv_gru2d(p["gru"], x, h)


def gruunet_forward(params, xs, ds):
    """xs:(B,V,C,H,W), ds:(B,V,1,H,W) — NCHW like PyTorch; returns (B,C,H,W)."""
    B, V, C, H, W = xs.shape
    n_enc, n_dec = len(params["enc"]), len(params["dec"])
    ve_hs = [None] * n_enc
    vd_hs = [None] * n_dec
    views = []
    for v in range(V):
        x = xs[:, v]
        d = ds[:, v]
        for l in range(n_enc):
            x = fuse_gru_block(params["enc"][l], x, d, ve_hs[l],
                               stride=2 if l > 0 else 1)
            ve_hs[l] = x
        x = conv2d(x, params["bn1_w"], None, act="relu")    # bottleneck
        x = conv2d(x, params["bn2_w"], None, act="relu")
        for l in range(n_dec):
            x = gru_block(params["dec"][l], x, vd_hs[l], ve_hs[n_dec - l - 1])
            vd_hs[l] = x
        views.append(x)
    return conf_view_fusion(views, params["conf_w"], params["conf_b"])


# ---------------------------------------------------------------------------
# Deterministic synthetic parameter init.
# Weight layout: w = (Cout, kh*kw*Cin), columns in tap-major / Cin-minor order
# (matching _im2col); bias = (Cout, 1); depthwise w = (kh*kw, C, 1).
# ---------------------------------------------------------------------------
def init_conv(key, kh, kw, cin, cout, bias=True):
    k1, k2 = jax.random.split(key)
    fan_in = cin * kh * kw
    w = jax.random.normal(k1, (cout, kh * kw * cin), jnp.float32) / jnp.sqrt(fan_in)
    b = 0.01 * jax.random.normal(k2, (cout, 1), jnp.float32) if bias else None
    return w, b


def init_dwconv(key, kh, kw, c):
    return jax.random.normal(key, (kh * kw, c, 1), jnp.float32) / jnp.sqrt(kh * kw)


def init_params(key, e_in, e_out, d_in, d_out):
    keys = iter(jax.random.split(key, 64))
    params = {"enc": [], "dec": []}
    for idx, (cin, cout) in enumerate(zip(e_in, e_out)):
        blk = {}
        if idx > 0:
            blk["down_w"], _ = init_conv(next(keys), 3, 3, cin, cout, bias=False)
        gru = {}
        gru["gate_w"], gru["gate_b"] = init_conv(next(keys), 3, 3, cout + 1, cout)
        gru["dh_w"], gru["dh_b"] = init_conv(next(keys), 1, 1, 1, cout)
        gru["hid_w"], gru["hid_b"] = init_conv(next(keys), 3, 3, cout, cout)
        blk["gru"] = gru
        params["enc"].append(blk)
    params["bn1_w"], _ = init_conv(next(keys), 3, 3, e_out[-1], e_out[-1], bias=False)
    params["bn2_w"], _ = init_conv(next(keys), 3, 3, e_out[-1], e_out[-1], bias=False)
    for cin, cout in zip(d_in, d_out):
        blk = {}
        blk["fuse1_w"], _ = init_conv(next(keys), 1, 1, cin + cout, cin, bias=False)
        blk["fuse2_w"] = init_dwconv(next(keys), 3, 3, cin)
        gru = {}
        gru["gate_w"], gru["gate_b"] = init_conv(next(keys), 3, 3, cin, cout)
        gru["hid_w"], gru["hid_b"] = init_conv(next(keys), 1, 1, cin, cout)
        blk["gru"] = gru
        params["dec"].append(blk)
    params["conf_w"], params["conf_b"] = init_conv(next(keys), 3, 3, e_in[0], e_in[0])
    return params


# ---------------------------------------------------------------------------
if __name__ == "__main__":
    # Channel config consistent with GRUUNet's own constraints:
    #   e_in[0] == e_out[0]; e_out[l] == e_in[l+1]; d_in[0] == e_out[-1];
    #   d_out[l] == skip channels; d_out[-1] == e_in[0].
    e_in_channels = [4, 4]
    e_out_channels = [4, 8]
    d_in_channels = [8, 8]
    d_out_channels = [8, 4]

    B, V, H, W = 2, 2, 16, 16
    key = jax.random.PRNGKey(0)
    kp, kx, kd = jax.random.split(key, 3)

    params = init_params(kp, e_in_channels, e_out_channels,
                         d_in_channels, d_out_channels)
    xs = jax.random.normal(kx, (B, V, e_in_channels[0], H, W), jnp.float32)
    ds = jax.random.normal(kd, (B, V, 1, H, W), jnp.float32)

    out = jax.jit(gruunet_forward)(params, xs, ds)
    out = jax.block_until_ready(out)
    assert out.shape == (B, e_in_channels[0], H, W), out.shape
    assert bool(jnp.all(jnp.isfinite(out)))
    print("KERNEL_OK")
</pallas_src>

<mosaic_0001>
module attributes {stable_mosaic.version = 11 : i64} {
  func.func @_dgate_kernel(%arg0: i32, %arg1: i32, %arg2: memref<1x4x256xf32, #tpu.memory_space<vmem>>, %arg3: memref<1x1x256xf32, #tpu.memory_space<vmem>>, %arg4: memref<4x1xf32, #tpu.memory_space<vmem>>, %arg5: memref<4x1xf32, #tpu.memory_space<vmem>>, %arg6: memref<1x4x256xf32, #tpu.memory_space<vmem>>) attributes {dimension_semantics = [#tpu.dimension_semantics<parallel>, #tpu.dimension_semantics<parallel>], iteration_bounds = array<i64: 2, 1>, scalar_prefetch = 0 : i64, scratch_operands = 0 : i64, tpu.core_type = #tpu.core_type<tc>, window_params = [{transform_indices = @transform_0, window_bounds = array<i64: 1, 4, 256>}, {transform_indices = @transform_1, window_bounds = array<i64: 1, 1, 256>}, {pipeline_mode = #tpu.pipeline_mode<synchronous>, transform_indices = @transform_2, window_bounds = array<i64: 4, 1>}, {pipeline_mode = #tpu.pipeline_mode<synchronous>, transform_indices = @transform_3, window_bounds = array<i64: 4, 1>}, {transform_indices = @transform_4, window_bounds = array<i64: 1, 4, 256>}]} {
    %c0 = arith.constant 0 : index
    %c0_0 = arith.constant 0 : index
    %0 = vector.load %arg4[%c0, %c0_0] : memref<4x1xf32, #tpu.memory_space<vmem>>, vector<4x1xf32>
    %c0_1 = arith.constant 0 : index
    %c0_2 = arith.constant 0 : index
    %c0_3 = arith.constant 0 : index
    %1 = vector.load %arg3[%c0_1, %c0_2, %c0_3] : memref<1x1x256xf32, #tpu.memory_space<vmem>>, vector<1x1x256xf32>
    %2 = vector.shape_cast %1 : vector<1x1x256xf32> to vector<1x256xf32>
    %3 = vector.broadcast %0 : vector<4x1xf32> to vector<4x256xf32>
    %4 = vector.broadcast %2 : vector<1x256xf32> to vector<4x256xf32>
    %5 = arith.mulf %3, %4 : vector<4x256xf32>
    %c0_4 = arith.constant 0 : index
    %c0_5 = arith.constant 0 : index
    %6 = vector.load %arg5[%c0_4, %c0_5] : memref<4x1xf32, #tpu.memory_space<vmem>>, vector<4x1xf32>
    %7 = vector.broadcast %6 : vector<4x1xf32> to vector<4x256xf32>
    %8 = arith.addf %5, %7 : vector<4x256xf32>
    %c0_6 = arith.constant 0 : index
    %c0_7 = arith.constant 0 : index
    %c0_8 = arith.constant 0 : index
    %9 = vector.load %arg2[%c0_6, %c0_7, %c0_8] : memref<1x4x256xf32, #tpu.memory_space<vmem>>, vector<1x4x256xf32>
    %10 = vector.shape_cast %9 : vector<1x4x256xf32> to vector<4x256xf32>
    %11 = arith.negf %8 : vector<4x256xf32>
    %12 = math.exp %11 : vector<4x256xf32>
    %cst = arith.constant 1.000000e+00 : f32
    %13 = vector.broadcast %cst : f32 to vector<4x256xf32>
    %14 = arith.addf %13, %12 : vector<4x256xf32>
    %15 = arith.divf %13, %14 : vector<4x256xf32>
    %16 = arith.mulf %10, %15 : vector<4x256xf32>
    %c0_9 = arith.constant 0 : index
    %c0_10 = arith.constant 0 : index
    %c0_11 = arith.constant 0 : index
    %17 = vector.load %arg6[%c0_9, %c0_10, %c0_11] : memref<1x4x256xf32, #tpu.memory_space<vmem>>, vector<1x4x256xf32>
    %18 = vector.shape_cast %17 : vector<1x4x256xf32> to vector<4x256xf32>
    %19 = vector.shape_cast %16 : vector<4x256xf32> to vector<1x4x256xf32>
    tpu.vector_store %arg6[%c0_9, %c0_10, %c0_11], %19 {strides = array<i32>} : memref<1x4x256xf32, #tpu.memory_space<vmem>>, vector<1x4x256xf32>,
    return
  }
  func.func @transform_0(%arg0: i32, %arg1: i32) -> (i32, i32, i32) {
    %c0_i32 = arith.constant 0 : i32
    %c0_i32_0 = arith.constant 0 : i32
    return %arg0, %c0_i32, %arg1 : i32, i32, i32
  }
  func.func @transform_1(%arg0: i32, %arg1: i32) -> (i32, i32, i32) {
    %c0_i32 = arith.constant 0 : i32
    %c0_i32_0 = arith.constant 0 : i32
    return %arg0, %c0_i32, %arg1 : i32, i32, i32
  }
  func.func @transform_2(%arg0: i32, %arg1: i32) -> (i32, i32) {
    %c0_i32 = arith.constant 0 : i32
    %c0_i32_0 = arith.constant 0 : i32
    %c0_i32_1 = arith.constant 0 : i32
    return %c0_i32, %c0_i32_0 : i32, i32
  }
  func.func @transform_3(%arg0: i32, %arg1: i32) -> (i32, i32) {
    %c0_i32 = arith.constant 0 : i32
    %c0_i32_0 = arith.constant 0 : i32
    %c0_i32_1 = arith.constant 0 : i32
    return %c0_i32, %c0_i32_0 : i32, i32
  }
  func.func @transform_4(%arg0: i32, %arg1: i32) -> (i32, i32, i32) {
    %c0_i32 = arith.constant 0 : i32
    %c0_i32_0 = arith.constant 0 : i32
    return %arg0, %c0_i32, %arg1 : i32, i32, i32
  }
}

module attributes {stable_mosaic.version = 11 : i64} {
  func.func @_fuse_gru_kernel(%arg0: i32, %arg1: i32, %arg2: memref<1x45x256xf32, #tpu.memory_space<vmem>>, %arg3: memref<4x45xf32, #tpu.memory_space<vmem>>, %arg4: memref<4x1xf32, #tpu.memory_space<vmem>>, %arg5: memref<1x36x256xf32, #tpu.memory_space<vmem>>, %arg6: memref<4x36xf32, #tpu.memory_space<vmem>>, %arg7: memref<4x1xf32, #tpu.memory_space<vmem>>, %arg8: memref<1x4x256xf32, #tpu.memory_space<vmem>>) attributes {dimension_semantics = [#tpu.dimension_semantics<parallel>, #tpu.dimension_semantics<parallel>], iteration_bounds = array<i64: 2, 1>, scalar_prefetch = 0 : i64, scratch_operands = 0 : i64, tpu.core_type = #tpu.core_type<tc>, window_params = [{transform_indices = @transform_0, window_bounds = array<i64: 1, 45, 256>}, {pipeline_mode = #tpu.pipeline_mode<synchronous>, transform_indices = @transform_1, window_bounds = array<i64: 4, 45>}, {pipeline_mode = #tpu.pipeline_mode<synchronous>, transform_indices = @transform_2, window_bounds = array<i64: 4, 1>}, {transform_indices = @transform_3, window_bounds = array<i64: 1, 36, 256>}, {pipeline_mode = #tpu.pipeline_mode<synchronous>, transform_indices = @transform_4, window_bounds = array<i64: 4, 36>}, {pipeline_mode = #tpu.pipeline_mode<synchronous>, transform_indices = @transform_5, window_bounds = array<i64: 4, 1>}, {transform_indices = @transform_6, window_bounds = array<i64: 1, 4, 256>}]} {
    %c0 = arith.constant 0 : index
    %c0_0 = arith.constant 0 : index
    %0 = vector.load %arg3[%c0, %c0_0] : memref<4x45xf32, #tpu.memory_space<vmem>>, vector<4x45xf32>
    %c0_1 = arith.constant 0 : index
    %c0_2 = arith.constant 0 : index
    %c0_3 = arith.constant 0 : index
    %1 = vector.load %arg2[%c0_1, %c0_2, %c0_3] : memref<1x45x256xf32, #tpu.memory_space<vmem>>, vector<1x45x256xf32>
    %2 = vector.shape_cast %1 : vector<1x45x256xf32> to vector<45x256xf32>
    %cst = arith.constant dense<0.000000e+00> : vector<4x256xf32>
    %3 = tpu.matmul %0, %2, %cst {dimension_numbers = #tpu.dot_dimension_numbers<[1], [0], [0], [1], [0, 0, 1, 1], [], []>} : vector<4x45xf32>, vector<45x256xf32>, vector<4x256xf32> -> vector<4x256xf32>
    %c0_4 = arith.constant 0 : index
    %c0_5 = arith.constant 0 : index
    %4 = vector.load %arg4[%c0_4, %c0_5] : memref<4x1xf32, #tpu.memory_space<vmem>>, vector<4x1xf32>
    %5 = vector.broadcast %4 : vector<4x1xf32> to vector<4x256xf32>
    %6 = arith.addf %3, %5 : vector<4x256xf32>
    %7 = arith.negf %6 : vector<4x256xf32>
    %8 = math.exp %7 : vector<4x256xf32>
    %cst_6 = arith.constant 1.000000e+00 : f32
    %9 = vector.broadcast %cst_6 : f32 to vector<4x256xf32>
    %10 = arith.addf %9, %8 : vector<4x256xf32>
    %11 = arith.divf %9, %10 : vector<4x256xf32>
    %c0_7 = arith.constant 0 : index
    %c0_8 = arith.constant 0 : index
    %12 = vector.load %arg6[%c0_7, %c0_8] : memref<4x36xf32, #tpu.memory_space<vmem>>, vector<4x36xf32>
    %c0_9 = arith.constant 0 : index
    %c0_10 = arith.constant 0 : index
    %c0_11 = arith.constant 0 : index
    %13 = vector.load %arg5[%c0_9, %c0_10, %c0_11] : memref<1x36x256xf32, #tpu.memory_space<vmem>>, vector<1x36x256xf32>
    %14 = vector.shape_cast %13 : vector<1x36x256xf32> to vector<36x256xf32>
    %cst_12 = arith.constant dense<0.000000e+00> : vector<4x256xf32>
    %15 = tpu.matmul %12, %14, %cst_12 {dimension_numbers = #tpu.dot_dimension_numbers<[1], [0], [0], [1], [0, 0, 1, 1], [], []>} : vector<4x36xf32>, vector<36x256xf32>, vector<4x256xf32> -> vector<4x256xf32>
    %c0_13 = arith.constant 0 : index
    %c0_14 = arith.constant 0 : index
    %16 = vector.load %arg7[%c0_13, %c0_14] : memref<4x1xf32, #tpu.memory_space<vmem>>, vector<4x1xf32>
    %17 = vector.broadcast %16 : vector<4x1xf32> to vector<4x256xf32>
    %18 = arith.addf %15, %17 : vector<4x256xf32>
    %cst_15 = arith.constant 0.000000e+00 : f32
    %19 = vector.broadcast %cst_15 : f32 to vector<4x256xf32>
    %20 = arith.cmpf oge, %18, %19 : vector<4x256xf32>
    %cst_16 = arith.constant 5.000000e-01 : f32
    %21 = vector.broadcast %cst_16 : f32 to vector<4x256xf32>
    %22 = arith.addf %18, %21 : vector<4x256xf32>
    %23 = arith.negf %18 : vector<4x256xf32>
    %24 = math.exp %23 : vector<4x256xf32>
    %cst_17 = arith.constant 1.000000e+00 : f32
    %25 = vector.broadcast %cst_17 : f32 to vector<4x256xf32>
    %26 = arith.addf %25, %24 : vector<4x256xf32>
    %27 = arith.divf %25, %26 : vector<4x256xf32>
    %28 = arith.select %20, %22, %27 : vector<4x256xi1>, vector<4x256xf32>
    %29 = arith.mulf %28, %11 : vector<4x256xf32>
    %c0_18 = arith.constant 0 : index
    %c0_19 = arith.constant 0 : index
    %c0_20 = arith.constant 0 : index
    %30 = vector.load %arg8[%c0_18, %c0_19, %c0_20] : memref<1x4x256xf32, #tpu.memory_space<vmem>>, vector<1x4x256xf32>
    %31 = vector.shape_cast %30 : vector<1x4x256xf32> to vector<4x256xf32>
    %32 = vector.shape_cast %29 : vector<4x256xf32> to vector<1x4x256xf32>
    tpu.vector_store %arg8[%c0_18, %c0_19, %c0_20], %32 {strides = array<i32>} : memref<1x4x256xf32, #tpu.memory_space<vmem>>, vector<1x4x256xf32>,
    return
  }
  func.func @transform_0(%arg0: i32, %arg1: i32) -> (i32, i32, i32) {
    %c0_i32 = arith.constant 0 : i32
    %c0_i32_0 = arith.constant 0 : i32
    return %arg0, %c0_i32, %arg1 : i32, i32, i32
  }
  func.func @transform_1(%arg0: i32, %arg1: i32) -> (i32, i32) {
    %c0_i32 = arith.constant 0 : i32
    %c0_i32_0 = arith.constant 0 : i32
    %c0_i32_1 = arith.constant 0 : i32
    return %c0_i32, %c0_i32_0 : i32, i32
  }
  func.func @transform_2(%arg0: i32, %arg1: i32) -> (i32, i32) {
    %c0_i32 = arith.constant 0 : i32
    %c0_i32_0 = arith.constant 0 : i32
    %c0_i32_1 = arith.constant 0 : i32
    return %c0_i32, %c0_i32_0 : i32, i32
  }
  func.func @transform_3(%arg0: i32, %arg1: i32) -> (i32, i32, i32) {
    %c0_i32 = arith.constant 0 : i32
    %c0_i32_0 = arith.constant 0 : i32
    return %arg0, %c0_i32, %arg1 : i32, i32, i32
  }
  func.func @transform_4(%arg0: i32, %arg1: i32) -> (i32, i32) {
    %c0_i32 = arith.constant 0 : i32
    %c0_i32_0 = arith.constant 0 : i32
    %c0_i32_1 = arith.constant 0 : i32
    return %c0_i32, %c0_i32_0 : i32, i32
  }
  func.func @transform_5(%arg0: i32, %arg1: i32) -> (i32, i32) {
    %c0_i32 = arith.constant 0 : i32
    %c0_i32_0 = arith.constant 0 : i32
    %c0_i32_1 = arith.constant 0 : i32
    return %c0_i32, %c0_i32_0 : i32, i32
  }
  func.func @transform_6(%arg0: i32, %arg1: i32) -> (i32, i32, i32) {
    %c0_i32 = arith.constant 0 : i32
    %c0_i32_0 = arith.constant 0 : i32
    return %arg0, %c0_i32, %arg1 : i32, i32, i32
  }
}

module attributes {stable_mosaic.version = 11 : i64} {
  func.func @_fuse_gru_prev_kernel(%arg0: i32, %arg1: i32, %arg2: memref<1x45x256xf32, #tpu.memory_space<vmem>>, %arg3: memref<4x45xf32, #tpu.memory_space<vmem>>, %arg4: memref<4x1xf32, #tpu.memory_space<vmem>>, %arg5: memref<1x36x256xf32, #tpu.memory_space<vmem>>, %arg6: memref<4x36xf32, #tpu.memory_space<vmem>>, %arg7: memref<4x1xf32, #tpu.memory_space<vmem>>, %arg8: memref<1x4x256xf32, #tpu.memory_space<vmem>>, %arg9: memref<1x4x256xf32, #tpu.memory_space<vmem>>) attributes {dimension_semantics = [#tpu.dimension_semantics<parallel>, #tpu.dimension_semantics<parallel>], iteration_bounds = array<i64: 2, 1>, scalar_prefetch = 0 : i64, scratch_operands = 0 : i64, tpu.core_type = #tpu.core_type<tc>, window_params = [{transform_indices = @transform_0, window_bounds = array<i64: 1, 45, 256>}, {pipeline_mode = #tpu.pipeline_mode<synchronous>, transform_indices = @transform_1, window_bounds = array<i64: 4, 45>}, {pipeline_mode = #tpu.pipeline_mode<synchronous>, transform_indices = @transform_2, window_bounds = array<i64: 4, 1>}, {transform_indices = @transform_3, window_bounds = array<i64: 1, 36, 256>}, {pipeline_mode = #tpu.pipeline_mode<synchronous>, transform_indices = @transform_4, window_bounds = array<i64: 4, 36>}, {pipeline_mode = #tpu.pipeline_mode<synchronous>, transform_indices = @transform_5, window_bounds = array<i64: 4, 1>}, {transform_indices = @transform_6, window_bounds = array<i64: 1, 4, 256>}, {transform_indices = @transform_7, window_bounds = array<i64: 1, 4, 256>}]} {
    %c0 = arith.constant 0 : index
    %c0_0 = arith.constant 0 : index
    %0 = vector.load %arg3[%c0, %c0_0] : memref<4x45xf32, #tpu.memory_space<vmem>>, vector<4x45xf32>
    %c0_1 = arith.constant 0 : index
    %c0_2 = arith.constant 0 : index
    %c0_3 = arith.constant 0 : index
    %1 = vector.load %arg2[%c0_1, %c0_2, %c0_3] : memref<1x45x256xf32, #tpu.memory_space<vmem>>, vector<1x45x256xf32>
    %2 = vector.shape_cast %1 : vector<1x45x256xf32> to vector<45x256xf32>
    %cst = arith.constant dense<0.000000e+00> : vector<4x256xf32>
    %3 = tpu.matmul %0, %2, %cst {dimension_numbers = #tpu.dot_dimension_numbers<[1], [0], [0], [1], [0, 0, 1, 1], [], []>} : vector<4x45xf32>, vector<45x256xf32>, vector<4x256xf32> -> vector<4x256xf32>
    %c0_4 = arith.constant 0 : index
    %c0_5 = arith.constant 0 : index
    %4 = vector.load %arg4[%c0_4, %c0_5] : memref<4x1xf32, #tpu.memory_space<vmem>>, vector<4x1xf32>
    %5 = vector.broadcast %4 : vector<4x1xf32> to vector<4x256xf32>
    %6 = arith.addf %3, %5 : vector<4x256xf32>
    %7 = arith.negf %6 : vector<4x256xf32>
    %8 = math.exp %7 : vector<4x256xf32>
    %cst_6 = arith.constant 1.000000e+00 : f32
    %9 = vector.broadcast %cst_6 : f32 to vector<4x256xf32>
    %10 = arith.addf %9, %8 : vector<4x256xf32>
    %11 = arith.divf %9, %10 : vector<4x256xf32>
    %c0_7 = arith.constant 0 : index
    %c0_8 = arith.constant 0 : index
    %12 = vector.load %arg6[%c0_7, %c0_8] : memref<4x36xf32, #tpu.memory_space<vmem>>, vector<4x36xf32>
    %c0_9 = arith.constant 0 : index
    %c0_10 = arith.constant 0 : index
    %c0_11 = arith.constant 0 : index
    %13 = vector.load %arg5[%c0_9, %c0_10, %c0_11] : memref<1x36x256xf32, #tpu.memory_space<vmem>>, vector<1x36x256xf32>
    %14 = vector.shape_cast %13 : vector<1x36x256xf32> to vector<36x256xf32>
    %cst_12 = arith.constant dense<0.000000e+00> : vector<4x256xf32>
    %15 = tpu.matmul %12, %14, %cst_12 {dimension_numbers = #tpu.dot_dimension_numbers<[1], [0], [0], [1], [0, 0, 1, 1], [], []>} : vector<4x36xf32>, vector<36x256xf32>, vector<4x256xf32> -> vector<4x256xf32>
    %c0_13 = arith.constant 0 : index
    %c0_14 = arith.constant 0 : index
    %16 = vector.load %arg7[%c0_13, %c0_14] : memref<4x1xf32, #tpu.memory_space<vmem>>, vector<4x1xf32>
    %17 = vector.broadcast %16 : vector<4x1xf32> to vector<4x256xf32>
    %18 = arith.addf %15, %17 : vector<4x256xf32>
    %cst_15 = arith.constant 0.000000e+00 : f32
    %19 = vector.broadcast %cst_15 : f32 to vector<4x256xf32>
    %20 = arith.cmpf oge, %18, %19 : vector<4x256xf32>
    %cst_16 = arith.constant 5.000000e-01 : f32
    %21 = vector.broadcast %cst_16 : f32 to vector<4x256xf32>
    %22 = arith.addf %18, %21 : vector<4x256xf32>
    %23 = arith.negf %18 : vector<4x256xf32>
    %24 = math.exp %23 : vector<4x256xf32>
    %cst_17 = arith.constant 1.000000e+00 : f32
    %25 = vector.broadcast %cst_17 : f32 to vector<4x256xf32>
    %26 = arith.addf %25, %24 : vector<4x256xf32>
    %27 = arith.divf %25, %26 : vector<4x256xf32>
    %28 = arith.select %20, %22, %27 : vector<4x256xi1>, vector<4x256xf32>
    %c0_18 = arith.constant 0 : index
    %c0_19 = arith.constant 0 : index
    %c0_20 = arith.constant 0 : index
    %29 = vector.load %arg8[%c0_18, %c0_19, %c0_20] : memref<1x4x256xf32, #tpu.memory_space<vmem>>, vector<1x4x256xf32>
    %30 = vector.shape_cast %29 : vector<1x4x256xf32> to vector<4x256xf32>
    %31 = arith.subf %28, %30 : vector<4x256xf32>
    %32 = arith.mulf %11, %31 : vector<4x256xf32>
    %33 = arith.addf %30, %32 : vector<4x256xf32>
    %c0_21 = arith.constant 0 : index
    %c0_22 = arith.constant 0 : index
    %c0_23 = arith.constant 0 : index
    %34 = vector.load %arg9[%c0_21, %c0_22, %c0_23] : memref<1x4x256xf32, #tpu.memory_space<vmem>>, vector<1x4x256xf32>
    %35 = vector.shape_cast %34 : vector<1x4x256xf32> to vector<4x256xf32>
    %36 = vector.shape_cast %33 : vector<4x256xf32> to vector<1x4x256xf32>
    tpu.vector_store %arg9[%c0_21, %c0_22, %c0_23], %36 {strides = array<i32>} : memref<1x4x256xf32, #tpu.memory_space<vmem>>, vector<1x4x256xf32>,
    return
  }
  func.func @transform_0(%arg0: i32, %arg1: i32) -> (i32, i32, i32) {
    %c0_i32 = arith.constant 0 : i32
    %c0_i32_0 = arith.constant 0 : i32
    return %arg0, %c0_i32, %arg1 : i32, i32, i32
  }
  func.func @transform_1(%arg0: i32, %arg1: i32) -> (i32, i32) {
    %c0_i32 = arith.constant 0 : i32
    %c0_i32_0 = arith.constant 0 : i32
    %c0_i32_1 = arith.constant 0 : i32
    return %c0_i32, %c0_i32_0 : i32, i32
  }
  func.func @transform_2(%arg0: i32, %arg1: i32) -> (i32, i32) {
    %c0_i32 = arith.constant 0 : i32
    %c0_i32_0 = arith.constant 0 : i32
    %c0_i32_1 = arith.constant 0 : i32
    return %c0_i32, %c0_i32_0 : i32, i32
  }
  func.func @transform_3(%arg0: i32, %arg1: i32) -> (i32, i32, i32) {
    %c0_i32 = arith.constant 0 : i32
    %c0_i32_0 = arith.constant 0 : i32
    return %arg0, %c0_i32, %arg1 : i32, i32, i32
  }
  func.func @transform_4(%arg0: i32, %arg1: i32) -> (i32, i32) {
    %c0_i32 = arith.constant 0 : i32
    %c0_i32_0 = arith.constant 0 : i32
    %c0_i32_1 = arith.constant 0 : i32
    return %c0_i32, %c0_i32_0 : i32, i32
  }
  func.func @transform_5(%arg0: i32, %arg1: i32) -> (i32, i32) {
    %c0_i32 = arith.constant 0 : i32
    %c0_i32_0 = arith.constant 0 : i32
    %c0_i32_1 = arith.constant 0 : i32
    return %c0_i32, %c0_i32_0 : i32, i32
  }
  func.func @transform_6(%arg0: i32, %arg1: i32) -> (i32, i32, i32) {
    %c0_i32 = arith.constant 0 : i32
    %c0_i32_0 = arith.constant 0 : i32
    return %arg0, %c0_i32, %arg1 : i32, i32, i32
  }
  func.func @transform_7(%arg0: i32, %arg1: i32) -> (i32, i32, i32) {
    %c0_i32 = arith.constant 0 : i32
    %c0_i32_0 = arith.constant 0 : i32
    return %arg0, %c0_i32, %arg1 : i32, i32, i32
  }
}

module attributes {stable_mosaic.version = 11 : i64} {
  func.func @_conv_kernel(%arg0: i32, %arg1: i32, %arg2: memref<1x36x64xf32, #tpu.memory_space<vmem>>, %arg3: memref<8x36xf32, #tpu.memory_space<vmem>>, %arg4: memref<1x8x64xf32, #tpu.memory_space<vmem>>) attributes {dimension_semantics = [#tpu.dimension_semantics<parallel>, #tpu.dimension_semantics<parallel>], iteration_bounds = array<i64: 2, 1>, scalar_prefetch = 0 : i64, scratch_operands = 0 : i64, tpu.core_type = #tpu.core_type<tc>, window_params = [{transform_indices = @transform_0, window_bounds = array<i64: 1, 36, 64>}, {pipeline_mode = #tpu.pipeline_mode<synchronous>, transform_indices = @transform_1, window_bounds = array<i64: 8, 36>}, {transform_indices = @transform_2, window_bounds = array<i64: 1, 8, 64>}]} {
    %c0 = arith.constant 0 : index
    %c0_0 = arith.constant 0 : index
    %0 = vector.load %arg3[%c0, %c0_0] : memref<8x36xf32, #tpu.memory_space<vmem>>, vector<8x36xf32>
    %c0_1 = arith.constant 0 : index
    %c0_2 = arith.constant 0 : index
    %c0_3 = arith.constant 0 : index
    %1 = vector.load %arg2[%c0_1, %c0_2, %c0_3] : memref<1x36x64xf32, #tpu.memory_space<vmem>>, vector<1x36x64xf32>
    %2 = vector.shape_cast %1 : vector<1x36x64xf32> to vector<36x64xf32>
    %cst = arith.constant dense<0.000000e+00> : vector<8x64xf32>
    %3 = tpu.matmul %0, %2, %cst {dimension_numbers = #tpu.dot_dimension_numbers<[1], [0], [0], [1], [0, 0, 1, 1], [], []>} : vector<8x36xf32>, vector<36x64xf32>, vector<8x64xf32> -> vector<8x64xf32>
    %cst_4 = arith.constant 0.000000e+00 : f32
    %4 = vector.broadcast %cst_4 : f32 to vector<8x64xf32>
    %5 = arith.maximumf %3, %4 : vector<8x64xf32>
    %c0_5 = arith.constant 0 : index
    %c0_6 = arith.constant 0 : index
    %c0_7 = arith.constant 0 : index
    %6 = vector.load %arg4[%c0_5, %c0_6, %c0_7] : memref<1x8x64xf32, #tpu.memory_space<vmem>>, vector<1x8x64xf32>
    %7 = vector.shape_cast %6 : vector<1x8x64xf32> to vector<8x64xf32>
    %8 = vector.shape_cast %5 : vector<8x64xf32> to vector<1x8x64xf32>
    tpu.vector_store %arg4[%c0_5, %c0_6, %c0_7], %8 {strides = array<i32>} : memref<1x8x64xf32, #tpu.memory_space<vmem>>, vector<1x8x64xf32>,
    return
  }
  func.func @transform_0(%arg0: i32, %arg1: i32) -> (i32, i32, i32) {
    %c0_i32 = arith.constant 0 : i32
    %c0_i32_0 = arith.constant 0 : i32
    return %arg0, %c0_i32, %arg1 : i32, i32, i32
  }
  func.func @transform_1(%arg0: i32, %arg1: i32) -> (i32, i32) {
    %c0_i32 = arith.constant 0 : i32
    %c0_i32_0 = arith.constant 0 : i32
    %c0_i32_1 = arith.constant 0 : i32
    return %c0_i32, %c0_i32_0 : i32, i32
  }
  func.func @transform_2(%arg0: i32, %arg1: i32) -> (i32, i32, i32) {
    %c0_i32 = arith.constant 0 : i32
    %c0_i32_0 = arith.constant 0 : i32
    return %arg0, %c0_i32, %arg1 : i32, i32, i32
  }
}

module attributes {stable_mosaic.version = 11 : i64} {
  func.func @_dgate_kernel(%arg0: i32, %arg1: i32, %arg2: memref<1x8x64xf32, #tpu.memory_space<vmem>>, %arg3: memref<1x1x64xf32, #tpu.memory_space<vmem>>, %arg4: memref<8x1xf32, #tpu.memory_space<vmem>>, %arg5: memref<8x1xf32, #tpu.memory_space<vmem>>, %arg6: memref<1x8x64xf32, #tpu.memory_space<vmem>>) attributes {dimension_semantics = [#tpu.dimension_semantics<parallel>, #tpu.dimension_semantics<parallel>], iteration_bounds = array<i64: 2, 1>, scalar_prefetch = 0 : i64, scratch_operands = 0 : i64, tpu.core_type = #tpu.core_type<tc>, window_params = [{transform_indices = @transform_0, window_bounds = array<i64: 1, 8, 64>}, {transform_indices = @transform_1, window_bounds = array<i64: 1, 1, 64>}, {pipeline_mode = #tpu.pipeline_mode<synchronous>, transform_indices = @transform_2, window_bounds = array<i64: 8, 1>}, {pipeline_mode = #tpu.pipeline_mode<synchronous>, transform_indices = @transform_3, window_bounds = array<i64: 8, 1>}, {transform_indices = @transform_4, window_bounds = array<i64: 1, 8, 64>}]} {
    %c0 = arith.constant 0 : index
    %c0_0 = arith.constant 0 : index
    %0 = vector.load %arg4[%c0, %c0_0] : memref<8x1xf32, #tpu.memory_space<vmem>>, vector<8x1xf32>
    %c0_1 = arith.constant 0 : index
    %c0_2 = arith.constant 0 : index
    %c0_3 = arith.constant 0 : index
    %1 = vector.load %arg3[%c0_1, %c0_2, %c0_3] : memref<1x1x64xf32, #tpu.memory_space<vmem>>, vector<1x1x64xf32>
    %2 = vector.shape_cast %1 : vector<1x1x64xf32> to vector<1x64xf32>
    %3 = vector.broadcast %0 : vector<8x1xf32> to vector<8x64xf32>
    %4 = vector.broadcast %2 : vector<1x64xf32> to vector<8x64xf32>
    %5 = arith.mulf %3, %4 : vector<8x64xf32>
    %c0_4 = arith.constant 0 : index
    %c0_5 = arith.constant 0 : index
    %6 = vector.load %arg5[%c0_4, %c0_5] : memref<8x1xf32, #tpu.memory_space<vmem>>, vector<8x1xf32>
    %7 = vector.broadcast %6 : vector<8x1xf32> to vector<8x64xf32>
    %8 = arith.addf %5, %7 : vector<8x64xf32>
    %c0_6 = arith.constant 0 : index
    %c0_7 = arith.constant 0 : index
    %c0_8 = arith.constant 0 : index
    %9 = vector.load %arg2[%c0_6, %c0_7, %c0_8] : memref<1x8x64xf32, #tpu.memory_space<vmem>>, vector<1x8x64xf32>
    %10 = vector.shape_cast %9 : vector<1x8x64xf32> to vector<8x64xf32>
    %11 = arith.negf %8 : vector<8x64xf32>
    %12 = math.exp %11 : vector<8x64xf32>
    %cst = arith.constant 1.000000e+00 : f32
    %13 = vector.broadcast %cst : f32 to vector<8x64xf32>
    %14 = arith.addf %13, %12 : vector<8x64xf32>
    %15 = arith.divf %13, %14 : vector<8x64xf32>
    %16 = arith.mulf %10, %15 : vector<8x64xf32>
    %c0_9 = arith.constant 0 : index
    %c0_10 = arith.constant 0 : index
    %c0_11 = arith.constant 0 : index
    %17 = vector.load %arg6[%c0_9, %c0_10, %c0_11] : memref<1x8x64xf32, #tpu.memory_space<vmem>>, vector<1x8x64xf32>
    %18 = vector.shape_cast %17 : vector<1x8x64xf32> to vector<8x64xf32>
    %19 = vector.shape_cast %16 : vector<8x64xf32> to vector<1x8x64xf32>
    tpu.vector_store %arg6[%c0_9, %c0_10, %c0_11], %19 {strides = array<i32>} : memref<1x8x64xf32, #tpu.memory_space<vmem>>, vector<1x8x64xf32>,
    return
  }
  func.func @transform_0(%arg0: i32, %arg1: i32) -> (i32, i32, i32) {
    %c0_i32 = arith.constant 0 : i32
    %c0_i32_0 = arith.constant 0 : i32
    return %arg0, %c0_i32, %arg1 : i32, i32, i32
  }
  func.func @transform_1(%arg0: i32, %arg1: i32) -> (i32, i32, i32) {
    %c0_i32 = arith.constant 0 : i32
    %c0_i32_0 = arith.constant 0 : i32
    return %arg0, %c0_i32, %arg1 : i32, i32, i32
  }
  func.func @transform_2(%arg0: i32, %arg1: i32) -> (i32, i32) {
    %c0_i32 = arith.constant 0 : i32
    %c0_i32_0 = arith.constant 0 : i32
    %c0_i32_1 = arith.constant 0 : i32
    return %c0_i32, %c0_i32_0 : i32, i32
  }
  func.func @transform_3(%arg0: i32, %arg1: i32) -> (i32, i32) {
    %c0_i32 = arith.constant 0 : i32
    %c0_i32_0 = arith.constant 0 : i32
    %c0_i32_1 = arith.constant 0 : i32
    return %c0_i32, %c0_i32_0 : i32, i32
  }
  func.func @transform_4(%arg0: i32, %arg1: i32) -> (i32, i32, i32) {
    %c0_i32 = arith.constant 0 : i32
    %c0_i32_0 = arith.constant 0 : i32
    return %arg0, %c0_i32, %arg1 : i32, i32, i32
  }
}

module attributes {stable_mosaic.version = 11 : i64} {
  func.func @_fuse_gru_prev_kernel(%arg0: i32, %arg1: i32, %arg2: memref<1x81x64xf32, #tpu.memory_space<vmem>>, %arg3: memref<8x81xf32, #tpu.memory_space<vmem>>, %arg4: memref<8x1xf32, #tpu.memory_space<vmem>>, %arg5: memref<1x72x64xf32, #tpu.memory_space<vmem>>, %arg6: memref<8x72xf32, #tpu.memory_space<vmem>>, %arg7: memref<8x1xf32, #tpu.memory_space<vmem>>, %arg8: memref<1x8x64xf32, #tpu.memory_space<vmem>>, %arg9: memref<1x8x64xf32, #tpu.memory_space<vmem>>) attributes {dimension_semantics = [#tpu.dimension_semantics<parallel>, #tpu.dimension_semantics<parallel>], iteration_bounds = array<i64: 2, 1>, scalar_prefetch = 0 : i64, scratch_operands = 0 : i64, tpu.core_type = #tpu.core_type<tc>, window_params = [{transform_indices = @transform_0, window_bounds = array<i64: 1, 81, 64>}, {pipeline_mode = #tpu.pipeline_mode<synchronous>, transform_indices = @transform_1, window_bounds = array<i64: 8, 81>}, {pipeline_mode = #tpu.pipeline_mode<synchronous>, transform_indices = @transform_2, window_bounds = array<i64: 8, 1>}, {transform_indices = @transform_3, window_bounds = array<i64: 1, 72, 64>}, {pipeline_mode = #tpu.pipeline_mode<synchronous>, transform_indices = @transform_4, window_bounds = array<i64: 8, 72>}, {pipeline_mode = #tpu.pipeline_mode<synchronous>, transform_indices = @transform_5, window_bounds = array<i64: 8, 1>}, {transform_indices = @transform_6, window_bounds = array<i64: 1, 8, 64>}, {transform_indices = @transform_7, window_bounds = array<i64: 1, 8, 64>}]} {
    %c0 = arith.constant 0 : index
    %c0_0 = arith.constant 0 : index
    %0 = vector.load %arg3[%c0, %c0_0] : memref<8x81xf32, #tpu.memory_space<vmem>>, vector<8x81xf32>
    %c0_1 = arith.constant 0 : index
    %c0_2 = arith.constant 0 : index
    %c0_3 = arith.constant 0 : index
    %1 = vector.load %arg2[%c0_1, %c0_2, %c0_3] : memref<1x81x64xf32, #tpu.memory_space<vmem>>, vector<1x81x64xf32>
    %2 = vector.shape_cast %1 : vector<1x81x64xf32> to vector<81x64xf32>
    %cst = arith.constant dense<0.000000e+00> : vector<8x64xf32>
    %3 = tpu.matmul %0, %2, %cst {dimension_numbers = #tpu.dot_dimension_numbers<[1], [0], [0], [1], [0, 0, 1, 1], [], []>} : vector<8x81xf32>, vector<81x64xf32>, vector<8x64xf32> -> vector<8x64xf32>
    %c0_4 = arith.constant 0 : index
    %c0_5 = arith.constant 0 : index
    %4 = vector.load %arg4[%c0_4, %c0_5] : memref<8x1xf32, #tpu.memory_space<vmem>>, vector<8x1xf32>
    %5 = vector.broadcast %4 : vector<8x1xf32> to vector<8x64xf32>
    %6 = arith.addf %3, %5 : vector<8x64xf32>
    %7 = arith.negf %6 : vector<8x64xf32>
    %8 = math.exp %7 : vector<8x64xf32>
    %cst_6 = arith.constant 1.000000e+00 : f32
    %9 = vector.broadcast %cst_6 : f32 to vector<8x64xf32>
    %10 = arith.addf %9, %8 : vector<8x64xf32>
    %11 = arith.divf %9, %10 : vector<8x64xf32>
    %c0_7 = arith.constant 0 : index
    %c0_8 = arith.constant 0 : index
    %12 = vector.load %arg6[%c0_7, %c0_8] : memref<8x72xf32, #tpu.memory_space<vmem>>, vector<8x72xf32>
    %c0_9 = arith.constant 0 : index
    %c0_10 = arith.constant 0 : index
    %c0_11 = arith.constant 0 : index
    %13 = vector.load %arg5[%c0_9, %c0_10, %c0_11] : memref<1x72x64xf32, #tpu.memory_space<vmem>>, vector<1x72x64xf32>
    %14 = vector.shape_cast %13 : vector<1x72x64xf32> to vector<72x64xf32>
    %cst_12 = arith.constant dense<0.000000e+00> : vector<8x64xf32>
    %15 = tpu.matmul %12, %14, %cst_12 {dimension_numbers = #tpu.dot_dimension_numbers<[1], [0], [0], [1], [0, 0, 1, 1], [], []>} : vector<8x72xf32>, vector<72x64xf32>, vector<8x64xf32> -> vector<8x64xf32>
    %c0_13 = arith.constant 0 : index
    %c0_14 = arith.constant 0 : index
    %16 = vector.load %arg7[%c0_13, %c0_14] : memref<8x1xf32, #tpu.memory_space<vmem>>, vector<8x1xf32>
    %17 = vector.broadcast %16 : vector<8x1xf32> to vector<8x64xf32>
    %18 = arith.addf %15, %17 : vector<8x64xf32>
    %cst_15 = arith.constant 0.000000e+00 : f32
    %19 = vector.broadcast %cst_15 : f32 to vector<8x64xf32>
    %20 = arith.cmpf oge, %18, %19 : vector<8x64xf32>
    %cst_16 = arith.constant 5.000000e-01 : f32
    %21 = vector.broadcast %cst_16 : f32 to vector<8x64xf32>
    %22 = arith.addf %18, %21 : vector<8x64xf32>
    %23 = arith.negf %18 : vector<8x64xf32>
    %24 = math.exp %23 : vector<8x64xf32>
    %cst_17 = arith.constant 1.000000e+00 : f32
    %25 = vector.broadcast %cst_17 : f32 to vector<8x64xf32>
    %26 = arith.addf %25, %24 : vector<8x64xf32>
    %27 = arith.divf %25, %26 : vector<8x64xf32>
    %28 = arith.select %20, %22, %27 : vector<8x64xi1>, vector<8x64xf32>
    %c0_18 = arith.constant 0 : index
    %c0_19 = arith.constant 0 : index
    %c0_20 = arith.constant 0 : index
    %29 = vector.load %arg8[%c0_18, %c0_19, %c0_20] : memref<1x8x64xf32, #tpu.memory_space<vmem>>, vector<1x8x64xf32>
    %30 = vector.shape_cast %29 : vector<1x8x64xf32> to vector<8x64xf32>
    %31 = arith.subf %28, %30 : vector<8x64xf32>
    %32 = arith.mulf %11, %31 : vector<8x64xf32>
    %33 = arith.addf %30, %32 : vector<8x64xf32>
    %c0_21 = arith.constant 0 : index
    %c0_22 = arith.constant 0 : index
    %c0_23 = arith.constant 0 : index
    %34 = vector.load %arg9[%c0_21, %c0_22, %c0_23] : memref<1x8x64xf32, #tpu.memory_space<vmem>>, vector<1x8x64xf32>
    %35 = vector.shape_cast %34 : vector<1x8x64xf32> to vector<8x64xf32>
    %36 = vector.shape_cast %33 : vector<8x64xf32> to vector<1x8x64xf32>
    tpu.vector_store %arg9[%c0_21, %c0_22, %c0_23], %36 {strides = array<i32>} : memref<1x8x64xf32, #tpu.memory_space<vmem>>, vector<1x8x64xf32>,
    return
  }
  func.func @transform_0(%arg0: i32, %arg1: i32) -> (i32, i32, i32) {
    %c0_i32 = arith.constant 0 : i32
    %c0_i32_0 = arith.constant 0 : i32
    return %arg0, %c0_i32, %arg1 : i32, i32, i32
  }
  func.func @transform_1(%arg0: i32, %arg1: i32) -> (i32, i32) {
    %c0_i32 = arith.constant 0 : i32
    %c0_i32_0 = arith.constant 0 : i32
    %c0_i32_1 = arith.constant 0 : i32
    return %c0_i32, %c0_i32_0 : i32, i32
  }
  func.func @transform_2(%arg0: i32, %arg1: i32) -> (i32, i32) {
    %c0_i32 = arith.constant 0 : i32
    %c0_i32_0 = arith.constant 0 : i32
    %c0_i32_1 = arith.constant 0 : i32
    return %c0_i32, %c0_i32_0 : i32, i32
  }
  func.func @transform_3(%arg0: i32, %arg1: i32) -> (i32, i32, i32) {
    %c0_i32 = arith.constant 0 : i32
    %c0_i32_0 = arith.constant 0 : i32
    return %arg0, %c0_i32, %arg1 : i32, i32, i32
  }
  func.func @transform_4(%arg0: i32, %arg1: i32) -> (i32, i32) {
    %c0_i32 = arith.constant 0 : i32
    %c0_i32_0 = arith.constant 0 : i32
    %c0_i32_1 = arith.constant 0 : i32
    return %c0_i32, %c0_i32_0 : i32, i32
  }
  func.func @transform_5(%arg0: i32, %arg1: i32) -> (i32, i32) {
    %c0_i32 = arith.constant 0 : i32
    %c0_i32_0 = arith.constant 0 : i32
    %c0_i32_1 = arith.constant 0 : i32
    return %c0_i32, %c0_i32_0 : i32, i32
  }
  func.func @transform_6(%arg0: i32, %arg1: i32) -> (i32, i32, i32) {
    %c0_i32 = arith.constant 0 : i32
    %c0_i32_0 = arith.constant 0 : i32
    return %arg0, %c0_i32, %arg1 : i32, i32, i32
  }
  func.func @transform_7(%arg0: i32, %arg1: i32) -> (i32, i32, i32) {
    %c0_i32 = arith.constant 0 : i32
    %c0_i32_0 = arith.constant 0 : i32
    return %arg0, %c0_i32, %arg1 : i32, i32, i32
  }
}

module attributes {stable_mosaic.version = 11 : i64} {
  func.func @_conv_kernel(%arg0: i32, %arg1: i32, %arg2: memref<1x72x64xf32, #tpu.memory_space<vmem>>, %arg3: memref<8x72xf32, #tpu.memory_space<vmem>>, %arg4: memref<1x8x64xf32, #tpu.memory_space<vmem>>) attributes {dimension_semantics = [#tpu.dimension_semantics<parallel>, #tpu.dimension_semantics<parallel>], iteration_bounds = array<i64: 2, 1>, scalar_prefetch = 0 : i64, scratch_operands = 0 : i64, tpu.core_type = #tpu.core_type<tc>, window_params = [{transform_indices = @transform_0, window_bounds = array<i64: 1, 72, 64>}, {pipeline_mode = #tpu.pipeline_mode<synchronous>, transform_indices = @transform_1, window_bounds = array<i64: 8, 72>}, {transform_indices = @transform_2, window_bounds = array<i64: 1, 8, 64>}]} {
    %c0 = arith.constant 0 : index
    %c0_0 = arith.constant 0 : index
    %0 = vector.load %arg3[%c0, %c0_0] : memref<8x72xf32, #tpu.memory_space<vmem>>, vector<8x72xf32>
    %c0_1 = arith.constant 0 : index
    %c0_2 = arith.constant 0 : index
    %c0_3 = arith.constant 0 : index
    %1 = vector.load %arg2[%c0_1, %c0_2, %c0_3] : memref<1x72x64xf32, #tpu.memory_space<vmem>>, vector<1x72x64xf32>
    %2 = vector.shape_cast %1 : vector<1x72x64xf32> to vector<72x64xf32>
    %cst = arith.constant dense<0.000000e+00> : vector<8x64xf32>
    %3 = tpu.matmul %0, %2, %cst {dimension_numbers = #tpu.dot_dimension_numbers<[1], [0], [0], [1], [0, 0, 1, 1], [], []>} : vector<8x72xf32>, vector<72x64xf32>, vector<8x64xf32> -> vector<8x64xf32>
    %cst_4 = arith.constant 0.000000e+00 : f32
    %4 = vector.broadcast %cst_4 : f32 to vector<8x64xf32>
    %5 = arith.maximumf %3, %4 : vector<8x64xf32>
    %c0_5 = arith.constant 0 : index
    %c0_6 = arith.constant 0 : index
    %c0_7 = arith.constant 0 : index
    %6 = vector.load %arg4[%c0_5, %c0_6, %c0_7] : memref<1x8x64xf32, #tpu.memory_space<vmem>>, vector<1x8x64xf32>
    %7 = vector.shape_cast %6 : vector<1x8x64xf32> to vector<8x64xf32>
    %8 = vector.shape_cast %5 : vector<8x64xf32> to vector<1x8x64xf32>
    tpu.vector_store %arg4[%c0_5, %c0_6, %c0_7], %8 {strides = array<i32>} : memref<1x8x64xf32, #tpu.memory_space<vmem>>, vector<1x8x64xf32>,
    return
  }
  func.func @transform_0(%arg0: i32, %arg1: i32) -> (i32, i32, i32) {
    %c0_i32 = arith.constant 0 : i32
    %c0_i32_0 = arith.constant 0 : i32
    return %arg0, %c0_i32, %arg1 : i32, i32, i32
  }
  func.func @transform_1(%arg0: i32, %arg1: i32) -> (i32, i32) {
    %c0_i32 = arith.constant 0 : i32
    %c0_i32_0 = arith.constant 0 : i32
    %c0_i32_1 = arith.constant 0 : i32
    return %c0_i32, %c0_i32_0 : i32, i32
  }
  func.func @transform_2(%arg0: i32, %arg1: i32) -> (i32, i32, i32) {
    %c0_i32 = arith.constant 0 : i32
    %c0_i32_0 = arith.constant 0 : i32
    return %arg0, %c0_i32, %arg1 : i32, i32, i32
  }
}

module attributes {stable_mosaic.version = 11 : i64} {
  func.func @_fuse_gru_kernel(%arg0: i32, %arg1: i32, %arg2: memref<1x81x64xf32, #tpu.memory_space<vmem>>, %arg3: memref<8x81xf32, #tpu.memory_space<vmem>>, %arg4: memref<8x1xf32, #tpu.memory_space<vmem>>, %arg5: memref<1x72x64xf32, #tpu.memory_space<vmem>>, %arg6: memref<8x72xf32, #tpu.memory_space<vmem>>, %arg7: memref<8x1xf32, #tpu.memory_space<vmem>>, %arg8: memref<1x8x64xf32, #tpu.memory_space<vmem>>) attributes {dimension_semantics = [#tpu.dimension_semantics<parallel>, #tpu.dimension_semantics<parallel>], iteration_bounds = array<i64: 2, 1>, scalar_prefetch = 0 : i64, scratch_operands = 0 : i64, tpu.core_type = #tpu.core_type<tc>, window_params = [{transform_indices = @transform_0, window_bounds = array<i64: 1, 81, 64>}, {pipeline_mode = #tpu.pipeline_mode<synchronous>, transform_indices = @transform_1, window_bounds = array<i64: 8, 81>}, {pipeline_mode = #tpu.pipeline_mode<synchronous>, transform_indices = @transform_2, window_bounds = array<i64: 8, 1>}, {transform_indices = @transform_3, window_bounds = array<i64: 1, 72, 64>}, {pipeline_mode = #tpu.pipeline_mode<synchronous>, transform_indices = @transform_4, window_bounds = array<i64: 8, 72>}, {pipeline_mode = #tpu.pipeline_mode<synchronous>, transform_indices = @transform_5, window_bounds = array<i64: 8, 1>}, {transform_indices = @transform_6, window_bounds = array<i64: 1, 8, 64>}]} {
    %c0 = arith.constant 0 : index
    %c0_0 = arith.constant 0 : index
    %0 = vector.load %arg3[%c0, %c0_0] : memref<8x81xf32, #tpu.memory_space<vmem>>, vector<8x81xf32>
    %c0_1 = arith.constant 0 : index
    %c0_2 = arith.constant 0 : index
    %c0_3 = arith.constant 0 : index
    %1 = vector.load %arg2[%c0_1, %c0_2, %c0_3] : memref<1x81x64xf32, #tpu.memory_space<vmem>>, vector<1x81x64xf32>
    %2 = vector.shape_cast %1 : vector<1x81x64xf32> to vector<81x64xf32>
    %cst = arith.constant dense<0.000000e+00> : vector<8x64xf32>
    %3 = tpu.matmul %0, %2, %cst {dimension_numbers = #tpu.dot_dimension_numbers<[1], [0], [0], [1], [0, 0, 1, 1], [], []>} : vector<8x81xf32>, vector<81x64xf32>, vector<8x64xf32> -> vector<8x64xf32>
    %c0_4 = arith.constant 0 : index
    %c0_5 = arith.constant 0 : index
    %4 = vector.load %arg4[%c0_4, %c0_5] : memref<8x1xf32, #tpu.memory_space<vmem>>, vector<8x1xf32>
    %5 = vector.broadcast %4 : vector<8x1xf32> to vector<8x64xf32>
    %6 = arith.addf %3, %5 : vector<8x64xf32>
    %7 = arith.negf %6 : vector<8x64xf32>
    %8 = math.exp %7 : vector<8x64xf32>
    %cst_6 = arith.constant 1.000000e+00 : f32
    %9 = vector.broadcast %cst_6 : f32 to vector<8x64xf32>
    %10 = arith.addf %9, %8 : vector<8x64xf32>
    %11 = arith.divf %9, %10 : vector<8x64xf32>
    %c0_7 = arith.constant 0 : index
    %c0_8 = arith.constant 0 : index
    %12 = vector.load %arg6[%c0_7, %c0_8] : memref<8x72xf32, #tpu.memory_space<vmem>>, vector<8x72xf32>
    %c0_9 = arith.constant 0 : index
    %c0_10 = arith.constant 0 : index
    %c0_11 = arith.constant 0 : index
    %13 = vector.load %arg5[%c0_9, %c0_10, %c0_11] : memref<1x72x64xf32, #tpu.memory_space<vmem>>, vector<1x72x64xf32>
    %14 = vector.shape_cast %13 : vector<1x72x64xf32> to vector<72x64xf32>
    %cst_12 = arith.constant dense<0.000000e+00> : vector<8x64xf32>
    %15 = tpu.matmul %12, %14, %cst_12 {dimension_numbers = #tpu.dot_dimension_numbers<[1], [0], [0], [1], [0, 0, 1, 1], [], []>} : vector<8x72xf32>, vector<72x64xf32>, vector<8x64xf32> -> vector<8x64xf32>
    %c0_13 = arith.constant 0 : index
    %c0_14 = arith.constant 0 : index
    %16 = vector.load %arg7[%c0_13, %c0_14] : memref<8x1xf32, #tpu.memory_space<vmem>>, vector<8x1xf32>
    %17 = vector.broadcast %16 : vector<8x1xf32> to vector<8x64xf32>
    %18 = arith.addf %15, %17 : vector<8x64xf32>
    %cst_15 = arith.constant 0.000000e+00 : f32
    %19 = vector.broadcast %cst_15 : f32 to vector<8x64xf32>
    %20 = arith.cmpf oge, %18, %19 : vector<8x64xf32>
    %cst_16 = arith.constant 5.000000e-01 : f32
    %21 = vector.broadcast %cst_16 : f32 to vector<8x64xf32>
    %22 = arith.addf %18, %21 : vector<8x64xf32>
    %23 = arith.negf %18 : vector<8x64xf32>
    %24 = math.exp %23 : vector<8x64xf32>
    %cst_17 = arith.constant 1.000000e+00 : f32
    %25 = vector.broadcast %cst_17 : f32 to vector<8x64xf32>
    %26 = arith.addf %25, %24 : vector<8x64xf32>
    %27 = arith.divf %25, %26 : vector<8x64xf32>
    %28 = arith.select %20, %22, %27 : vector<8x64xi1>, vector<8x64xf32>
    %29 = arith.mulf %28, %11 : vector<8x64xf32>
    %c0_18 = arith.constant 0 : index
    %c0_19 = arith.constant 0 : index
    %c0_20 = arith.constant 0 : index
    %30 = vector.load %arg8[%c0_18, %c0_19, %c0_20] : memref<1x8x64xf32, #tpu.memory_space<vmem>>, vector<1x8x64xf32>
    %31 = vector.shape_cast %30 : vector<1x8x64xf32> to vector<8x64xf32>
    %32 = vector.shape_cast %29 : vector<8x64xf32> to vector<1x8x64xf32>
    tpu.vector_store %arg8[%c0_18, %c0_19, %c0_20], %32 {strides = array<i32>} : memref<1x8x64xf32, #tpu.memory_space<vmem>>, vector<1x8x64xf32>,
    return
  }
  func.func @transform_0(%arg0: i32, %arg1: i32) -> (i32, i32, i32) {
    %c0_i32 = arith.constant 0 : i32
    %c0_i32_0 = arith.constant 0 : i32
    return %arg0, %c0_i32, %arg1 : i32, i32, i32
  }
  func.func @transform_1(%arg0: i32, %arg1: i32) -> (i32, i32) {
    %c0_i32 = arith.constant 0 : i32
    %c0_i32_0 = arith.constant 0 : i32
    %c0_i32_1 = arith.constant 0 : i32
    return %c0_i32, %c0_i32_0 : i32, i32
  }
  func.func @transform_2(%arg0: i32, %arg1: i32) -> (i32, i32) {
    %c0_i32 = arith.constant 0 : i32
    %c0_i32_0 = arith.constant 0 : i32
    %c0_i32_1 = arith.constant 0 : i32
    return %c0_i32, %c0_i32_0 : i32, i32
  }
  func.func @transform_3(%arg0: i32, %arg1: i32) -> (i32, i32, i32) {
    %c0_i32 = arith.constant 0 : i32
    %c0_i32_0 = arith.constant 0 : i32
    return %arg0, %c0_i32, %arg1 : i32, i32, i32
  }
  func.func @transform_4(%arg0: i32, %arg1: i32) -> (i32, i32) {
    %c0_i32 = arith.constant 0 : i32
    %c0_i32_0 = arith.constant 0 : i32
    %c0_i32_1 = arith.constant 0 : i32
    return %c0_i32, %c0_i32_0 : i32, i32
  }
  func.func @transform_5(%arg0: i32, %arg1: i32) -> (i32, i32) {
    %c0_i32 = arith.constant 0 : i32
    %c0_i32_0 = arith.constant 0 : i32
    %c0_i32_1 = arith.constant 0 : i32
    return %c0_i32, %c0_i32_0 : i32, i32
  }
  func.func @transform_6(%arg0: i32, %arg1: i32) -> (i32, i32, i32) {
    %c0_i32 = arith.constant 0 : i32
    %c0_i32_0 = arith.constant 0 : i32
    return %arg0, %c0_i32, %arg1 : i32, i32, i32
  }
}

module attributes {stable_mosaic.version = 11 : i64} {
  func.func @_conv_kernel(%arg0: i32, %arg1: i32, %arg2: memref<1x16x64xf32, #tpu.memory_space<vmem>>, %arg3: memref<8x16xf32, #tpu.memory_space<vmem>>, %arg4: memref<1x8x64xf32, #tpu.memory_space<vmem>>) attributes {dimension_semantics = [#tpu.dimension_semantics<parallel>, #tpu.dimension_semantics<parallel>], iteration_bounds = array<i64: 2, 1>, scalar_prefetch = 0 : i64, scratch_operands = 0 : i64, tpu.core_type = #tpu.core_type<tc>, window_params = [{transform_indices = @transform_0, window_bounds = array<i64: 1, 16, 64>}, {pipeline_mode = #tpu.pipeline_mode<synchronous>, transform_indices = @transform_1, window_bounds = array<i64: 8, 16>}, {transform_indices = @transform_2, window_bounds = array<i64: 1, 8, 64>}]} {
    %c0 = arith.constant 0 : index
    %c0_0 = arith.constant 0 : index
    %0 = vector.load %arg3[%c0, %c0_0] : memref<8x16xf32, #tpu.memory_space<vmem>>, vector<8x16xf32>
    %c0_1 = arith.constant 0 : index
    %c0_2 = arith.constant 0 : index
    %c0_3 = arith.constant 0 : index
    %1 = vector.load %arg2[%c0_1, %c0_2, %c0_3] : memref<1x16x64xf32, #tpu.memory_space<vmem>>, vector<1x16x64xf32>
    %2 = vector.shape_cast %1 : vector<1x16x64xf32> to vector<16x64xf32>
    %cst = arith.constant dense<0.000000e+00> : vector<8x64xf32>
    %3 = tpu.matmul %0, %2, %cst {dimension_numbers = #tpu.dot_dimension_numbers<[1], [0], [0], [1], [0, 0, 1, 1], [], []>} : vector<8x16xf32>, vector<16x64xf32>, vector<8x64xf32> -> vector<8x64xf32>
    %cst_4 = arith.constant 0.000000e+00 : f32
    %4 = vector.broadcast %cst_4 : f32 to vector<8x64xf32>
    %5 = arith.maximumf %3, %4 : vector<8x64xf32>
    %c0_5 = arith.constant 0 : index
    %c0_6 = arith.constant 0 : index
    %c0_7 = arith.constant 0 : index
    %6 = vector.load %arg4[%c0_5, %c0_6, %c0_7] : memref<1x8x64xf32, #tpu.memory_space<vmem>>, vector<1x8x64xf32>
    %7 = vector.shape_cast %6 : vector<1x8x64xf32> to vector<8x64xf32>
    %8 = vector.shape_cast %5 : vector<8x64xf32> to vector<1x8x64xf32>
    tpu.vector_store %arg4[%c0_5, %c0_6, %c0_7], %8 {strides = array<i32>} : memref<1x8x64xf32, #tpu.memory_space<vmem>>, vector<1x8x64xf32>,
    return
  }
  func.func @transform_0(%arg0: i32, %arg1: i32) -> (i32, i32, i32) {
    %c0_i32 = arith.constant 0 : i32
    %c0_i32_0 = arith.constant 0 : i32
    return %arg0, %c0_i32, %arg1 : i32, i32, i32
  }
  func.func @transform_1(%arg0: i32, %arg1: i32) -> (i32, i32) {
    %c0_i32 = arith.constant 0 : i32
    %c0_i32_0 = arith.constant 0 : i32
    %c0_i32_1 = arith.constant 0 : i32
    return %c0_i32, %c0_i32_0 : i32, i32
  }
  func.func @transform_2(%arg0: i32, %arg1: i32) -> (i32, i32, i32) {
    %c0_i32 = arith.constant 0 : i32
    %c0_i32_0 = arith.constant 0 : i32
    return %arg0, %c0_i32, %arg1 : i32, i32, i32
  }
}

module attributes {stable_mosaic.version = 11 : i64} {
  func.func @_dwconv_kernel(%arg0: i32, %arg1: i32, %arg2: memref<1x9x8x64xf32, #tpu.memory_space<vmem>>, %arg3: memref<9x8x1xf32, #tpu.memory_space<vmem>>, %arg4: memref<1x8x64xf32, #tpu.memory_space<vmem>>) attributes {dimension_semantics = [#tpu.dimension_semantics<parallel>, #tpu.dimension_semantics<parallel>], iteration_bounds = array<i64: 2, 1>, scalar_prefetch = 0 : i64, scratch_operands = 0 : i64, tpu.core_type = #tpu.core_type<tc>, window_params = [{transform_indices = @transform_0, window_bounds = array<i64: 1, 9, 8, 64>}, {pipeline_mode = #tpu.pipeline_mode<synchronous>, transform_indices = @transform_1, window_bounds = array<i64: 9, 8, 1>}, {transform_indices = @transform_2, window_bounds = array<i64: 1, 8, 64>}]} {
    %c0 = arith.constant 0 : index
    %c0_0 = arith.constant 0 : index
    %c0_1 = arith.constant 0 : index
    %0 = vector.load %arg3[%c0, %c0_0, %c0_1] : memref<9x8x1xf32, #tpu.memory_space<vmem>>, vector<1x8x1xf32>
    %1 = vector.shape_cast %0 : vector<1x8x1xf32> to vector<8x1xf32>
    %c0_2 = arith.constant 0 : index
    %c0_3 = arith.constant 0 : index
    %c0_4 = arith.constant 0 : index
    %c0_5 = arith.constant 0 : index
    %2 = vector.load %arg2[%c0_2, %c0_3, %c0_4, %c0_5] : memref<1x9x8x64xf32, #tpu.memory_space<vmem>>, vector<1x1x8x64xf32>
    %3 = vector.shape_cast %2 : vector<1x1x8x64xf32> to vector<8x64xf32>
    %4 = vector.broadcast %1 : vector<8x1xf32> to vector<8x64xf32>
    %5 = arith.mulf %4, %3 : vector<8x64xf32>
    %c1 = arith.constant 1 : index
    %c0_6 = arith.constant 0 : index
    %c0_7 = arith.constant 0 : index
    %6 = vector.load %arg3[%c1, %c0_6, %c0_7] : memref<9x8x1xf32, #tpu.memory_space<vmem>>, vector<1x8x1xf32>
    %7 = vector.shape_cast %6 : vector<1x8x1xf32> to vector<8x1xf32>
    %c0_8 = arith.constant 0 : index
    %c1_9 = arith.constant 1 : index
    %c0_10 = arith.constant 0 : index
    %c0_11 = arith.constant 0 : index
    %8 = vector.load %arg2[%c0_8, %c1_9, %c0_10, %c0_11] : memref<1x9x8x64xf32, #tpu.memory_space<vmem>>, vector<1x1x8x64xf32>
    %9 = vector.shape_cast %8 : vector<1x1x8x64xf32> to vector<8x64xf32>
    %10 = vector.broadcast %7 : vector<8x1xf32> to vector<8x64xf32>
    %11 = arith.mulf %10, %9 : vector<8x64xf32>
    %12 = arith.addf %5, %11 : vector<8x64xf32>
    %c2 = arith.constant 2 : index
    %c0_12 = arith.constant 0 : index
    %c0_13 = arith.constant 0 : index
    %13 = vector.load %arg3[%c2, %c0_12, %c0_13] : memref<9x8x1xf32, #tpu.memory_space<vmem>>, vector<1x8x1xf32>
    %14 = vector.shape_cast %13 : vector<1x8x1xf32> to vector<8x1xf32>
    %c0_14 = arith.constant 0 : index
    %c2_15 = arith.constant 2 : index
    %c0_16 = arith.constant 0 : index
    %c0_17 = arith.constant 0 : index
    %15 = vector.load %arg2[%c0_14, %c2_15, %c0_16, %c0_17] : memref<1x9x8x64xf32, #tpu.memory_space<vmem>>, vector<1x1x8x64xf32>
    %16 = vector.shape_cast %15 : vector<1x1x8x64xf32> to vector<8x64xf32>
    %17 = vector.broadcast %14 : vector<8x1xf32> to vector<8x64xf32>
    %18 = arith.mulf %17, %16 : vector<8x64xf32>
    %19 = arith.addf %12, %18 : vector<8x64xf32>
    %c3 = arith.constant 3 : index
    %c0_18 = arith.constant 0 : index
    %c0_19 = arith.constant 0 : index
    %20 = vector.load %arg3[%c3, %c0_18, %c0_19] : memref<9x8x1xf32, #tpu.memory_space<vmem>>, vector<1x8x1xf32>
    %21 = vector.shape_cast %20 : vector<1x8x1xf32> to vector<8x1xf32>
    %c0_20 = arith.constant 0 : index
    %c3_21 = arith.constant 3 : index
    %c0_22 = arith.constant 0 : index
    %c0_23 = arith.constant 0 : index
    %22 = vector.load %arg2[%c0_20, %c3_21, %c0_22, %c0_23] : memref<1x9x8x64xf32, #tpu.memory_space<vmem>>, vector<1x1x8x64xf32>
    %23 = vector.shape_cast %22 : vector<1x1x8x64xf32> to vector<8x64xf32>
    %24 = vector.broadcast %21 : vector<8x1xf32> to vector<8x64xf32>
    %25 = arith.mulf %24, %23 : vector<8x64xf32>
    %26 = arith.addf %19, %25 : vector<8x64xf32>
    %c4 = arith.constant 4 : index
    %c0_24 = arith.constant 0 : index
    %c0_25 = arith.constant 0 : index
    %27 = vector.load %arg3[%c4, %c0_24, %c0_25] : memref<9x8x1xf32, #tpu.memory_space<vmem>>, vector<1x8x1xf32>
    %28 = vector.shape_cast %27 : vector<1x8x1xf32> to vector<8x1xf32>
    %c0_26 = arith.constant 0 : index
    %c4_27 = arith.constant 4 : index
    %c0_28 = arith.constant 0 : index
    %c0_29 = arith.constant 0 : index
    %29 = vector.load %arg2[%c0_26, %c4_27, %c0_28, %c0_29] : memref<1x9x8x64xf32, #tpu.memory_space<vmem>>, vector<1x1x8x64xf32>
    %30 = vector.shape_cast %29 : vector<1x1x8x64xf32> to vector<8x64xf32>
    %31 = vector.broadcast %28 : vector<8x1xf32> to vector<8x64xf32>
    %32 = arith.mulf %31, %30 : vector<8x64xf32>
    %33 = arith.addf %26, %32 : vector<8x64xf32>
    %c5 = arith.constant 5 : index
    %c0_30 = arith.constant 0 : index
    %c0_31 = arith.constant 0 : index
    %34 = vector.load %arg3[%c5, %c0_30, %c0_31] : memref<9x8x1xf32, #tpu.memory_space<vmem>>, vector<1x8x1xf32>
    %35 = vector.shape_cast %34 : vector<1x8x1xf32> to vector<8x1xf32>
    %c0_32 = arith.constant 0 : index
    %c5_33 = arith.constant 5 : index
    %c0_34 = arith.constant 0 : index
    %c0_35 = arith.constant 0 : index
    %36 = vector.load %arg2[%c0_32, %c5_33, %c0_34, %c0_35] : memref<1x9x8x64xf32, #tpu.memory_space<vmem>>, vector<1x1x8x64xf32>
    %37 = vector.shape_cast %36 : vector<1x1x8x64xf32> to vector<8x64xf32>
    %38 = vector.broadcast %35 : vector<8x1xf32> to vector<8x64xf32>
    %39 = arith.mulf %38, %37 : vector<8x64xf32>
    %40 = arith.addf %33, %39 : vector<8x64xf32>
    %c6 = arith.constant 6 : index
    %c0_36 = arith.constant 0 : index
    %c0_37 = arith.constant 0 : index
    %41 = vector.load %arg3[%c6, %c0_36, %c0_37] : memref<9x8x1xf32, #tpu.memory_space<vmem>>, vector<1x8x1xf32>
    %42 = vector.shape_cast %41 : vector<1x8x1xf32> to vector<8x1xf32>
    %c0_38 = arith.constant 0 : index
    %c6_39 = arith.constant 6 : index
    %c0_40 = arith.constant 0 : index
    %c0_41 = arith.constant 0 : index
    %43 = vector.load %arg2[%c0_38, %c6_39, %c0_40, %c0_41] : memref<1x9x8x64xf32, #tpu.memory_space<vmem>>, vector<1x1x8x64xf32>
    %44 = vector.shape_cast %43 : vector<1x1x8x64xf32> to vector<8x64xf32>
    %45 = vector.broadcast %42 : vector<8x1xf32> to vector<8x64xf32>
    %46 = arith.mulf %45, %44 : vector<8x64xf32>
    %47 = arith.addf %40, %46 : vector<8x64xf32>
    %c7 = arith.constant 7 : index
    %c0_42 = arith.constant 0 : index
    %c0_43 = arith.constant 0 : index
    %48 = vector.load %arg3[%c7, %c0_42, %c0_43] : memref<9x8x1xf32, #tpu.memory_space<vmem>>, vector<1x8x1xf32>
    %49 = vector.shape_cast %48 : vector<1x8x1xf32> to vector<8x1xf32>
    %c0_44 = arith.constant 0 : index
    %c7_45 = arith.constant 7 : index
    %c0_46 = arith.constant 0 : index
    %c0_47 = arith.constant 0 : index
    %50 = vector.load %arg2[%c0_44, %c7_45, %c0_46, %c0_47] : memref<1x9x8x64xf32, #tpu.memory_space<vmem>>, vector<1x1x8x64xf32>
    %51 = vector.shape_cast %50 : vector<1x1x8x64xf32> to vector<8x64xf32>
    %52 = vector.broadcast %49 : vector<8x1xf32> to vector<8x64xf32>
    %53 = arith.mulf %52, %51 : vector<8x64xf32>
    %54 = arith.addf %47, %53 : vector<8x64xf32>
    %c8 = arith.constant 8 : index
    %c0_48 = arith.constant 0 : index
    %c0_49 = arith.constant 0 : index
    %55 = vector.load %arg3[%c8, %c0_48, %c0_49] : memref<9x8x1xf32, #tpu.memory_space<vmem>>, vector<1x8x1xf32>
    %56 = vector.shape_cast %55 : vector<1x8x1xf32> to vector<8x1xf32>
    %c0_50 = arith.constant 0 : index
    %c8_51 = arith.constant 8 : index
    %c0_52 = arith.constant 0 : index
    %c0_53 = arith.constant 0 : index
    %57 = vector.load %arg2[%c0_50, %c8_51, %c0_52, %c0_53] : memref<1x9x8x64xf32, #tpu.memory_space<vmem>>, vector<1x1x8x64xf32>
    %58 = vector.shape_cast %57 : vector<1x1x8x64xf32> to vector<8x64xf32>
    %59 = vector.broadcast %56 : vector<8x1xf32> to vector<8x64xf32>
    %60 = arith.mulf %59, %58 : vector<8x64xf32>
    %61 = arith.addf %54, %60 : vector<8x64xf32>
    %cst = arith.constant 0.000000e+00 : f32
    %62 = vector.broadcast %cst : f32 to vector<8x64xf32>
    %63 = arith.maximumf %61, %62 : vector<8x64xf32>
    %c0_54 = arith.constant 0 : index
    %c0_55 = arith.constant 0 : index
    %c0_56 = arith.constant 0 : index
    %64 = vector.load %arg4[%c0_54, %c0_55, %c0_56] : memref<1x8x64xf32, #tpu.memory_space<vmem>>, vector<1x8x64xf32>
    %65 = vector.shape_cast %64 : vector<1x8x64xf32> to vector<8x64xf32>
    %66 = vector.shape_cast %63 : vector<8x64xf32> to vector<1x8x64xf32>
    tpu.vector_store %arg4[%c0_54, %c0_55, %c0_56], %66 {strides = array<i32>} : memref<1x8x64xf32, #tpu.memory_space<vmem>>, vector<1x8x64xf32>,
    return
  }
  func.func @transform_0(%arg0: i32, %arg1: i32) -> (i32, i32, i32, i32) {
    %c0_i32 = arith.constant 0 : i32
    %c0_i32_0 = arith.constant 0 : i32
    %c0_i32_1 = arith.constant 0 : i32
    return %arg0, %c0_i32, %c0_i32_0, %arg1 : i32, i32, i32, i32
  }
  func.func @transform_1(%arg0: i32, %arg1: i32) -> (i32, i32, i32) {
    %c0_i32 = arith.constant 0 : i32
    %c0_i32_0 = arith.constant 0 : i32
    %c0_i32_1 = arith.constant 0 : i32
    %c0_i32_2 = arith.constant 0 : i32
    return %c0_i32, %c0_i32_0, %c0_i32_1 : i32, i32, i32
  }
  func.func @transform_2(%arg0: i32, %arg1: i32) -> (i32, i32, i32) {
    %c0_i32 = arith.constant 0 : i32
    %c0_i32_0 = arith.constant 0 : i32
    return %arg0, %c0_i32, %arg1 : i32, i32, i32
  }
}

module attributes {stable_mosaic.version = 11 : i64} {
  func.func @_conv_gru_kernel(%arg0: i32, %arg1: i32, %arg2: memref<1x72x64xf32, #tpu.memory_space<vmem>>, %arg3: memref<1x8x64xf32, #tpu.memory_space<vmem>>, %arg4: memref<8x72xf32, #tpu.memory_space<vmem>>, %arg5: memref<8x1xf32, #tpu.memory_space<vmem>>, %arg6: memref<8x8xf32, #tpu.memory_space<vmem>>, %arg7: memref<8x1xf32, #tpu.memory_space<vmem>>, %arg8: memref<1x8x64xf32, #tpu.memory_space<vmem>>) attributes {dimension_semantics = [#tpu.dimension_semantics<parallel>, #tpu.dimension_semantics<parallel>], iteration_bounds = array<i64: 2, 1>, scalar_prefetch = 0 : i64, scratch_operands = 0 : i64, tpu.core_type = #tpu.core_type<tc>, window_params = [{transform_indices = @transform_0, window_bounds = array<i64: 1, 72, 64>}, {transform_indices = @transform_1, window_bounds = array<i64: 1, 8, 64>}, {pipeline_mode = #tpu.pipeline_mode<synchronous>, transform_indices = @transform_2, window_bounds = array<i64: 8, 72>}, {pipeline_mode = #tpu.pipeline_mode<synchronous>, transform_indices = @transform_3, window_bounds = array<i64: 8, 1>}, {pipeline_mode = #tpu.pipeline_mode<synchronous>, transform_indices = @transform_4, window_bounds = array<i64: 8, 8>}, {pipeline_mode = #tpu.pipeline_mode<synchronous>, transform_indices = @transform_5, window_bounds = array<i64: 8, 1>}, {transform_indices = @transform_6, window_bounds = array<i64: 1, 8, 64>}]} {
    %c0 = arith.constant 0 : index
    %c0_0 = arith.constant 0 : index
    %0 = vector.load %arg4[%c0, %c0_0] : memref<8x72xf32, #tpu.memory_space<vmem>>, vector<8x72xf32>
    %c0_1 = arith.constant 0 : index
    %c0_2 = arith.constant 0 : index
    %c0_3 = arith.constant 0 : index
    %1 = vector.load %arg2[%c0_1, %c0_2, %c0_3] : memref<1x72x64xf32, #tpu.memory_space<vmem>>, vector<1x72x64xf32>
    %2 = vector.shape_cast %1 : vector<1x72x64xf32> to vector<72x64xf32>
    %cst = arith.constant dense<0.000000e+00> : vector<8x64xf32>
    %3 = tpu.matmul %0, %2, %cst {dimension_numbers = #tpu.dot_dimension_numbers<[1], [0], [0], [1], [0, 0, 1, 1], [], []>} : vector<8x72xf32>, vector<72x64xf32>, vector<8x64xf32> -> vector<8x64xf32>
    %c0_4 = arith.constant 0 : index
    %c0_5 = arith.constant 0 : index
    %4 = vector.load %arg5[%c0_4, %c0_5] : memref<8x1xf32, #tpu.memory_space<vmem>>, vector<8x1xf32>
    %5 = vector.broadcast %4 : vector<8x1xf32> to vector<8x64xf32>
    %6 = arith.addf %3, %5 : vector<8x64xf32>
    %7 = arith.negf %6 : vector<8x64xf32>
    %8 = math.exp %7 : vector<8x64xf32>
    %cst_6 = arith.constant 1.000000e+00 : f32
    %9 = vector.broadcast %cst_6 : f32 to vector<8x64xf32>
    %10 = arith.addf %9, %8 : vector<8x64xf32>
    %11 = arith.divf %9, %10 : vector<8x64xf32>
    %c0_7 = arith.constant 0 : index
    %c0_8 = arith.constant 0 : index
    %12 = vector.load %arg6[%c0_7, %c0_8] : memref<8x8xf32, #tpu.memory_space<vmem>>, vector<8x8xf32>
    %c0_9 = arith.constant 0 : index
    %c0_10 = arith.constant 0 : index
    %c0_11 = arith.constant 0 : index
    %13 = vector.load %arg3[%c0_9, %c0_10, %c0_11] : memref<1x8x64xf32, #tpu.memory_space<vmem>>, vector<1x8x64xf32>
    %14 = vector.shape_cast %13 : vector<1x8x64xf32> to vector<8x64xf32>
    %cst_12 = arith.constant dense<0.000000e+00> : vector<8x64xf32>
    %15 = tpu.matmul %12, %14, %cst_12 {dimension_numbers = #tpu.dot_dimension_numbers<[1], [0], [0], [1], [0, 0, 1, 1], [], []>} : vector<8x8xf32>, vector<8x64xf32>, vector<8x64xf32> -> vector<8x64xf32>
    %c0_13 = arith.constant 0 : index
    %c0_14 = arith.constant 0 : index
    %16 = vector.load %arg7[%c0_13, %c0_14] : memref<8x1xf32, #tpu.memory_space<vmem>>, vector<8x1xf32>
    %17 = vector.broadcast %16 : vector<8x1xf32> to vector<8x64xf32>
    %18 = arith.addf %15, %17 : vector<8x64xf32>
    %cst_15 = arith.constant 0.000000e+00 : f32
    %19 = vector.broadcast %cst_15 : f32 to vector<8x64xf32>
    %20 = arith.cmpf oge, %18, %19 : vector<8x64xf32>
    %cst_16 = arith.constant 5.000000e-01 : f32
    %21 = vector.broadcast %cst_16 : f32 to vector<8x64xf32>
    %22 = arith.addf %18, %21 : vector<8x64xf32>
    %23 = arith.negf %18 : vector<8x64xf32>
    %24 = math.exp %23 : vector<8x64xf32>
    %cst_17 = arith.constant 1.000000e+00 : f32
    %25 = vector.broadcast %cst_17 : f32 to vector<8x64xf32>
    %26 = arith.addf %25, %24 : vector<8x64xf32>
    %27 = arith.divf %25, %26 : vector<8x64xf32>
    %28 = arith.select %20, %22, %27 : vector<8x64xi1>, vector<8x64xf32>
    %29 = arith.mulf %28, %11 : vector<8x64xf32>
    %c0_18 = arith.constant 0 : index
    %c0_19 = arith.constant 0 : index
    %c0_20 = arith.constant 0 : index
    %30 = vector.load %arg8[%c0_18, %c0_19, %c0_20] : memref<1x8x64xf32, #tpu.memory_space<vmem>>, vector<1x8x64xf32>
    %31 = vector.shape_cast %30 : vector<1x8x64xf32> to vector<8x64xf32>
    %32 = vector.shape_cast %29 : vector<8x64xf32> to vector<1x8x64xf32>
    tpu.vector_store %arg8[%c0_18, %c0_19, %c0_20], %32 {strides = array<i32>} : memref<1x8x64xf32, #tpu.memory_space<vmem>>, vector<1x8x64xf32>,
    return
  }
  func.func @transform_0(%arg0: i32, %arg1: i32) -> (i32, i32, i32) {
    %c0_i32 = arith.constant 0 : i32
    %c0_i32_0 = arith.constant 0 : i32
    return %arg0, %c0_i32, %arg1 : i32, i32, i32
  }
  func.func @transform_1(%arg0: i32, %arg1: i32) -> (i32, i32, i32) {
    %c0_i32 = arith.constant 0 : i32
    %c0_i32_0 = arith.constant 0 : i32
    return %arg0, %c0_i32, %arg1 : i32, i32, i32
  }
  func.func @transform_2(%arg0: i32, %arg1: i32) -> (i32, i32) {
    %c0_i32 = arith.constant 0 : i32
    %c0_i32_0 = arith.constant 0 : i32
    %c0_i32_1 = arith.constant 0 : i32
    return %c0_i32, %c0_i32_0 : i32, i32
  }
  func.func @transform_3(%arg0: i32, %arg1: i32) -> (i32, i32) {
    %c0_i32 = arith.constant 0 : i32
    %c0_i32_0 = arith.constant 0 : i32
    %c0_i32_1 = arith.constant 0 : i32
    return %c0_i32, %c0_i32_0 : i32, i32
  }
  func.func @transform_4(%arg0: i32, %arg1: i32) -> (i32, i32) {
    %c0_i32 = arith.constant 0 : i32
    %c0_i32_0 = arith.constant 0 : i32
    %c0_i32_1 = arith.constant 0 : i32
    return %c0_i32, %c0_i32_0 : i32, i32
  }
  func.func @transform_5(%arg0: i32, %arg1: i32) -> (i32, i32) {
    %c0_i32 = arith.constant 0 : i32
    %c0_i32_0 = arith.constant 0 : i32
    %c0_i32_1 = arith.constant 0 : i32
    return %c0_i32, %c0_i32_0 : i32, i32
  }
  func.func @transform_6(%arg0: i32, %arg1: i32) -> (i32, i32, i32) {
    %c0_i32 = arith.constant 0 : i32
    %c0_i32_0 = arith.constant 0 : i32
    return %arg0, %c0_i32, %arg1 : i32, i32, i32
  }
}

module attributes {stable_mosaic.version = 11 : i64} {
  func.func @_conv_gru_prev_kernel(%arg0: i32, %arg1: i32, %arg2: memref<1x72x64xf32, #tpu.memory_space<vmem>>, %arg3: memref<1x8x64xf32, #tpu.memory_space<vmem>>, %arg4: memref<8x72xf32, #tpu.memory_space<vmem>>, %arg5: memref<8x1xf32, #tpu.memory_space<vmem>>, %arg6: memref<8x8xf32, #tpu.memory_space<vmem>>, %arg7: memref<8x1xf32, #tpu.memory_space<vmem>>, %arg8: memref<1x8x64xf32, #tpu.memory_space<vmem>>, %arg9: memref<1x8x64xf32, #tpu.memory_space<vmem>>) attributes {dimension_semantics = [#tpu.dimension_semantics<parallel>, #tpu.dimension_semantics<parallel>], iteration_bounds = array<i64: 2, 1>, scalar_prefetch = 0 : i64, scratch_operands = 0 : i64, tpu.core_type = #tpu.core_type<tc>, window_params = [{transform_indices = @transform_0, window_bounds = array<i64: 1, 72, 64>}, {transform_indices = @transform_1, window_bounds = array<i64: 1, 8, 64>}, {pipeline_mode = #tpu.pipeline_mode<synchronous>, transform_indices = @transform_2, window_bounds = array<i64: 8, 72>}, {pipeline_mode = #tpu.pipeline_mode<synchronous>, transform_indices = @transform_3, window_bounds = array<i64: 8, 1>}, {pipeline_mode = #tpu.pipeline_mode<synchronous>, transform_indices = @transform_4, window_bounds = array<i64: 8, 8>}, {pipeline_mode = #tpu.pipeline_mode<synchronous>, transform_indices = @transform_5, window_bounds = array<i64: 8, 1>}, {transform_indices = @transform_6, window_bounds = array<i64: 1, 8, 64>}, {transform_indices = @transform_7, window_bounds = array<i64: 1, 8, 64>}]} {
    %c0 = arith.constant 0 : index
    %c0_0 = arith.constant 0 : index
    %0 = vector.load %arg4[%c0, %c0_0] : memref<8x72xf32, #tpu.memory_space<vmem>>, vector<8x72xf32>
    %c0_1 = arith.constant 0 : index
    %c0_2 = arith.constant 0 : index
    %c0_3 = arith.constant 0 : index
    %1 = vector.load %arg2[%c0_1, %c0_2, %c0_3] : memref<1x72x64xf32, #tpu.memory_space<vmem>>, vector<1x72x64xf32>
    %2 = vector.shape_cast %1 : vector<1x72x64xf32> to vector<72x64xf32>
    %cst = arith.constant dense<0.000000e+00> : vector<8x64xf32>
    %3 = tpu.matmul %0, %2, %cst {dimension_numbers = #tpu.dot_dimension_numbers<[1], [0], [0], [1], [0, 0, 1, 1], [], []>} : vector<8x72xf32>, vector<72x64xf32>, vector<8x64xf32> -> vector<8x64xf32>
    %c0_4 = arith.constant 0 : index
    %c0_5 = arith.constant 0 : index
    %4 = vector.load %arg5[%c0_4, %c0_5] : memref<8x1xf32, #tpu.memory_space<vmem>>, vector<8x1xf32>
    %5 = vector.broadcast %4 : vector<8x1xf32> to vector<8x64xf32>
    %6 = arith.addf %3, %5 : vector<8x64xf32>
    %7 = arith.negf %6 : vector<8x64xf32>
    %8 = math.exp %7 : vector<8x64xf32>
    %cst_6 = arith.constant 1.000000e+00 : f32
    %9 = vector.broadcast %cst_6 : f32 to vector<8x64xf32>
    %10 = arith.addf %9, %8 : vector<8x64xf32>
    %11 = arith.divf %9, %10 : vector<8x64xf32>
    %c0_7 = arith.constant 0 : index
    %c0_8 = arith.constant 0 : index
    %12 = vector.load %arg6[%c0_7, %c0_8] : memref<8x8xf32, #tpu.memory_space<vmem>>, vector<8x8xf32>
    %c0_9 = arith.constant 0 : index
    %c0_10 = arith.constant 0 : index
    %c0_11 = arith.constant 0 : index
    %13 = vector.load %arg3[%c0_9, %c0_10, %c0_11] : memref<1x8x64xf32, #tpu.memory_space<vmem>>, vector<1x8x64xf32>
    %14 = vector.shape_cast %13 : vector<1x8x64xf32> to vector<8x64xf32>
    %cst_12 = arith.constant dense<0.000000e+00> : vector<8x64xf32>
    %15 = tpu.matmul %12, %14, %cst_12 {dimension_numbers = #tpu.dot_dimension_numbers<[1], [0], [0], [1], [0, 0, 1, 1], [], []>} : vector<8x8xf32>, vector<8x64xf32>, vector<8x64xf32> -> vector<8x64xf32>
    %c0_13 = arith.constant 0 : index
    %c0_14 = arith.constant 0 : index
    %16 = vector.load %arg7[%c0_13, %c0_14] : memref<8x1xf32, #tpu.memory_space<vmem>>, vector<8x1xf32>
    %17 = vector.broadcast %16 : vector<8x1xf32> to vector<8x64xf32>
    %18 = arith.addf %15, %17 : vector<8x64xf32>
    %cst_15 = arith.constant 0.000000e+00 : f32
    %19 = vector.broadcast %cst_15 : f32 to vector<8x64xf32>
    %20 = arith.cmpf oge, %18, %19 : vector<8x64xf32>
    %cst_16 = arith.constant 5.000000e-01 : f32
    %21 = vector.broadcast %cst_16 : f32 to vector<8x64xf32>
    %22 = arith.addf %18, %21 : vector<8x64xf32>
    %23 = arith.negf %18 : vector<8x64xf32>
    %24 = math.exp %23 : vector<8x64xf32>
    %cst_17 = arith.constant 1.000000e+00 : f32
    %25 = vector.broadcast %cst_17 : f32 to vector<8x64xf32>
    %26 = arith.addf %25, %24 : vector<8x64xf32>
    %27 = arith.divf %25, %26 : vector<8x64xf32>
    %28 = arith.select %20, %22, %27 : vector<8x64xi1>, vector<8x64xf32>
    %c0_18 = arith.constant 0 : index
    %c0_19 = arith.constant 0 : index
    %c0_20 = arith.constant 0 : index
    %29 = vector.load %arg8[%c0_18, %c0_19, %c0_20] : memref<1x8x64xf32, #tpu.memory_space<vmem>>, vector<1x8x64xf32>
    %30 = vector.shape_cast %29 : vector<1x8x64xf32> to vector<8x64xf32>
    %31 = arith.subf %28, %30 : vector<8x64xf32>
    %32 = arith.mulf %11, %31 : vector<8x64xf32>
    %33 = arith.addf %30, %32 : vector<8x64xf32>
    %c0_21 = arith.constant 0 : index
    %c0_22 = arith.constant 0 : index
    %c0_23 = arith.constant 0 : index
    %34 = vector.load %arg9[%c0_21, %c0_22, %c0_23] : memref<1x8x64xf32, #tpu.memory_space<vmem>>, vector<1x8x64xf32>
    %35 = vector.shape_cast %34 : vector<1x8x64xf32> to vector<8x64xf32>
    %36 = vector.shape_cast %33 : vector<8x64xf32> to vector<1x8x64xf32>
    tpu.vector_store %arg9[%c0_21, %c0_22, %c0_23], %36 {strides = array<i32>} : memref<1x8x64xf32, #tpu.memory_space<vmem>>, vector<1x8x64xf32>,
    return
  }
  func.func @transform_0(%arg0: i32, %arg1: i32) -> (i32, i32, i32) {
    %c0_i32 = arith.constant 0 : i32
    %c0_i32_0 = arith.constant 0 : i32
    return %arg0, %c0_i32, %arg1 : i32, i32, i32
  }
  func.func @transform_1(%arg0: i32, %arg1: i32) -> (i32, i32, i32) {
    %c0_i32 = arith.constant 0 : i32
    %c0_i32_0 = arith.constant 0 : i32
    return %arg0, %c0_i32, %arg1 : i32, i32, i32
  }
  func.func @transform_2(%arg0: i32, %arg1: i32) -> (i32, i32) {
    %c0_i32 = arith.constant 0 : i32
    %c0_i32_0 = arith.constant 0 : i32
    %c0_i32_1 = arith.constant 0 : i32
    return %c0_i32, %c0_i32_0 : i32, i32
  }
  func.func @transform_3(%arg0: i32, %arg1: i32) -> (i32, i32) {
    %c0_i32 = arith.constant 0 : i32
    %c0_i32_0 = arith.constant 0 : i32
    %c0_i32_1 = arith.constant 0 : i32
    return %c0_i32, %c0_i32_0 : i32, i32
  }
  func.func @transform_4(%arg0: i32, %arg1: i32) -> (i32, i32) {
    %c0_i32 = arith.constant 0 : i32
    %c0_i32_0 = arith.constant 0 : i32
    %c0_i32_1 = arith.constant 0 : i32
    return %c0_i32, %c0_i32_0 : i32, i32
  }
  func.func @transform_5(%arg0: i32, %arg1: i32) -> (i32, i32) {
    %c0_i32 = arith.constant 0 : i32
    %c0_i32_0 = arith.constant 0 : i32
    %c0_i32_1 = arith.constant 0 : i32
    return %c0_i32, %c0_i32_0 : i32, i32
  }
  func.func @transform_6(%arg0: i32, %arg1: i32) -> (i32, i32, i32) {
    %c0_i32 = arith.constant 0 : i32
    %c0_i32_0 = arith.constant 0 : i32
    return %arg0, %c0_i32, %arg1 : i32, i32, i32
  }
  func.func @transform_7(%arg0: i32, %arg1: i32) -> (i32, i32, i32) {
    %c0_i32 = arith.constant 0 : i32
    %c0_i32_0 = arith.constant 0 : i32
    return %arg0, %c0_i32, %arg1 : i32, i32, i32
  }
}

module attributes {stable_mosaic.version = 11 : i64} {
  func.func @_conv_kernel(%arg0: i32, %arg1: i32, %arg2: memref<1x12x256xf32, #tpu.memory_space<vmem>>, %arg3: memref<8x12xf32, #tpu.memory_space<vmem>>, %arg4: memref<1x8x256xf32, #tpu.memory_space<vmem>>) attributes {dimension_semantics = [#tpu.dimension_semantics<parallel>, #tpu.dimension_semantics<parallel>], iteration_bounds = array<i64: 2, 1>, scalar_prefetch = 0 : i64, scratch_operands = 0 : i64, tpu.core_type = #tpu.core_type<tc>, window_params = [{transform_indices = @transform_0, window_bounds = array<i64: 1, 12, 256>}, {pipeline_mode = #tpu.pipeline_mode<synchronous>, transform_indices = @transform_1, window_bounds = array<i64: 8, 12>}, {transform_indices = @transform_2, window_bounds = array<i64: 1, 8, 256>}]} {
    %c0 = arith.constant 0 : index
    %c0_0 = arith.constant 0 : index
    %0 = vector.load %arg3[%c0, %c0_0] : memref<8x12xf32, #tpu.memory_space<vmem>>, vector<8x12xf32>
    %c0_1 = arith.constant 0 : index
    %c0_2 = arith.constant 0 : index
    %c0_3 = arith.constant 0 : index
    %1 = vector.load %arg2[%c0_1, %c0_2, %c0_3] : memref<1x12x256xf32, #tpu.memory_space<vmem>>, vector<1x12x256xf32>
    %2 = vector.shape_cast %1 : vector<1x12x256xf32> to vector<12x256xf32>
    %cst = arith.constant dense<0.000000e+00> : vector<8x256xf32>
    %3 = tpu.matmul %0, %2, %cst {dimension_numbers = #tpu.dot_dimension_numbers<[1], [0], [0], [1], [0, 0, 1, 1], [], []>} : vector<8x12xf32>, vector<12x256xf32>, vector<8x256xf32> -> vector<8x256xf32>
    %cst_4 = arith.constant 0.000000e+00 : f32
    %4 = vector.broadcast %cst_4 : f32 to vector<8x256xf32>
    %5 = arith.maximumf %3, %4 : vector<8x256xf32>
    %c0_5 = arith.constant 0 : index
    %c0_6 = arith.constant 0 : index
    %c0_7 = arith.constant 0 : index
    %6 = vector.load %arg4[%c0_5, %c0_6, %c0_7] : memref<1x8x256xf32, #tpu.memory_space<vmem>>, vector<1x8x256xf32>
    %7 = vector.shape_cast %6 : vector<1x8x256xf32> to vector<8x256xf32>
    %8 = vector.shape_cast %5 : vector<8x256xf32> to vector<1x8x256xf32>
    tpu.vector_store %arg4[%c0_5, %c0_6, %c0_7], %8 {strides = array<i32>} : memref<1x8x256xf32, #tpu.memory_space<vmem>>, vector<1x8x256xf32>,
    return
  }
  func.func @transform_0(%arg0: i32, %arg1: i32) -> (i32, i32, i32) {
    %c0_i32 = arith.constant 0 : i32
    %c0_i32_0 = arith.constant 0 : i32
    return %arg0, %c0_i32, %arg1 : i32, i32, i32
  }
  func.func @transform_1(%arg0: i32, %arg1: i32) -> (i32, i32) {
    %c0_i32 = arith.constant 0 : i32
    %c0_i32_0 = arith.constant 0 : i32
    %c0_i32_1 = arith.constant 0 : i32
    return %c0_i32, %c0_i32_0 : i32, i32
  }
  func.func @transform_2(%arg0: i32, %arg1: i32) -> (i32, i32, i32) {
    %c0_i32 = arith.constant 0 : i32
    %c0_i32_0 = arith.constant 0 : i32
    return %arg0, %c0_i32, %arg1 : i32, i32, i32
  }
}

module attributes {stable_mosaic.version = 11 : i64} {
  func.func @_dwconv_kernel(%arg0: i32, %arg1: i32, %arg2: memref<1x9x8x256xf32, #tpu.memory_space<vmem>>, %arg3: memref<9x8x1xf32, #tpu.memory_space<vmem>>, %arg4: memref<1x8x256xf32, #tpu.memory_space<vmem>>) attributes {dimension_semantics = [#tpu.dimension_semantics<parallel>, #tpu.dimension_semantics<parallel>], iteration_bounds = array<i64: 2, 1>, scalar_prefetch = 0 : i64, scratch_operands = 0 : i64, tpu.core_type = #tpu.core_type<tc>, window_params = [{transform_indices = @transform_0, window_bounds = array<i64: 1, 9, 8, 256>}, {pipeline_mode = #tpu.pipeline_mode<synchronous>, transform_indices = @transform_1, window_bounds = array<i64: 9, 8, 1>}, {transform_indices = @transform_2, window_bounds = array<i64: 1, 8, 256>}]} {
    %c0 = arith.constant 0 : index
    %c0_0 = arith.constant 0 : index
    %c0_1 = arith.constant 0 : index
    %0 = vector.load %arg3[%c0, %c0_0, %c0_1] : memref<9x8x1xf32, #tpu.memory_space<vmem>>, vector<1x8x1xf32>
    %1 = vector.shape_cast %0 : vector<1x8x1xf32> to vector<8x1xf32>
    %c0_2 = arith.constant 0 : index
    %c0_3 = arith.constant 0 : index
    %c0_4 = arith.constant 0 : index
    %c0_5 = arith.constant 0 : index
    %2 = vector.load %arg2[%c0_2, %c0_3, %c0_4, %c0_5] : memref<1x9x8x256xf32, #tpu.memory_space<vmem>>, vector<1x1x8x256xf32>
    %3 = vector.shape_cast %2 : vector<1x1x8x256xf32> to vector<8x256xf32>
    %4 = vector.broadcast %1 : vector<8x1xf32> to vector<8x256xf32>
    %5 = arith.mulf %4, %3 : vector<8x256xf32>
    %c1 = arith.constant 1 : index
    %c0_6 = arith.constant 0 : index
    %c0_7 = arith.constant 0 : index
    %6 = vector.load %arg3[%c1, %c0_6, %c0_7] : memref<9x8x1xf32, #tpu.memory_space<vmem>>, vector<1x8x1xf32>
    %7 = vector.shape_cast %6 : vector<1x8x1xf32> to vector<8x1xf32>
    %c0_8 = arith.constant 0 : index
    %c1_9 = arith.constant 1 : index
    %c0_10 = arith.constant 0 : index
    %c0_11 = arith.constant 0 : index
    %8 = vector.load %arg2[%c0_8, %c1_9, %c0_10, %c0_11] : memref<1x9x8x256xf32, #tpu.memory_space<vmem>>, vector<1x1x8x256xf32>
    %9 = vector.shape_cast %8 : vector<1x1x8x256xf32> to vector<8x256xf32>
    %10 = vector.broadcast %7 : vector<8x1xf32> to vector<8x256xf32>
    %11 = arith.mulf %10, %9 : vector<8x256xf32>
    %12 = arith.addf %5, %11 : vector<8x256xf32>
    %c2 = arith.constant 2 : index
    %c0_12 = arith.constant 0 : index
    %c0_13 = arith.constant 0 : index
    %13 = vector.load %arg3[%c2, %c0_12, %c0_13] : memref<9x8x1xf32, #tpu.memory_space<vmem>>, vector<1x8x1xf32>
    %14 = vector.shape_cast %13 : vector<1x8x1xf32> to vector<8x1xf32>
    %c0_14 = arith.constant 0 : index
    %c2_15 = arith.constant 2 : index
    %c0_16 = arith.constant 0 : index
    %c0_17 = arith.constant 0 : index
    %15 = vector.load %arg2[%c0_14, %c2_15, %c0_16, %c0_17] : memref<1x9x8x256xf32, #tpu.memory_space<vmem>>, vector<1x1x8x256xf32>
    %16 = vector.shape_cast %15 : vector<1x1x8x256xf32> to vector<8x256xf32>
    %17 = vector.broadcast %14 : vector<8x1xf32> to vector<8x256xf32>
    %18 = arith.mulf %17, %16 : vector<8x256xf32>
    %19 = arith.addf %12, %18 : vector<8x256xf32>
    %c3 = arith.constant 3 : index
    %c0_18 = arith.constant 0 : index
    %c0_19 = arith.constant 0 : index
    %20 = vector.load %arg3[%c3, %c0_18, %c0_19] : memref<9x8x1xf32, #tpu.memory_space<vmem>>, vector<1x8x1xf32>
    %21 = vector.shape_cast %20 : vector<1x8x1xf32> to vector<8x1xf32>
    %c0_20 = arith.constant 0 : index
    %c3_21 = arith.constant 3 : index
    %c0_22 = arith.constant 0 : index
    %c0_23 = arith.constant 0 : index
    %22 = vector.load %arg2[%c0_20, %c3_21, %c0_22, %c0_23] : memref<1x9x8x256xf32, #tpu.memory_space<vmem>>, vector<1x1x8x256xf32>
    %23 = vector.shape_cast %22 : vector<1x1x8x256xf32> to vector<8x256xf32>
    %24 = vector.broadcast %21 : vector<8x1xf32> to vector<8x256xf32>
    %25 = arith.mulf %24, %23 : vector<8x256xf32>
    %26 = arith.addf %19, %25 : vector<8x256xf32>
    %c4 = arith.constant 4 : index
    %c0_24 = arith.constant 0 : index
    %c0_25 = arith.constant 0 : index
    %27 = vector.load %arg3[%c4, %c0_24, %c0_25] : memref<9x8x1xf32, #tpu.memory_space<vmem>>, vector<1x8x1xf32>
    %28 = vector.shape_cast %27 : vector<1x8x1xf32> to vector<8x1xf32>
    %c0_26 = arith.constant 0 : index
    %c4_27 = arith.constant 4 : index
    %c0_28 = arith.constant 0 : index
    %c0_29 = arith.constant 0 : index
    %29 = vector.load %arg2[%c0_26, %c4_27, %c0_28, %c0_29] : memref<1x9x8x256xf32, #tpu.memory_space<vmem>>, vector<1x1x8x256xf32>
    %30 = vector.shape_cast %29 : vector<1x1x8x256xf32> to vector<8x256xf32>
    %31 = vector.broadcast %28 : vector<8x1xf32> to vector<8x256xf32>
    %32 = arith.mulf %31, %30 : vector<8x256xf32>
    %33 = arith.addf %26, %32 : vector<8x256xf32>
    %c5 = arith.constant 5 : index
    %c0_30 = arith.constant 0 : index
    %c0_31 = arith.constant 0 : index
    %34 = vector.load %arg3[%c5, %c0_30, %c0_31] : memref<9x8x1xf32, #tpu.memory_space<vmem>>, vector<1x8x1xf32>
    %35 = vector.shape_cast %34 : vector<1x8x1xf32> to vector<8x1xf32>
    %c0_32 = arith.constant 0 : index
    %c5_33 = arith.constant 5 : index
    %c0_34 = arith.constant 0 : index
    %c0_35 = arith.constant 0 : index
    %36 = vector.load %arg2[%c0_32, %c5_33, %c0_34, %c0_35] : memref<1x9x8x256xf32, #tpu.memory_space<vmem>>, vector<1x1x8x256xf32>
    %37 = vector.shape_cast %36 : vector<1x1x8x256xf32> to vector<8x256xf32>
    %38 = vector.broadcast %35 : vector<8x1xf32> to vector<8x256xf32>
    %39 = arith.mulf %38, %37 : vector<8x256xf32>
    %40 = arith.addf %33, %39 : vector<8x256xf32>
    %c6 = arith.constant 6 : index
    %c0_36 = arith.constant 0 : index
    %c0_37 = arith.constant 0 : index
    %41 = vector.load %arg3[%c6, %c0_36, %c0_37] : memref<9x8x1xf32, #tpu.memory_space<vmem>>, vector<1x8x1xf32>
    %42 = vector.shape_cast %41 : vector<1x8x1xf32> to vector<8x1xf32>
    %c0_38 = arith.constant 0 : index
    %c6_39 = arith.constant 6 : index
    %c0_40 = arith.constant 0 : index
    %c0_41 = arith.constant 0 : index
    %43 = vector.load %arg2[%c0_38, %c6_39, %c0_40, %c0_41] : memref<1x9x8x256xf32, #tpu.memory_space<vmem>>, vector<1x1x8x256xf32>
    %44 = vector.shape_cast %43 : vector<1x1x8x256xf32> to vector<8x256xf32>
    %45 = vector.broadcast %42 : vector<8x1xf32> to vector<8x256xf32>
    %46 = arith.mulf %45, %44 : vector<8x256xf32>
    %47 = arith.addf %40, %46 : vector<8x256xf32>
    %c7 = arith.constant 7 : index
    %c0_42 = arith.constant 0 : index
    %c0_43 = arith.constant 0 : index
    %48 = vector.load %arg3[%c7, %c0_42, %c0_43] : memref<9x8x1xf32, #tpu.memory_space<vmem>>, vector<1x8x1xf32>
    %49 = vector.shape_cast %48 : vector<1x8x1xf32> to vector<8x1xf32>
    %c0_44 = arith.constant 0 : index
    %c7_45 = arith.constant 7 : index
    %c0_46 = arith.constant 0 : index
    %c0_47 = arith.constant 0 : index
    %50 = vector.load %arg2[%c0_44, %c7_45, %c0_46, %c0_47] : memref<1x9x8x256xf32, #tpu.memory_space<vmem>>, vector<1x1x8x256xf32>
    %51 = vector.shape_cast %50 : vector<1x1x8x256xf32> to vector<8x256xf32>
    %52 = vector.broadcast %49 : vector<8x1xf32> to vector<8x256xf32>
    %53 = arith.mulf %52, %51 : vector<8x256xf32>
    %54 = arith.addf %47, %53 : vector<8x256xf32>
    %c8 = arith.constant 8 : index
    %c0_48 = arith.constant 0 : index
    %c0_49 = arith.constant 0 : index
    %55 = vector.load %arg3[%c8, %c0_48, %c0_49] : memref<9x8x1xf32, #tpu.memory_space<vmem>>, vector<1x8x1xf32>
    %56 = vector.shape_cast %55 : vector<1x8x1xf32> to vector<8x1xf32>
    %c0_50 = arith.constant 0 : index
    %c8_51 = arith.constant 8 : index
    %c0_52 = arith.constant 0 : index
    %c0_53 = arith.constant 0 : index
    %57 = vector.load %arg2[%c0_50, %c8_51, %c0_52, %c0_53] : memref<1x9x8x256xf32, #tpu.memory_space<vmem>>, vector<1x1x8x256xf32>
    %58 = vector.shape_cast %57 : vector<1x1x8x256xf32> to vector<8x256xf32>
    %59 = vector.broadcast %56 : vector<8x1xf32> to vector<8x256xf32>
    %60 = arith.mulf %59, %58 : vector<8x256xf32>
    %61 = arith.addf %54, %60 : vector<8x256xf32>
    %cst = arith.constant 0.000000e+00 : f32
    %62 = vector.broadcast %cst : f32 to vector<8x256xf32>
    %63 = arith.maximumf %61, %62 : vector<8x256xf32>
    %c0_54 = arith.constant 0 : index
    %c0_55 = arith.constant 0 : index
    %c0_56 = arith.constant 0 : index
    %64 = vector.load %arg4[%c0_54, %c0_55, %c0_56] : memref<1x8x256xf32, #tpu.memory_space<vmem>>, vector<1x8x256xf32>
    %65 = vector.shape_cast %64 : vector<1x8x256xf32> to vector<8x256xf32>
    %66 = vector.shape_cast %63 : vector<8x256xf32> to vector<1x8x256xf32>
    tpu.vector_store %arg4[%c0_54, %c0_55, %c0_56], %66 {strides = array<i32>} : memref<1x8x256xf32, #tpu.memory_space<vmem>>, vector<1x8x256xf32>,
    return
  }
  func.func @transform_0(%arg0: i32, %arg1: i32) -> (i32, i32, i32, i32) {
    %c0_i32 = arith.constant 0 : i32
    %c0_i32_0 = arith.constant 0 : i32
    %c0_i32_1 = arith.constant 0 : i32
    return %arg0, %c0_i32, %c0_i32_0, %arg1 : i32, i32, i32, i32
  }
  func.func @transform_1(%arg0: i32, %arg1: i32) -> (i32, i32, i32) {
    %c0_i32 = arith.constant 0 : i32
    %c0_i32_0 = arith.constant 0 : i32
    %c0_i32_1 = arith.constant 0 : i32
    %c0_i32_2 = arith.constant 0 : i32
    return %c0_i32, %c0_i32_0, %c0_i32_1 : i32, i32, i32
  }
  func.func @transform_2(%arg0: i32, %arg1: i32) -> (i32, i32, i32) {
    %c0_i32 = arith.constant 0 : i32
    %c0_i32_0 = arith.constant 0 : i32
    return %arg0, %c0_i32, %arg1 : i32, i32, i32
  }
}

module attributes {stable_mosaic.version = 11 : i64} {
  func.func @_conv_gru_kernel(%arg0: i32, %arg1: i32, %arg2: memref<1x72x256xf32, #tpu.memory_space<vmem>>, %arg3: memref<1x8x256xf32, #tpu.memory_space<vmem>>, %arg4: memref<4x72xf32, #tpu.memory_space<vmem>>, %arg5: memref<4x1xf32, #tpu.memory_space<vmem>>, %arg6: memref<4x8xf32, #tpu.memory_space<vmem>>, %arg7: memref<4x1xf32, #tpu.memory_space<vmem>>, %arg8: memref<1x4x256xf32, #tpu.memory_space<vmem>>) attributes {dimension_semantics = [#tpu.dimension_semantics<parallel>, #tpu.dimension_semantics<parallel>], iteration_bounds = array<i64: 2, 1>, scalar_prefetch = 0 : i64, scratch_operands = 0 : i64, tpu.core_type = #tpu.core_type<tc>, window_params = [{transform_indices = @transform_0, window_bounds = array<i64: 1, 72, 256>}, {transform_indices = @transform_1, window_bounds = array<i64: 1, 8, 256>}, {pipeline_mode = #tpu.pipeline_mode<synchronous>, transform_indices = @transform_2, window_bounds = array<i64: 4, 72>}, {pipeline_mode = #tpu.pipeline_mode<synchronous>, transform_indices = @transform_3, window_bounds = array<i64: 4, 1>}, {pipeline_mode = #tpu.pipeline_mode<synchronous>, transform_indices = @transform_4, window_bounds = array<i64: 4, 8>}, {pipeline_mode = #tpu.pipeline_mode<synchronous>, transform_indices = @transform_5, window_bounds = array<i64: 4, 1>}, {transform_indices = @transform_6, window_bounds = array<i64: 1, 4, 256>}]} {
    %c0 = arith.constant 0 : index
    %c0_0 = arith.constant 0 : index
    %0 = vector.load %arg4[%c0, %c0_0] : memref<4x72xf32, #tpu.memory_space<vmem>>, vector<4x72xf32>
    %c0_1 = arith.constant 0 : index
    %c0_2 = arith.constant 0 : index
    %c0_3 = arith.constant 0 : index
    %1 = vector.load %arg2[%c0_1, %c0_2, %c0_3] : memref<1x72x256xf32, #tpu.memory_space<vmem>>, vector<1x72x256xf32>
    %2 = vector.shape_cast %1 : vector<1x72x256xf32> to vector<72x256xf32>
    %cst = arith.constant dense<0.000000e+00> : vector<4x256xf32>
    %3 = tpu.matmul %0, %2, %cst {dimension_numbers = #tpu.dot_dimension_numbers<[1], [0], [0], [1], [0, 0, 1, 1], [], []>} : vector<4x72xf32>, vector<72x256xf32>, vector<4x256xf32> -> vector<4x256xf32>
    %c0_4 = arith.constant 0 : index
    %c0_5 = arith.constant 0 : index
    %4 = vector.load %arg5[%c0_4, %c0_5] : memref<4x1xf32, #tpu.memory_space<vmem>>, vector<4x1xf32>
    %5 = vector.broadcast %4 : vector<4x1xf32> to vector<4x256xf32>
    %6 = arith.addf %3, %5 : vector<4x256xf32>
    %7 = arith.negf %6 : vector<4x256xf32>
    %8 = math.exp %7 : vector<4x256xf32>
    %cst_6 = arith.constant 1.000000e+00 : f32
    %9 = vector.broadcast %cst_6 : f32 to vector<4x256xf32>
    %10 = arith.addf %9, %8 : vector<4x256xf32>
    %11 = arith.divf %9, %10 : vector<4x256xf32>
    %c0_7 = arith.constant 0 : index
    %c0_8 = arith.constant 0 : index
    %12 = vector.load %arg6[%c0_7, %c0_8] : memref<4x8xf32, #tpu.memory_space<vmem>>, vector<4x8xf32>
    %c0_9 = arith.constant 0 : index
    %c0_10 = arith.constant 0 : index
    %c0_11 = arith.constant 0 : index
    %13 = vector.load %arg3[%c0_9, %c0_10, %c0_11] : memref<1x8x256xf32, #tpu.memory_space<vmem>>, vector<1x8x256xf32>
    %14 = vector.shape_cast %13 : vector<1x8x256xf32> to vector<8x256xf32>
    %cst_12 = arith.constant dense<0.000000e+00> : vector<4x256xf32>
    %15 = tpu.matmul %12, %14, %cst_12 {dimension_numbers = #tpu.dot_dimension_numbers<[1], [0], [0], [1], [0, 0, 1, 1], [], []>} : vector<4x8xf32>, vector<8x256xf32>, vector<4x256xf32> -> vector<4x256xf32>
    %c0_13 = arith.constant 0 : index
    %c0_14 = arith.constant 0 : index
    %16 = vector.load %arg7[%c0_13, %c0_14] : memref<4x1xf32, #tpu.memory_space<vmem>>, vector<4x1xf32>
    %17 = vector.broadcast %16 : vector<4x1xf32> to vector<4x256xf32>
    %18 = arith.addf %15, %17 : vector<4x256xf32>
    %cst_15 = arith.constant 0.000000e+00 : f32
    %19 = vector.broadcast %cst_15 : f32 to vector<4x256xf32>
    %20 = arith.cmpf oge, %18, %19 : vector<4x256xf32>
    %cst_16 = arith.constant 5.000000e-01 : f32
    %21 = vector.broadcast %cst_16 : f32 to vector<4x256xf32>
    %22 = arith.addf %18, %21 : vector<4x256xf32>
    %23 = arith.negf %18 : vector<4x256xf32>
    %24 = math.exp %23 : vector<4x256xf32>
    %cst_17 = arith.constant 1.000000e+00 : f32
    %25 = vector.broadcast %cst_17 : f32 to vector<4x256xf32>
    %26 = arith.addf %25, %24 : vector<4x256xf32>
    %27 = arith.divf %25, %26 : vector<4x256xf32>
    %28 = arith.select %20, %22, %27 : vector<4x256xi1>, vector<4x256xf32>
    %29 = arith.mulf %28, %11 : vector<4x256xf32>
    %c0_18 = arith.constant 0 : index
    %c0_19 = arith.constant 0 : index
    %c0_20 = arith.constant 0 : index
    %30 = vector.load %arg8[%c0_18, %c0_19, %c0_20] : memref<1x4x256xf32, #tpu.memory_space<vmem>>, vector<1x4x256xf32>
    %31 = vector.shape_cast %30 : vector<1x4x256xf32> to vector<4x256xf32>
    %32 = vector.shape_cast %29 : vector<4x256xf32> to vector<1x4x256xf32>
    tpu.vector_store %arg8[%c0_18, %c0_19, %c0_20], %32 {strides = array<i32>} : memref<1x4x256xf32, #tpu.memory_space<vmem>>, vector<1x4x256xf32>,
    return
  }
  func.func @transform_0(%arg0: i32, %arg1: i32) -> (i32, i32, i32) {
    %c0_i32 = arith.constant 0 : i32
    %c0_i32_0 = arith.constant 0 : i32
    return %arg0, %c0_i32, %arg1 : i32, i32, i32
  }
  func.func @transform_1(%arg0: i32, %arg1: i32) -> (i32, i32, i32) {
    %c0_i32 = arith.constant 0 : i32
    %c0_i32_0 = arith.constant 0 : i32
    return %arg0, %c0_i32, %arg1 : i32, i32, i32
  }
  func.func @transform_2(%arg0: i32, %arg1: i32) -> (i32, i32) {
    %c0_i32 = arith.constant 0 : i32
    %c0_i32_0 = arith.constant 0 : i32
    %c0_i32_1 = arith.constant 0 : i32
    return %c0_i32, %c0_i32_0 : i32, i32
  }
  func.func @transform_3(%arg0: i32, %arg1: i32) -> (i32, i32) {
    %c0_i32 = arith.constant 0 : i32
    %c0_i32_0 = arith.constant 0 : i32
    %c0_i32_1 = arith.constant 0 : i32
    return %c0_i32, %c0_i32_0 : i32, i32
  }
  func.func @transform_4(%arg0: i32, %arg1: i32) -> (i32, i32) {
    %c0_i32 = arith.constant 0 : i32
    %c0_i32_0 = arith.constant 0 : i32
    %c0_i32_1 = arith.constant 0 : i32
    return %c0_i32, %c0_i32_0 : i32, i32
  }
  func.func @transform_5(%arg0: i32, %arg1: i32) -> (i32, i32) {
    %c0_i32 = arith.constant 0 : i32
    %c0_i32_0 = arith.constant 0 : i32
    %c0_i32_1 = arith.constant 0 : i32
    return %c0_i32, %c0_i32_0 : i32, i32
  }
  func.func @transform_6(%arg0: i32, %arg1: i32) -> (i32, i32, i32) {
    %c0_i32 = arith.constant 0 : i32
    %c0_i32_0 = arith.constant 0 : i32
    return %arg0, %c0_i32, %arg1 : i32, i32, i32
  }
}

module attributes {stable_mosaic.version = 11 : i64} {
  func.func @_conv_gru_prev_kernel(%arg0: i32, %arg1: i32, %arg2: memref<1x72x256xf32, #tpu.memory_space<vmem>>, %arg3: memref<1x8x256xf32, #tpu.memory_space<vmem>>, %arg4: memref<4x72xf32, #tpu.memory_space<vmem>>, %arg5: memref<4x1xf32, #tpu.memory_space<vmem>>, %arg6: memref<4x8xf32, #tpu.memory_space<vmem>>, %arg7: memref<4x1xf32, #tpu.memory_space<vmem>>, %arg8: memref<1x4x256xf32, #tpu.memory_space<vmem>>, %arg9: memref<1x4x256xf32, #tpu.memory_space<vmem>>) attributes {dimension_semantics = [#tpu.dimension_semantics<parallel>, #tpu.dimension_semantics<parallel>], iteration_bounds = array<i64: 2, 1>, scalar_prefetch = 0 : i64, scratch_operands = 0 : i64, tpu.core_type = #tpu.core_type<tc>, window_params = [{transform_indices = @transform_0, window_bounds = array<i64: 1, 72, 256>}, {transform_indices = @transform_1, window_bounds = array<i64: 1, 8, 256>}, {pipeline_mode = #tpu.pipeline_mode<synchronous>, transform_indices = @transform_2, window_bounds = array<i64: 4, 72>}, {pipeline_mode = #tpu.pipeline_mode<synchronous>, transform_indices = @transform_3, window_bounds = array<i64: 4, 1>}, {pipeline_mode = #tpu.pipeline_mode<synchronous>, transform_indices = @transform_4, window_bounds = array<i64: 4, 8>}, {pipeline_mode = #tpu.pipeline_mode<synchronous>, transform_indices = @transform_5, window_bounds = array<i64: 4, 1>}, {transform_indices = @transform_6, window_bounds = array<i64: 1, 4, 256>}, {transform_indices = @transform_7, window_bounds = array<i64: 1, 4, 256>}]} {
    %c0 = arith.constant 0 : index
    %c0_0 = arith.constant 0 : index
    %0 = vector.load %arg4[%c0, %c0_0] : memref<4x72xf32, #tpu.memory_space<vmem>>, vector<4x72xf32>
    %c0_1 = arith.constant 0 : index
    %c0_2 = arith.constant 0 : index
    %c0_3 = arith.constant 0 : index
    %1 = vector.load %arg2[%c0_1, %c0_2, %c0_3] : memref<1x72x256xf32, #tpu.memory_space<vmem>>, vector<1x72x256xf32>
    %2 = vector.shape_cast %1 : vector<1x72x256xf32> to vector<72x256xf32>
    %cst = arith.constant dense<0.000000e+00> : vector<4x256xf32>
    %3 = tpu.matmul %0, %2, %cst {dimension_numbers = #tpu.dot_dimension_numbers<[1], [0], [0], [1], [0, 0, 1, 1], [], []>} : vector<4x72xf32>, vector<72x256xf32>, vector<4x256xf32> -> vector<4x256xf32>
    %c0_4 = arith.constant 0 : index
    %c0_5 = arith.constant 0 : index
    %4 = vector.load %arg5[%c0_4, %c0_5] : memref<4x1xf32, #tpu.memory_space<vmem>>, vector<4x1xf32>
    %5 = vector.broadcast %4 : vector<4x1xf32> to vector<4x256xf32>
    %6 = arith.addf %3, %5 : vector<4x256xf32>
    %7 = arith.negf %6 : vector<4x256xf32>
    %8 = math.exp %7 : vector<4x256xf32>
    %cst_6 = arith.constant 1.000000e+00 : f32
    %9 = vector.broadcast %cst_6 : f32 to vector<4x256xf32>
    %10 = arith.addf %9, %8 : vector<4x256xf32>
    %11 = arith.divf %9, %10 : vector<4x256xf32>
    %c0_7 = arith.constant 0 : index
    %c0_8 = arith.constant 0 : index
    %12 = vector.load %arg6[%c0_7, %c0_8] : memref<4x8xf32, #tpu.memory_space<vmem>>, vector<4x8xf32>
    %c0_9 = arith.constant 0 : index
    %c0_10 = arith.constant 0 : index
    %c0_11 = arith.constant 0 : index
    %13 = vector.load %arg3[%c0_9, %c0_10, %c0_11] : memref<1x8x256xf32, #tpu.memory_space<vmem>>, vector<1x8x256xf32>
    %14 = vector.shape_cast %13 : vector<1x8x256xf32> to vector<8x256xf32>
    %cst_12 = arith.constant dense<0.000000e+00> : vector<4x256xf32>
    %15 = tpu.matmul %12, %14, %cst_12 {dimension_numbers = #tpu.dot_dimension_numbers<[1], [0], [0], [1], [0, 0, 1, 1], [], []>} : vector<4x8xf32>, vector<8x256xf32>, vector<4x256xf32> -> vector<4x256xf32>
    %c0_13 = arith.constant 0 : index
    %c0_14 = arith.constant 0 : index
    %16 = vector.load %arg7[%c0_13, %c0_14] : memref<4x1xf32, #tpu.memory_space<vmem>>, vector<4x1xf32>
    %17 = vector.broadcast %16 : vector<4x1xf32> to vector<4x256xf32>
    %18 = arith.addf %15, %17 : vector<4x256xf32>
    %cst_15 = arith.constant 0.000000e+00 : f32
    %19 = vector.broadcast %cst_15 : f32 to vector<4x256xf32>
    %20 = arith.cmpf oge, %18, %19 : vector<4x256xf32>
    %cst_16 = arith.constant 5.000000e-01 : f32
    %21 = vector.broadcast %cst_16 : f32 to vector<4x256xf32>
    %22 = arith.addf %18, %21 : vector<4x256xf32>
    %23 = arith.negf %18 : vector<4x256xf32>
    %24 = math.exp %23 : vector<4x256xf32>
    %cst_17 = arith.constant 1.000000e+00 : f32
    %25 = vector.broadcast %cst_17 : f32 to vector<4x256xf32>
    %26 = arith.addf %25, %24 : vector<4x256xf32>
    %27 = arith.divf %25, %26 : vector<4x256xf32>
    %28 = arith.select %20, %22, %27 : vector<4x256xi1>, vector<4x256xf32>
    %c0_18 = arith.constant 0 : index
    %c0_19 = arith.constant 0 : index
    %c0_20 = arith.constant 0 : index
    %29 = vector.load %arg8[%c0_18, %c0_19, %c0_20] : memref<1x4x256xf32, #tpu.memory_space<vmem>>, vector<1x4x256xf32>
    %30 = vector.shape_cast %29 : vector<1x4x256xf32> to vector<4x256xf32>
    %31 = arith.subf %28, %30 : vector<4x256xf32>
    %32 = arith.mulf %11, %31 : vector<4x256xf32>
    %33 = arith.addf %30, %32 : vector<4x256xf32>
    %c0_21 = arith.constant 0 : index
    %c0_22 = arith.constant 0 : index
    %c0_23 = arith.constant 0 : index
    %34 = vector.load %arg9[%c0_21, %c0_22, %c0_23] : memref<1x4x256xf32, #tpu.memory_space<vmem>>, vector<1x4x256xf32>
    %35 = vector.shape_cast %34 : vector<1x4x256xf32> to vector<4x256xf32>
    %36 = vector.shape_cast %33 : vector<4x256xf32> to vector<1x4x256xf32>
    tpu.vector_store %arg9[%c0_21, %c0_22, %c0_23], %36 {strides = array<i32>} : memref<1x4x256xf32, #tpu.memory_space<vmem>>, vector<1x4x256xf32>,
    return
  }
  func.func @transform_0(%arg0: i32, %arg1: i32) -> (i32, i32, i32) {
    %c0_i32 = arith.constant 0 : i32
    %c0_i32_0 = arith.constant 0 : i32
    return %arg0, %c0_i32, %arg1 : i32, i32, i32
  }
  func.func @transform_1(%arg0: i32, %arg1: i32) -> (i32, i32, i32) {
    %c0_i32 = arith.constant 0 : i32
    %c0_i32_0 = arith.constant 0 : i32
    return %arg0, %c0_i32, %arg1 : i32, i32, i32
  }
  func.func @transform_2(%arg0: i32, %arg1: i32) -> (i32, i32) {
    %c0_i32 = arith.constant 0 : i32
    %c0_i32_0 = arith.constant 0 : i32
    %c0_i32_1 = arith.constant 0 : i32
    return %c0_i32, %c0_i32_0 : i32, i32
  }
  func.func @transform_3(%arg0: i32, %arg1: i32) -> (i32, i32) {
    %c0_i32 = arith.constant 0 : i32
    %c0_i32_0 = arith.constant 0 : i32
    %c0_i32_1 = arith.constant 0 : i32
    return %c0_i32, %c0_i32_0 : i32, i32
  }
  func.func @transform_4(%arg0: i32, %arg1: i32) -> (i32, i32) {
    %c0_i32 = arith.constant 0 : i32
    %c0_i32_0 = arith.constant 0 : i32
    %c0_i32_1 = arith.constant 0 : i32
    return %c0_i32, %c0_i32_0 : i32, i32
  }
  func.func @transform_5(%arg0: i32, %arg1: i32) -> (i32, i32) {
    %c0_i32 = arith.constant 0 : i32
    %c0_i32_0 = arith.constant 0 : i32
    %c0_i32_1 = arith.constant 0 : i32
    return %c0_i32, %c0_i32_0 : i32, i32
  }
  func.func @transform_6(%arg0: i32, %arg1: i32) -> (i32, i32, i32) {
    %c0_i32 = arith.constant 0 : i32
    %c0_i32_0 = arith.constant 0 : i32
    return %arg0, %c0_i32, %arg1 : i32, i32, i32
  }
  func.func @transform_7(%arg0: i32, %arg1: i32) -> (i32, i32, i32) {
    %c0_i32 = arith.constant 0 : i32
    %c0_i32_0 = arith.constant 0 : i32
    return %arg0, %c0_i32, %arg1 : i32, i32, i32
  }
}

module attributes {stable_mosaic.version = 11 : i64} {
  func.func @_conf_fuse_kernel(%arg0: i32, %arg1: i32, %arg2: memref<1x2x4x256xf32, #tpu.memory_space<vmem>>, %arg3: memref<1x2x36x256xf32, #tpu.memory_space<vmem>>, %arg4: memref<4x36xf32, #tpu.memory_space<vmem>>, %arg5: memref<4x1xf32, #tpu.memory_space<vmem>>, %arg6: memref<1x4x256xf32, #tpu.memory_space<vmem>>) attributes {dimension_semantics = [#tpu.dimension_semantics<parallel>, #tpu.dimension_semantics<parallel>], iteration_bounds = array<i64: 2, 1>, scalar_prefetch = 0 : i64, scratch_operands = 0 : i64, tpu.core_type = #tpu.core_type<tc>, window_params = [{transform_indices = @transform_0, window_bounds = array<i64: 1, 2, 4, 256>}, {transform_indices = @transform_1, window_bounds = array<i64: 1, 2, 36, 256>}, {pipeline_mode = #tpu.pipeline_mode<synchronous>, transform_indices = @transform_2, window_bounds = array<i64: 4, 36>}, {pipeline_mode = #tpu.pipeline_mode<synchronous>, transform_indices = @transform_3, window_bounds = array<i64: 4, 1>}, {transform_indices = @transform_4, window_bounds = array<i64: 1, 4, 256>}]} {
    %c0 = arith.constant 0 : index
    %c0_0 = arith.constant 0 : index
    %0 = vector.load %arg4[%c0, %c0_0] : memref<4x36xf32, #tpu.memory_space<vmem>>, vector<4x36xf32>
    %c0_1 = arith.constant 0 : index
    %c0_2 = arith.constant 0 : index
    %c0_3 = arith.constant 0 : index
    %c0_4 = arith.constant 0 : index
    %1 = vector.load %arg3[%c0_1, %c0_2, %c0_3, %c0_4] : memref<1x2x36x256xf32, #tpu.memory_space<vmem>>, vector<1x1x36x256xf32>
    %2 = vector.shape_cast %1 : vector<1x1x36x256xf32> to vector<36x256xf32>
    %cst = arith.constant dense<0.000000e+00> : vector<4x256xf32>
    %3 = tpu.matmul %0, %2, %cst {dimension_numbers = #tpu.dot_dimension_numbers<[1], [0], [0], [1], [0, 0, 1, 1], [], []>} : vector<4x36xf32>, vector<36x256xf32>, vector<4x256xf32> -> vector<4x256xf32>
    %c0_5 = arith.constant 0 : index
    %c0_6 = arith.constant 0 : index
    %4 = vector.load %arg5[%c0_5, %c0_6] : memref<4x1xf32, #tpu.memory_space<vmem>>, vector<4x1xf32>
    %5 = vector.broadcast %4 : vector<4x1xf32> to vector<4x256xf32>
    %6 = arith.addf %3, %5 : vector<4x256xf32>
    %c0_7 = arith.constant 0 : index
    %c0_8 = arith.constant 0 : index
    %7 = vector.load %arg4[%c0_7, %c0_8] : memref<4x36xf32, #tpu.memory_space<vmem>>, vector<4x36xf32>
    %c0_9 = arith.constant 0 : index
    %c1 = arith.constant 1 : index
    %c0_10 = arith.constant 0 : index
    %c0_11 = arith.constant 0 : index
    %8 = vector.load %arg3[%c0_9, %c1, %c0_10, %c0_11] : memref<1x2x36x256xf32, #tpu.memory_space<vmem>>, vector<1x1x36x256xf32>
    %9 = vector.shape_cast %8 : vector<1x1x36x256xf32> to vector<36x256xf32>
    %cst_12 = arith.constant dense<0.000000e+00> : vector<4x256xf32>
    %10 = tpu.matmul %7, %9, %cst_12 {dimension_numbers = #tpu.dot_dimension_numbers<[1], [0], [0], [1], [0, 0, 1, 1], [], []>} : vector<4x36xf32>, vector<36x256xf32>, vector<4x256xf32> -> vector<4x256xf32>
    %c0_13 = arith.constant 0 : index
    %c0_14 = arith.constant 0 : index
    %11 = vector.load %arg5[%c0_13, %c0_14] : memref<4x1xf32, #tpu.memory_space<vmem>>, vector<4x1xf32>
    %12 = vector.broadcast %11 : vector<4x1xf32> to vector<4x256xf32>
    %13 = arith.addf %10, %12 : vector<4x256xf32>
    %14 = arith.maximumf %6, %13 : vector<4x256xf32>
    %15 = arith.subf %6, %14 : vector<4x256xf32>
    %16 = math.exp %15 : vector<4x256xf32>
    %17 = arith.subf %13, %14 : vector<4x256xf32>
    %18 = math.exp %17 : vector<4x256xf32>
    %19 = arith.addf %16, %18 : vector<4x256xf32>
    %c0_15 = arith.constant 0 : index
    %c0_16 = arith.constant 0 : index
    %c0_17 = arith.constant 0 : index
    %c0_18 = arith.constant 0 : index
    %20 = vector.load %arg2[%c0_15, %c0_16, %c0_17, %c0_18] : memref<1x2x4x256xf32, #tpu.memory_space<vmem>>, vector<1x1x4x256xf32>
    %21 = vector.shape_cast %20 : vector<1x1x4x256xf32> to vector<4x256xf32>
    %22 = arith.mulf %21, %16 : vector<4x256xf32>
    %c0_19 = arith.constant 0 : index
    %c1_20 = arith.constant 1 : index
    %c0_21 = arith.constant 0 : index
    %c0_22 = arith.constant 0 : index
    %23 = vector.load %arg2[%c0_19, %c1_20, %c0_21, %c0_22] : memref<1x2x4x256xf32, #tpu.memory_space<vmem>>, vector<1x1x4x256xf32>
    %24 = vector.shape_cast %23 : vector<1x1x4x256xf32> to vector<4x256xf32>
    %25 = arith.mulf %24, %18 : vector<4x256xf32>
    %26 = arith.addf %22, %25 : vector<4x256xf32>
    %27 = arith.divf %26, %19 : vector<4x256xf32>
    %c0_23 = arith.constant 0 : index
    %c0_24 = arith.constant 0 : index
    %c0_25 = arith.constant 0 : index
    %28 = vector.load %arg6[%c0_23, %c0_24, %c0_25] : memref<1x4x256xf32, #tpu.memory_space<vmem>>, vector<1x4x256xf32>
    %29 = vector.shape_cast %28 : vector<1x4x256xf32> to vector<4x256xf32>
    %30 = vector.shape_cast %27 : vector<4x256xf32> to vector<1x4x256xf32>
    tpu.vector_store %arg6[%c0_23, %c0_24, %c0_25], %30 {strides = array<i32>} : memref<1x4x256xf32, #tpu.memory_space<vmem>>, vector<1x4x256xf32>,
    return
  }
  func.func @transform_0(%arg0: i32, %arg1: i32) -> (i32, i32, i32, i32) {
    %c0_i32 = arith.constant 0 : i32
    %c0_i32_0 = arith.constant 0 : i32
    %c0_i32_1 = arith.constant 0 : i32
    return %arg0, %c0_i32, %c0_i32_0, %arg1 : i32, i32, i32, i32
  }
  func.func @transform_1(%arg0: i32, %arg1: i32) -> (i32, i32, i32, i32) {
    %c0_i32 = arith.constant 0 : i32
    %c0_i32_0 = arith.constant 0 : i32
    %c0_i32_1 = arith.constant 0 : i32
    return %arg0, %c0_i32, %c0_i32_0, %arg1 : i32, i32, i32, i32
  }
  func.func @transform_2(%arg0: i32, %arg1: i32) -> (i32, i32) {
    %c0_i32 = arith.constant 0 : i32
    %c0_i32_0 = arith.constant 0 : i32
    %c0_i32_1 = arith.constant 0 : i32
    return %c0_i32, %c0_i32_0 : i32, i32
  }
  func.func @transform_3(%arg0: i32, %arg1: i32) -> (i32, i32) {
    %c0_i32 = arith.constant 0 : i32
    %c0_i32_0 = arith.constant 0 : i32
    %c0_i32_1 = arith.constant 0 : i32
    return %c0_i32, %c0_i32_0 : i32, i32
  }
  func.func @transform_4(%arg0: i32, %arg1: i32) -> (i32, i32, i32) {
    %c0_i32 = arith.constant 0 : i32
    %c0_i32_0 = arith.constant 0 : i32
    return %arg0, %c0_i32, %arg1 : i32, i32, i32
  }
}

</mosaic_0001>

<llo_original>
// kernel: squeeze.10
$region0: #{squeeze.10}
  %s0 = inlined_call_operand.vmem [shape: f32[2,1,4,16,16], index: 0, kind: input, shape index: {}]
  %s1 = inlined_call_operand.vmem [shape: f32[2,4,256], index: 1, kind: output, shape index: {}]
  $region1: #{squeeze.10} parent=0
    #allocation0 [shape = 'u8[16384]{0}', space=vmem, size = 0x4000, scoped, tag = 'scoped mem for output reshape']
    %v2 = vld [vmem:[%s0] ss:$8 sm:$0xf]
    %v3 = vld [vmem:[%s0] ss:$8 sm:$0xf0]
    %vm4 = vcmask 1047556
    %v5 = vsel %vm4, %v3, %v2
    %vm6 = vcmask 130048
    %7 = vst.msk [vmem:[#allocation0] ss:$8 sm:$0x3] %vm6, %v5
    %s8 = scalar_lea.vmem [#allocation0], 4294967281
    %9 = vst.msk [vmem:[%s8] ss:$8 sm:$0xc] %vm6, %v5
    %s10 = scalar_lea.vmem [#allocation0], 4294967266
    %11 = vst.msk [vmem:[%s10] ss:$8 sm:$0x30] %vm6, %v5
    %s12 = scalar_lea.vmem [#allocation0], 4294967251
    %13 = vst.msk [vmem:[%s12] ss:$8 sm:$0xc0] %vm6, %v5
    %s14 = scalar_lea.vmem %s0, 64
    %v15 = vld [vmem:[%s14] ss:$8 sm:$0xf]
    %s16 = scalar_lea.vmem %s0, 64
    %v17 = vld [vmem:[%s16] ss:$8 sm:$0xf0]
    %vm18 = vcmask 1047556
    %v19 = vsel %vm18, %v17, %v15
    %vm20 = vcmask 130048
    %s21 = scalar_lea.vmem [#allocation0], 16
    %22 = vst.msk [vmem:[%s21] ss:$8 sm:$0x3] %vm20, %v19
    %s23 = scalar_lea.vmem [#allocation0], 1
    %24 = vst.msk [vmem:[%s23] ss:$8 sm:$0xc] %vm20, %v19
    %s25 = scalar_lea.vmem [#allocation0], 4294967282
    %26 = vst.msk [vmem:[%s25] ss:$8 sm:$0x30] %vm20, %v19
    %s27 = scalar_lea.vmem [#allocation0], 4294967267
    %28 = vst.msk [vmem:[%s27] ss:$8 sm:$0xc0] %vm20, %v19
    %s29 = scalar_lea.vmem %s0, 7
    %s30 = smov 3
    %v31 = vld [vmem:[%s29] ss:$16 sm:%s30]
    %s32 = scalar_lea.vmem %s0, 7
    %s33 = smov 12
    %v34 = vld [vmem:[%s32] ss:$16 sm:%s33]
    %vm35 = vcmask 1043458
    %v36 = vsel %vm35, %v34, %v31
    %s37 = scalar_lea.vmem %s0, 4294967247
    %s38 = smov 48
    %v39 = vld [vmem:[%s37] ss:$16 sm:%s38]
    %vm40 = vcmask 1045508
    %v41 = vsel %vm40, %v39, %v36
    %s42 = scalar_lea.vmem %s0, 4294967247
    %s43 = smov 192
    %v44 = vld [vmem:[%s42] ss:$16 sm:%s43]
    %vm45 = vcmask 1047558
    %v46 = vsel %vm45, %v44, %v41
    %47 = vrot.lane.b32.xlu0 %v46, 112
    %v48 = vpop.permute.xlu0 %47
    %vm49 = vcmask 1048448
    %50 = vst.msk [vmem:[#allocation0] sm:$0xf] %vm49, %v48
    %s51 = scalar_lea.vmem [#allocation0], 4
    %52 = vst.msk [vmem:[%s51] sm:$0xf0] %vm49, %v48
    %s53 = scalar_lea.vmem %s0, 71
    %s54 = smov 3
    %v55 = vld [vmem:[%s53] ss:$16 sm:%s54]
    %s56 = scalar_lea.vmem %s0, 71
    %s57 = smov 12
    %v58 = vld [vmem:[%s56] ss:$16 sm:%s57]
    %vm59 = vcmask 1043458
    %v60 = vsel %vm59, %v58, %v55
    %s61 = scalar_lea.vmem %s0, 15
    %s62 = smov 48
    %v63 = vld [vmem:[%s61] ss:$16 sm:%s62]
    %vm64 = vcmask 1045508
    %v65 = vsel %vm64, %v63, %v60
    %s66 = scalar_lea.vmem %s0, 15
    %s67 = smov 192
    %v68 = vld [vmem:[%s66] ss:$16 sm:%s67]
    %vm69 = vcmask 1047558
    %v70 = vsel %vm69, %v68, %v65
    %71 = vrot.lane.b32.xlu0 %v70, 112
    %v72 = vpop.permute.xlu0 %71
    %vm73 = vcmask 1048448
    %s74 = scalar_lea.vmem [#allocation0], 16
    %75 = vst.msk [vmem:[%s74] sm:$0xf] %vm73, %v72
    %s76 = scalar_lea.vmem [#allocation0], 20
    %77 = vst.msk [vmem:[%s76] sm:$0xf0] %vm73, %v72
    %s78 = scalar_lea.vmem %s0, 6
    %s79 = smov 3
    %v80 = vld [vmem:[%s78] ss:$16 sm:%s79]
    %s81 = scalar_lea.vmem %s0, 6
    %s82 = smov 12
    %v83 = vld [vmem:[%s81] ss:$16 sm:%s82]
    %vm84 = vcmask 1043458
    %v85 = vsel %vm84, %v83, %v80
    %s86 = scalar_lea.vmem %s0, 4294967246
    %s87 = smov 48
    %v88 = vld [vmem:[%s86] ss:$16 sm:%s87]
    %vm89 = vcmask 1045508
    %v90 = vsel %vm89, %v88, %v85
    %s91 = scalar_lea.vmem %s0, 4294967246
    %s92 = smov 192
    %v93 = vld [vmem:[%s91] ss:$16 sm:%s92]
    %vm94 = vcmask 1047558
    %v95 = vsel %vm94, %v93, %v90
    %96 = vrot.lane.b32.xlu0 %v95, 96
    %v97 = vpop.permute.xlu0 %96
    %vm98 = vcmask 917248
    %99 = vst.msk [vmem:[#allocation0] sm:$0xf] %vm98, %v97
    %s100 = scalar_lea.vmem [#allocation0], 4
    %101 = vst.msk [vmem:[%s100] sm:$0xf0] %vm98, %v97
    %s102 = scalar_lea.vmem %s0, 70
    %s103 = smov 3
    %v104 = vld [vmem:[%s102] ss:$16 sm:%s103]
    %s105 = scalar_lea.vmem %s0, 70
    %s106 = smov 12
    %v107 = vld [vmem:[%s105] ss:$16 sm:%s106]
    %vm108 = vcmask 1043458
    %v109 = vsel %vm108, %v107, %v104
    %s110 = scalar_lea.vmem %s0, 14
    %s111 = smov 48
    %v112 = vld [vmem:[%s110] ss:$16 sm:%s111]
    %vm113 = vcmask 1045508
    %v114 = vsel %vm113, %v112, %v109
    %s115 = scalar_lea.vmem %s0, 14
    %s116 = smov 192
    %v117 = vld [vmem:[%s115] ss:$16 sm:%s116]
    %vm118 = vcmask 1047558
    %v119 = vsel %vm118, %v117, %v114
    %120 = vrot.lane.b32.xlu0 %v119, 96
    %v121 = vpop.permute.xlu0 %120
    %vm122 = vcmask 917248
    %s123 = scalar_lea.vmem [#allocation0], 16
    %124 = vst.msk [vmem:[%s123] sm:$0xf] %vm122, %v121
    %s125 = scalar_lea.vmem [#allocation0], 20
    %126 = vst.msk [vmem:[%s125] sm:$0xf0] %vm122, %v121
    %s127 = scalar_lea.vmem %s0, 5
    %s128 = smov 3
    %v129 = vld [vmem:[%s127] ss:$16 sm:%s128]
    %s130 = scalar_lea.vmem %s0, 5
    %s131 = smov 12
    %v132 = vld [vmem:[%s130] ss:$16 sm:%s131]
    %vm133 = vcmask 1043458
    %v134 = vsel %vm133, %v132, %v129
    %s135 = scalar_lea.vmem %s0, 4294967245
    %s136 = smov 48
    %v137 = vld [vmem:[%s135] ss:$16 sm:%s136]
    %vm138 = vcmask 1045508
    %v139 = vsel %vm138, %v137, %v134
    %s140 = scalar_lea.vmem %s0, 4294967245
    %s141 = smov 192
    %v142 = vld [vmem:[%s140] ss:$16 sm:%s141]
    %vm143 = vcmask 1047558
    %v144 = vsel %vm143, %v142, %v139
    %145 = vrot.lane.b32.xlu0 %v144, 80
    %v146 = vpop.permute.xlu0 %145
    %vm147 = vcmask 786048
    %148 = vst.msk [vmem:[#allocation0] sm:$0xf] %vm147, %v146
    %s149 = scalar_lea.vmem [#allocation0], 4
    %150 = vst.msk [vmem:[%s149] sm:$0xf0] %vm147, %v146
    %s151 = scalar_lea.vmem %s0, 69
    %s152 = smov 3
    %v153 = vld [vmem:[%s151] ss:$16 sm:%s152]
    %s154 = scalar_lea.vmem %s0, 69
    %s155 = smov 12
    %v156 = vld [vmem:[%s154] ss:$16 sm:%s155]
    %vm157 = vcmask 1043458
    %v158 = vsel %vm157, %v156, %v153
    %s159 = scalar_lea.vmem %s0, 13
    %s160 = smov 48
    %v161 = vld [vmem:[%s159] ss:$16 sm:%s160]
    %vm162 = vcmask 1045508
    %v163 = vsel %vm162, %v161, %v158
    %s164 = scalar_lea.vmem %s0, 13
    %s165 = smov 192
    %v166 = vld [vmem:[%s164] ss:$16 sm:%s165]
    %vm167 = vcmask 1047558
    %v168 = vsel %vm167, %v166, %v163
    %169 = vrot.lane.b32.xlu0 %v168, 80
    %v170 = vpop.permute.xlu0 %169
    %vm171 = vcmask 786048
    %s172 = scalar_lea.vmem [#allocation0], 16
    %173 = vst.msk [vmem:[%s172] sm:$0xf] %vm171, %v170
    %s174 = scalar_lea.vmem [#allocation0], 20
    %175 = vst.msk [vmem:[%s174] sm:$0xf0] %vm171, %v170
    %s176 = scalar_lea.vmem %s0, 4
    %s177 = smov 3
    %v178 = vld [vmem:[%s176] ss:$16 sm:%s177]
    %s179 = scalar_lea.vmem %s0, 4
    %s180 = smov 12
    %v181 = vld [vmem:[%s179] ss:$16 sm:%s180]
    %vm182 = vcmask 1043458
    %v183 = vsel %vm182, %v181, %v178
    %s184 = scalar_lea.vmem %s0, 4294967244
    %s185 = smov 48
    %v186 = vld [vmem:[%s184] ss:$16 sm:%s185]
    %vm187 = vcmask 1045508
    %v188 = vsel %vm187, %v186, %v183
    %s189 = scalar_lea.vmem %s0, 4294967244
    %s190 = smov 192
    %v191 = vld [vmem:[%s189] ss:$16 sm:%s190]
    %vm192 = vcmask 1047558
    %v193 = vsel %vm192, %v191, %v188
    %194 = vrot.lane.b32.xlu0 %v193, 64
    %v195 = vpop.permute.xlu0 %194
    %vm196 = vcmask 654848
    %197 = vst.msk [vmem:[#allocation0] sm:$0xf] %vm196, %v195
    %s198 = scalar_lea.vmem [#allocation0], 4
    %199 = vst.msk [vmem:[%s198] sm:$0xf0] %vm196, %v195
    %s200 = scalar_lea.vmem %s0, 68
    %s201 = smov 3
    %v202 = vld [vmem:[%s200] ss:$16 sm:%s201]
    %s203 = scalar_lea.vmem %s0, 68
    %s204 = smov 12
    %v205 = vld [vmem:[%s203] ss:$16 sm:%s204]
    %vm206 = vcmask 1043458
    %v207 = vsel %vm206, %v205, %v202
    %s208 = scalar_lea.vmem %s0, 12
    %s209 = smov 48
    %v210 = vld [vmem:[%s208] ss:$16 sm:%s209]
    %vm211 = vcmask 1045508
    %v212 = vsel %vm211, %v210, %v207
    %s213 = scalar_lea.vmem %s0, 12
    %s214 = smov 192
    %v215 = vld [vmem:[%s213] ss:$16 sm:%s214]
    %vm216 = vcmask 1047558
    %v217 = vsel %vm216, %v215, %v212
    %218 = vrot.lane.b32.xlu0 %v217, 64
    %v219 = vpop.permute.xlu0 %218
    %vm220 = vcmask 654848
    %s221 = scalar_lea.vmem [#allocation0], 16
    %222 = vst.msk [vmem:[%s221] sm:$0xf] %vm220, %v219
    %s223 = scalar_lea.vmem [#allocation0], 20
    %224 = vst.msk [vmem:[%s223] sm:$0xf0] %vm220, %v219
    %s225 = scalar_lea.vmem %s0, 3
    %s226 = smov 3
    %v227 = vld [vmem:[%s225] ss:$16 sm:%s226]
    %s228 = scalar_lea.vmem %s0, 3
    %s229 = smov 12
    %v230 = vld [vmem:[%s228] ss:$16 sm:%s229]
    %vm231 = vcmask 1043458
    %v232 = vsel %vm231, %v230, %v227
    %s233 = scalar_lea.vmem %s0, 4294967243
    %s234 = smov 48
    %v235 = vld [vmem:[%s233] ss:$16 sm:%s234]
    %vm236 = vcmask 1045508
    %v237 = vsel %vm236, %v235, %v232
    %s238 = scalar_lea.vmem %s0, 4294967243
    %s239 = smov 192
    %v240 = vld [vmem:[%s238] ss:$16 sm:%s239]
    %vm241 = vcmask 1047558
    %v242 = vsel %vm241, %v240, %v237
    %243 = vrot.lane.b32.xlu0 %v242, 48
    %v244 = vpop.permute.xlu0 %243
    %vm245 = vcmask 523648
    %246 = vst.msk [vmem:[#allocation0] sm:$0xf] %vm245, %v244
    %s247 = scalar_lea.vmem [#allocation0], 4
    %248 = vst.msk [vmem:[%s247] sm:$0xf0] %vm245, %v244
    %s249 = scalar_lea.vmem %s0, 67
    %s250 = smov 3
    %v251 = vld [vmem:[%s249] ss:$16 sm:%s250]
    %s252 = scalar_lea.vmem %s0, 67
    %s253 = smov 12
    %v254 = vld [vmem:[%s252] ss:$16 sm:%s253]
    %vm255 = vcmask 1043458
    %v256 = vsel %vm255, %v254, %v251
    %s257 = scalar_lea.vmem %s0, 11
    %s258 = smov 48
    %v259 = vld [vmem:[%s257] ss:$16 sm:%s258]
    %vm260 = vcmask 1045508
    %v261 = vsel %vm260, %v259, %v256
    %s262 = scalar_lea.vmem %s0, 11
    %s263 = smov 192
    %v264 = vld [vmem:[%s262] ss:$16 sm:%s263]
    %vm265 = vcmask 1047558
    %v266 = vsel %vm265, %v264, %v261
    %267 = vrot.lane.b32.xlu0 %v266, 48
    %v268 = vpop.permute.xlu0 %267
    %vm269 = vcmask 523648
    %s270 = scalar_lea.vmem [#allocation0], 16
    %271 = vst.msk [vmem:[%s270] sm:$0xf] %vm269, %v268
    %s272 = scalar_lea.vmem [#allocation0], 20
    %273 = vst.msk [vmem:[%s272] sm:$0xf0] %vm269, %v268
    %s274 = scalar_lea.vmem %s0, 2
    %s275 = smov 3
    %v276 = vld [vmem:[%s274] ss:$16 sm:%s275]
    %s277 = scalar_lea.vmem %s0, 2
    %s278 = smov 12
    %v279 = vld [vmem:[%s277] ss:$16 sm:%s278]
    %vm280 = vcmask 1043458
    %v281 = vsel %vm280, %v279, %v276
    %s282 = scalar_lea.vmem %s0, 4294967242
    %s283 = smov 48
    %v284 = vld [vmem:[%s282] ss:$16 sm:%s283]
    %vm285 = vcmask 1045508
    %v286 = vsel %vm285, %v284, %v281
    %s287 = scalar_lea.vmem %s0, 4294967242
    %s288 = smov 192
    %v289 = vld [vmem:[%s287] ss:$16 sm:%s288]
    %vm290 = vcmask 1047558
    %v291 = vsel %vm290, %v289, %v286
    %292 = vrot.lane.b32.xlu0 %v291, 32
    %v293 = vpop.permute.xlu0 %292
    %vm294 = vcmask 392448
    %295 = vst.msk [vmem:[#allocation0] sm:$0xf] %vm294, %v293
    %s296 = scalar_lea.vmem [#allocation0], 4
    %297 = vst.msk [vmem:[%s296] sm:$0xf0] %vm294, %v293
    %s298 = scalar_lea.vmem %s0, 66
    %s299 = smov 3
    %v300 = vld [vmem:[%s298] ss:$16 sm:%s299]
    %s301 = scalar_lea.vmem %s0, 66
    %s302 = smov 12
    %v303 = vld [vmem:[%s301] ss:$16 sm:%s302]
    %vm304 = vcmask 1043458
    %v305 = vsel %vm304, %v303, %v300
    %s306 = scalar_lea.vmem %s0, 10
    %s307 = smov 48
    %v308 = vld [vmem:[%s306] ss:$16 sm:%s307]
    %vm309 = vcmask 1045508
    %v310 = vsel %vm309, %v308, %v305
    %s311 = scalar_lea.vmem %s0, 10
    %s312 = smov 192
    %v313 = vld [vmem:[%s311] ss:$16 sm:%s312]
    %vm314 = vcmask 1047558
    %v315 = vsel %vm314, %v313, %v310
    %316 = vrot.lane.b32.xlu0 %v315, 32
    %v317 = vpop.permute.xlu0 %316
    %vm318 = vcmask 392448
    %s319 = scalar_lea.vmem [#allocation0], 16
    %320 = vst.msk [vmem:[%s319] sm:$0xf] %vm318, %v317
    %s321 = scalar_lea.vmem [#allocation0], 20
    %322 = vst.msk [vmem:[%s321] sm:$0xf0] %vm318, %v317
    %s323 = scalar_lea.vmem %s0, 1
    %s324 = smov 3
    %v325 = vld [vmem:[%s323] ss:$16 sm:%s324]
    %s326 = scalar_lea.vmem %s0, 1
    %s327 = smov 12
    %v328 = vld [vmem:[%s326] ss:$16 sm:%s327]
    %vm329 = vcmask 1043458
    %v330 = vsel %vm329, %v328, %v325
    %s331 = scalar_lea.vmem %s0, 4294967241
    %s332 = smov 48
    %v333 = vld [vmem:[%s331] ss:$16 sm:%s332]
    %vm334 = vcmask 1045508
    %v335 = vsel %vm334, %v333, %v330
    %s336 = scalar_lea.vmem %s0, 4294967241
    %s337 = smov 192
    %v338 = vld [vmem:[%s336] ss:$16 sm:%s337]
    %vm339 = vcmask 1047558
    %v340 = vsel %vm339, %v338, %v335
    %341 = vrot.lane.b32.xlu0 %v340, 16
    %v342 = vpop.permute.xlu0 %341
    %vm343 = vcmask 261248
    %344 = vst.msk [vmem:[#allocation0] sm:$0xf] %vm343, %v342
    %s345 = scalar_lea.vmem [#allocation0], 4
    %346 = vst.msk [vmem:[%s345] sm:$0xf0] %vm343, %v342
    %s347 = scalar_lea.vmem %s0, 65
    %s348 = smov 3
    %v349 = vld [vmem:[%s347] ss:$16 sm:%s348]
    %s350 = scalar_lea.vmem %s0, 65
    %s351 = smov 12
    %v352 = vld [vmem:[%s350] ss:$16 sm:%s351]
    %vm353 = vcmask 1043458
    %v354 = vsel %vm353, %v352, %v349
    %s355 = scalar_lea.vmem %s0, 9
    %s356 = smov 48
    %v357 = vld [vmem:[%s355] ss:$16 sm:%s356]
    %vm358 = vcmask 1045508
    %v359 = vsel %vm358, %v357, %v354
    %s360 = scalar_lea.vmem %s0, 9
    %s361 = smov 192
    %v362 = vld [vmem:[%s360] ss:$16 sm:%s361]
    %vm363 = vcmask 1047558
    %v364 = vsel %vm363, %v362, %v359
    %365 = vrot.lane.b32.xlu0 %v364, 16
    %v366 = vpop.permute.xlu0 %365
    %vm367 = vcmask 261248
    %s368 = scalar_lea.vmem [#allocation0], 16
    %369 = vst.msk [vmem:[%s368] sm:$0xf] %vm367, %v366
    %s370 = scalar_lea.vmem [#allocation0], 20
    %371 = vst.msk [vmem:[%s370] sm:$0xf0] %vm367, %v366
    %s373 = sshllo.u32 0, 4
    %v375 = vld [vmem:[#allocation0] sm:%s373]
    %s376 = sshllo.u32 0, 4
    %377 = vst [vmem:[%s1] sm:%s376] %v375
    %s378 = scalar_lea.vmem [#allocation0], 8
    %v379 = vld [vmem:[%s378] sm:%s373]
    %s380 = sshllo.u32 0, 4
    %s381 = scalar_lea.vmem %s1, 4
    %382 = vst [vmem:[%s381] sm:%s380] %v379
    %s383 = scalar_lea.vmem [#allocation0], 16
    %v384 = vld [vmem:[%s383] sm:%s373]
    %s385 = sshllo.u32 0, 4
    %s386 = smul.addr 4, 2
    %s387 = scalar_lea.vmem %s1, %s386
    %388 = vst [vmem:[%s387] sm:%s385] %v384
    %s389 = scalar_lea.vmem [#allocation0], 24
    %v390 = vld [vmem:[%s389] sm:%s373]
    %s391 = sshllo.u32 0, 4
    %s392 = smul.addr 4, 3
    %s393 = scalar_lea.vmem %s1, %s392
    %394 = vst [vmem:[%s393] sm:%s391] %v390

// kernel: gruunet_forward.27
$region0: #{gruunet_forward.27}
  #allocation0 [shape = 'u32[]', space=smem, size = 0x4, offset = 0x4, fixed_abs, tag = 'smem constant byte address 0x4 - core index']
  #allocation1 [shape = 'u32[144,128]{1,0:T(1,128)}', space=vmem, size = 0x12000, scoped, tag = 'internal scratch']
  %s0 = inlined_call_operand.vmem [shape: f32[2,4,256], index: 0, kind: input, shape index: {}]
  %s1 = inlined_call_operand.vmem [shape: f32[2,1,256], index: 1, kind: input, shape index: {}]
  %s2 = inlined_call_operand.vmem [shape: f32[4,1], index: 2, kind: input, shape index: {}]
  %s3 = inlined_call_operand.vmem [shape: f32[4,1], index: 3, kind: input, shape index: {}]
  %s4 = inlined_call_operand.vmem [shape: f32[2,4,256], index: 4, kind: output, shape index: {}]
  %s5 = sld [smem:[#allocation0]]
  $region49: #{gruunet_forward.27} parent=0
    _
  %s7 = ssub.s32 1, %s5
  %s8 = scalar_select 0, %s7, %s5
  loop: start=0, step=1, limit=4
  $region2: #{gruunet_forward.27} parent=0 // loop_pre_header
    _
  $region3: #{gruunet_forward.27} parent=0 // loop_header
    %s10 = sphi 0, %s14
    %p11 = scmp.ge.s32.totalorder %s10, 4
    %s17 = sphi 0, %s29
    %s18 = sphi 0, %s25
    %s19 = sphi 0, %s17
    %s20 = sphi 0, %s18
    %s21 = sphi 0, %s19
    %s22 = sphi 0, %s20
    %s34 = sphi 0, %s36
    %s37 = sphi 0, %s34
    %s38 = sphi 0, %s37
    %s54 = sphi 0, %s38
    %s62 = sphi 0, %s64
    %s65 = sphi 0, %s62
    %s66 = sphi 0, %s65
    %s82 = sphi 0, %s66
    %s86 = sphi 0, %s86
    %s88 = sphi 0, %s86
    %s89 = sphi 0, %s88
    %s103 = sphi 0, %s89
    %s107 = sphi 0, %s107
    %s109 = sphi 0, %s107
    %s110 = sphi 0, %s109
    %s124 = sphi 0, %s110
    %s132 = sphi 0, %s134
    %s135 = sphi 0, %s132
    %s136 = sphi 0, %s135
    %s152 = sphi 0, %s136
  $region4: #{gruunet_forward.27} parent=0 // loop_header_branch
    %13 = sbr.rel (%p11) target = $region8
  $region5: #{gruunet_forward.27} parent=0 // loop_body
    %s15 = ssub.s32 %s10, 1
    %s16 = ssub.s32 %s10, 2
    %s23 = sadd.s32 1, %s18
    %p24 = scmp.ge.s32.totalorder %s23, 1
    %s25 = scalar_select %p24, 0, %s23
    %s26 = sadd.s32 1, %s17
    %s27 = scalar_select %p24, %s26, %s17
    %p28 = scmp.ge.s32.totalorder %s27, 2
    %s29 = scalar_select %p28, 0, %s27
    %s30 = ssub.s32 %s17, %s29
    %s31 = ssub.s32 %s18, %s25
    %s32 = sor.u32 %s30, %s31
    %p33 = scmp.eq.s32.totalorder %s32, 0
    %s35 = sadd.s32 %s34, 1
    %s36 = scalar_select %p33, %s34, %s35
    %p39 = pneg %p33
    %p40 = scmp.eq.s32.totalorder %s10, 1
    %p41 = por %p39, %p40
    %p42 = scmp.ne.s32.totalorder %s34, %s37
    %p43 = scmp.eq.s32.totalorder %s10, 0
    %p44 = por %p42, %p43
    %p45 = scmp.ne.s32.totalorder %s34, %s37
    %p46 = scmp.eq.s32.totalorder %s15, 1
    %p47 = por %p45, %p46
    %p48 = scmp.ne.s32.totalorder %s37, %s38
    %p49 = scmp.eq.s32.totalorder %s15, 0
    %p50 = por %p48, %p49
    %p51 = scmp.ne.s32.totalorder %s37, %s38
    %p52 = scmp.eq.s32.totalorder %s16, 1
    %p53 = por %p51, %p52
    %p55 = scmp.ne.s32.totalorder %s38, %s54
    %p56 = scmp.eq.s32.totalorder %s16, 0
    %p57 = por %p55, %p56
    %s58 = ssub.s32 %s17, %s29
    %s59 = ssub.s32 %s18, %s25
    %s60 = sor.u32 %s58, %s59
    %p61 = scmp.eq.s32.totalorder %s60, 0
    %s63 = sadd.s32 %s62, 1
    %s64 = scalar_select %p61, %s62, %s63
    %p67 = pneg %p61
    %p68 = scmp.eq.s32.totalorder %s10, 1
    %p69 = por %p67, %p68
    %p70 = scmp.ne.s32.totalorder %s62, %s65
    %p71 = scmp.eq.s32.totalorder %s10, 0
    %p72 = por %p70, %p71
    %p73 = scmp.ne.s32.totalorder %s62, %s65
    %p74 = scmp.eq.s32.totalorder %s15, 1
    %p75 = por %p73, %p74
    %p76 = scmp.ne.s32.totalorder %s65, %s66
    %p77 = scmp.eq.s32.totalorder %s15, 0
    %p78 = por %p76, %p77
    %p79 = scmp.ne.s32.totalorder %s65, %s66
    %p80 = scmp.eq.s32.totalorder %s16, 1
    %p81 = por %p79, %p80
    %p83 = scmp.ne.s32.totalorder %s66, %s82
    %p84 = scmp.eq.s32.totalorder %s16, 0
    %p85 = por %p83, %p84
    %s87 = sadd.s32 %s86, 1
    %p90 = scmp.eq.s32.totalorder %s10, 1
    %p91 = scmp.ne.s32.totalorder %s86, %s88
    %p92 = scmp.eq.s32.totalorder %s10, 0
    %p93 = por %p91, %p92
    %p94 = scmp.ne.s32.totalorder %s86, %s88
    %p95 = scmp.eq.s32.totalorder %s15, 1
    %p96 = por %p94, %p95
    %p97 = scmp.ne.s32.totalorder %s88, %s89
    %p98 = scmp.eq.s32.totalorder %s15, 0
    %p99 = por %p97, %p98
    %p100 = scmp.ne.s32.totalorder %s88, %s89
    %p101 = scmp.eq.s32.totalorder %s16, 1
    %p102 = por %p100, %p101
    %p104 = scmp.ne.s32.totalorder %s89, %s103
    %p105 = scmp.eq.s32.totalorder %s16, 0
    %p106 = por %p104, %p105
    %s108 = sadd.s32 %s107, 1
    %p111 = scmp.eq.s32.totalorder %s10, 1
    %p112 = scmp.ne.s32.totalorder %s107, %s109
    %p113 = scmp.eq.s32.totalorder %s10, 0
    %p114 = por %p112, %p113
    %p115 = scmp.ne.s32.totalorder %s107, %s109
    %p116 = scmp.eq.s32.totalorder %s15, 1
    %p117 = por %p115, %p116
    %p118 = scmp.ne.s32.totalorder %s109, %s110
    %p119 = scmp.eq.s32.totalorder %s15, 0
    %p120 = por %p118, %p119
    %p121 = scmp.ne.s32.totalorder %s109, %s110
    %p122 = scmp.eq.s32.totalorder %s16, 1
    %p123 = por %p121, %p122
    %p125 = scmp.ne.s32.totalorder %s110, %s124
    %p126 = scmp.eq.s32.totalorder %s16, 0
    %p127 = por %p125, %p126
    %s128 = ssub.s32 %s17, %s29
    %s129 = ssub.s32 %s18, %s25
    %s130 = sor.u32 %s128, %s129
    %p131 = scmp.eq.s32.totalorder %s130, 0
    %s133 = sadd.s32 %s132, 1
    %s134 = scalar_select %p131, %s132, %s133
    %p137 = pneg %p131
    %p138 = scmp.eq.s32.totalorder %s10, 1
    %p139 = por %p137, %p138
    %p140 = scmp.ne.s32.totalorder %s132, %s135
    %p141 = scmp.eq.s32.totalorder %s10, 0
    %p142 = por %p140, %p141
    %p143 = scmp.ne.s32.totalorder %s132, %s135
    %p144 = scmp.eq.s32.totalorder %s15, 1
    %p145 = por %p143, %p144
    %p146 = scmp.ne.s32.totalorder %s135, %s136
    %p147 = scmp.eq.s32.totalorder %s15, 0
    %p148 = por %p146, %p147
    %p149 = scmp.ne.s32.totalorder %s135, %s136
    %p150 = scmp.eq.s32.totalorder %s16, 1
    %p151 = por %p149, %p150
    %p153 = scmp.ne.s32.totalorder %s136, %s152
    %p154 = scmp.eq.s32.totalorder %s16, 0
    %p155 = por %p153, %p154
    %p156 = scmp.le.s32.totalorder 1, %s10
    %p157 = scmp.lt.s32.totalorder %s10, 3
    %p158 = pnand %p156, %p157
    %p159 = pneg %p158
    // Predicated region
    $region9: #{gruunet_forward.27} parent=5 // pred_check
      _
    $region10: #{gruunet_forward.27} parent=5 // pred_check_branch
      %161 = sbr.rel (%p158) target = $region12
    $region11: #{gruunet_forward.27} parent=5 // pred_region
      %s162 = ssub.s32 %s10, 1
      // Predicated region
      $region13: #{gruunet_forward.27} parent=11 // pred_check
        %p163 = pneg %p99
      $region14: #{gruunet_forward.27} parent=11 // pred_check_branch
        %165 = sbr.rel (%p163) target = $region16
      $region15: #{gruunet_forward.27} parent=11 // pred_region
        _
      $region16: #{gruunet_forward.27} parent=11 // pred_fallthru
        _
      // Predicated region
      $region17: #{gruunet_forward.27} parent=11 // pred_check
        %p166 = pneg %p120
      $region18: #{gruunet_forward.27} parent=11 // pred_check_branch
        %168 = sbr.rel (%p166) target = $region20
      $region19: #{gruunet_forward.27} parent=11 // pred_region
        _
      $region20: #{gruunet_forward.27} parent=11 // pred_fallthru
        _
    $region12: #{gruunet_forward.27} parent=5 // pred_fallthru
      _
    %p169 = scmp.lt.s32.totalorder %s10, 2
    // Predicated region
    $region21: #{gruunet_forward.27} parent=5 // pred_check
      %p170 = pneg %p169
    $region22: #{gruunet_forward.27} parent=5 // pred_check_branch
      %172 = sbr.rel (%p170) target = $region24
    $region23: #{gruunet_forward.27} parent=5 // pred_region
      // Predicated region
      $region25: #{gruunet_forward.27} parent=23 // pred_check
        %p173 = pneg %p44
      $region26: #{gruunet_forward.27} parent=23 // pred_check_branch
        %175 = sbr.rel (%p173) target = $region28
      $region27: #{gruunet_forward.27} parent=23 // pred_region
        %s176 = smul.u32 2, %s18
        %p177 = scmp.lt.s32.totalorder %s17, 1
        %s178 = scalar_select %p177, %s17, 1
        %p179 = scmp.lt.s32.totalorder %s176, 1
        %s180 = scalar_select %p179, %s176, 1
        %s181 = smul.addr %s178, 2
        %s182 = sadd.s32 %s180, %s181
        %s183 = smul.addr %s182, 4
        %s184 = scalar_lea.vmem %s0, %s183
        %s185 = smul.u32 2, %s18
      $region28: #{gruunet_forward.27} parent=23 // pred_fallthru
        _
      // Predicated region
      $region29: #{gruunet_forward.27} parent=23 // pred_check
        %p186 = pneg %p72
      $region30: #{gruunet_forward.27} parent=23 // pred_check_branch
        %188 = sbr.rel (%p186) target = $region32
      $region31: #{gruunet_forward.27} parent=23 // pred_region
        %s189 = smul.u32 2, %s18
        %p190 = scmp.lt.s32.totalorder %s17, 1
        %s191 = scalar_select %p190, %s17, 1
        %p192 = scmp.lt.s32.totalorder %s189, 1
        %s193 = scalar_select %p192, %s189, 1
        %s194 = smul.addr %s191, 2
        %s195 = sadd.s32 %s193, %s194
        %s196 = scalar_lea.vmem %s1, %s195
        %s197 = smul.u32 2, %s18
      $region32: #{gruunet_forward.27} parent=23 // pred_fallthru
        _
    $region24: #{gruunet_forward.27} parent=5 // pred_fallthru
      _
    %p198 = scmp.le.s32.totalorder 1, %s10
    %p199 = scmp.lt.s32.totalorder %s10, 3
    %p200 = pnand %p198, %p199
    %p201 = pneg %p200
    // Predicated region
    $region33: #{gruunet_forward.27} parent=5 // pred_check
      _
    $region34: #{gruunet_forward.27} parent=5 // pred_check_branch
      %203 = sbr.rel (%p200) target = $region36
    $region35: #{gruunet_forward.27} parent=5 // pred_region
      %s204 = ssub.s32 %s10, 1
      %s205 = smul.u32 2, %s20
      %p206 = scmp.lt.s32.totalorder %s19, 1
      %s207 = scalar_select %p206, %s19, 1
      %p208 = scmp.lt.s32.totalorder %s205, 1
      %s209 = scalar_select %p208, %s205, 1
      %s210 = smul.addr %s207, 2
      %s211 = sadd.s32 %s209, %s210
      %s212 = smul.addr %s211, 4
      %s213 = scalar_lea.vmem %s0, %s212
      %p214 = pneg %p50
      %p215 = pneg %p47
      %s216 = smul.u32 2, %s20
      %p217 = scmp.lt.s32.totalorder %s19, 1
      %s218 = scalar_select %p217, %s19, 1
      %p219 = scmp.lt.s32.totalorder %s216, 1
      %s220 = scalar_select %p219, %s216, 1
      %s221 = smul.addr %s218, 2
      %s222 = sadd.s32 %s220, %s221
      %s223 = scalar_lea.vmem %s1, %s222
      %p224 = pneg %p78
      %p225 = pneg %p75
      %p226 = pneg %p99
      %p227 = pneg %p96
      %p228 = pneg %p120
      %p229 = pneg %p117
      %p230 = pneg %p148
      %p231 = pneg %p145
      %s232 = smul.u32 2, %s20
      %p233 = scmp.lt.s32.totalorder %s19, 1
      %s234 = scalar_select %p233, %s19, 1
      %p235 = scmp.lt.s32.totalorder %s232, 1
      %s236 = scalar_select %p235, %s232, 1
      %s237 = smul.addr %s234, 2
      %s238 = sadd.s32 %s236, %s237
      %s239 = smul.addr %s238, 4
      %s240 = scalar_lea.vmem %s4, %s239
      %s241 = smul.u32 2, %s20
      %p242 = scmp.lt.s32.totalorder %s19, 1
      %s243 = scalar_select %p242, %s19, 1
      %p244 = scmp.lt.s32.totalorder %s241, 1
      %s245 = scalar_select %p244, %s241, 1
      %s246 = smul.addr %s243, 2
      %s247 = sadd.s32 %s245, %s246
      %s248 = smul.addr %s247, 4
      %s249 = scalar_lea.vmem %s0, %s248
      %s250 = smul.u32 2, %s20
      %s251 = smul.u32 2, %s20
      %p252 = scmp.lt.s32.totalorder %s19, 1
      %s253 = scalar_select %p252, %s19, 1
      %p254 = scmp.lt.s32.totalorder %s251, 1
      %s255 = scalar_select %p254, %s251, 1
      %s256 = smul.addr %s253, 2
      %s257 = sadd.s32 %s255, %s256
      %s258 = scalar_lea.vmem %s1, %s257
      %s259 = smul.u32 2, %s20
      %s260 = smul.u32 2, %s20
      %p261 = scmp.lt.s32.totalorder %s19, 1
      %s262 = scalar_select %p261, %s19, 1
      %p263 = scmp.lt.s32.totalorder %s260, 1
      %s264 = scalar_select %p263, %s260, 1
      %s265 = smul.addr %s262, 2
      %s266 = sadd.s32 %s264, %s265
      %s267 = smul.addr %s266, 4
      %s268 = scalar_lea.vmem %s4, %s267
      %s269 = smul.u32 2, %s20
      %v270 = vld [vmem:[%s2] sm:$0xf]
      %v271 = vld [vmem:[%s258] sm:$0x3]
      %273 = vset.pattern.permute.xlu0 0
      %274 = vperm.xlu0 %273, %v270
      %v275 = vpop.permute.xlu0 %274
      %v278 = vlaneseq
      %v279 = vshrl.u32 %v278, 7
      %v280 = vsub.s32 0, %v279
      %v281 = vrot.slane %v271, %v280
      %v282 = vlaneseq
      %v283 = vshrl.u32 %v282, 7
      %v284 = vsub.s32 1, %v283
      %v285 = vrot.slane %v271, %v284
      %v288 = vmul.f32 %v275, %v281
      %v289 = vmul.f32 %v275, %v285
      %v290 = vld [vmem:[%s3] sm:$0xf]
      %292 = vset.pattern.permute.xlu0 0
      %293 = vperm.xlu0 %292, %v290
      %v294 = vpop.permute.xlu0 %293
      %v296 = vadd.f32 %v288, %v294
      %v297 = vadd.f32 %v289, %v294
      %v298 = vld [vmem:[%s249] sm:$0xff]
      %v299 = vxor.u32 %v296, 2147483648
      %v300 = vxor.u32 %v297, 2147483648
      %v301 = vmul.f32 %v299, 1.442695
      %v302 = vpow.pop %v301
      %v303 = vmul.f32 %v300, 1.442695
      %v304 = vpow.pop %v303
      %v305 = vadd.f32 %v302, 1.0
      %v306 = vadd.f32 %v304, 1.0
      %v307 = vrcp.pop %v305
      %v308 = vmul.f32 1.0, %v307
      %v309 = vrcp.pop %v306
      %v310 = vmul.f32 1.0, %v309
      %v313 = vcombine.low %v308, %v310
      %v315 = vmul.f32 %v298, %v313
      %316 = vst [vmem:[%s268] sm:$0xff] %v315
      %s317 = smul.u32 2, %s20
      %p318 = scmp.lt.s32.totalorder %s19, 1
      %s319 = scalar_select %p318, %s19, 1
      %p320 = scmp.lt.s32.totalorder %s317, 1
      %s321 = scalar_select %p320, %s317, 1
      %s322 = smul.addr %s319, 2
      %s323 = sadd.s32 %s321, %s322
      %s324 = smul.addr %s323, 4
      %s325 = scalar_lea.vmem %s4, %s324
      // Predicated region
      $region37: #{gruunet_forward.27} parent=35 // pred_check
        %p326 = pneg %p145
      $region38: #{gruunet_forward.27} parent=35 // pred_check_branch
        %328 = sbr.rel (%p326) target = $region40
      $region39: #{gruunet_forward.27} parent=35 // pred_region
        %s329 = smul.u32 2, %s20
      $region40: #{gruunet_forward.27} parent=35 // pred_fallthru
        _
    $region36: #{gruunet_forward.27} parent=5 // pred_fallthru
      _
    %p330 = scmp.le.s32.totalorder 2, %s10
    // Predicated region
    $region41: #{gruunet_forward.27} parent=5 // pred_check
      %p331 = pneg %p330
    $region42: #{gruunet_forward.27} parent=5 // pred_check_branch
      %333 = sbr.rel (%p331) target = $region44
    $region43: #{gruunet_forward.27} parent=5 // pred_region
      %s334 = ssub.s32 %s10, 2
      // Predicated region
      $region45: #{gruunet_forward.27} parent=43 // pred_check
        %p335 = pneg %p151
      $region46: #{gruunet_forward.27} parent=43 // pred_check_branch
        %337 = sbr.rel (%p335) target = $region48
      $region47: #{gruunet_forward.27} parent=43 // pred_region
        %s338 = smul.u32 2, %s22
        %p339 = scmp.lt.s32.totalorder %s21, 1
        %s340 = scalar_select %p339, %s21, 1
        %p341 = scmp.lt.s32.totalorder %s338, 1
        %s342 = scalar_select %p341, %s338, 1
        %s343 = smul.addr %s340, 2
        %s344 = sadd.s32 %s342, %s343
        %s345 = smul.addr %s344, 4
        %s346 = scalar_lea.vmem %s4, %s345
      $region48: #{gruunet_forward.27} parent=43 // pred_fallthru
        _
    $region44: #{gruunet_forward.27} parent=5 // pred_fallthru
      _
  $region6: #{gruunet_forward.27} parent=0 // loop_footer
    %s14 = sadd.s32 1, %s10
  $region7: #{gruunet_forward.27} parent=0 // loop_footer_branch
    %9 = sbr.rel target = $region3
  $region8: #{gruunet_forward.27} parent=0 // loop_exit
    _

// kernel: gruunet_forward.28
$region0: #{gruunet_forward.28}
  #allocation0 [shape = 'u32[]', space=smem, size = 0x4, offset = 0x4, fixed_abs, tag = 'smem constant byte address 0x4 - core index']
  #allocation1 [shape = 'u32[144,128]{1,0:T(1,128)}', space=vmem, size = 0x12000, scoped, tag = 'internal scratch']
  %s0 = inlined_call_operand.vmem [shape: f32[2,45,256], index: 0, kind: input, shape index: {}]
  %s1 = inlined_call_operand.vmem [shape: f32[4,45], index: 1, kind: input, shape index: {}]
  %s2 = inlined_call_operand.vmem [shape: f32[4,1], index: 2, kind: input, shape index: {}]
  %s3 = inlined_call_operand.vmem [shape: f32[2,36,256], index: 3, kind: input, shape index: {}]
  %s4 = inlined_call_operand.vmem [shape: f32[4,36], index: 4, kind: input, shape index: {}]
  %s5 = inlined_call_operand.vmem [shape: f32[4,1], index: 5, kind: input, shape index: {}]
  %s6 = inlined_call_operand.vmem [shape: f32[2,4,256], index: 6, kind: output, shape index: {}]
  %s7 = sld [smem:[#allocation0]]
  $region57: #{gruunet_forward.28} parent=0
    _
  %s9 = ssub.s32 1, %s7
  %s10 = scalar_select 0, %s9, %s7
  loop: start=0, step=1, limit=4
  $region2: #{gruunet_forward.28} parent=0 // loop_pre_header
    _
  $region3: #{gruunet_forward.28} parent=0 // loop_header
    %s12 = sphi 0, %s16
    %p13 = scmp.ge.s32.totalorder %s12, 4
    %s19 = sphi 0, %s31
    %s20 = sphi 0, %s27
    %s21 = sphi 0, %s19
    %s22 = sphi 0, %s20
    %s23 = sphi 0, %s21
    %s24 = sphi 0, %s22
    %s36 = sphi 0, %s38
    %s39 = sphi 0, %s36
    %s40 = sphi 0, %s39
    %s56 = sphi 0, %s40
    %s60 = sphi 0, %s60
    %s62 = sphi 0, %s60
    %s63 = sphi 0, %s62
    %s77 = sphi 0, %s63
    %s81 = sphi 0, %s81
    %s83 = sphi 0, %s81
    %s84 = sphi 0, %s83
    %s98 = sphi 0, %s84
    %s106 = sphi 0, %s108
    %s109 = sphi 0, %s106
    %s110 = sphi 0, %s109
    %s126 = sphi 0, %s110
    %s130 = sphi 0, %s130
    %s132 = sphi 0, %s130
    %s133 = sphi 0, %s132
    %s147 = sphi 0, %s133
    %s151 = sphi 0, %s151
    %s153 = sphi 0, %s151
    %s154 = sphi 0, %s153
    %s168 = sphi 0, %s154
    %s176 = sphi 0, %s178
    %s179 = sphi 0, %s176
    %s180 = sphi 0, %s179
    %s196 = sphi 0, %s180
  $region4: #{gruunet_forward.28} parent=0 // loop_header_branch
    %15 = sbr.rel (%p13) target = $region8
  $region5: #{gruunet_forward.28} parent=0 // loop_body
    %s17 = ssub.s32 %s12, 1
    %s18 = ssub.s32 %s12, 2
    %s25 = sadd.s32 1, %s20
    %p26 = scmp.ge.s32.totalorder %s25, 1
    %s27 = scalar_select %p26, 0, %s25
    %s28 = sadd.s32 1, %s19
    %s29 = scalar_select %p26, %s28, %s19
    %p30 = scmp.ge.s32.totalorder %s29, 2
    %s31 = scalar_select %p30, 0, %s29
    %s32 = ssub.s32 %s19, %s31
    %s33 = ssub.s32 %s20, %s27
    %s34 = sor.u32 %s32, %s33
    %p35 = scmp.eq.s32.totalorder %s34, 0
    %s37 = sadd.s32 %s36, 1
    %s38 = scalar_select %p35, %s36, %s37
    %p41 = pneg %p35
    %p42 = scmp.eq.s32.totalorder %s12, 1
    %p43 = por %p41, %p42
    %p44 = scmp.ne.s32.totalorder %s36, %s39
    %p45 = scmp.eq.s32.totalorder %s12, 0
    %p46 = por %p44, %p45
    %p47 = scmp.ne.s32.totalorder %s36, %s39
    %p48 = scmp.eq.s32.totalorder %s17, 1
    %p49 = por %p47, %p48
    %p50 = scmp.ne.s32.totalorder %s39, %s40
    %p51 = scmp.eq.s32.totalorder %s17, 0
    %p52 = por %p50, %p51
    %p53 = scmp.ne.s32.totalorder %s39, %s40
    %p54 = scmp.eq.s32.totalorder %s18, 1
    %p55 = por %p53, %p54
    %p57 = scmp.ne.s32.totalorder %s40, %s56
    %p58 = scmp.eq.s32.totalorder %s18, 0
    %p59 = por %p57, %p58
    %s61 = sadd.s32 %s60, 1
    %p64 = scmp.eq.s32.totalorder %s12, 1
    %p65 = scmp.ne.s32.totalorder %s60, %s62
    %p66 = scmp.eq.s32.totalorder %s12, 0
    %p67 = por %p65, %p66
    %p68 = scmp.ne.s32.totalorder %s60, %s62
    %p69 = scmp.eq.s32.totalorder %s17, 1
    %p70 = por %p68, %p69
    %p71 = scmp.ne.s32.totalorder %s62, %s63
    %p72 = scmp.eq.s32.totalorder %s17, 0
    %p73 = por %p71, %p72
    %p74 = scmp.ne.s32.totalorder %s62, %s63
    %p75 = scmp.eq.s32.totalorder %s18, 1
    %p76 = por %p74, %p75
    %p78 = scmp.ne.s32.totalorder %s63, %s77
    %p79 = scmp.eq.s32.totalorder %s18, 0
    %p80 = por %p78, %p79
    %s82 = sadd.s32 %s81, 1
    %p85 = scmp.eq.s32.totalorder %s12, 1
    %p86 = scmp.ne.s32.totalorder %s81, %s83
    %p87 = scmp.eq.s32.totalorder %s12, 0
    %p88 = por %p86, %p87
    %p89 = scmp.ne.s32.totalorder %s81, %s83
    %p90 = scmp.eq.s32.totalorder %s17, 1
    %p91 = por %p89, %p90
    %p92 = scmp.ne.s32.totalorder %s83, %s84
    %p93 = scmp.eq.s32.totalorder %s17, 0
    %p94 = por %p92, %p93
    %p95 = scmp.ne.s32.totalorder %s83, %s84
    %p96 = scmp.eq.s32.totalorder %s18, 1
    %p97 = por %p95, %p96
    %p99 = scmp.ne.s32.totalorder %s84, %s98
    %p100 = scmp.eq.s32.totalorder %s18, 0
    %p101 = por %p99, %p100
    %s102 = ssub.s32 %s19, %s31
    %s103 = ssub.s32 %s20, %s27
    %s104 = sor.u32 %s102, %s103
    %p105 = scmp.eq.s32.totalorder %s104, 0
    %s107 = sadd.s32 %s106, 1
    %s108 = scalar_select %p105, %s106, %s107
    %p111 = pneg %p105
    %p112 = scmp.eq.s32.totalorder %s12, 1
    %p113 = por %p111, %p112
    %p114 = scmp.ne.s32.totalorder %s106, %s109
    %p115 = scmp.eq.s32.totalorder %s12, 0
    %p116 = por %p114, %p115
    %p117 = scmp.ne.s32.totalorder %s106, %s109
    %p118 = scmp.eq.s32.totalorder %s17, 1
    %p119 = por %p117, %p118
    %p120 = scmp.ne.s32.totalorder %s109, %s110
    %p121 = scmp.eq.s32.totalorder %s17, 0
    %p122 = por %p120, %p121
    %p123 = scmp.ne.s32.totalorder %s109, %s110
    %p124 = scmp.eq.s32.totalorder %s18, 1
    %p125 = por %p123, %p124
    %p127 = scmp.ne.s32.totalorder %s110, %s126
    %p128 = scmp.eq.s32.totalorder %s18, 0
    %p129 = por %p127, %p128
    %s131 = sadd.s32 %s130, 1
    %p134 = scmp.eq.s32.totalorder %s12, 1
    %p135 = scmp.ne.s32.totalorder %s130, %s132
    %p136 = scmp.eq.s32.totalorder %s12, 0
    %p137 = por %p135, %p136
    %p138 = scmp.ne.s32.totalorder %s130, %s132
    %p139 = scmp.eq.s32.totalorder %s17, 1
    %p140 = por %p138, %p139
    %p141 = scmp.ne.s32.totalorder %s132, %s133
    %p142 = scmp.eq.s32.totalorder %s17, 0
    %p143 = por %p141, %p142
    %p144 = scmp.ne.s32.totalorder %s132, %s133
    %p145 = scmp.eq.s32.totalorder %s18, 1
    %p146 = por %p144, %p145
    %p148 = scmp.ne.s32.totalorder %s133, %s147
    %p149 = scmp.eq.s32.totalorder %s18, 0
    %p150 = por %p148, %p149
    %s152 = sadd.s32 %s151, 1
    %p155 = scmp.eq.s32.totalorder %s12, 1
    %p156 = scmp.ne.s32.totalorder %s151, %s153
    %p157 = scmp.eq.s32.totalorder %s12, 0
    %p158 = por %p156, %p157
    %p159 = scmp.ne.s32.totalorder %s151, %s153
    %p160 = scmp.eq.s32.totalorder %s17, 1
    %p161 = por %p159, %p160
    %p162 = scmp.ne.s32.totalorder %s153, %s154
    %p163 = scmp.eq.s32.totalorder %s17, 0
    %p164 = por %p162, %p163
    %p165 = scmp.ne.s32.totalorder %s153, %s154
    %p166 = scmp.eq.s32.totalorder %s18, 1
    %p167 = por %p165, %p166
    %p169 = scmp.ne.s32.totalorder %s154, %s168
    %p170 = scmp.eq.s32.totalorder %s18, 0
    %p171 = por %p169, %p170
    %s172 = ssub.s32 %s19, %s31
    %s173 = ssub.s32 %s20, %s27
    %s174 = sor.u32 %s172, %s173
    %p175 = scmp.eq.s32.totalorder %s174, 0
    %s177 = sadd.s32 %s176, 1
    %s178 = scalar_select %p175, %s176, %s177
    %p181 = pneg %p175
    %p182 = scmp.eq.s32.totalorder %s12, 1
    %p183 = por %p181, %p182
    %p184 = scmp.ne.s32.totalorder %s176, %s179
    %p185 = scmp.eq.s32.totalorder %s12, 0
    %p186 = por %p184, %p185
    %p187 = scmp.ne.s32.totalorder %s176, %s179
    %p188 = scmp.eq.s32.totalorder %s17, 1
    %p189 = por %p187, %p188
    %p190 = scmp.ne.s32.totalorder %s179, %s180
    %p191 = scmp.eq.s32.totalorder %s17, 0
    %p192 = por %p190, %p191
    %p193 = scmp.ne.s32.totalorder %s179, %s180
    %p194 = scmp.eq.s32.totalorder %s18, 1
    %p195 = por %p193, %p194
    %p197 = scmp.ne.s32.totalorder %s180, %s196
    %p198 = scmp.eq.s32.totalorder %s18, 0
    %p199 = por %p197, %p198
    %p200 = scmp.le.s32.totalorder 1, %s12
    %p201 = scmp.lt.s32.totalorder %s12, 3
    %p202 = pnand %p200, %p201
    %p203 = pneg %p202
    // Predicated region
    $region9: #{gruunet_forward.28} parent=5 // pred_check
      _
    $region10: #{gruunet_forward.28} parent=5 // pred_check_branch
      %205 = sbr.rel (%p202) target = $region12
    $region11: #{gruunet_forward.28} parent=5 // pred_region
      %s206 = ssub.s32 %s12, 1
      // Predicated region
      $region13: #{gruunet_forward.28} parent=11 // pred_check
        %p207 = pneg %p73
      $region14: #{gruunet_forward.28} parent=11 // pred_check_branch
        %209 = sbr.rel (%p207) target = $region16
      $region15: #{gruunet_forward.28} parent=11 // pred_region
        _
      $region16: #{gruunet_forward.28} parent=11 // pred_fallthru
        _
      // Predicated region
      $region17: #{gruunet_forward.28} parent=11 // pred_check
        %p210 = pneg %p94
      $region18: #{gruunet_forward.28} parent=11 // pred_check_branch
        %212 = sbr.rel (%p210) target = $region20
      $region19: #{gruunet_forward.28} parent=11 // pred_region
        _
      $region20: #{gruunet_forward.28} parent=11 // pred_fallthru
        _
      // Predicated region
      $region21: #{gruunet_forward.28} parent=11 // pred_check
        %p213 = pneg %p143
      $region22: #{gruunet_forward.28} parent=11 // pred_check_branch
        %215 = sbr.rel (%p213) target = $region24
      $region23: #{gruunet_forward.28} parent=11 // pred_region
        _
      $region24: #{gruunet_forward.28} parent=11 // pred_fallthru
        _
      // Predicated region
      $region25: #{gruunet_forward.28} parent=11 // pred_check
        %p216 = pneg %p164
      $region26: #{gruunet_forward.28} parent=11 // pred_check_branch
        %218 = sbr.rel (%p216) target = $region28
      $region27: #{gruunet_forward.28} parent=11 // pred_region
        _
      $region28: #{gruunet_forward.28} parent=11 // pred_fallthru
        _
    $region12: #{gruunet_forward.28} parent=5 // pred_fallthru
      _
    %p219 = scmp.lt.s32.totalorder %s12, 2
    // Predicated region
    $region29: #{gruunet_forward.28} parent=5 // pred_check
      %p220 = pneg %p219
    $region30: #{gruunet_forward.28} parent=5 // pred_check_branch
      %222 = sbr.rel (%p220) target = $region32
    $region31: #{gruunet_forward.28} parent=5 // pred_region
      // Predicated region
      $region33: #{gruunet_forward.28} parent=31 // pred_check
        %p223 = pneg %p46
      $region34: #{gruunet_forward.28} parent=31 // pred_check_branch
        %225 = sbr.rel (%p223) target = $region36
      $region35: #{gruunet_forward.28} parent=31 // pred_region
        %s226 = smul.u32 2, %s20
        %p227 = scmp.lt.s32.totalorder %s19, 1
        %s228 = scalar_select %p227, %s19, 1
        %p229 = scmp.lt.s32.totalorder %s226, 1
        %s230 = scalar_select %p229, %s226, 1
        %s231 = smul.addr %s228, 12
        %s232 = sadd.s32 %s230, %s231
        %s233 = smul.addr %s232, 8
        %s234 = scalar_lea.vmem %s0, %s233
        %s235 = smul.u32 2, %s20
      $region36: #{gruunet_forward.28} parent=31 // pred_fallthru
        _
      // Predicated region
      $region37: #{gruunet_forward.28} parent=31 // pred_check
        %p236 = pneg %p116
      $region38: #{gruunet_forward.28} parent=31 // pred_check_branch
        %238 = sbr.rel (%p236) target = $region40
      $region39: #{gruunet_forward.28} parent=31 // pred_region
        %s239 = smul.u32 2, %s20
        %p240 = scmp.lt.s32.totalorder %s19, 1
        %s241 = scalar_select %p240, %s19, 1
        %p242 = scmp.lt.s32.totalorder %s239, 1
        %s243 = scalar_select %p242, %s239, 1
        %s244 = smul.addr %s241, 10
        %s245 = sadd.s32 %s243, %s244
        %s246 = smul.addr %s245, 8
        %s247 = scalar_lea.vmem %s3, %s246
        %s248 = smul.u32 2, %s20
      $region40: #{gruunet_forward.28} parent=31 // pred_fallthru
        _
    $region32: #{gruunet_forward.28} parent=5 // pred_fallthru
      _
    %p249 = scmp.le.s32.totalorder 1, %s12
    %p250 = scmp.lt.s32.totalorder %s12, 3
    %p251 = pnand %p249, %p250
    %p252 = pneg %p251
    // Predicated region
    $region41: #{gruunet_forward.28} parent=5 // pred_check
      _
    $region42: #{gruunet_forward.28} parent=5 // pred_check_branch
      %254 = sbr.rel (%p251) target = $region44
    $region43: #{gruunet_forward.28} parent=5 // pred_region
      %s255 = ssub.s32 %s12, 1
      %s256 = smul.u32 2, %s22
      %p257 = scmp.lt.s32.totalorder %s21, 1
      %s258 = scalar_select %p257, %s21, 1
      %p259 = scmp.lt.s32.totalorder %s256, 1
      %s260 = scalar_select %p259, %s256, 1
      %s261 = smul.addr %s258, 12
      %s262 = sadd.s32 %s260, %s261
      %s263 = smul.addr %s262, 8
      %s264 = scalar_lea.vmem %s0, %s263
      %p265 = pneg %p52
      %p266 = pneg %p49
      %p267 = pneg %p73
      %p268 = pneg %p70
      %p269 = pneg %p94
      %p270 = pneg %p91
      %s271 = smul.u32 2, %s22
      %p272 = scmp.lt.s32.totalorder %s21, 1
      %s273 = scalar_select %p272, %s21, 1
      %p274 = scmp.lt.s32.totalorder %s271, 1
      %s275 = scalar_select %p274, %s271, 1
      %s276 = smul.addr %s273, 10
      %s277 = sadd.s32 %s275, %s276
      %s278 = smul.addr %s277, 8
      %s279 = scalar_lea.vmem %s3, %s278
      %p280 = pneg %p122
      %p281 = pneg %p119
      %p282 = pneg %p143
      %p283 = pneg %p140
      %p284 = pneg %p164
      %p285 = pneg %p161
      %p286 = pneg %p192
      %p287 = pneg %p189
      %s288 = smul.u32 2, %s22
      %p289 = scmp.lt.s32.totalorder %s21, 1
      %s290 = scalar_select %p289, %s21, 1
      %p291 = scmp.lt.s32.totalorder %s288, 1
      %s292 = scalar_select %p291, %s288, 1
      %s293 = smul.addr %s290, 2
      %s294 = sadd.s32 %s292, %s293
      %s295 = smul.addr %s294, 4
      %s296 = scalar_lea.vmem %s6, %s295
      %s297 = smul.u32 2, %s22
      %p298 = scmp.lt.s32.totalorder %s21, 1
      %s299 = scalar_select %p298, %s21, 1
      %p300 = scmp.lt.s32.totalorder %s297, 1
      %s301 = scalar_select %p300, %s297, 1
      %s302 = smul.addr %s299, 12
      %s303 = sadd.s32 %s301, %s302
      %s304 = smul.addr %s303, 8
      %s305 = scalar_lea.vmem %s0, %s304
      %s306 = smul.u32 2, %s22
      %s307 = smul.u32 2, %s22
      %p308 = scmp.lt.s32.totalorder %s21, 1
      %s309 = scalar_select %p308, %s21, 1
      %p310 = scmp.lt.s32.totalorder %s307, 1
      %s311 = scalar_select %p310, %s307, 1
      %s312 = smul.addr %s309, 10
      %s313 = sadd.s32 %s311, %s312
      %s314 = smul.addr %s313, 8
      %s315 = scalar_lea.vmem %s3, %s314
      %s316 = smul.u32 2, %s22
      %s317 = smul.u32 2, %s22
      %p318 = scmp.lt.s32.totalorder %s21, 1
      %s319 = scalar_select %p318, %s21, 1
      %p320 = scmp.lt.s32.totalorder %s317, 1
      %s321 = scalar_select %p320, %s317, 1
      %s322 = smul.addr %s319, 2
      %s323 = sadd.s32 %s321, %s322
      %s324 = smul.addr %s323, 4
      %s325 = scalar_lea.vmem %s6, %s324
      %s326 = smul.u32 2, %s22
      %v327 = vld [vmem:[%s1] sm:$0xf]
      %v328 = vld [vmem:[%s305] sm:$0xff]
      %v329 = vld [vmem:[%s305 + $0x8] sm:$0xff]
      %v330 = vld [vmem:[%s305 + $0x10] sm:$0xff]
      %v331 = vld [vmem:[%s305 + $0x18] sm:$0xff]
      %v332 = vld [vmem:[%s305 + $0x20] sm:$0xff]
      %v333 = vld [vmem:[%s305 + $0x28] sm:$0xff]
      %v334 = vld [vmem:[%s305 + $0x30] sm:$0xff]
      %v335 = vld [vmem:[%s305 + $0x38] sm:$0xff]
      %v336 = vld [vmem:[%s305 + $0x40] sm:$0xff]
      %v337 = vld [vmem:[%s305 + $0x48] sm:$0xff]
      %v338 = vld [vmem:[%s305 + $0x50] sm:$0x1f]
      %v339 = vld [vmem:[%s305 + $0x58] sm:$0x1f]
      %v340 = vld [vmem:[%s2] sm:$0xf]
      %342 = vset.pattern.permute.xlu0 0
      %343 = vperm.xlu0 %342, %v340
      %v344 = vpop.permute.xlu0 %343
      %vm346 = vcmask 367616
      %v348 = vsel %vm346, %v327, 0
      %vm350 = vcmask 1044480
      %v352 = vsel %vm350, %v338, 0
      %v355 = vsel %vm350, %v339, 0
      %357 = vmatprep.subr.mxu0 %v329
      %358 = vmatpush1.msra.mxu0 %v328
      %359 = vmatprep.subr.mxu0 %v331
      %360 = vmatpush1.msra.mxu0 %v330
      %361 = vmatprep.subr.mxu0 %v333
      %362 = vmatpush1.msra.mxu0 %v332
      %363 = vmatprep.subr.mxu0 %v335
      %364 = vmatpush1.msra.mxu0 %v334
      %365 = vmatprep.subr.mxu0 %v337
      %366 = vmatpush1.msra.mxu0 %v336
      %367 = vmatprep.subr.mxu0 %v355
      %368 = vmatpush1.msra.mxu0 %v352
      %369 = vmatprep.subr.mxu0 0.0
      %370 = vmatpush1.msra.mxu0 0.0
      %371 = vmatprep.subr.mxu0 0.0
      %372 = vmatpush1.msra.mxu0 0.0
      %373 = vmatprep.subr.mxu0 0.0
      %374 = vmatpush1.msra.mxu0 0.0
      %375 = vmatprep.subr.mxu0 0.0
      %376 = vmatpush1.msra.mxu0 0.0
      %377 = vmatprep.subr.mxu0 0.0
      %378 = vmatpush1.msra.mxu0 0.0
      %379 = vmatprep.subr.mxu0 0.0
      %380 = vmatpush1.msra.mxu0 0.0
      %381 = vmatprep.subr.mxu0 0.0
      %382 = vmatpush1.msra.mxu0 0.0
      %383 = vmatprep.subr.mxu0 0.0
      %384 = vmatpush1.msra.mxu0 0.0
      %385 = vmatprep.subr.mxu0 0.0
      %386 = vmatpush1.msra.mxu0 0.0
      %387 = vmatprep.subr.mxu0 0.0
      %388 = vmatpush1.msra.mxu0 0.0
      %389 = vmatprep.subr.mxu0 0.0
      %390 = vmatpush1.msra.mxu0 0.0
      %391 = vmatprep.subr.mxu0 0.0
      %392 = vmatpush1.msra.mxu0 0.0
      %393 = vmatprep.subr.mxu0 0.0
      %394 = vmatpush1.msra.mxu0 0.0
      %395 = vmatprep.subr.mxu0 0.0
      %396 = vmatpush1.msra.mxu0 0.0
      %397 = vmatprep.subr.mxu0 0.0
      %398 = vmatpush1.msra.mxu0 0.0
      %399 = vmatprep.subr.mxu0 0.0
      %400 = vmatpush1.msra.mxu0 0.0
      %401 = vmatprep.subr.mxu0 0.0
      %402 = vmatpush1.msra.mxu0 0.0
      %403 = vmatprep.subr.mxu0 0.0
      %404 = vmatpush1.msra.mxu0 0.0
      %405 = vmatprep.subr.mxu0 0.0
      %406 = vmatpush1.msra.mxu0 0.0
      %407 = vmatprep.subr.mxu0 0.0
      %408 = vmatpush1.msra.mxu0 0.0
      %409 = vmatprep.subr.mxu0 0.0
      %410 = vmatpush1.msra.mxu0 0.0
      %411 = vmatprep.subr.mxu0 0.0
      %412 = vmatpush1.msra.mxu0 0.0
      %413 = vmatprep.subr.mxu0 0.0
      %414 = vmatpush1.msra.mxu0 0.0
      %415 = vmatprep.subr.mxu0 0.0
      %416 = vmatpush1.msra.mxu0 0.0
      %417 = vmatprep.subr.mxu0 0.0
      %418 = vmatpush1.msra.mxu0 0.0
      %419 = vmatprep.subr.mxu0 0.0
      %420 = vmatpush1.msra.mxu0 0.0
      %421 = vmatprep.mubr.f32.mxu0 0.0
      %422 = vmatmul.mubr.f32.gmra.mrb[0].mxu0 %v348
      %v423 = vpop.f32.mrb[0].mxu0
      %v424 = vadd.f32 %v344, %v423
      %v425 = vpop.f32.mrb[0].mxu0
      %v426 = vadd.f32 %v344, %v425
      %427 = vdwg.mxu0
      %v428 = vxor.u32 %v424, 2147483648
      %v429 = vxor.u32 %v426, 2147483648
      %v430 = vmul.f32 %v428, 1.442695
      %v431 = vpow.pop %v430
      %v432 = vmul.f32 %v429, 1.442695
      %v433 = vpow.pop %v432
      %v434 = vadd.f32 %v431, 1.0
      %v435 = vadd.f32 %v433, 1.0
      %v436 = vrcp.pop %v434
      %v437 = vmul.f32 1.0, %v436
      %v438 = vrcp.pop %v435
      %v439 = vmul.f32 1.0, %v438
      %v440 = vld [vmem:[%s4] sm:$0xf]
      %v441 = vld [vmem:[%s315] sm:$0xff]
      %v442 = vld [vmem:[%s315 + $0x8] sm:$0xff]
      %v443 = vld [vmem:[%s315 + $0x10] sm:$0xff]
      %v444 = vld [vmem:[%s315 + $0x18] sm:$0xff]
      %v445 = vld [vmem:[%s315 + $0x20] sm:$0xff]
      %v446 = vld [vmem:[%s315 + $0x28] sm:$0xff]
      %v447 = vld [vmem:[%s315 + $0x30] sm:$0xff]
      %v448 = vld [vmem:[%s315 + $0x38] sm:$0xff]
      %v449 = vld [vmem:[%s315 + $0x40] sm:$0xf]
      %v450 = vld [vmem:[%s315 + $0x48] sm:$0xf]
      %v451 = vld [vmem:[%s5] sm:$0xf]
      %453 = vset.pattern.permute.xlu0 0
      %454 = vperm.xlu0 %453, %v451
      %v455 = vpop.permute.xlu0 %454
      %vm457 = vcmask 293888
      %v459 = vsel %vm457, %v440, 0
      %vm461 = vcmask 1043456
      %v463 = vsel %vm461, %v449, 0
      %v466 = vsel %vm461, %v450, 0
      %468 = vmatprep.subr.mxu0 %v442
      %469 = vmatpush1.msra.mxu0 %v441
      %470 = vmatprep.subr.mxu0 %v444
      %471 = vmatpush1.msra.mxu0 %v443
      %472 = vmatprep.subr.mxu0 %v446
      %473 = vmatpush1.msra.mxu0 %v445
      %474 = vmatprep.subr.mxu0 %v448
      %475 = vmatpush1.msra.mxu0 %v447
      %476 = vmatprep.subr.mxu0 %v466
      %477 = vmatpush1.msra.mxu0 %v463
      %478 = vmatprep.subr.mxu0 0.0
      %479 = vmatpush1.msra.mxu0 0.0
      %480 = vmatprep.subr.mxu0 0.0
      %481 = vmatpush1.msra.mxu0 0.0
      %482 = vmatprep.subr.mxu0 0.0
      %483 = vmatpush1.msra.mxu0 0.0
      %484 = vmatprep.subr.mxu0 0.0
      %485 = vmatpush1.msra.mxu0 0.0
      %486 = vmatprep.subr.mxu0 0.0
      %487 = vmatpush1.msra.mxu0 0.0
      %488 = vmatprep.subr.mxu0 0.0
      %489 = vmatpush1.msra.mxu0 0.0
      %490 = vmatprep.subr.mxu0 0.0
      %491 = vmatpush1.msra.mxu0 0.0
      %492 = vmatprep.subr.mxu0 0.0
      %493 = vmatpush1.msra.mxu0 0.0
      %494 = vmatprep.subr.mxu0 0.0
      %495 = vmatpush1.msra.mxu0 0.0
      %496 = vmatprep.subr.mxu0 0.0
      %497 = vmatpush1.msra.mxu0 0.0
      %498 = vmatprep.subr.mxu0 0.0
      %499 = vmatpush1.msra.mxu0 0.0
      %500 = vmatprep.subr.mxu0 0.0
      %501 = vmatpush1.msra.mxu0 0.0
      %502 = vmatprep.subr.mxu0 0.0
      %503 = vmatpush1.msra.mxu0 0.0
      %504 = vmatprep.subr.mxu0 0.0
      %505 = vmatpush1.msra.mxu0 0.0
      %506 = vmatprep.subr.mxu0 0.0
      %507 = vmatpush1.msra.mxu0 0.0
      %508 = vmatprep.subr.mxu0 0.0
      %509 = vmatpush1.msra.mxu0 0.0
      %510 = vmatprep.subr.mxu0 0.0
      %511 = vmatpush1.msra.mxu0 0.0
      %512 = vmatprep.subr.mxu0 0.0
      %513 = vmatpush1.msra.mxu0 0.0
      %514 = vmatprep.subr.mxu0 0.0
      %515 = vmatpush1.msra.mxu0 0.0
      %516 = vmatprep.subr.mxu0 0.0
      %517 = vmatpush1.msra.mxu0 0.0
      %518 = vmatprep.subr.mxu0 0.0
      %519 = vmatpush1.msra.mxu0 0.0
      %520 = vmatprep.subr.mxu0 0.0
      %521 = vmatpush1.msra.mxu0 0.0
      %522 = vmatprep.subr.mxu0 0.0
      %523 = vmatpush1.msra.mxu0 0.0
      %524 = vmatprep.subr.mxu0 0.0
      %525 = vmatpush1.msra.mxu0 0.0
      %526 = vmatprep.subr.mxu0 0.0
      %527 = vmatpush1.msra.mxu0 0.0
      %528 = vmatprep.subr.mxu0 0.0
      %529 = vmatpush1.msra.mxu0 0.0
      %530 = vmatprep.subr.mxu0 0.0
      %531 = vmatpush1.msra.mxu0 0.0
      %532 = vmatprep.mubr.f32.mxu0 0.0
      %533 = vmatmul.mubr.f32.gmra.mrb[0].mxu0 %v459
      %v534 = vpop.f32.mrb[0].mxu0
      %v535 = vadd.f32 %v455, %v534
      %v536 = vpop.f32.mrb[0].mxu0
      %v537 = vadd.f32 %v455, %v536
      %538 = vdwg.mxu0
      %vm539 = vcmp.ge.f32.partialorder %v535, 0.0
      %vm540 = vcmp.ge.f32.partialorder %v537, 0.0
      %v541 = vadd.f32 %v535, 0.5
      %v542 = vadd.f32 %v537, 0.5
      %v543 = vxor.u32 %v535, 2147483648
      %v544 = vxor.u32 %v537, 2147483648
      %v545 = vmul.f32 %v543, 1.442695
      %v546 = vpow.pop %v545
      %v547 = vmul.f32 %v544, 1.442695
      %v548 = vpow.pop %v547
      %v549 = vadd.f32 %v546, 1.0
      %v550 = vadd.f32 %v548, 1.0
      %v551 = vrcp.pop %v549
      %v552 = vmul.f32 1.0, %v551
      %v553 = vrcp.pop %v550
      %v554 = vmul.f32 1.0, %v553
      %v555 = vsel %vm539, %v541, %v552
      %v556 = vsel %vm540, %v542, %v554
      %v557 = vmul.f32 %v555, %v437
      %v558 = vmul.f32 %v556, %v439
      %v561 = vcombine.low %v557, %v558
      %563 = vst [vmem:[%s325] sm:$0xff] %v561
      %s564 = smul.u32 2, %s22
      %p565 = scmp.lt.s32.totalorder %s21, 1
      %s566 = scalar_select %p565, %s21, 1
      %p567 = scmp.lt.s32.totalorder %s564, 1
      %s568 = scalar_select %p567, %s564, 1
      %s569 = smul.addr %s566, 2
      %s570 = sadd.s32 %s568, %s569
      %s571 = smul.addr %s570, 4
      %s572 = scalar_lea.vmem %s6, %s571
      // Predicated region
      $region45: #{gruunet_forward.28} parent=43 // pred_check
        %p573 = pneg %p189
      $region46: #{gruunet_forward.28} parent=43 // pred_check_branch
        %575 = sbr.rel (%p573) target = $region48
      $region47: #{gruunet_forward.28} parent=43 // pred_region
        %s576 = smul.u32 2, %s22
      $region48: #{gruunet_forward.28} parent=43 // pred_fallthru
        _
    $region44: #{gruunet_forward.28} parent=5 // pred_fallthru
      _
    %p577 = scmp.le.s32.totalorder 2, %s12
    // Predicated region
    $region49: #{gruunet_forward.28} parent=5 // pred_check
      %p578 = pneg %p577
    $region50: #{gruunet_forward.28} parent=5 // pred_check_branch
      %580 = sbr.rel (%p578) target = $region52
    $region51: #{gruunet_forward.28} parent=5 // pred_region
      %s581 = ssub.s32 %s12, 2
      // Predicated region
      $region53: #{gruunet_forward.28} parent=51 // pred_check
        %p582 = pneg %p195
      $region54: #{gruunet_forward.28} parent=51 // pred_check_branch
        %584 = sbr.rel (%p582) target = $region56
      $region55: #{gruunet_forward.28} parent=51 // pred_region
        %s585 = smul.u32 2, %s24
        %p586 = scmp.lt.s32.totalorder %s23, 1
        %s587 = scalar_select %p586, %s23, 1
        %p588 = scmp.lt.s32.totalorder %s585, 1
        %s589 = scalar_select %p588, %s585, 1
        %s590 = smul.addr %s587, 2
        %s591 = sadd.s32 %s589, %s590
        %s592 = smul.addr %s591, 4
        %s593 = scalar_lea.vmem %s6, %s592
      $region56: #{gruunet_forward.28} parent=51 // pred_fallthru
        _
    $region52: #{gruunet_forward.28} parent=5 // pred_fallthru
      _
  $region6: #{gruunet_forward.28} parent=0 // loop_footer
    %s16 = sadd.s32 1, %s12
  $region7: #{gruunet_forward.28} parent=0 // loop_footer_branch
    %11 = sbr.rel target = $region3
  $region8: #{gruunet_forward.28} parent=0 // loop_exit
    _

// kernel: gruunet_forward.41
$region0: #{gruunet_forward.41}
  #allocation0 [shape = 'u32[]', space=smem, size = 0x4, offset = 0x4, fixed_abs, tag = 'smem constant byte address 0x4 - core index']
  #allocation1 [shape = 'u32[144,128]{1,0:T(1,128)}', space=vmem, size = 0x12000, scoped, tag = 'internal scratch']
  %s0 = inlined_call_operand.vmem [shape: f32[2,45,256], index: 0, kind: input, shape index: {}]
  %s1 = inlined_call_operand.vmem [shape: f32[4,45], index: 1, kind: input, shape index: {}]
  %s2 = inlined_call_operand.vmem [shape: f32[4,1], index: 2, kind: input, shape index: {}]
  %s3 = inlined_call_operand.vmem [shape: f32[2,36,256], index: 3, kind: input, shape index: {}]
  %s4 = inlined_call_operand.vmem [shape: f32[4,36], index: 4, kind: input, shape index: {}]
  %s5 = inlined_call_operand.vmem [shape: f32[4,1], index: 5, kind: input, shape index: {}]
  %s6 = inlined_call_operand.vmem [shape: f32[2,4,256], index: 6, kind: input, shape index: {}]
  %s7 = inlined_call_operand.vmem [shape: f32[2,4,256], index: 7, kind: output, shape index: {}]
  %s8 = sld [smem:[#allocation0]]
  $region61: #{gruunet_forward.41} parent=0
    _
  %s10 = ssub.s32 1, %s8
  %s11 = scalar_select 0, %s10, %s8
  loop: start=0, step=1, limit=4
  $region2: #{gruunet_forward.41} parent=0 // loop_pre_header
    _
  $region3: #{gruunet_forward.41} parent=0 // loop_header
    %s13 = sphi 0, %s17
    %p14 = scmp.ge.s32.totalorder %s13, 4
    %s20 = sphi 0, %s32
    %s21 = sphi 0, %s28
    %s22 = sphi 0, %s20
    %s23 = sphi 0, %s21
    %s24 = sphi 0, %s22
    %s25 = sphi 0, %s23
    %s37 = sphi 0, %s39
    %s40 = sphi 0, %s37
    %s41 = sphi 0, %s40
    %s57 = sphi 0, %s41
    %s61 = sphi 0, %s61
    %s63 = sphi 0, %s61
    %s64 = sphi 0, %s63
    %s78 = sphi 0, %s64
    %s82 = sphi 0, %s82
    %s84 = sphi 0, %s82
    %s85 = sphi 0, %s84
    %s99 = sphi 0, %s85
    %s107 = sphi 0, %s109
    %s110 = sphi 0, %s107
    %s111 = sphi 0, %s110
    %s127 = sphi 0, %s111
    %s131 = sphi 0, %s131
    %s133 = sphi 0, %s131
    %s134 = sphi 0, %s133
    %s148 = sphi 0, %s134
    %s152 = sphi 0, %s152
    %s154 = sphi 0, %s152
    %s155 = sphi 0, %s154
    %s169 = sphi 0, %s155
    %s177 = sphi 0, %s179
    %s180 = sphi 0, %s177
    %s181 = sphi 0, %s180
    %s197 = sphi 0, %s181
    %s205 = sphi 0, %s207
    %s208 = sphi 0, %s205
    %s209 = sphi 0, %s208
    %s225 = sphi 0, %s209
  $region4: #{gruunet_forward.41} parent=0 // loop_header_branch
    %16 = sbr.rel (%p14) target = $region8
  $region5: #{gruunet_forward.41} parent=0 // loop_body
    %s18 = ssub.s32 %s13, 1
    %s19 = ssub.s32 %s13, 2
    %s26 = sadd.s32 1, %s21
    %p27 = scmp.ge.s32.totalorder %s26, 1
    %s28 = scalar_select %p27, 0, %s26
    %s29 = sadd.s32 1, %s20
    %s30 = scalar_select %p27, %s29, %s20
    %p31 = scmp.ge.s32.totalorder %s30, 2
    %s32 = scalar_select %p31, 0, %s30
    %s33 = ssub.s32 %s20, %s32
    %s34 = ssub.s32 %s21, %s28
    %s35 = sor.u32 %s33, %s34
    %p36 = scmp.eq.s32.totalorder %s35, 0
    %s38 = sadd.s32 %s37, 1
    %s39 = scalar_select %p36, %s37, %s38
    %p42 = pneg %p36
    %p43 = scmp.eq.s32.totalorder %s13, 1
    %p44 = por %p42, %p43
    %p45 = scmp.ne.s32.totalorder %s37, %s40
    %p46 = scmp.eq.s32.totalorder %s13, 0
    %p47 = por %p45, %p46
    %p48 = scmp.ne.s32.totalorder %s37, %s40
    %p49 = scmp.eq.s32.totalorder %s18, 1
    %p50 = por %p48, %p49
    %p51 = scmp.ne.s32.totalorder %s40, %s41
    %p52 = scmp.eq.s32.totalorder %s18, 0
    %p53 = por %p51, %p52
    %p54 = scmp.ne.s32.totalorder %s40, %s41
    %p55 = scmp.eq.s32.totalorder %s19, 1
    %p56 = por %p54, %p55
    %p58 = scmp.ne.s32.totalorder %s41, %s57
    %p59 = scmp.eq.s32.totalorder %s19, 0
    %p60 = por %p58, %p59
    %s62 = sadd.s32 %s61, 1
    %p65 = scmp.eq.s32.totalorder %s13, 1
    %p66 = scmp.ne.s32.totalorder %s61, %s63
    %p67 = scmp.eq.s32.totalorder %s13, 0
    %p68 = por %p66, %p67
    %p69 = scmp.ne.s32.totalorder %s61, %s63
    %p70 = scmp.eq.s32.totalorder %s18, 1
    %p71 = por %p69, %p70
    %p72 = scmp.ne.s32.totalorder %s63, %s64
    %p73 = scmp.eq.s32.totalorder %s18, 0
    %p74 = por %p72, %p73
    %p75 = scmp.ne.s32.totalorder %s63, %s64
    %p76 = scmp.eq.s32.totalorder %s19, 1
    %p77 = por %p75, %p76
    %p79 = scmp.ne.s32.totalorder %s64, %s78
    %p80 = scmp.eq.s32.totalorder %s19, 0
    %p81 = por %p79, %p80
    %s83 = sadd.s32 %s82, 1
    %p86 = scmp.eq.s32.totalorder %s13, 1
    %p87 = scmp.ne.s32.totalorder %s82, %s84
    %p88 = scmp.eq.s32.totalorder %s13, 0
    %p89 = por %p87, %p88
    %p90 = scmp.ne.s32.totalorder %s82, %s84
    %p91 = scmp.eq.s32.totalorder %s18, 1
    %p92 = por %p90, %p91
    %p93 = scmp.ne.s32.totalorder %s84, %s85
    %p94 = scmp.eq.s32.totalorder %s18, 0
    %p95 = por %p93, %p94
    %p96 = scmp.ne.s32.totalorder %s84, %s85
    %p97 = scmp.eq.s32.totalorder %s19, 1
    %p98 = por %p96, %p97
    %p100 = scmp.ne.s32.totalorder %s85, %s99
    %p101 = scmp.eq.s32.totalorder %s19, 0
    %p102 = por %p100, %p101
    %s103 = ssub.s32 %s20, %s32
    %s104 = ssub.s32 %s21, %s28
    %s105 = sor.u32 %s103, %s104
    %p106 = scmp.eq.s32.totalorder %s105, 0
    %s108 = sadd.s32 %s107, 1
    %s109 = scalar_select %p106, %s107, %s108
    %p112 = pneg %p106
    %p113 = scmp.eq.s32.totalorder %s13, 1
    %p114 = por %p112, %p113
    %p115 = scmp.ne.s32.totalorder %s107, %s110
    %p116 = scmp.eq.s32.totalorder %s13, 0
    %p117 = por %p115, %p116
    %p118 = scmp.ne.s32.totalorder %s107, %s110
    %p119 = scmp.eq.s32.totalorder %s18, 1
    %p120 = por %p118, %p119
    %p121 = scmp.ne.s32.totalorder %s110, %s111
    %p122 = scmp.eq.s32.totalorder %s18, 0
    %p123 = por %p121, %p122
    %p124 = scmp.ne.s32.totalorder %s110, %s111
    %p125 = scmp.eq.s32.totalorder %s19, 1
    %p126 = por %p124, %p125
    %p128 = scmp.ne.s32.totalorder %s111, %s127
    %p129 = scmp.eq.s32.totalorder %s19, 0
    %p130 = por %p128, %p129
    %s132 = sadd.s32 %s131, 1
    %p135 = scmp.eq.s32.totalorder %s13, 1
    %p136 = scmp.ne.s32.totalorder %s131, %s133
    %p137 = scmp.eq.s32.totalorder %s13, 0
    %p138 = por %p136, %p137
    %p139 = scmp.ne.s32.totalorder %s131, %s133
    %p140 = scmp.eq.s32.totalorder %s18, 1
    %p141 = por %p139, %p140
    %p142 = scmp.ne.s32.totalorder %s133, %s134
    %p143 = scmp.eq.s32.totalorder %s18, 0
    %p144 = por %p142, %p143
    %p145 = scmp.ne.s32.totalorder %s133, %s134
    %p146 = scmp.eq.s32.totalorder %s19, 1
    %p147 = por %p145, %p146
    %p149 = scmp.ne.s32.totalorder %s134, %s148
    %p150 = scmp.eq.s32.totalorder %s19, 0
    %p151 = por %p149, %p150
    %s153 = sadd.s32 %s152, 1
    %p156 = scmp.eq.s32.totalorder %s13, 1
    %p157 = scmp.ne.s32.totalorder %s152, %s154
    %p158 = scmp.eq.s32.totalorder %s13, 0
    %p159 = por %p157, %p158
    %p160 = scmp.ne.s32.totalorder %s152, %s154
    %p161 = scmp.eq.s32.totalorder %s18, 1
    %p162 = por %p160, %p161
    %p163 = scmp.ne.s32.totalorder %s154, %s155
    %p164 = scmp.eq.s32.totalorder %s18, 0
    %p165 = por %p163, %p164
    %p166 = scmp.ne.s32.totalorder %s154, %s155
    %p167 = scmp.eq.s32.totalorder %s19, 1
    %p168 = por %p166, %p167
    %p170 = scmp.ne.s32.totalorder %s155, %s169
    %p171 = scmp.eq.s32.totalorder %s19, 0
    %p172 = por %p170, %p171
    %s173 = ssub.s32 %s20, %s32
    %s174 = ssub.s32 %s21, %s28
    %s175 = sor.u32 %s173, %s174
    %p176 = scmp.eq.s32.totalorder %s175, 0
    %s178 = sadd.s32 %s177, 1
    %s179 = scalar_select %p176, %s177, %s178
    %p182 = pneg %p176
    %p183 = scmp.eq.s32.totalorder %s13, 1
    %p184 = por %p182, %p183
    %p185 = scmp.ne.s32.totalorder %s177, %s180
    %p186 = scmp.eq.s32.totalorder %s13, 0
    %p187 = por %p185, %p186
    %p188 = scmp.ne.s32.totalorder %s177, %s180
    %p189 = scmp.eq.s32.totalorder %s18, 1
    %p190 = por %p188, %p189
    %p191 = scmp.ne.s32.totalorder %s180, %s181
    %p192 = scmp.eq.s32.totalorder %s18, 0
    %p193 = por %p191, %p192
    %p194 = scmp.ne.s32.totalorder %s180, %s181
    %p195 = scmp.eq.s32.totalorder %s19, 1
    %p196 = por %p194, %p195
    %p198 = scmp.ne.s32.totalorder %s181, %s197
    %p199 = scmp.eq.s32.totalorder %s19, 0
    %p200 = por %p198, %p199
    %s201 = ssub.s32 %s20, %s32
    %s202 = ssub.s32 %s21, %s28
    %s203 = sor.u32 %s201, %s202
    %p204 = scmp.eq.s32.totalorder %s203, 0
    %s206 = sadd.s32 %s205, 1
    %s207 = scalar_select %p204, %s205, %s206
    %p210 = pneg %p204
    %p211 = scmp.eq.s32.totalorder %s13, 1
    %p212 = por %p210, %p211
    %p213 = scmp.ne.s32.totalorder %s205, %s208
    %p214 = scmp.eq.s32.totalorder %s13, 0
    %p215 = por %p213, %p214
    %p216 = scmp.ne.s32.totalorder %s205, %s208
    %p217 = scmp.eq.s32.totalorder %s18, 1
    %p218 = por %p216, %p217
    %p219 = scmp.ne.s32.totalorder %s208, %s209
    %p220 = scmp.eq.s32.totalorder %s18, 0
    %p221 = por %p219, %p220
    %p222 = scmp.ne.s32.totalorder %s208, %s209
    %p223 = scmp.eq.s32.totalorder %s19, 1
    %p224 = por %p222, %p223
    %p226 = scmp.ne.s32.totalorder %s209, %s225
    %p227 = scmp.eq.s32.totalorder %s19, 0
    %p228 = por %p226, %p227
    %p229 = scmp.le.s32.totalorder 1, %s13
    %p230 = scmp.lt.s32.totalorder %s13, 3
    %p231 = pnand %p229, %p230
    %p232 = pneg %p231
    // Predicated region
    $region9: #{gruunet_forward.41} parent=5 // pred_check
      _
    $region10: #{gruunet_forward.41} parent=5 // pred_check_branch
      %234 = sbr.rel (%p231) target = $region12
    $region11: #{gruunet_forward.41} parent=5 // pred_region
      %s235 = ssub.s32 %s13, 1
      // Predicated region
      $region13: #{gruunet_forward.41} parent=11 // pred_check
        %p236 = pneg %p74
      $region14: #{gruunet_forward.41} parent=11 // pred_check_branch
        %238 = sbr.rel (%p236) target = $region16
      $region15: #{gruunet_forward.41} parent=11 // pred_region
        _
      $region16: #{gruunet_forward.41} parent=11 // pred_fallthru
        _
      // Predicated region
      $region17: #{gruunet_forward.41} parent=11 // pred_check
        %p239 = pneg %p95
      $region18: #{gruunet_forward.41} parent=11 // pred_check_branch
        %241 = sbr.rel (%p239) target = $region20
      $region19: #{gruunet_forward.41} parent=11 // pred_region
        _
      $region20: #{gruunet_forward.41} parent=11 // pred_fallthru
        _
      // Predicated region
      $region21: #{gruunet_forward.41} parent=11 // pred_check
        %p242 = pneg %p144
      $region22: #{gruunet_forward.41} parent=11 // pred_check_branch
        %244 = sbr.rel (%p242) target = $region24
      $region23: #{gruunet_forward.41} parent=11 // pred_region
        _
      $region24: #{gruunet_forward.41} parent=11 // pred_fallthru
        _
      // Predicated region
      $region25: #{gruunet_forward.41} parent=11 // pred_check
        %p245 = pneg %p165
      $region26: #{gruunet_forward.41} parent=11 // pred_check_branch
        %247 = sbr.rel (%p245) target = $region28
      $region27: #{gruunet_forward.41} parent=11 // pred_region
        _
      $region28: #{gruunet_forward.41} parent=11 // pred_fallthru
        _
    $region12: #{gruunet_forward.41} parent=5 // pred_fallthru
      _
    %p248 = scmp.lt.s32.totalorder %s13, 2
    // Predicated region
    $region29: #{gruunet_forward.41} parent=5 // pred_check
      %p249 = pneg %p248
    $region30: #{gruunet_forward.41} parent=5 // pred_check_branch
      %251 = sbr.rel (%p249) target = $region32
    $region31: #{gruunet_forward.41} parent=5 // pred_region
      // Predicated region
      $region33: #{gruunet_forward.41} parent=31 // pred_check
        %p252 = pneg %p47
      $region34: #{gruunet_forward.41} parent=31 // pred_check_branch
        %254 = sbr.rel (%p252) target = $region36
      $region35: #{gruunet_forward.41} parent=31 // pred_region
        %s255 = smul.u32 2, %s21
        %p256 = scmp.lt.s32.totalorder %s20, 1
        %s257 = scalar_select %p256, %s20, 1
        %p258 = scmp.lt.s32.totalorder %s255, 1
        %s259 = scalar_select %p258, %s255, 1
        %s260 = smul.addr %s257, 12
        %s261 = sadd.s32 %s259, %s260
        %s262 = smul.addr %s261, 8
        %s263 = scalar_lea.vmem %s0, %s262
        %s264 = smul.u32 2, %s21
      $region36: #{gruunet_forward.41} parent=31 // pred_fallthru
        _
      // Predicated region
      $region37: #{gruunet_forward.41} parent=31 // pred_check
        %p265 = pneg %p117
      $region38: #{gruunet_forward.41} parent=31 // pred_check_branch
        %267 = sbr.rel (%p265) target = $region40
      $region39: #{gruunet_forward.41} parent=31 // pred_region
        %s268 = smul.u32 2, %s21
        %p269 = scmp.lt.s32.totalorder %s20, 1
        %s270 = scalar_select %p269, %s20, 1
        %p271 = scmp.lt.s32.totalorder %s268, 1
        %s272 = scalar_select %p271, %s268, 1
        %s273 = smul.addr %s270, 10
        %s274 = sadd.s32 %s272, %s273
        %s275 = smul.addr %s274, 8
        %s276 = scalar_lea.vmem %s3, %s275
        %s277 = smul.u32 2, %s21
      $region40: #{gruunet_forward.41} parent=31 // pred_fallthru
        _
      // Predicated region
      $region41: #{gruunet_forward.41} parent=31 // pred_check
        %p278 = pneg %p187
      $region42: #{gruunet_forward.41} parent=31 // pred_check_branch
        %280 = sbr.rel (%p278) target = $region44
      $region43: #{gruunet_forward.41} parent=31 // pred_region
        %s281 = smul.u32 2, %s21
        %p282 = scmp.lt.s32.totalorder %s20, 1
        %s283 = scalar_select %p282, %s20, 1
        %p284 = scmp.lt.s32.totalorder %s281, 1
        %s285 = scalar_select %p284, %s281, 1
        %s286 = smul.addr %s283, 2
        %s287 = sadd.s32 %s285, %s286
        %s288 = smul.addr %s287, 4
        %s289 = scalar_lea.vmem %s6, %s288
        %s290 = smul.u32 2, %s21
      $region44: #{gruunet_forward.41} parent=31 // pred_fallthru
        _
    $region32: #{gruunet_forward.41} parent=5 // pred_fallthru
      _
    %p291 = scmp.le.s32.totalorder 1, %s13
    %p292 = scmp.lt.s32.totalorder %s13, 3
    %p293 = pnand %p291, %p292
    %p294 = pneg %p293
    // Predicated region
    $region45: #{gruunet_forward.41} parent=5 // pred_check
      _
    $region46: #{gruunet_forward.41} parent=5 // pred_check_branch
      %296 = sbr.rel (%p293) target = $region48
    $region47: #{gruunet_forward.41} parent=5 // pred_region
      %s297 = ssub.s32 %s13, 1
      %s298 = smul.u32 2, %s23
      %p299 = scmp.lt.s32.totalorder %s22, 1
      %s300 = scalar_select %p299, %s22, 1
      %p301 = scmp.lt.s32.totalorder %s298, 1
      %s302 = scalar_select %p301, %s298, 1
      %s303 = smul.addr %s300, 12
      %s304 = sadd.s32 %s302, %s303
      %s305 = smul.addr %s304, 8
      %s306 = scalar_lea.vmem %s0, %s305
      %p307 = pneg %p53
      %p308 = pneg %p50
      %p309 = pneg %p74
      %p310 = pneg %p71
      %p311 = pneg %p95
      %p312 = pneg %p92
      %s313 = smul.u32 2, %s23
      %p314 = scmp.lt.s32.totalorder %s22, 1
      %s315 = scalar_select %p314, %s22, 1
      %p316 = scmp.lt.s32.totalorder %s313, 1
      %s317 = scalar_select %p316, %s313, 1
      %s318 = smul.addr %s315, 10
      %s319 = sadd.s32 %s317, %s318
      %s320 = smul.addr %s319, 8
      %s321 = scalar_lea.vmem %s3, %s320
      %p322 = pneg %p123
      %p323 = pneg %p120
      %p324 = pneg %p144
      %p325 = pneg %p141
      %p326 = pneg %p165
      %p327 = pneg %p162
      %s328 = smul.u32 2, %s23
      %p329 = scmp.lt.s32.totalorder %s22, 1
      %s330 = scalar_select %p329, %s22, 1
      %p331 = scmp.lt.s32.totalorder %s328, 1
      %s332 = scalar_select %p331, %s328, 1
      %s333 = smul.addr %s330, 2
      %s334 = sadd.s32 %s332, %s333
      %s335 = smul.addr %s334, 4
      %s336 = scalar_lea.vmem %s6, %s335
      %p337 = pneg %p193
      %p338 = pneg %p190
      %p339 = pneg %p221
      %p340 = pneg %p218
      %s341 = smul.u32 2, %s23
      %p342 = scmp.lt.s32.totalorder %s22, 1
      %s343 = scalar_select %p342, %s22, 1
      %p344 = scmp.lt.s32.totalorder %s341, 1
      %s345 = scalar_select %p344, %s341, 1
      %s346 = smul.addr %s343, 2
      %s347 = sadd.s32 %s345, %s346
      %s348 = smul.addr %s347, 4
      %s349 = scalar_lea.vmem %s7, %s348
      %s350 = smul.u32 2, %s23
      %p351 = scmp.lt.s32.totalorder %s22, 1
      %s352 = scalar_select %p351, %s22, 1
      %p353 = scmp.lt.s32.totalorder %s350, 1
      %s354 = scalar_select %p353, %s350, 1
      %s355 = smul.addr %s352, 12
      %s356 = sadd.s32 %s354, %s355
      %s357 = smul.addr %s356, 8
      %s358 = scalar_lea.vmem %s0, %s357
      %s359 = smul.u32 2, %s23
      %s360 = smul.u32 2, %s23
      %p361 = scmp.lt.s32.totalorder %s22, 1
      %s362 = scalar_select %p361, %s22, 1
      %p363 = scmp.lt.s32.totalorder %s360, 1
      %s364 = scalar_select %p363, %s360, 1
      %s365 = smul.addr %s362, 10
      %s366 = sadd.s32 %s364, %s365
      %s367 = smul.addr %s366, 8
      %s368 = scalar_lea.vmem %s3, %s367
      %s369 = smul.u32 2, %s23
      %s370 = smul.u32 2, %s23
      %p371 = scmp.lt.s32.totalorder %s22, 1
      %s372 = scalar_select %p371, %s22, 1
      %p373 = scmp.lt.s32.totalorder %s370, 1
      %s374 = scalar_select %p373, %s370, 1
      %s375 = smul.addr %s372, 2
      %s376 = sadd.s32 %s374, %s375
      %s377 = smul.addr %s376, 4
      %s378 = scalar_lea.vmem %s6, %s377
      %s379 = smul.u32 2, %s23
      %s380 = smul.u32 2, %s23
      %p381 = scmp.lt.s32.totalorder %s22, 1
      %s382 = scalar_select %p381, %s22, 1
      %p383 = scmp.lt.s32.totalorder %s380, 1
      %s384 = scalar_select %p383, %s380, 1
      %s385 = smul.addr %s382, 2
      %s386 = sadd.s32 %s384, %s385
      %s387 = smul.addr %s386, 4
      %s388 = scalar_lea.vmem %s7, %s387
      %s389 = smul.u32 2, %s23
      %v390 = vld [vmem:[%s1] sm:$0xf]
      %v391 = vld [vmem:[%s358] sm:$0xff]
      %v392 = vld [vmem:[%s358 + $0x8] sm:$0xff]
      %v393 = vld [vmem:[%s358 + $0x10] sm:$0xff]
      %v394 = vld [vmem:[%s358 + $0x18] sm:$0xff]
      %v395 = vld [vmem:[%s358 + $0x20] sm:$0xff]
      %v396 = vld [vmem:[%s358 + $0x28] sm:$0xff]
      %v397 = vld [vmem:[%s358 + $0x30] sm:$0xff]
      %v398 = vld [vmem:[%s358 + $0x38] sm:$0xff]
      %v399 = vld [vmem:[%s358 + $0x40] sm:$0xff]
      %v400 = vld [vmem:[%s358 + $0x48] sm:$0xff]
      %v401 = vld [vmem:[%s358 + $0x50] sm:$0x1f]
      %v402 = vld [vmem:[%s358 + $0x58] sm:$0x1f]
      %v403 = vld [vmem:[%s2] sm:$0xf]
      %405 = vset.pattern.permute.xlu0 0
      %406 = vperm.xlu0 %405, %v403
      %v407 = vpop.permute.xlu0 %406
      %vm409 = vcmask 367616
      %v411 = vsel %vm409, %v390, 0
      %vm413 = vcmask 1044480
      %v415 = vsel %vm413, %v401, 0
      %v418 = vsel %vm413, %v402, 0
      %420 = vmatprep.subr.mxu0 %v392
      %421 = vmatpush1.msra.mxu0 %v391
      %422 = vmatprep.subr.mxu0 %v394
      %423 = vmatpush1.msra.mxu0 %v393
      %424 = vmatprep.subr.mxu0 %v396
      %425 = vmatpush1.msra.mxu0 %v395
      %426 = vmatprep.subr.mxu0 %v398
      %427 = vmatpush1.msra.mxu0 %v397
      %428 = vmatprep.subr.mxu0 %v400
      %429 = vmatpush1.msra.mxu0 %v399
      %430 = vmatprep.subr.mxu0 %v418
      %431 = vmatpush1.msra.mxu0 %v415
      %432 = vmatprep.subr.mxu0 0.0
      %433 = vmatpush1.msra.mxu0 0.0
      %434 = vmatprep.subr.mxu0 0.0
      %435 = vmatpush1.msra.mxu0 0.0
      %436 = vmatprep.subr.mxu0 0.0
      %437 = vmatpush1.msra.mxu0 0.0
      %438 = vmatprep.subr.mxu0 0.0
      %439 = vmatpush1.msra.mxu0 0.0
      %440 = vmatprep.subr.mxu0 0.0
      %441 = vmatpush1.msra.mxu0 0.0
      %442 = vmatprep.subr.mxu0 0.0
      %443 = vmatpush1.msra.mxu0 0.0
      %444 = vmatprep.subr.mxu0 0.0
      %445 = vmatpush1.msra.mxu0 0.0
      %446 = vmatprep.subr.mxu0 0.0
      %447 = vmatpush1.msra.mxu0 0.0
      %448 = vmatprep.subr.mxu0 0.0
      %449 = vmatpush1.msra.mxu0 0.0
      %450 = vmatprep.subr.mxu0 0.0
      %451 = vmatpush1.msra.mxu0 0.0
      %452 = vmatprep.subr.mxu0 0.0
      %453 = vmatpush1.msra.mxu0 0.0
      %454 = vmatprep.subr.mxu0 0.0
      %455 = vmatpush1.msra.mxu0 0.0
      %456 = vmatprep.subr.mxu0 0.0
      %457 = vmatpush1.msra.mxu0 0.0
      %458 = vmatprep.subr.mxu0 0.0
      %459 = vmatpush1.msra.mxu0 0.0
      %460 = vmatprep.subr.mxu0 0.0
      %461 = vmatpush1.msra.mxu0 0.0
      %462 = vmatprep.subr.mxu0 0.0
      %463 = vmatpush1.msra.mxu0 0.0
      %464 = vmatprep.subr.mxu0 0.0
      %465 = vmatpush1.msra.mxu0 0.0
      %466 = vmatprep.subr.mxu0 0.0
      %467 = vmatpush1.msra.mxu0 0.0
      %468 = vmatprep.subr.mxu0 0.0
      %469 = vmatpush1.msra.mxu0 0.0
      %470 = vmatprep.subr.mxu0 0.0
      %471 = vmatpush1.msra.mxu0 0.0
      %472 = vmatprep.subr.mxu0 0.0
      %473 = vmatpush1.msra.mxu0 0.0
      %474 = vmatprep.subr.mxu0 0.0
      %475 = vmatpush1.msra.mxu0 0.0
      %476 = vmatprep.subr.mxu0 0.0
      %477 = vmatpush1.msra.mxu0 0.0
      %478 = vmatprep.subr.mxu0 0.0
      %479 = vmatpush1.msra.mxu0 0.0
      %480 = vmatprep.subr.mxu0 0.0
      %481 = vmatpush1.msra.mxu0 0.0
      %482 = vmatprep.subr.mxu0 0.0
      %483 = vmatpush1.msra.mxu0 0.0
      %484 = vmatprep.mubr.f32.mxu0 0.0
      %485 = vmatmul.mubr.f32.gmra.mrb[0].mxu0 %v411
      %v486 = vpop.f32.mrb[0].mxu0
      %v487 = vadd.f32 %v407, %v486
      %v488 = vpop.f32.mrb[0].mxu0
      %v489 = vadd.f32 %v407, %v488
      %490 = vdwg.mxu0
      %v491 = vxor.u32 %v487, 2147483648
      %v492 = vxor.u32 %v489, 2147483648
      %v493 = vmul.f32 %v491, 1.442695
      %v494 = vpow.pop %v493
      %v495 = vmul.f32 %v492, 1.442695
      %v496 = vpow.pop %v495
      %v497 = vadd.f32 %v494, 1.0
      %v498 = vadd.f32 %v496, 1.0
      %v499 = vrcp.pop %v497
      %v500 = vmul.f32 1.0, %v499
      %v501 = vrcp.pop %v498
      %v502 = vmul.f32 1.0, %v501
      %v503 = vld [vmem:[%s4] sm:$0xf]
      %v504 = vld [vmem:[%s368] sm:$0xff]
      %v505 = vld [vmem:[%s368 + $0x8] sm:$0xff]
      %v506 = vld [vmem:[%s368 + $0x10] sm:$0xff]
      %v507 = vld [vmem:[%s368 + $0x18] sm:$0xff]
      %v508 = vld [vmem:[%s368 + $0x20] sm:$0xff]
      %v509 = vld [vmem:[%s368 + $0x28] sm:$0xff]
      %v510 = vld [vmem:[%s368 + $0x30] sm:$0xff]
      %v511 = vld [vmem:[%s368 + $0x38] sm:$0xff]
      %v512 = vld [vmem:[%s368 + $0x40] sm:$0xf]
      %v513 = vld [vmem:[%s368 + $0x48] sm:$0xf]
      %v514 = vld [vmem:[%s5] sm:$0xf]
      %516 = vset.pattern.permute.xlu0 0
      %517 = vperm.xlu0 %516, %v514
      %v518 = vpop.permute.xlu0 %517
      %vm520 = vcmask 293888
      %v522 = vsel %vm520, %v503, 0
      %vm524 = vcmask 1043456
      %v526 = vsel %vm524, %v512, 0
      %v529 = vsel %vm524, %v513, 0
      %531 = vmatprep.subr.mxu0 %v505
      %532 = vmatpush1.msra.mxu0 %v504
      %533 = vmatprep.subr.mxu0 %v507
      %534 = vmatpush1.msra.mxu0 %v506
      %535 = vmatprep.subr.mxu0 %v509
      %536 = vmatpush1.msra.mxu0 %v508
      %537 = vmatprep.subr.mxu0 %v511
      %538 = vmatpush1.msra.mxu0 %v510
      %539 = vmatprep.subr.mxu0 %v529
      %540 = vmatpush1.msra.mxu0 %v526
      %541 = vmatprep.subr.mxu0 0.0
      %542 = vmatpush1.msra.mxu0 0.0
      %543 = vmatprep.subr.mxu0 0.0
      %544 = vmatpush1.msra.mxu0 0.0
      %545 = vmatprep.subr.mxu0 0.0
      %546 = vmatpush1.msra.mxu0 0.0
      %547 = vmatprep.subr.mxu0 0.0
      %548 = vmatpush1.msra.mxu0 0.0
      %549 = vmatprep.subr.mxu0 0.0
      %550 = vmatpush1.msra.mxu0 0.0
      %551 = vmatprep.subr.mxu0 0.0
      %552 = vmatpush1.msra.mxu0 0.0
      %553 = vmatprep.subr.mxu0 0.0
      %554 = vmatpush1.msra.mxu0 0.0
      %555 = vmatprep.subr.mxu0 0.0
      %556 = vmatpush1.msra.mxu0 0.0
      %557 = vmatprep.subr.mxu0 0.0
      %558 = vmatpush1.msra.mxu0 0.0
      %559 = vmatprep.subr.mxu0 0.0
      %560 = vmatpush1.msra.mxu0 0.0
      %561 = vmatprep.subr.mxu0 0.0
      %562 = vmatpush1.msra.mxu0 0.0
      %563 = vmatprep.subr.mxu0 0.0
      %564 = vmatpush1.msra.mxu0 0.0
      %565 = vmatprep.subr.mxu0 0.0
      %566 = vmatpush1.msra.mxu0 0.0
      %567 = vmatprep.subr.mxu0 0.0
      %568 = vmatpush1.msra.mxu0 0.0
      %569 = vmatprep.subr.mxu0 0.0
      %570 = vmatpush1.msra.mxu0 0.0
      %571 = vmatprep.subr.mxu0 0.0
      %572 = vmatpush1.msra.mxu0 0.0
      %573 = vmatprep.subr.mxu0 0.0
      %574 = vmatpush1.msra.mxu0 0.0
      %575 = vmatprep.subr.mxu0 0.0
      %576 = vmatpush1.msra.mxu0 0.0
      %577 = vmatprep.subr.mxu0 0.0
      %578 = vmatpush1.msra.mxu0 0.0
      %579 = vmatprep.subr.mxu0 0.0
      %580 = vmatpush1.msra.mxu0 0.0
      %581 = vmatprep.subr.mxu0 0.0
      %582 = vmatpush1.msra.mxu0 0.0
      %583 = vmatprep.subr.mxu0 0.0
      %584 = vmatpush1.msra.mxu0 0.0
      %585 = vmatprep.subr.mxu0 0.0
      %586 = vmatpush1.msra.mxu0 0.0
      %587 = vmatprep.subr.mxu0 0.0
      %588 = vmatpush1.msra.mxu0 0.0
      %589 = vmatprep.subr.mxu0 0.0
      %590 = vmatpush1.msra.mxu0 0.0
      %591 = vmatprep.subr.mxu0 0.0
      %592 = vmatpush1.msra.mxu0 0.0
      %593 = vmatprep.subr.mxu0 0.0
      %594 = vmatpush1.msra.mxu0 0.0
      %595 = vmatprep.mubr.f32.mxu0 0.0
      %596 = vmatmul.mubr.f32.gmra.mrb[0].mxu0 %v522
      %v597 = vpop.f32.mrb[0].mxu0
      %v598 = vadd.f32 %v518, %v597
      %v599 = vpop.f32.mrb[0].mxu0
      %v600 = vadd.f32 %v518, %v599
      %601 = vdwg.mxu0
      %vm602 = vcmp.ge.f32.partialorder %v598, 0.0
      %vm603 = vcmp.ge.f32.partialorder %v600, 0.0
      %v604 = vadd.f32 %v598, 0.5
      %v605 = vadd.f32 %v600, 0.5
      %v606 = vxor.u32 %v598, 2147483648
      %v607 = vxor.u32 %v600, 2147483648
      %v608 = vmul.f32 %v606, 1.442695
      %v609 = vpow.pop %v608
      %v610 = vmul.f32 %v607, 1.442695
      %v611 = vpow.pop %v610
      %v612 = vadd.f32 %v609, 1.0
      %v613 = vadd.f32 %v611, 1.0
      %v614 = vrcp.pop %v612
      %v615 = vmul.f32 1.0, %v614
      %v616 = vrcp.pop %v613
      %v617 = vmul.f32 1.0, %v616
      %v618 = vsel %vm602, %v604, %v615
      %v619 = vsel %vm603, %v605, %v617
      %v620 = vld [vmem:[%s378] sm:$0xff]
      %v622 = vcombine.high %v620, %v620
      %v624 = vsub.f32 %v618, %v620
      %v625 = vsub.f32 %v619, %v622
      %v626 = vmul.f32 %v500, %v624
      %v627 = vmul.f32 %v502, %v625
      %v630 = vcombine.low %v626, %v627
      %v632 = vadd.f32 %v620, %v630
      %633 = vst [vmem:[%s388] sm:$0xff] %v632
      %s634 = smul.u32 2, %s23
      %p635 = scmp.lt.s32.totalorder %s22, 1
      %s636 = scalar_select %p635, %s22, 1
      %p637 = scmp.lt.s32.totalorder %s634, 1
      %s638 = scalar_select %p637, %s634, 1
      %s639 = smul.addr %s636, 2
      %s640 = sadd.s32 %s638, %s639
      %s641 = smul.addr %s640, 4
      %s642 = scalar_lea.vmem %s7, %s641
      // Predicated region
      $region49: #{gruunet_forward.41} parent=47 // pred_check
        %p643 = pneg %p218
      $region50: #{gruunet_forward.41} parent=47 // pred_check_branch
        %645 = sbr.rel (%p643) target = $region52
      $region51: #{gruunet_forward.41} parent=47 // pred_region
        %s646 = smul.u32 2, %s23
      $region52: #{gruunet_forward.41} parent=47 // pred_fallthru
        _
    $region48: #{gruunet_forward.41} parent=5 // pred_fallthru
      _
    %p647 = scmp.le.s32.totalorder 2, %s13
    // Predicated region
    $region53: #{gruunet_forward.41} parent=5 // pred_check
      %p648 = pneg %p647
    $region54: #{gruunet_forward.41} parent=5 // pred_check_branch
      %650 = sbr.rel (%p648) target = $region56
    $region55: #{gruunet_forward.41} parent=5 // pred_region
      %s651 = ssub.s32 %s13, 2
      // Predicated region
      $region57: #{gruunet_forward.41} parent=55 // pred_check
        %p652 = pneg %p224
      $region58: #{gruunet_forward.41} parent=55 // pred_check_branch
        %654 = sbr.rel (%p652) target = $region60
      $region59: #{gruunet_forward.41} parent=55 // pred_region
        %s655 = smul.u32 2, %s25
        %p656 = scmp.lt.s32.totalorder %s24, 1
        %s657 = scalar_select %p656, %s24, 1
        %p658 = scmp.lt.s32.totalorder %s655, 1
        %s659 = scalar_select %p658, %s655, 1
        %s660 = smul.addr %s657, 2
        %s661 = sadd.s32 %s659, %s660
        %s662 = smul.addr %s661, 4
        %s663 = scalar_lea.vmem %s7, %s662
      $region60: #{gruunet_forward.41} parent=55 // pred_fallthru
        _
    $region56: #{gruunet_forward.41} parent=5 // pred_fallthru
      _
  $region6: #{gruunet_forward.41} parent=0 // loop_footer
    %s17 = sadd.s32 1, %s13
  $region7: #{gruunet_forward.41} parent=0 // loop_footer_branch
    %12 = sbr.rel target = $region3
  $region8: #{gruunet_forward.41} parent=0 // loop_exit
    _

// kernel: gruunet_forward.42
$region0: #{gruunet_forward.42}
  #allocation0 [shape = 'u32[]', space=smem, size = 0x4, offset = 0x4, fixed_abs, tag = 'smem constant byte address 0x4 - core index']
  #allocation1 [shape = 'u32[144,128]{1,0:T(1,128)}', space=vmem, size = 0x12000, scoped, tag = 'internal scratch']
  %s0 = inlined_call_operand.vmem [shape: f32[2,36,64], index: 0, kind: input, shape index: {}]
  %s1 = inlined_call_operand.vmem [shape: f32[8,36], index: 1, kind: input, shape index: {}]
  %s2 = inlined_call_operand.vmem [shape: f32[2,8,64], index: 2, kind: output, shape index: {}]
  %s3 = sld [smem:[#allocation0]]
  $region41: #{gruunet_forward.42} parent=0
    _
  %s5 = ssub.s32 1, %s3
  %s6 = scalar_select 0, %s5, %s3
  loop: start=0, step=1, limit=4
  $region2: #{gruunet_forward.42} parent=0 // loop_pre_header
    _
  $region3: #{gruunet_forward.42} parent=0 // loop_header
    %s8 = sphi 0, %s12
    %p9 = scmp.ge.s32.totalorder %s8, 4
    %s15 = sphi 0, %s27
    %s16 = sphi 0, %s23
    %s17 = sphi 0, %s15
    %s18 = sphi 0, %s16
    %s19 = sphi 0, %s17
    %s20 = sphi 0, %s18
    %s32 = sphi 0, %s34
    %s35 = sphi 0, %s32
    %s36 = sphi 0, %s35
    %s52 = sphi 0, %s36
    %s56 = sphi 0, %s56
    %s58 = sphi 0, %s56
    %s59 = sphi 0, %s58
    %s73 = sphi 0, %s59
    %s81 = sphi 0, %s83
    %s84 = sphi 0, %s81
    %s85 = sphi 0, %s84
    %s101 = sphi 0, %s85
  $region4: #{gruunet_forward.42} parent=0 // loop_header_branch
    %11 = sbr.rel (%p9) target = $region8
  $region5: #{gruunet_forward.42} parent=0 // loop_body
    %s13 = ssub.s32 %s8, 1
    %s14 = ssub.s32 %s8, 2
    %s21 = sadd.s32 1, %s16
    %p22 = scmp.ge.s32.totalorder %s21, 1
    %s23 = scalar_select %p22, 0, %s21
    %s24 = sadd.s32 1, %s15
    %s25 = scalar_select %p22, %s24, %s15
    %p26 = scmp.ge.s32.totalorder %s25, 2
    %s27 = scalar_select %p26, 0, %s25
    %s28 = ssub.s32 %s15, %s27
    %s29 = ssub.s32 %s16, %s23
    %s30 = sor.u32 %s28, %s29
    %p31 = scmp.eq.s32.totalorder %s30, 0
    %s33 = sadd.s32 %s32, 1
    %s34 = scalar_select %p31, %s32, %s33
    %p37 = pneg %p31
    %p38 = scmp.eq.s32.totalorder %s8, 1
    %p39 = por %p37, %p38
    %p40 = scmp.ne.s32.totalorder %s32, %s35
    %p41 = scmp.eq.s32.totalorder %s8, 0
    %p42 = por %p40, %p41
    %p43 = scmp.ne.s32.totalorder %s32, %s35
    %p44 = scmp.eq.s32.totalorder %s13, 1
    %p45 = por %p43, %p44
    %p46 = scmp.ne.s32.totalorder %s35, %s36
    %p47 = scmp.eq.s32.totalorder %s13, 0
    %p48 = por %p46, %p47
    %p49 = scmp.ne.s32.totalorder %s35, %s36
    %p50 = scmp.eq.s32.totalorder %s14, 1
    %p51 = por %p49, %p50
    %p53 = scmp.ne.s32.totalorder %s36, %s52
    %p54 = scmp.eq.s32.totalorder %s14, 0
    %p55 = por %p53, %p54
    %s57 = sadd.s32 %s56, 1
    %p60 = scmp.eq.s32.totalorder %s8, 1
    %p61 = scmp.ne.s32.totalorder %s56, %s58
    %p62 = scmp.eq.s32.totalorder %s8, 0
    %p63 = por %p61, %p62
    %p64 = scmp.ne.s32.totalorder %s56, %s58
    %p65 = scmp.eq.s32.totalorder %s13, 1
    %p66 = por %p64, %p65
    %p67 = scmp.ne.s32.totalorder %s58, %s59
    %p68 = scmp.eq.s32.totalorder %s13, 0
    %p69 = por %p67, %p68
    %p70 = scmp.ne.s32.totalorder %s58, %s59
    %p71 = scmp.eq.s32.totalorder %s14, 1
    %p72 = por %p70, %p71
    %p74 = scmp.ne.s32.totalorder %s59, %s73
    %p75 = scmp.eq.s32.totalorder %s14, 0
    %p76 = por %p74, %p75
    %s77 = ssub.s32 %s15, %s27
    %s78 = ssub.s32 %s16, %s23
    %s79 = sor.u32 %s77, %s78
    %p80 = scmp.eq.s32.totalorder %s79, 0
    %s82 = sadd.s32 %s81, 1
    %s83 = scalar_select %p80, %s81, %s82
    %p86 = pneg %p80
    %p87 = scmp.eq.s32.totalorder %s8, 1
    %p88 = por %p86, %p87
    %p89 = scmp.ne.s32.totalorder %s81, %s84
    %p90 = scmp.eq.s32.totalorder %s8, 0
    %p91 = por %p89, %p90
    %p92 = scmp.ne.s32.totalorder %s81, %s84
    %p93 = scmp.eq.s32.totalorder %s13, 1
    %p94 = por %p92, %p93
    %p95 = scmp.ne.s32.totalorder %s84, %s85
    %p96 = scmp.eq.s32.totalorder %s13, 0
    %p97 = por %p95, %p96
    %p98 = scmp.ne.s32.totalorder %s84, %s85
    %p99 = scmp.eq.s32.totalorder %s14, 1
    %p100 = por %p98, %p99
    %p102 = scmp.ne.s32.totalorder %s85, %s101
    %p103 = scmp.eq.s32.totalorder %s14, 0
    %p104 = por %p102, %p103
    %p105 = scmp.le.s32.totalorder 1, %s8
    %p106 = scmp.lt.s32.totalorder %s8, 3
    %p107 = pnand %p105, %p106
    %p108 = pneg %p107
    // Predicated region
    $region9: #{gruunet_forward.42} parent=5 // pred_check
      _
    $region10: #{gruunet_forward.42} parent=5 // pred_check_branch
      %110 = sbr.rel (%p107) target = $region12
    $region11: #{gruunet_forward.42} parent=5 // pred_region
      %s111 = ssub.s32 %s8, 1
      // Predicated region
      $region13: #{gruunet_forward.42} parent=11 // pred_check
        %p112 = pneg %p69
      $region14: #{gruunet_forward.42} parent=11 // pred_check_branch
        %114 = sbr.rel (%p112) target = $region16
      $region15: #{gruunet_forward.42} parent=11 // pred_region
        _
      $region16: #{gruunet_forward.42} parent=11 // pred_fallthru
        _
    $region12: #{gruunet_forward.42} parent=5 // pred_fallthru
      _
    %p115 = scmp.lt.s32.totalorder %s8, 2
    // Predicated region
    $region17: #{gruunet_forward.42} parent=5 // pred_check
      %p116 = pneg %p115
    $region18: #{gruunet_forward.42} parent=5 // pred_check_branch
      %118 = sbr.rel (%p116) target = $region20
    $region19: #{gruunet_forward.42} parent=5 // pred_region
      // Predicated region
      $region21: #{gruunet_forward.42} parent=19 // pred_check
        %p119 = pneg %p42
      $region22: #{gruunet_forward.42} parent=19 // pred_check_branch
        %121 = sbr.rel (%p119) target = $region24
      $region23: #{gruunet_forward.42} parent=19 // pred_region
        %p122 = scmp.lt.s32.totalorder %s15, 1
        %s123 = scalar_select %p122, %s15, 1
        %p124 = scmp.lt.s32.totalorder %s16, 0
        %s125 = scalar_select %p124, %s16, 0
        %s126 = smul.addr %s123, 5
        %s127 = sadd.s32 %s125, %s126
        %s128 = smul.addr %s127, 8
        %s129 = scalar_lea.vmem %s0, %s128
      $region24: #{gruunet_forward.42} parent=19 // pred_fallthru
        _
    $region20: #{gruunet_forward.42} parent=5 // pred_fallthru
      _
    %p130 = scmp.le.s32.totalorder 1, %s8
    %p131 = scmp.lt.s32.totalorder %s8, 3
    %p132 = pnand %p130, %p131
    %p133 = pneg %p132
    // Predicated region
    $region25: #{gruunet_forward.42} parent=5 // pred_check
      _
    $region26: #{gruunet_forward.42} parent=5 // pred_check_branch
      %135 = sbr.rel (%p132) target = $region28
    $region27: #{gruunet_forward.42} parent=5 // pred_region
      %s136 = ssub.s32 %s8, 1
      %p137 = scmp.lt.s32.totalorder %s17, 1
      %s138 = scalar_select %p137, %s17, 1
      %p139 = scmp.lt.s32.totalorder %s18, 0
      %s140 = scalar_select %p139, %s18, 0
      %s141 = smul.addr %s138, 5
      %s142 = sadd.s32 %s140, %s141
      %s143 = smul.addr %s142, 8
      %s144 = scalar_lea.vmem %s0, %s143
      %p145 = pneg %p48
      %p146 = pneg %p45
      %p147 = pneg %p69
      %p148 = pneg %p66
      %p149 = pneg %p97
      %p150 = pneg %p94
      %p151 = scmp.lt.s32.totalorder %s17, 1
      %s152 = scalar_select %p151, %s17, 1
      %p153 = scmp.lt.s32.totalorder %s18, 0
      %s154 = scalar_select %p153, %s18, 0
      %s155 = sadd.s32 %s154, %s152
      %s156 = smul.addr %s155, 8
      %s157 = scalar_lea.vmem %s2, %s156
      %p158 = scmp.lt.s32.totalorder %s17, 1
      %s159 = scalar_select %p158, %s17, 1
      %p160 = scmp.lt.s32.totalorder %s18, 0
      %s161 = scalar_select %p160, %s18, 0
      %s162 = smul.addr %s159, 5
      %s163 = sadd.s32 %s161, %s162
      %s164 = smul.addr %s163, 8
      %s165 = scalar_lea.vmem %s0, %s164
      %p166 = scmp.lt.s32.totalorder %s17, 1
      %s167 = scalar_select %p166, %s17, 1
      %p168 = scmp.lt.s32.totalorder %s18, 0
      %s169 = scalar_select %p168, %s18, 0
      %s170 = sadd.s32 %s169, %s167
      %s171 = smul.addr %s170, 8
      %s172 = scalar_lea.vmem %s2, %s171
      %v173 = vld [vmem:[%s1] sm:$0xff]
      %v174 = vld [vmem:[%s165] sm:$0xff]
      %v175 = vld [vmem:[%s165 + $0x8] sm:$0xff]
      %v176 = vld [vmem:[%s165 + $0x10] sm:$0xff]
      %v177 = vld [vmem:[%s165 + $0x18] sm:$0xff]
      %v178 = vld [vmem:[%s165 + $0x20] sm:$0xf]
      %vm179 = vcmask 293888
      %v181 = vsel %vm179, %v173, 0
      %vm183 = vcmask 1043456
      %v185 = vsel %vm183, %v178, 0
      %187 = vmatprep.subr.mxu0 0.0
      %188 = vmatpush1.msra.mxu0 %v174
      %189 = vmatprep.subr.mxu0 0.0
      %190 = vmatpush1.msra.mxu0 %v175
      %191 = vmatprep.subr.mxu0 0.0
      %192 = vmatpush1.msra.mxu0 %v176
      %193 = vmatprep.subr.mxu0 0.0
      %194 = vmatpush1.msra.mxu0 %v177
      %195 = vmatprep.subr.mxu0 0.0
      %196 = vmatpush1.msra.mxu0 %v185
      %197 = vmatprep.subr.mxu0 0.0
      %198 = vmatpush1.msra.mxu0 0.0
      %199 = vmatprep.subr.mxu0 0.0
      %200 = vmatpush1.msra.mxu0 0.0
      %201 = vmatprep.subr.mxu0 0.0
      %202 = vmatpush1.msra.mxu0 0.0
      %203 = vmatprep.subr.mxu0 0.0
      %204 = vmatpush1.msra.mxu0 0.0
      %205 = vmatprep.subr.mxu0 0.0
      %206 = vmatpush1.msra.mxu0 0.0
      %207 = vmatprep.subr.mxu0 0.0
      %208 = vmatpush1.msra.mxu0 0.0
      %209 = vmatprep.subr.mxu0 0.0
      %210 = vmatpush1.msra.mxu0 0.0
      %211 = vmatprep.subr.mxu0 0.0
      %212 = vmatpush1.msra.mxu0 0.0
      %213 = vmatprep.subr.mxu0 0.0
      %214 = vmatpush1.msra.mxu0 0.0
      %215 = vmatprep.subr.mxu0 0.0
      %216 = vmatpush1.msra.mxu0 0.0
      %217 = vmatprep.subr.mxu0 0.0
      %218 = vmatpush1.msra.mxu0 0.0
      %219 = vmatprep.subr.mxu0 0.0
      %220 = vmatpush1.msra.mxu0 0.0
      %221 = vmatprep.subr.mxu0 0.0
      %222 = vmatpush1.msra.mxu0 0.0
      %223 = vmatprep.subr.mxu0 0.0
      %224 = vmatpush1.msra.mxu0 0.0
      %225 = vmatprep.subr.mxu0 0.0
      %226 = vmatpush1.msra.mxu0 0.0
      %227 = vmatprep.subr.mxu0 0.0
      %228 = vmatpush1.msra.mxu0 0.0
      %229 = vmatprep.subr.mxu0 0.0
      %230 = vmatpush1.msra.mxu0 0.0
      %231 = vmatprep.subr.mxu0 0.0
      %232 = vmatpush1.msra.mxu0 0.0
      %233 = vmatprep.subr.mxu0 0.0
      %234 = vmatpush1.msra.mxu0 0.0
      %235 = vmatprep.subr.mxu0 0.0
      %236 = vmatpush1.msra.mxu0 0.0
      %237 = vmatprep.subr.mxu0 0.0
      %238 = vmatpush1.msra.mxu0 0.0
      %239 = vmatprep.subr.mxu0 0.0
      %240 = vmatpush1.msra.mxu0 0.0
      %241 = vmatprep.subr.mxu0 0.0
      %242 = vmatpush1.msra.mxu0 0.0
      %243 = vmatprep.subr.mxu0 0.0
      %244 = vmatpush1.msra.mxu0 0.0
      %245 = vmatprep.subr.mxu0 0.0
      %246 = vmatpush1.msra.mxu0 0.0
      %247 = vmatprep.subr.mxu0 0.0
      %248 = vmatpush1.msra.mxu0 0.0
      %249 = vmatprep.subr.mxu0 0.0
      %250 = vmatpush1.msra.mxu0 0.0
      %251 = vmatprep.mubr.f32.mxu0 0.0
      %252 = vmatmul.mubr.f32.gmra.mrb[0].mxu0 %v181
      %v253 = vpop.f32.mrb[0].mxu0
      %v254 = vadd.f32 0.0, %v253
      %v255 = vpop.f32.mrb[0].mxu0
      %256 = vdwg.mxu0
      %v257 = vmax.f32 %v254, 0.0
      %vm258 = vcmask 523264
      %259 = vst.msk [vmem:[%s172] sm:$0xff] %vm258, %v257
      %p260 = scmp.lt.s32.totalorder %s17, 1
      %s261 = scalar_select %p260, %s17, 1
      %p262 = scmp.lt.s32.totalorder %s18, 0
      %s263 = scalar_select %p262, %s18, 0
      %s264 = sadd.s32 %s263, %s261
      %s265 = smul.addr %s264, 8
      %s266 = scalar_lea.vmem %s2, %s265
      // Predicated region
      $region29: #{gruunet_forward.42} parent=27 // pred_check
        %p267 = pneg %p94
      $region30: #{gruunet_forward.42} parent=27 // pred_check_branch
        %269 = sbr.rel (%p267) target = $region32
      $region31: #{gruunet_forward.42} parent=27 // pred_region
        _
      $region32: #{gruunet_forward.42} parent=27 // pred_fallthru
        _
    $region28: #{gruunet_forward.42} parent=5 // pred_fallthru
      _
    %p270 = scmp.le.s32.totalorder 2, %s8
    // Predicated region
    $region33: #{gruunet_forward.42} parent=5 // pred_check
      %p271 = pneg %p270
    $region34: #{gruunet_forward.42} parent=5 // pred_check_branch
      %273 = sbr.rel (%p271) target = $region36
    $region35: #{gruunet_forward.42} parent=5 // pred_region
      %s274 = ssub.s32 %s8, 2
      // Predicated region
      $region37: #{gruunet_forward.42} parent=35 // pred_check
        %p275 = pneg %p100
      $region38: #{gruunet_forward.42} parent=35 // pred_check_branch
        %277 = sbr.rel (%p275) target = $region40
      $region39: #{gruunet_forward.42} parent=35 // pred_region
        %p278 = scmp.lt.s32.totalorder %s19, 1
        %s279 = scalar_select %p278, %s19, 1
        %p280 = scmp.lt.s32.totalorder %s20, 0
        %s281 = scalar_select %p280, %s20, 0
        %s282 = sadd.s32 %s281, %s279
        %s283 = smul.addr %s282, 8
        %s284 = scalar_lea.vmem %s2, %s283
      $region40: #{gruunet_forward.42} parent=35 // pred_fallthru
        _
    $region36: #{gruunet_forward.42} parent=5 // pred_fallthru
      _
  $region6: #{gruunet_forward.42} parent=0 // loop_footer
    %s12 = sadd.s32 1, %s8
  $region7: #{gruunet_forward.42} parent=0 // loop_footer_branch
    %7 = sbr.rel target = $region3
  $region8: #{gruunet_forward.42} parent=0 // loop_exit
    _

// kernel: gruunet_forward.43
$region0: #{gruunet_forward.43}
  #allocation0 [shape = 'u32[]', space=smem, size = 0x4, offset = 0x4, fixed_abs, tag = 'smem constant byte address 0x4 - core index']
  #allocation1 [shape = 'u32[144,128]{1,0:T(1,128)}', space=vmem, size = 0x12000, scoped, tag = 'internal scratch']
  %s0 = inlined_call_operand.vmem [shape: f32[2,8,64], index: 0, kind: input, shape index: {}]
  %s1 = inlined_call_operand.vmem [shape: f32[2,1,64], index: 1, kind: input, shape index: {}]
  %s2 = inlined_call_operand.vmem [shape: f32[8,1], index: 2, kind: input, shape index: {}]
  %s3 = inlined_call_operand.vmem [shape: f32[8,1], index: 3, kind: input, shape index: {}]
  %s4 = inlined_call_operand.vmem [shape: f32[2,8,64], index: 4, kind: output, shape index: {}]
  %s5 = sld [smem:[#allocation0]]
  $region49: #{gruunet_forward.43} parent=0
    _
  %s7 = ssub.s32 1, %s5
  %s8 = scalar_select 0, %s7, %s5
  loop: start=0, step=1, limit=4
  $region2: #{gruunet_forward.43} parent=0 // loop_pre_header
    _
  $region3: #{gruunet_forward.43} parent=0 // loop_header
    %s10 = sphi 0, %s14
    %p11 = scmp.ge.s32.totalorder %s10, 4
    %s17 = sphi 0, %s29
    %s18 = sphi 0, %s25
    %s19 = sphi 0, %s17
    %s20 = sphi 0, %s18
    %s21 = sphi 0, %s19
    %s22 = sphi 0, %s20
    %s34 = sphi 0, %s36
    %s37 = sphi 0, %s34
    %s38 = sphi 0, %s37
    %s54 = sphi 0, %s38
    %s62 = sphi 0, %s64
    %s65 = sphi 0, %s62
    %s66 = sphi 0, %s65
    %s82 = sphi 0, %s66
    %s86 = sphi 0, %s86
    %s88 = sphi 0, %s86
    %s89 = sphi 0, %s88
    %s103 = sphi 0, %s89
    %s107 = sphi 0, %s107
    %s109 = sphi 0, %s107
    %s110 = sphi 0, %s109
    %s124 = sphi 0, %s110
    %s132 = sphi 0, %s134
    %s135 = sphi 0, %s132
    %s136 = sphi 0, %s135
    %s152 = sphi 0, %s136
  $region4: #{gruunet_forward.43} parent=0 // loop_header_branch
    %13 = sbr.rel (%p11) target = $region8
  $region5: #{gruunet_forward.43} parent=0 // loop_body
    %s15 = ssub.s32 %s10, 1
    %s16 = ssub.s32 %s10, 2
    %s23 = sadd.s32 1, %s18
    %p24 = scmp.ge.s32.totalorder %s23, 1
    %s25 = scalar_select %p24, 0, %s23
    %s26 = sadd.s32 1, %s17
    %s27 = scalar_select %p24, %s26, %s17
    %p28 = scmp.ge.s32.totalorder %s27, 2
    %s29 = scalar_select %p28, 0, %s27
    %s30 = ssub.s32 %s17, %s29
    %s31 = ssub.s32 %s18, %s25
    %s32 = sor.u32 %s30, %s31
    %p33 = scmp.eq.s32.totalorder %s32, 0
    %s35 = sadd.s32 %s34, 1
    %s36 = scalar_select %p33, %s34, %s35
    %p39 = pneg %p33
    %p40 = scmp.eq.s32.totalorder %s10, 1
    %p41 = por %p39, %p40
    %p42 = scmp.ne.s32.totalorder %s34, %s37
    %p43 = scmp.eq.s32.totalorder %s10, 0
    %p44 = por %p42, %p43
    %p45 = scmp.ne.s32.totalorder %s34, %s37
    %p46 = scmp.eq.s32.totalorder %s15, 1
    %p47 = por %p45, %p46
    %p48 = scmp.ne.s32.totalorder %s37, %s38
    %p49 = scmp.eq.s32.totalorder %s15, 0
    %p50 = por %p48, %p49
    %p51 = scmp.ne.s32.totalorder %s37, %s38
    %p52 = scmp.eq.s32.totalorder %s16, 1
    %p53 = por %p51, %p52
    %p55 = scmp.ne.s32.totalorder %s38, %s54
    %p56 = scmp.eq.s32.totalorder %s16, 0
    %p57 = por %p55, %p56
    %s58 = ssub.s32 %s17, %s29
    %s59 = ssub.s32 %s18, %s25
    %s60 = sor.u32 %s58, %s59
    %p61 = scmp.eq.s32.totalorder %s60, 0
    %s63 = sadd.s32 %s62, 1
    %s64 = scalar_select %p61, %s62, %s63
    %p67 = pneg %p61
    %p68 = scmp.eq.s32.totalorder %s10, 1
    %p69 = por %p67, %p68
    %p70 = scmp.ne.s32.totalorder %s62, %s65
    %p71 = scmp.eq.s32.totalorder %s10, 0
    %p72 = por %p70, %p71
    %p73 = scmp.ne.s32.totalorder %s62, %s65
    %p74 = scmp.eq.s32.totalorder %s15, 1
    %p75 = por %p73, %p74
    %p76 = scmp.ne.s32.totalorder %s65, %s66
    %p77 = scmp.eq.s32.totalorder %s15, 0
    %p78 = por %p76, %p77
    %p79 = scmp.ne.s32.totalorder %s65, %s66
    %p80 = scmp.eq.s32.totalorder %s16, 1
    %p81 = por %p79, %p80
    %p83 = scmp.ne.s32.totalorder %s66, %s82
    %p84 = scmp.eq.s32.totalorder %s16, 0
    %p85 = por %p83, %p84
    %s87 = sadd.s32 %s86, 1
    %p90 = scmp.eq.s32.totalorder %s10, 1
    %p91 = scmp.ne.s32.totalorder %s86, %s88
    %p92 = scmp.eq.s32.totalorder %s10, 0
    %p93 = por %p91, %p92
    %p94 = scmp.ne.s32.totalorder %s86, %s88
    %p95 = scmp.eq.s32.totalorder %s15, 1
    %p96 = por %p94, %p95
    %p97 = scmp.ne.s32.totalorder %s88, %s89
    %p98 = scmp.eq.s32.totalorder %s15, 0
    %p99 = por %p97, %p98
    %p100 = scmp.ne.s32.totalorder %s88, %s89
    %p101 = scmp.eq.s32.totalorder %s16, 1
    %p102 = por %p100, %p101
    %p104 = scmp.ne.s32.totalorder %s89, %s103
    %p105 = scmp.eq.s32.totalorder %s16, 0
    %p106 = por %p104, %p105
    %s108 = sadd.s32 %s107, 1
    %p111 = scmp.eq.s32.totalorder %s10, 1
    %p112 = scmp.ne.s32.totalorder %s107, %s109
    %p113 = scmp.eq.s32.totalorder %s10, 0
    %p114 = por %p112, %p113
    %p115 = scmp.ne.s32.totalorder %s107, %s109
    %p116 = scmp.eq.s32.totalorder %s15, 1
    %p117 = por %p115, %p116
    %p118 = scmp.ne.s32.totalorder %s109, %s110
    %p119 = scmp.eq.s32.totalorder %s15, 0
    %p120 = por %p118, %p119
    %p121 = scmp.ne.s32.totalorder %s109, %s110
    %p122 = scmp.eq.s32.totalorder %s16, 1
    %p123 = por %p121, %p122
    %p125 = scmp.ne.s32.totalorder %s110, %s124
    %p126 = scmp.eq.s32.totalorder %s16, 0
    %p127 = por %p125, %p126
    %s128 = ssub.s32 %s17, %s29
    %s129 = ssub.s32 %s18, %s25
    %s130 = sor.u32 %s128, %s129
    %p131 = scmp.eq.s32.totalorder %s130, 0
    %s133 = sadd.s32 %s132, 1
    %s134 = scalar_select %p131, %s132, %s133
    %p137 = pneg %p131
    %p138 = scmp.eq.s32.totalorder %s10, 1
    %p139 = por %p137, %p138
    %p140 = scmp.ne.s32.totalorder %s132, %s135
    %p141 = scmp.eq.s32.totalorder %s10, 0
    %p142 = por %p140, %p141
    %p143 = scmp.ne.s32.totalorder %s132, %s135
    %p144 = scmp.eq.s32.totalorder %s15, 1
    %p145 = por %p143, %p144
    %p146 = scmp.ne.s32.totalorder %s135, %s136
    %p147 = scmp.eq.s32.totalorder %s15, 0
    %p148 = por %p146, %p147
    %p149 = scmp.ne.s32.totalorder %s135, %s136
    %p150 = scmp.eq.s32.totalorder %s16, 1
    %p151 = por %p149, %p150
    %p153 = scmp.ne.s32.totalorder %s136, %s152
    %p154 = scmp.eq.s32.totalorder %s16, 0
    %p155 = por %p153, %p154
    %p156 = scmp.le.s32.totalorder 1, %s10
    %p157 = scmp.lt.s32.totalorder %s10, 3
    %p158 = pnand %p156, %p157
    %p159 = pneg %p158
    // Predicated region
    $region9: #{gruunet_forward.43} parent=5 // pred_check
      _
    $region10: #{gruunet_forward.43} parent=5 // pred_check_branch
      %161 = sbr.rel (%p158) target = $region12
    $region11: #{gruunet_forward.43} parent=5 // pred_region
      %s162 = ssub.s32 %s10, 1
      // Predicated region
      $region13: #{gruunet_forward.43} parent=11 // pred_check
        %p163 = pneg %p99
      $region14: #{gruunet_forward.43} parent=11 // pred_check_branch
        %165 = sbr.rel (%p163) target = $region16
      $region15: #{gruunet_forward.43} parent=11 // pred_region
        _
      $region16: #{gruunet_forward.43} parent=11 // pred_fallthru
        _
      // Predicated region
      $region17: #{gruunet_forward.43} parent=11 // pred_check
        %p166 = pneg %p120
      $region18: #{gruunet_forward.43} parent=11 // pred_check_branch
        %168 = sbr.rel (%p166) target = $region20
      $region19: #{gruunet_forward.43} parent=11 // pred_region
        _
      $region20: #{gruunet_forward.43} parent=11 // pred_fallthru
        _
    $region12: #{gruunet_forward.43} parent=5 // pred_fallthru
      _
    %p169 = scmp.lt.s32.totalorder %s10, 2
    // Predicated region
    $region21: #{gruunet_forward.43} parent=5 // pred_check
      %p170 = pneg %p169
    $region22: #{gruunet_forward.43} parent=5 // pred_check_branch
      %172 = sbr.rel (%p170) target = $region24
    $region23: #{gruunet_forward.43} parent=5 // pred_region
      // Predicated region
      $region25: #{gruunet_forward.43} parent=23 // pred_check
        %p173 = pneg %p44
      $region26: #{gruunet_forward.43} parent=23 // pred_check_branch
        %175 = sbr.rel (%p173) target = $region28
      $region27: #{gruunet_forward.43} parent=23 // pred_region
        %p176 = scmp.lt.s32.totalorder %s17, 1
        %s177 = scalar_select %p176, %s17, 1
        %p178 = scmp.lt.s32.totalorder %s18, 0
        %s179 = scalar_select %p178, %s18, 0
        %s180 = sadd.s32 %s179, %s177
        %s181 = smul.addr %s180, 8
        %s182 = scalar_lea.vmem %s0, %s181
      $region28: #{gruunet_forward.43} parent=23 // pred_fallthru
        _
      // Predicated region
      $region29: #{gruunet_forward.43} parent=23 // pred_check
        %p183 = pneg %p72
      $region30: #{gruunet_forward.43} parent=23 // pred_check_branch
        %185 = sbr.rel (%p183) target = $region32
      $region31: #{gruunet_forward.43} parent=23 // pred_region
        %p186 = scmp.lt.s32.totalorder %s17, 1
        %s187 = scalar_select %p186, %s17, 1
        %p188 = scmp.lt.s32.totalorder %s18, 0
        %s189 = scalar_select %p188, %s18, 0
        %s190 = sadd.s32 %s189, %s187
        %s191 = scalar_lea.vmem %s1, %s190
      $region32: #{gruunet_forward.43} parent=23 // pred_fallthru
        _
    $region24: #{gruunet_forward.43} parent=5 // pred_fallthru
      _
    %p192 = scmp.le.s32.totalorder 1, %s10
    %p193 = scmp.lt.s32.totalorder %s10, 3
    %p194 = pnand %p192, %p193
    %p195 = pneg %p194
    // Predicated region
    $region33: #{gruunet_forward.43} parent=5 // pred_check
      _
    $region34: #{gruunet_forward.43} parent=5 // pred_check_branch
      %197 = sbr.rel (%p194) target = $region36
    $region35: #{gruunet_forward.43} parent=5 // pred_region
      %s198 = ssub.s32 %s10, 1
      %p199 = scmp.lt.s32.totalorder %s19, 1
      %s200 = scalar_select %p199, %s19, 1
      %p201 = scmp.lt.s32.totalorder %s20, 0
      %s202 = scalar_select %p201, %s20, 0
      %s203 = sadd.s32 %s202, %s200
      %s204 = smul.addr %s203, 8
      %s205 = scalar_lea.vmem %s0, %s204
      %p206 = pneg %p50
      %p207 = pneg %p47
      %p208 = scmp.lt.s32.totalorder %s19, 1
      %s209 = scalar_select %p208, %s19, 1
      %p210 = scmp.lt.s32.totalorder %s20, 0
      %s211 = scalar_select %p210, %s20, 0
      %s212 = sadd.s32 %s211, %s209
      %s213 = scalar_lea.vmem %s1, %s212
      %p214 = pneg %p78
      %p215 = pneg %p75
      %p216 = pneg %p99
      %p217 = pneg %p96
      %p218 = pneg %p120
      %p219 = pneg %p117
      %p220 = pneg %p148
      %p221 = pneg %p145
      %p222 = scmp.lt.s32.totalorder %s19, 1
      %s223 = scalar_select %p222, %s19, 1
      %p224 = scmp.lt.s32.totalorder %s20, 0
      %s225 = scalar_select %p224, %s20, 0
      %s226 = sadd.s32 %s225, %s223
      %s227 = smul.addr %s226, 8
      %s228 = scalar_lea.vmem %s4, %s227
      %p229 = scmp.lt.s32.totalorder %s19, 1
      %s230 = scalar_select %p229, %s19, 1
      %p231 = scmp.lt.s32.totalorder %s20, 0
      %s232 = scalar_select %p231, %s20, 0
      %s233 = sadd.s32 %s232, %s230
      %s234 = smul.addr %s233, 8
      %s235 = scalar_lea.vmem %s0, %s234
      %p236 = scmp.lt.s32.totalorder %s19, 1
      %s237 = scalar_select %p236, %s19, 1
      %p238 = scmp.lt.s32.totalorder %s20, 0
      %s239 = scalar_select %p238, %s20, 0
      %s240 = sadd.s32 %s239, %s237
      %s241 = scalar_lea.vmem %s1, %s240
      %p242 = scmp.lt.s32.totalorder %s19, 1
      %s243 = scalar_select %p242, %s19, 1
      %p244 = scmp.lt.s32.totalorder %s20, 0
      %s245 = scalar_select %p244, %s20, 0
      %s246 = sadd.s32 %s245, %s243
      %s247 = smul.addr %s246, 8
      %s248 = scalar_lea.vmem %s4, %s247
      %v249 = vld [vmem:[%s2] sm:$0xff]
      %v250 = vld [vmem:[%s241] sm:$0x1]
      %252 = vset.pattern.permute.xlu0 0
      %253 = vperm.xlu0 %252, %v249
      %v254 = vpop.permute.xlu0 %253
      %v257 = vlaneseq
      %v258 = vshrl.u32 %v257, 7
      %v259 = vsub.s32 0, %v258
      %v260 = vrot.slane %v250, %v259
      %v262 = vmul.f32 %v254, %v260
      %v263 = vld [vmem:[%s3] sm:$0xff]
      %265 = vset.pattern.permute.xlu0 0
      %266 = vperm.xlu0 %265, %v263
      %v267 = vpop.permute.xlu0 %266
      %v269 = vadd.f32 %v262, %v267
      %v270 = vld [vmem:[%s235] sm:$0xff]
      %v271 = vxor.u32 %v269, 2147483648
      %v272 = vmul.f32 %v271, 1.442695
      %v273 = vpow.pop %v272
      %v274 = vadd.f32 %v273, 1.0
      %v275 = vrcp.pop %v274
      %v276 = vmul.f32 1.0, %v275
      %v277 = vmul.f32 %v270, %v276
      %vm278 = vcmask 523264
      %279 = vst.msk [vmem:[%s248] sm:$0xff] %vm278, %v277
      %p280 = scmp.lt.s32.totalorder %s19, 1
      %s281 = scalar_select %p280, %s19, 1
      %p282 = scmp.lt.s32.totalorder %s20, 0
      %s283 = scalar_select %p282, %s20, 0
      %s284 = sadd.s32 %s283, %s281
      %s285 = smul.addr %s284, 8
      %s286 = scalar_lea.vmem %s4, %s285
      // Predicated region
      $region37: #{gruunet_forward.43} parent=35 // pred_check
        %p287 = pneg %p145
      $region38: #{gruunet_forward.43} parent=35 // pred_check_branch
        %289 = sbr.rel (%p287) target = $region40
      $region39: #{gruunet_forward.43} parent=35 // pred_region
        _
      $region40: #{gruunet_forward.43} parent=35 // pred_fallthru
        _
    $region36: #{gruunet_forward.43} parent=5 // pred_fallthru
      _
    %p290 = scmp.le.s32.totalorder 2, %s10
    // Predicated region
    $region41: #{gruunet_forward.43} parent=5 // pred_check
      %p291 = pneg %p290
    $region42: #{gruunet_forward.43} parent=5 // pred_check_branch
      %293 = sbr.rel (%p291) target = $region44
    $region43: #{gruunet_forward.43} parent=5 // pred_region
      %s294 = ssub.s32 %s10, 2
      // Predicated region
      $region45: #{gruunet_forward.43} parent=43 // pred_check
        %p295 = pneg %p151
      $region46: #{gruunet_forward.43} parent=43 // pred_check_branch
        %297 = sbr.rel (%p295) target = $region48
      $region47: #{gruunet_forward.43} parent=43 // pred_region
        %p298 = scmp.lt.s32.totalorder %s21, 1
        %s299 = scalar_select %p298, %s21, 1
        %p300 = scmp.lt.s32.totalorder %s22, 0
        %s301 = scalar_select %p300, %s22, 0
        %s302 = sadd.s32 %s301, %s299
        %s303 = smul.addr %s302, 8
        %s304 = scalar_lea.vmem %s4, %s303
      $region48: #{gruunet_forward.43} parent=43 // pred_fallthru
        _
    $region44: #{gruunet_forward.43} parent=5 // pred_fallthru
      _
  $region6: #{gruunet_forward.43} parent=0 // loop_footer
    %s14 = sadd.s32 1, %s10
  $region7: #{gruunet_forward.43} parent=0 // loop_footer_branch
    %9 = sbr.rel target = $region3
  $region8: #{gruunet_forward.43} parent=0 // loop_exit
    _

// kernel: gruunet_forward.45
$region0: #{gruunet_forward.45}
  #allocation0 [shape = 'u32[]', space=smem, size = 0x4, offset = 0x4, fixed_abs, tag = 'smem constant byte address 0x4 - core index']
  #allocation1 [shape = 'u32[144,128]{1,0:T(1,128)}', space=vmem, size = 0x12000, scoped, tag = 'internal scratch']
  %s0 = inlined_call_operand.vmem [shape: f32[2,72,64], index: 0, kind: input, shape index: {}]
  %s1 = inlined_call_operand.vmem [shape: f32[8,72], index: 1, kind: input, shape index: {}]
  %s2 = inlined_call_operand.vmem [shape: f32[2,8,64], index: 2, kind: output, shape index: {}]
  %s3 = sld [smem:[#allocation0]]
  $region41: #{gruunet_forward.45} parent=0
    _
  %s5 = ssub.s32 1, %s3
  %s6 = scalar_select 0, %s5, %s3
  loop: start=0, step=1, limit=4
  $region2: #{gruunet_forward.45} parent=0 // loop_pre_header
    _
  $region3: #{gruunet_forward.45} parent=0 // loop_header
    %s8 = sphi 0, %s12
    %p9 = scmp.ge.s32.totalorder %s8, 4
    %s15 = sphi 0, %s27
    %s16 = sphi 0, %s23
    %s17 = sphi 0, %s15
    %s18 = sphi 0, %s16
    %s19 = sphi 0, %s17
    %s20 = sphi 0, %s18
    %s32 = sphi 0, %s34
    %s35 = sphi 0, %s32
    %s36 = sphi 0, %s35
    %s52 = sphi 0, %s36
    %s56 = sphi 0, %s56
    %s58 = sphi 0, %s56
    %s59 = sphi 0, %s58
    %s73 = sphi 0, %s59
    %s81 = sphi 0, %s83
    %s84 = sphi 0, %s81
    %s85 = sphi 0, %s84
    %s101 = sphi 0, %s85
  $region4: #{gruunet_forward.45} parent=0 // loop_header_branch
    %11 = sbr.rel (%p9) target = $region8
  $region5: #{gruunet_forward.45} parent=0 // loop_body
    %s13 = ssub.s32 %s8, 1
    %s14 = ssub.s32 %s8, 2
    %s21 = sadd.s32 1, %s16
    %p22 = scmp.ge.s32.totalorder %s21, 1
    %s23 = scalar_select %p22, 0, %s21
    %s24 = sadd.s32 1, %s15
    %s25 = scalar_select %p22, %s24, %s15
    %p26 = scmp.ge.s32.totalorder %s25, 2
    %s27 = scalar_select %p26, 0, %s25
    %s28 = ssub.s32 %s15, %s27
    %s29 = ssub.s32 %s16, %s23
    %s30 = sor.u32 %s28, %s29
    %p31 = scmp.eq.s32.totalorder %s30, 0
    %s33 = sadd.s32 %s32, 1
    %s34 = scalar_select %p31, %s32, %s33
    %p37 = pneg %p31
    %p38 = scmp.eq.s32.totalorder %s8, 1
    %p39 = por %p37, %p38
    %p40 = scmp.ne.s32.totalorder %s32, %s35
    %p41 = scmp.eq.s32.totalorder %s8, 0
    %p42 = por %p40, %p41
    %p43 = scmp.ne.s32.totalorder %s32, %s35
    %p44 = scmp.eq.s32.totalorder %s13, 1
    %p45 = por %p43, %p44
    %p46 = scmp.ne.s32.totalorder %s35, %s36
    %p47 = scmp.eq.s32.totalorder %s13, 0
    %p48 = por %p46, %p47
    %p49 = scmp.ne.s32.totalorder %s35, %s36
    %p50 = scmp.eq.s32.totalorder %s14, 1
    %p51 = por %p49, %p50
    %p53 = scmp.ne.s32.totalorder %s36, %s52
    %p54 = scmp.eq.s32.totalorder %s14, 0
    %p55 = por %p53, %p54
    %s57 = sadd.s32 %s56, 1
    %p60 = scmp.eq.s32.totalorder %s8, 1
    %p61 = scmp.ne.s32.totalorder %s56, %s58
    %p62 = scmp.eq.s32.totalorder %s8, 0
    %p63 = por %p61, %p62
    %p64 = scmp.ne.s32.totalorder %s56, %s58
    %p65 = scmp.eq.s32.totalorder %s13, 1
    %p66 = por %p64, %p65
    %p67 = scmp.ne.s32.totalorder %s58, %s59
    %p68 = scmp.eq.s32.totalorder %s13, 0
    %p69 = por %p67, %p68
    %p70 = scmp.ne.s32.totalorder %s58, %s59
    %p71 = scmp.eq.s32.totalorder %s14, 1
    %p72 = por %p70, %p71
    %p74 = scmp.ne.s32.totalorder %s59, %s73
    %p75 = scmp.eq.s32.totalorder %s14, 0
    %p76 = por %p74, %p75
    %s77 = ssub.s32 %s15, %s27
    %s78 = ssub.s32 %s16, %s23
    %s79 = sor.u32 %s77, %s78
    %p80 = scmp.eq.s32.totalorder %s79, 0
    %s82 = sadd.s32 %s81, 1
    %s83 = scalar_select %p80, %s81, %s82
    %p86 = pneg %p80
    %p87 = scmp.eq.s32.totalorder %s8, 1
    %p88 = por %p86, %p87
    %p89 = scmp.ne.s32.totalorder %s81, %s84
    %p90 = scmp.eq.s32.totalorder %s8, 0
    %p91 = por %p89, %p90
    %p92 = scmp.ne.s32.totalorder %s81, %s84
    %p93 = scmp.eq.s32.totalorder %s13, 1
    %p94 = por %p92, %p93
    %p95 = scmp.ne.s32.totalorder %s84, %s85
    %p96 = scmp.eq.s32.totalorder %s13, 0
    %p97 = por %p95, %p96
    %p98 = scmp.ne.s32.totalorder %s84, %s85
    %p99 = scmp.eq.s32.totalorder %s14, 1
    %p100 = por %p98, %p99
    %p102 = scmp.ne.s32.totalorder %s85, %s101
    %p103 = scmp.eq.s32.totalorder %s14, 0
    %p104 = por %p102, %p103
    %p105 = scmp.le.s32.totalorder 1, %s8
    %p106 = scmp.lt.s32.totalorder %s8, 3
    %p107 = pnand %p105, %p106
    %p108 = pneg %p107
    // Predicated region
    $region9: #{gruunet_forward.45} parent=5 // pred_check
      _
    $region10: #{gruunet_forward.45} parent=5 // pred_check_branch
      %110 = sbr.rel (%p107) target = $region12
    $region11: #{gruunet_forward.45} parent=5 // pred_region
      %s111 = ssub.s32 %s8, 1
      // Predicated region
      $region13: #{gruunet_forward.45} parent=11 // pred_check
        %p112 = pneg %p69
      $region14: #{gruunet_forward.45} parent=11 // pred_check_branch
        %114 = sbr.rel (%p112) target = $region16
      $region15: #{gruunet_forward.45} parent=11 // pred_region
        _
      $region16: #{gruunet_forward.45} parent=11 // pred_fallthru
        _
    $region12: #{gruunet_forward.45} parent=5 // pred_fallthru
      _
    %p115 = scmp.lt.s32.totalorder %s8, 2
    // Predicated region
    $region17: #{gruunet_forward.45} parent=5 // pred_check
      %p116 = pneg %p115
    $region18: #{gruunet_forward.45} parent=5 // pred_check_branch
      %118 = sbr.rel (%p116) target = $region20
    $region19: #{gruunet_forward.45} parent=5 // pred_region
      // Predicated region
      $region21: #{gruunet_forward.45} parent=19 // pred_check
        %p119 = pneg %p42
      $region22: #{gruunet_forward.45} parent=19 // pred_check_branch
        %121 = sbr.rel (%p119) target = $region24
      $region23: #{gruunet_forward.45} parent=19 // pred_region
        %p122 = scmp.lt.s32.totalorder %s15, 1
        %s123 = scalar_select %p122, %s15, 1
        %p124 = scmp.lt.s32.totalorder %s16, 0
        %s125 = scalar_select %p124, %s16, 0
        %s126 = smul.addr %s123, 9
        %s127 = sadd.s32 %s125, %s126
        %s128 = smul.addr %s127, 8
        %s129 = scalar_lea.vmem %s0, %s128
      $region24: #{gruunet_forward.45} parent=19 // pred_fallthru
        _
    $region20: #{gruunet_forward.45} parent=5 // pred_fallthru
      _
    %p130 = scmp.le.s32.totalorder 1, %s8
    %p131 = scmp.lt.s32.totalorder %s8, 3
    %p132 = pnand %p130, %p131
    %p133 = pneg %p132
    // Predicated region
    $region25: #{gruunet_forward.45} parent=5 // pred_check
      _
    $region26: #{gruunet_forward.45} parent=5 // pred_check_branch
      %135 = sbr.rel (%p132) target = $region28
    $region27: #{gruunet_forward.45} parent=5 // pred_region
      %s136 = ssub.s32 %s8, 1
      %p137 = scmp.lt.s32.totalorder %s17, 1
      %s138 = scalar_select %p137, %s17, 1
      %p139 = scmp.lt.s32.totalorder %s18, 0
      %s140 = scalar_select %p139, %s18, 0
      %s141 = smul.addr %s138, 9
      %s142 = sadd.s32 %s140, %s141
      %s143 = smul.addr %s142, 8
      %s144 = scalar_lea.vmem %s0, %s143
      %p145 = pneg %p48
      %p146 = pneg %p45
      %p147 = pneg %p69
      %p148 = pneg %p66
      %p149 = pneg %p97
      %p150 = pneg %p94
      %p151 = scmp.lt.s32.totalorder %s17, 1
      %s152 = scalar_select %p151, %s17, 1
      %p153 = scmp.lt.s32.totalorder %s18, 0
      %s154 = scalar_select %p153, %s18, 0
      %s155 = sadd.s32 %s154, %s152
      %s156 = smul.addr %s155, 8
      %s157 = scalar_lea.vmem %s2, %s156
      %p158 = scmp.lt.s32.totalorder %s17, 1
      %s159 = scalar_select %p158, %s17, 1
      %p160 = scmp.lt.s32.totalorder %s18, 0
      %s161 = scalar_select %p160, %s18, 0
      %s162 = smul.addr %s159, 9
      %s163 = sadd.s32 %s161, %s162
      %s164 = smul.addr %s163, 8
      %s165 = scalar_lea.vmem %s0, %s164
      %p166 = scmp.lt.s32.totalorder %s17, 1
      %s167 = scalar_select %p166, %s17, 1
      %p168 = scmp.lt.s32.totalorder %s18, 0
      %s169 = scalar_select %p168, %s18, 0
      %s170 = sadd.s32 %s169, %s167
      %s171 = smul.addr %s170, 8
      %s172 = scalar_lea.vmem %s2, %s171
      %v173 = vld [vmem:[%s1] sm:$0xff]
      %v174 = vld [vmem:[%s165] sm:$0xff]
      %v175 = vld [vmem:[%s165 + $0x8] sm:$0xff]
      %v176 = vld [vmem:[%s165 + $0x10] sm:$0xff]
      %v177 = vld [vmem:[%s165 + $0x18] sm:$0xff]
      %v178 = vld [vmem:[%s165 + $0x20] sm:$0xff]
      %v179 = vld [vmem:[%s165 + $0x28] sm:$0xff]
      %v180 = vld [vmem:[%s165 + $0x30] sm:$0xff]
      %v181 = vld [vmem:[%s165 + $0x38] sm:$0xff]
      %v182 = vld [vmem:[%s165 + $0x40] sm:$0xff]
      %vm183 = vcmask 588800
      %v185 = vsel %vm183, %v173, 0
      %187 = vmatprep.subr.mxu0 0.0
      %188 = vmatpush1.msra.mxu0 %v174
      %189 = vmatprep.subr.mxu0 0.0
      %190 = vmatpush1.msra.mxu0 %v175
      %191 = vmatprep.subr.mxu0 0.0
      %192 = vmatpush1.msra.mxu0 %v176
      %193 = vmatprep.subr.mxu0 0.0
      %194 = vmatpush1.msra.mxu0 %v177
      %195 = vmatprep.subr.mxu0 0.0
      %196 = vmatpush1.msra.mxu0 %v178
      %197 = vmatprep.subr.mxu0 0.0
      %198 = vmatpush1.msra.mxu0 %v179
      %199 = vmatprep.subr.mxu0 0.0
      %200 = vmatpush1.msra.mxu0 %v180
      %201 = vmatprep.subr.mxu0 0.0
      %202 = vmatpush1.msra.mxu0 %v181
      %203 = vmatprep.subr.mxu0 0.0
      %204 = vmatpush1.msra.mxu0 %v182
      %205 = vmatprep.subr.mxu0 0.0
      %206 = vmatpush1.msra.mxu0 0.0
      %207 = vmatprep.subr.mxu0 0.0
      %208 = vmatpush1.msra.mxu0 0.0
      %209 = vmatprep.subr.mxu0 0.0
      %210 = vmatpush1.msra.mxu0 0.0
      %211 = vmatprep.subr.mxu0 0.0
      %212 = vmatpush1.msra.mxu0 0.0
      %213 = vmatprep.subr.mxu0 0.0
      %214 = vmatpush1.msra.mxu0 0.0
      %215 = vmatprep.subr.mxu0 0.0
      %216 = vmatpush1.msra.mxu0 0.0
      %217 = vmatprep.subr.mxu0 0.0
      %218 = vmatpush1.msra.mxu0 0.0
      %219 = vmatprep.subr.mxu0 0.0
      %220 = vmatpush1.msra.mxu0 0.0
      %221 = vmatprep.subr.mxu0 0.0
      %222 = vmatpush1.msra.mxu0 0.0
      %223 = vmatprep.subr.mxu0 0.0
      %224 = vmatpush1.msra.mxu0 0.0
      %225 = vmatprep.subr.mxu0 0.0
      %226 = vmatpush1.msra.mxu0 0.0
      %227 = vmatprep.subr.mxu0 0.0
      %228 = vmatpush1.msra.mxu0 0.0
      %229 = vmatprep.subr.mxu0 0.0
      %230 = vmatpush1.msra.mxu0 0.0
      %231 = vmatprep.subr.mxu0 0.0
      %232 = vmatpush1.msra.mxu0 0.0
      %233 = vmatprep.subr.mxu0 0.0
      %234 = vmatpush1.msra.mxu0 0.0
      %235 = vmatprep.subr.mxu0 0.0
      %236 = vmatpush1.msra.mxu0 0.0
      %237 = vmatprep.subr.mxu0 0.0
      %238 = vmatpush1.msra.mxu0 0.0
      %239 = vmatprep.subr.mxu0 0.0
      %240 = vmatpush1.msra.mxu0 0.0
      %241 = vmatprep.subr.mxu0 0.0
      %242 = vmatpush1.msra.mxu0 0.0
      %243 = vmatprep.subr.mxu0 0.0
      %244 = vmatpush1.msra.mxu0 0.0
      %245 = vmatprep.subr.mxu0 0.0
      %246 = vmatpush1.msra.mxu0 0.0
      %247 = vmatprep.subr.mxu0 0.0
      %248 = vmatpush1.msra.mxu0 0.0
      %249 = vmatprep.subr.mxu0 0.0
      %250 = vmatpush1.msra.mxu0 0.0
      %251 = vmatprep.mubr.f32.mxu0 0.0
      %252 = vmatmul.mubr.f32.gmra.mrb[0].mxu0 %v185
      %v253 = vpop.f32.mrb[0].mxu0
      %v254 = vadd.f32 0.0, %v253
      %v255 = vpop.f32.mrb[0].mxu0
      %256 = vdwg.mxu0
      %v257 = vmax.f32 %v254, 0.0
      %vm258 = vcmask 523264
      %259 = vst.msk [vmem:[%s172] sm:$0xff] %vm258, %v257
      %p260 = scmp.lt.s32.totalorder %s17, 1
      %s261 = scalar_select %p260, %s17, 1
      %p262 = scmp.lt.s32.totalorder %s18, 0
      %s263 = scalar_select %p262, %s18, 0
      %s264 = sadd.s32 %s263, %s261
      %s265 = smul.addr %s264, 8
      %s266 = scalar_lea.vmem %s2, %s265
      // Predicated region
      $region29: #{gruunet_forward.45} parent=27 // pred_check
        %p267 = pneg %p94
      $region30: #{gruunet_forward.45} parent=27 // pred_check_branch
        %269 = sbr.rel (%p267) target = $region32
      $region31: #{gruunet_forward.45} parent=27 // pred_region
        _
      $region32: #{gruunet_forward.45} parent=27 // pred_fallthru
        _
    $region28: #{gruunet_forward.45} parent=5 // pred_fallthru
      _
    %p270 = scmp.le.s32.totalorder 2, %s8
    // Predicated region
    $region33: #{gruunet_forward.45} parent=5 // pred_check
      %p271 = pneg %p270
    $region34: #{gruunet_forward.45} parent=5 // pred_check_branch
      %273 = sbr.rel (%p271) target = $region36
    $region35: #{gruunet_forward.45} parent=5 // pred_region
      %s274 = ssub.s32 %s8, 2
      // Predicated region
      $region37: #{gruunet_forward.45} parent=35 // pred_check
        %p275 = pneg %p100
      $region38: #{gruunet_forward.45} parent=35 // pred_check_branch
        %277 = sbr.rel (%p275) target = $region40
      $region39: #{gruunet_forward.45} parent=35 // pred_region
        %p278 = scmp.lt.s32.totalorder %s19, 1
        %s279 = scalar_select %p278, %s19, 1
        %p280 = scmp.lt.s32.totalorder %s20, 0
        %s281 = scalar_select %p280, %s20, 0
        %s282 = sadd.s32 %s281, %s279
        %s283 = smul.addr %s282, 8
        %s284 = scalar_lea.vmem %s2, %s283
      $region40: #{gruunet_forward.45} parent=35 // pred_fallthru
        _
    $region36: #{gruunet_forward.45} parent=5 // pred_fallthru
      _
  $region6: #{gruunet_forward.45} parent=0 // loop_footer
    %s12 = sadd.s32 1, %s8
  $region7: #{gruunet_forward.45} parent=0 // loop_footer_branch
    %7 = sbr.rel target = $region3
  $region8: #{gruunet_forward.45} parent=0 // loop_exit
    _

// kernel: gruunet_forward.44
$region0: #{gruunet_forward.44}
  #allocation0 [shape = 'u32[]', space=smem, size = 0x4, offset = 0x4, fixed_abs, tag = 'smem constant byte address 0x4 - core index']
  #allocation1 [shape = 'u32[144,128]{1,0:T(1,128)}', space=vmem, size = 0x12000, scoped, tag = 'internal scratch']
  %s0 = inlined_call_operand.vmem [shape: f32[2,81,64], index: 0, kind: input, shape index: {}]
  %s1 = inlined_call_operand.vmem [shape: f32[8,81], index: 1, kind: input, shape index: {}]
  %s2 = inlined_call_operand.vmem [shape: f32[8,1], index: 2, kind: input, shape index: {}]
  %s3 = inlined_call_operand.vmem [shape: f32[2,72,64], index: 3, kind: input, shape index: {}]
  %s4 = inlined_call_operand.vmem [shape: f32[8,72], index: 4, kind: input, shape index: {}]
  %s5 = inlined_call_operand.vmem [shape: f32[8,1], index: 5, kind: input, shape index: {}]
  %s6 = inlined_call_operand.vmem [shape: f32[2,8,64], index: 6, kind: input, shape index: {}]
  %s7 = inlined_call_operand.vmem [shape: f32[2,8,64], index: 7, kind: output, shape index: {}]
  %s8 = sld [smem:[#allocation0]]
  $region61: #{gruunet_forward.44} parent=0
    _
  %s10 = ssub.s32 1, %s8
  %s11 = scalar_select 0, %s10, %s8
  loop: start=0, step=1, limit=4
  $region2: #{gruunet_forward.44} parent=0 // loop_pre_header
    _
  $region3: #{gruunet_forward.44} parent=0 // loop_header
    %s13 = sphi 0, %s17
    %p14 = scmp.ge.s32.totalorder %s13, 4
    %s20 = sphi 0, %s32
    %s21 = sphi 0, %s28
    %s22 = sphi 0, %s20
    %s23 = sphi 0, %s21
    %s24 = sphi 0, %s22
    %s25 = sphi 0, %s23
    %s37 = sphi 0, %s39
    %s40 = sphi 0, %s37
    %s41 = sphi 0, %s40
    %s57 = sphi 0, %s41
    %s61 = sphi 0, %s61
    %s63 = sphi 0, %s61
    %s64 = sphi 0, %s63
    %s78 = sphi 0, %s64
    %s82 = sphi 0, %s82
    %s84 = sphi 0, %s82
    %s85 = sphi 0, %s84
    %s99 = sphi 0, %s85
    %s107 = sphi 0, %s109
    %s110 = sphi 0, %s107
    %s111 = sphi 0, %s110
    %s127 = sphi 0, %s111
    %s131 = sphi 0, %s131
    %s133 = sphi 0, %s131
    %s134 = sphi 0, %s133
    %s148 = sphi 0, %s134
    %s152 = sphi 0, %s152
    %s154 = sphi 0, %s152
    %s155 = sphi 0, %s154
    %s169 = sphi 0, %s155
    %s177 = sphi 0, %s179
    %s180 = sphi 0, %s177
    %s181 = sphi 0, %s180
    %s197 = sphi 0, %s181
    %s205 = sphi 0, %s207
    %s208 = sphi 0, %s205
    %s209 = sphi 0, %s208
    %s225 = sphi 0, %s209
  $region4: #{gruunet_forward.44} parent=0 // loop_header_branch
    %16 = sbr.rel (%p14) target = $region8
  $region5: #{gruunet_forward.44} parent=0 // loop_body
    %s18 = ssub.s32 %s13, 1
    %s19 = ssub.s32 %s13, 2
    %s26 = sadd.s32 1, %s21
    %p27 = scmp.ge.s32.totalorder %s26, 1
    %s28 = scalar_select %p27, 0, %s26
    %s29 = sadd.s32 1, %s20
    %s30 = scalar_select %p27, %s29, %s20
    %p31 = scmp.ge.s32.totalorder %s30, 2
    %s32 = scalar_select %p31, 0, %s30
    %s33 = ssub.s32 %s20, %s32
    %s34 = ssub.s32 %s21, %s28
    %s35 = sor.u32 %s33, %s34
    %p36 = scmp.eq.s32.totalorder %s35, 0
    %s38 = sadd.s32 %s37, 1
    %s39 = scalar_select %p36, %s37, %s38
    %p42 = pneg %p36
    %p43 = scmp.eq.s32.totalorder %s13, 1
    %p44 = por %p42, %p43
    %p45 = scmp.ne.s32.totalorder %s37, %s40
    %p46 = scmp.eq.s32.totalorder %s13, 0
    %p47 = por %p45, %p46
    %p48 = scmp.ne.s32.totalorder %s37, %s40
    %p49 = scmp.eq.s32.totalorder %s18, 1
    %p50 = por %p48, %p49
    %p51 = scmp.ne.s32.totalorder %s40, %s41
    %p52 = scmp.eq.s32.totalorder %s18, 0
    %p53 = por %p51, %p52
    %p54 = scmp.ne.s32.totalorder %s40, %s41
    %p55 = scmp.eq.s32.totalorder %s19, 1
    %p56 = por %p54, %p55
    %p58 = scmp.ne.s32.totalorder %s41, %s57
    %p59 = scmp.eq.s32.totalorder %s19, 0
    %p60 = por %p58, %p59
    %s62 = sadd.s32 %s61, 1
    %p65 = scmp.eq.s32.totalorder %s13, 1
    %p66 = scmp.ne.s32.totalorder %s61, %s63
    %p67 = scmp.eq.s32.totalorder %s13, 0
    %p68 = por %p66, %p67
    %p69 = scmp.ne.s32.totalorder %s61, %s63
    %p70 = scmp.eq.s32.totalorder %s18, 1
    %p71 = por %p69, %p70
    %p72 = scmp.ne.s32.totalorder %s63, %s64
    %p73 = scmp.eq.s32.totalorder %s18, 0
    %p74 = por %p72, %p73
    %p75 = scmp.ne.s32.totalorder %s63, %s64
    %p76 = scmp.eq.s32.totalorder %s19, 1
    %p77 = por %p75, %p76
    %p79 = scmp.ne.s32.totalorder %s64, %s78
    %p80 = scmp.eq.s32.totalorder %s19, 0
    %p81 = por %p79, %p80
    %s83 = sadd.s32 %s82, 1
    %p86 = scmp.eq.s32.totalorder %s13, 1
    %p87 = scmp.ne.s32.totalorder %s82, %s84
    %p88 = scmp.eq.s32.totalorder %s13, 0
    %p89 = por %p87, %p88
    %p90 = scmp.ne.s32.totalorder %s82, %s84
    %p91 = scmp.eq.s32.totalorder %s18, 1
    %p92 = por %p90, %p91
    %p93 = scmp.ne.s32.totalorder %s84, %s85
    %p94 = scmp.eq.s32.totalorder %s18, 0
    %p95 = por %p93, %p94
    %p96 = scmp.ne.s32.totalorder %s84, %s85
    %p97 = scmp.eq.s32.totalorder %s19, 1
    %p98 = por %p96, %p97
    %p100 = scmp.ne.s32.totalorder %s85, %s99
    %p101 = scmp.eq.s32.totalorder %s19, 0
    %p102 = por %p100, %p101
    %s103 = ssub.s32 %s20, %s32
    %s104 = ssub.s32 %s21, %s28
    %s105 = sor.u32 %s103, %s104
    %p106 = scmp.eq.s32.totalorder %s105, 0
    %s108 = sadd.s32 %s107, 1
    %s109 = scalar_select %p106, %s107, %s108
    %p112 = pneg %p106
    %p113 = scmp.eq.s32.totalorder %s13, 1
    %p114 = por %p112, %p113
    %p115 = scmp.ne.s32.totalorder %s107, %s110
    %p116 = scmp.eq.s32.totalorder %s13, 0
    %p117 = por %p115, %p116
    %p118 = scmp.ne.s32.totalorder %s107, %s110
    %p119 = scmp.eq.s32.totalorder %s18, 1
    %p120 = por %p118, %p119
    %p121 = scmp.ne.s32.totalorder %s110, %s111
    %p122 = scmp.eq.s32.totalorder %s18, 0
    %p123 = por %p121, %p122
    %p124 = scmp.ne.s32.totalorder %s110, %s111
    %p125 = scmp.eq.s32.totalorder %s19, 1
    %p126 = por %p124, %p125
    %p128 = scmp.ne.s32.totalorder %s111, %s127
    %p129 = scmp.eq.s32.totalorder %s19, 0
    %p130 = por %p128, %p129
    %s132 = sadd.s32 %s131, 1
    %p135 = scmp.eq.s32.totalorder %s13, 1
    %p136 = scmp.ne.s32.totalorder %s131, %s133
    %p137 = scmp.eq.s32.totalorder %s13, 0
    %p138 = por %p136, %p137
    %p139 = scmp.ne.s32.totalorder %s131, %s133
    %p140 = scmp.eq.s32.totalorder %s18, 1
    %p141 = por %p139, %p140
    %p142 = scmp.ne.s32.totalorder %s133, %s134
    %p143 = scmp.eq.s32.totalorder %s18, 0
    %p144 = por %p142, %p143
    %p145 = scmp.ne.s32.totalorder %s133, %s134
    %p146 = scmp.eq.s32.totalorder %s19, 1
    %p147 = por %p145, %p146
    %p149 = scmp.ne.s32.totalorder %s134, %s148
    %p150 = scmp.eq.s32.totalorder %s19, 0
    %p151 = por %p149, %p150
    %s153 = sadd.s32 %s152, 1
    %p156 = scmp.eq.s32.totalorder %s13, 1
    %p157 = scmp.ne.s32.totalorder %s152, %s154
    %p158 = scmp.eq.s32.totalorder %s13, 0
    %p159 = por %p157, %p158
    %p160 = scmp.ne.s32.totalorder %s152, %s154
    %p161 = scmp.eq.s32.totalorder %s18, 1
    %p162 = por %p160, %p161
    %p163 = scmp.ne.s32.totalorder %s154, %s155
    %p164 = scmp.eq.s32.totalorder %s18, 0
    %p165 = por %p163, %p164
    %p166 = scmp.ne.s32.totalorder %s154, %s155
    %p167 = scmp.eq.s32.totalorder %s19, 1
    %p168 = por %p166, %p167
    %p170 = scmp.ne.s32.totalorder %s155, %s169
    %p171 = scmp.eq.s32.totalorder %s19, 0
    %p172 = por %p170, %p171
    %s173 = ssub.s32 %s20, %s32
    %s174 = ssub.s32 %s21, %s28
    %s175 = sor.u32 %s173, %s174
    %p176 = scmp.eq.s32.totalorder %s175, 0
    %s178 = sadd.s32 %s177, 1
    %s179 = scalar_select %p176, %s177, %s178
    %p182 = pneg %p176
    %p183 = scmp.eq.s32.totalorder %s13, 1
    %p184 = por %p182, %p183
    %p185 = scmp.ne.s32.totalorder %s177, %s180
    %p186 = scmp.eq.s32.totalorder %s13, 0
    %p187 = por %p185, %p186
    %p188 = scmp.ne.s32.totalorder %s177, %s180
    %p189 = scmp.eq.s32.totalorder %s18, 1
    %p190 = por %p188, %p189
    %p191 = scmp.ne.s32.totalorder %s180, %s181
    %p192 = scmp.eq.s32.totalorder %s18, 0
    %p193 = por %p191, %p192
    %p194 = scmp.ne.s32.totalorder %s180, %s181
    %p195 = scmp.eq.s32.totalorder %s19, 1
    %p196 = por %p194, %p195
    %p198 = scmp.ne.s32.totalorder %s181, %s197
    %p199 = scmp.eq.s32.totalorder %s19, 0
    %p200 = por %p198, %p199
    %s201 = ssub.s32 %s20, %s32
    %s202 = ssub.s32 %s21, %s28
    %s203 = sor.u32 %s201, %s202
    %p204 = scmp.eq.s32.totalorder %s203, 0
    %s206 = sadd.s32 %s205, 1
    %s207 = scalar_select %p204, %s205, %s206
    %p210 = pneg %p204
    %p211 = scmp.eq.s32.totalorder %s13, 1
    %p212 = por %p210, %p211
    %p213 = scmp.ne.s32.totalorder %s205, %s208
    %p214 = scmp.eq.s32.totalorder %s13, 0
    %p215 = por %p213, %p214
    %p216 = scmp.ne.s32.totalorder %s205, %s208
    %p217 = scmp.eq.s32.totalorder %s18, 1
    %p218 = por %p216, %p217
    %p219 = scmp.ne.s32.totalorder %s208, %s209
    %p220 = scmp.eq.s32.totalorder %s18, 0
    %p221 = por %p219, %p220
    %p222 = scmp.ne.s32.totalorder %s208, %s209
    %p223 = scmp.eq.s32.totalorder %s19, 1
    %p224 = por %p222, %p223
    %p226 = scmp.ne.s32.totalorder %s209, %s225
    %p227 = scmp.eq.s32.totalorder %s19, 0
    %p228 = por %p226, %p227
    %p229 = scmp.le.s32.totalorder 1, %s13
    %p230 = scmp.lt.s32.totalorder %s13, 3
    %p231 = pnand %p229, %p230
    %p232 = pneg %p231
    // Predicated region
    $region9: #{gruunet_forward.44} parent=5 // pred_check
      _
    $region10: #{gruunet_forward.44} parent=5 // pred_check_branch
      %234 = sbr.rel (%p231) target = $region12
    $region11: #{gruunet_forward.44} parent=5 // pred_region
      %s235 = ssub.s32 %s13, 1
      // Predicated region
      $region13: #{gruunet_forward.44} parent=11 // pred_check
        %p236 = pneg %p74
      $region14: #{gruunet_forward.44} parent=11 // pred_check_branch
        %238 = sbr.rel (%p236) target = $region16
      $region15: #{gruunet_forward.44} parent=11 // pred_region
        _
      $region16: #{gruunet_forward.44} parent=11 // pred_fallthru
        _
      // Predicated region
      $region17: #{gruunet_forward.44} parent=11 // pred_check
        %p239 = pneg %p95
      $region18: #{gruunet_forward.44} parent=11 // pred_check_branch
        %241 = sbr.rel (%p239) target = $region20
      $region19: #{gruunet_forward.44} parent=11 // pred_region
        _
      $region20: #{gruunet_forward.44} parent=11 // pred_fallthru
        _
      // Predicated region
      $region21: #{gruunet_forward.44} parent=11 // pred_check
        %p242 = pneg %p144
      $region22: #{gruunet_forward.44} parent=11 // pred_check_branch
        %244 = sbr.rel (%p242) target = $region24
      $region23: #{gruunet_forward.44} parent=11 // pred_region
        _
      $region24: #{gruunet_forward.44} parent=11 // pred_fallthru
        _
      // Predicated region
      $region25: #{gruunet_forward.44} parent=11 // pred_check
        %p245 = pneg %p165
      $region26: #{gruunet_forward.44} parent=11 // pred_check_branch
        %247 = sbr.rel (%p245) target = $region28
      $region27: #{gruunet_forward.44} parent=11 // pred_region
        _
      $region28: #{gruunet_forward.44} parent=11 // pred_fallthru
        _
    $region12: #{gruunet_forward.44} parent=5 // pred_fallthru
      _
    %p248 = scmp.lt.s32.totalorder %s13, 2
    // Predicated region
    $region29: #{gruunet_forward.44} parent=5 // pred_check
      %p249 = pneg %p248
    $region30: #{gruunet_forward.44} parent=5 // pred_check_branch
      %251 = sbr.rel (%p249) target = $region32
    $region31: #{gruunet_forward.44} parent=5 // pred_region
      // Predicated region
      $region33: #{gruunet_forward.44} parent=31 // pred_check
        %p252 = pneg %p47
      $region34: #{gruunet_forward.44} parent=31 // pred_check_branch
        %254 = sbr.rel (%p252) target = $region36
      $region35: #{gruunet_forward.44} parent=31 // pred_region
        %p255 = scmp.lt.s32.totalorder %s20, 1
        %s256 = scalar_select %p255, %s20, 1
        %p257 = scmp.lt.s32.totalorder %s21, 0
        %s258 = scalar_select %p257, %s21, 0
        %s259 = smul.addr %s256, 11
        %s260 = sadd.s32 %s258, %s259
        %s261 = smul.addr %s260, 8
        %s262 = scalar_lea.vmem %s0, %s261
      $region36: #{gruunet_forward.44} parent=31 // pred_fallthru
        _
      // Predicated region
      $region37: #{gruunet_forward.44} parent=31 // pred_check
        %p263 = pneg %p117
      $region38: #{gruunet_forward.44} parent=31 // pred_check_branch
        %265 = sbr.rel (%p263) target = $region40
      $region39: #{gruunet_forward.44} parent=31 // pred_region
        %p266 = scmp.lt.s32.totalorder %s20, 1
        %s267 = scalar_select %p266, %s20, 1
        %p268 = scmp.lt.s32.totalorder %s21, 0
        %s269 = scalar_select %p268, %s21, 0
        %s270 = smul.addr %s267, 9
        %s271 = sadd.s32 %s269, %s270
        %s272 = smul.addr %s271, 8
        %s273 = scalar_lea.vmem %s3, %s272
      $region40: #{gruunet_forward.44} parent=31 // pred_fallthru
        _
      // Predicated region
      $region41: #{gruunet_forward.44} parent=31 // pred_check
        %p274 = pneg %p187
      $region42: #{gruunet_forward.44} parent=31 // pred_check_branch
        %276 = sbr.rel (%p274) target = $region44
      $region43: #{gruunet_forward.44} parent=31 // pred_region
        %p277 = scmp.lt.s32.totalorder %s20, 1
        %s278 = scalar_select %p277, %s20, 1
        %p279 = scmp.lt.s32.totalorder %s21, 0
        %s280 = scalar_select %p279, %s21, 0
        %s281 = sadd.s32 %s280, %s278
        %s282 = smul.addr %s281, 8
        %s283 = scalar_lea.vmem %s6, %s282
      $region44: #{gruunet_forward.44} parent=31 // pred_fallthru
        _
    $region32: #{gruunet_forward.44} parent=5 // pred_fallthru
      _
    %p284 = scmp.le.s32.totalorder 1, %s13
    %p285 = scmp.lt.s32.totalorder %s13, 3
    %p286 = pnand %p284, %p285
    %p287 = pneg %p286
    // Predicated region
    $region45: #{gruunet_forward.44} parent=5 // pred_check
      _
    $region46: #{gruunet_forward.44} parent=5 // pred_check_branch
      %289 = sbr.rel (%p286) target = $region48
    $region47: #{gruunet_forward.44} parent=5 // pred_region
      %s290 = ssub.s32 %s13, 1
      %p291 = scmp.lt.s32.totalorder %s22, 1
      %s292 = scalar_select %p291, %s22, 1
      %p293 = scmp.lt.s32.totalorder %s23, 0
      %s294 = scalar_select %p293, %s23, 0
      %s295 = smul.addr %s292, 11
      %s296 = sadd.s32 %s294, %s295
      %s297 = smul.addr %s296, 8
      %s298 = scalar_lea.vmem %s0, %s297
      %p299 = pneg %p53
      %p300 = pneg %p50
      %p301 = pneg %p74
      %p302 = pneg %p71
      %p303 = pneg %p95
      %p304 = pneg %p92
      %p305 = scmp.lt.s32.totalorder %s22, 1
      %s306 = scalar_select %p305, %s22, 1
      %p307 = scmp.lt.s32.totalorder %s23, 0
      %s308 = scalar_select %p307, %s23, 0
      %s309 = smul.addr %s306, 9
      %s310 = sadd.s32 %s308, %s309
      %s311 = smul.addr %s310, 8
      %s312 = scalar_lea.vmem %s3, %s311
      %p313 = pneg %p123
      %p314 = pneg %p120
      %p315 = pneg %p144
      %p316 = pneg %p141
      %p317 = pneg %p165
      %p318 = pneg %p162
      %p319 = scmp.lt.s32.totalorder %s22, 1
      %s320 = scalar_select %p319, %s22, 1
      %p321 = scmp.lt.s32.totalorder %s23, 0
      %s322 = scalar_select %p321, %s23, 0
      %s323 = sadd.s32 %s322, %s320
      %s324 = smul.addr %s323, 8
      %s325 = scalar_lea.vmem %s6, %s324
      %p326 = pneg %p193
      %p327 = pneg %p190
      %p328 = pneg %p221
      %p329 = pneg %p218
      %p330 = scmp.lt.s32.totalorder %s22, 1
      %s331 = scalar_select %p330, %s22, 1
      %p332 = scmp.lt.s32.totalorder %s23, 0
      %s333 = scalar_select %p332, %s23, 0
      %s334 = sadd.s32 %s333, %s331
      %s335 = smul.addr %s334, 8
      %s336 = scalar_lea.vmem %s7, %s335
      %p337 = scmp.lt.s32.totalorder %s22, 1
      %s338 = scalar_select %p337, %s22, 1
      %p339 = scmp.lt.s32.totalorder %s23, 0
      %s340 = scalar_select %p339, %s23, 0
      %s341 = smul.addr %s338, 11
      %s342 = sadd.s32 %s340, %s341
      %s343 = smul.addr %s342, 8
      %s344 = scalar_lea.vmem %s0, %s343
      %p345 = scmp.lt.s32.totalorder %s22, 1
      %s346 = scalar_select %p345, %s22, 1
      %p347 = scmp.lt.s32.totalorder %s23, 0
      %s348 = scalar_select %p347, %s23, 0
      %s349 = smul.addr %s346, 9
      %s350 = sadd.s32 %s348, %s349
      %s351 = smul.addr %s350, 8
      %s352 = scalar_lea.vmem %s3, %s351
      %p353 = scmp.lt.s32.totalorder %s22, 1
      %s354 = scalar_select %p353, %s22, 1
      %p355 = scmp.lt.s32.totalorder %s23, 0
      %s356 = scalar_select %p355, %s23, 0
      %s357 = sadd.s32 %s356, %s354
      %s358 = smul.addr %s357, 8
      %s359 = scalar_lea.vmem %s6, %s358
      %p360 = scmp.lt.s32.totalorder %s22, 1
      %s361 = scalar_select %p360, %s22, 1
      %p362 = scmp.lt.s32.totalorder %s23, 0
      %s363 = scalar_select %p362, %s23, 0
      %s364 = sadd.s32 %s363, %s361
      %s365 = smul.addr %s364, 8
      %s366 = scalar_lea.vmem %s7, %s365
      %v367 = vld [vmem:[%s1] sm:$0xff]
      %v368 = vld [vmem:[%s344] sm:$0xff]
      %v369 = vld [vmem:[%s344 + $0x8] sm:$0xff]
      %v370 = vld [vmem:[%s344 + $0x10] sm:$0xff]
      %v371 = vld [vmem:[%s344 + $0x18] sm:$0xff]
      %v372 = vld [vmem:[%s344 + $0x20] sm:$0xff]
      %v373 = vld [vmem:[%s344 + $0x28] sm:$0xff]
      %v374 = vld [vmem:[%s344 + $0x30] sm:$0xff]
      %v375 = vld [vmem:[%s344 + $0x38] sm:$0xff]
      %v376 = vld [vmem:[%s344 + $0x40] sm:$0xff]
      %v377 = vld [vmem:[%s344 + $0x48] sm:$0xff]
      %v378 = vld [vmem:[%s344 + $0x50] sm:$0x1]
      %v379 = vld [vmem:[%s2] sm:$0xff]
      %381 = vset.pattern.permute.xlu0 0
      %382 = vperm.xlu0 %381, %v379
      %v383 = vpop.permute.xlu0 %382
      %vm385 = vcmask 662528
      %v387 = vsel %vm385, %v367, 0
      %vm389 = vcmask 1040384
      %v391 = vsel %vm389, %v378, 0
      %393 = vmatprep.subr.mxu0 0.0
      %394 = vmatpush1.msra.mxu0 %v368
      %395 = vmatprep.subr.mxu0 0.0
      %396 = vmatpush1.msra.mxu0 %v369
      %397 = vmatprep.subr.mxu0 0.0
      %398 = vmatpush1.msra.mxu0 %v370
      %399 = vmatprep.subr.mxu0 0.0
      %400 = vmatpush1.msra.mxu0 %v371
      %401 = vmatprep.subr.mxu0 0.0
      %402 = vmatpush1.msra.mxu0 %v372
      %403 = vmatprep.subr.mxu0 0.0
      %404 = vmatpush1.msra.mxu0 %v373
      %405 = vmatprep.subr.mxu0 0.0
      %406 = vmatpush1.msra.mxu0 %v374
      %407 = vmatprep.subr.mxu0 0.0
      %408 = vmatpush1.msra.mxu0 %v375
      %409 = vmatprep.subr.mxu0 0.0
      %410 = vmatpush1.msra.mxu0 %v376
      %411 = vmatprep.subr.mxu0 0.0
      %412 = vmatpush1.msra.mxu0 %v377
      %413 = vmatprep.subr.mxu0 0.0
      %414 = vmatpush1.msra.mxu0 %v391
      %415 = vmatprep.subr.mxu0 0.0
      %416 = vmatpush1.msra.mxu0 0.0
      %417 = vmatprep.subr.mxu0 0.0
      %418 = vmatpush1.msra.mxu0 0.0
      %419 = vmatprep.subr.mxu0 0.0
      %420 = vmatpush1.msra.mxu0 0.0
      %421 = vmatprep.subr.mxu0 0.0
      %422 = vmatpush1.msra.mxu0 0.0
      %423 = vmatprep.subr.mxu0 0.0
      %424 = vmatpush1.msra.mxu0 0.0
      %425 = vmatprep.subr.mxu0 0.0
      %426 = vmatpush1.msra.mxu0 0.0
      %427 = vmatprep.subr.mxu0 0.0
      %428 = vmatpush1.msra.mxu0 0.0
      %429 = vmatprep.subr.mxu0 0.0
      %430 = vmatpush1.msra.mxu0 0.0
      %431 = vmatprep.subr.mxu0 0.0
      %432 = vmatpush1.msra.mxu0 0.0
      %433 = vmatprep.subr.mxu0 0.0
      %434 = vmatpush1.msra.mxu0 0.0
      %435 = vmatprep.subr.mxu0 0.0
      %436 = vmatpush1.msra.mxu0 0.0
      %437 = vmatprep.subr.mxu0 0.0
      %438 = vmatpush1.msra.mxu0 0.0
      %439 = vmatprep.subr.mxu0 0.0
      %440 = vmatpush1.msra.mxu0 0.0
      %441 = vmatprep.subr.mxu0 0.0
      %442 = vmatpush1.msra.mxu0 0.0
      %443 = vmatprep.subr.mxu0 0.0
      %444 = vmatpush1.msra.mxu0 0.0
      %445 = vmatprep.subr.mxu0 0.0
      %446 = vmatpush1.msra.mxu0 0.0
      %447 = vmatprep.subr.mxu0 0.0
      %448 = vmatpush1.msra.mxu0 0.0
      %449 = vmatprep.subr.mxu0 0.0
      %450 = vmatpush1.msra.mxu0 0.0
      %451 = vmatprep.subr.mxu0 0.0
      %452 = vmatpush1.msra.mxu0 0.0
      %453 = vmatprep.subr.mxu0 0.0
      %454 = vmatpush1.msra.mxu0 0.0
      %455 = vmatprep.subr.mxu0 0.0
      %456 = vmatpush1.msra.mxu0 0.0
      %457 = vmatprep.mubr.f32.mxu0 0.0
      %458 = vmatmul.mubr.f32.gmra.mrb[0].mxu0 %v387
      %v459 = vpop.f32.mrb[0].mxu0
      %v460 = vadd.f32 %v383, %v459
      %v461 = vpop.f32.mrb[0].mxu0
      %462 = vdwg.mxu0
      %v463 = vxor.u32 %v460, 2147483648
      %v464 = vmul.f32 %v463, 1.442695
      %v465 = vpow.pop %v464
      %v466 = vadd.f32 %v465, 1.0
      %v467 = vrcp.pop %v466
      %v468 = vmul.f32 1.0, %v467
      %v469 = vld [vmem:[%s4] sm:$0xff]
      %v470 = vld [vmem:[%s352] sm:$0xff]
      %v471 = vld [vmem:[%s352 + $0x8] sm:$0xff]
      %v472 = vld [vmem:[%s352 + $0x10] sm:$0xff]
      %v473 = vld [vmem:[%s352 + $0x18] sm:$0xff]
      %v474 = vld [vmem:[%s352 + $0x20] sm:$0xff]
      %v475 = vld [vmem:[%s352 + $0x28] sm:$0xff]
      %v476 = vld [vmem:[%s352 + $0x30] sm:$0xff]
      %v477 = vld [vmem:[%s352 + $0x38] sm:$0xff]
      %v478 = vld [vmem:[%s352 + $0x40] sm:$0xff]
      %v479 = vld [vmem:[%s5] sm:$0xff]
      %481 = vset.pattern.permute.xlu0 0
      %482 = vperm.xlu0 %481, %v479
      %v483 = vpop.permute.xlu0 %482
      %vm485 = vcmask 588800
      %v487 = vsel %vm485, %v469, 0
      %489 = vmatprep.subr.mxu0 0.0
      %490 = vmatpush1.msra.mxu0 %v470
      %491 = vmatprep.subr.mxu0 0.0
      %492 = vmatpush1.msra.mxu0 %v471
      %493 = vmatprep.subr.mxu0 0.0
      %494 = vmatpush1.msra.mxu0 %v472
      %495 = vmatprep.subr.mxu0 0.0
      %496 = vmatpush1.msra.mxu0 %v473
      %497 = vmatprep.subr.mxu0 0.0
      %498 = vmatpush1.msra.mxu0 %v474
      %499 = vmatprep.subr.mxu0 0.0
      %500 = vmatpush1.msra.mxu0 %v475
      %501 = vmatprep.subr.mxu0 0.0
      %502 = vmatpush1.msra.mxu0 %v476
      %503 = vmatprep.subr.mxu0 0.0
      %504 = vmatpush1.msra.mxu0 %v477
      %505 = vmatprep.subr.mxu0 0.0
      %506 = vmatpush1.msra.mxu0 %v478
      %507 = vmatprep.subr.mxu0 0.0
      %508 = vmatpush1.msra.mxu0 0.0
      %509 = vmatprep.subr.mxu0 0.0
      %510 = vmatpush1.msra.mxu0 0.0
      %511 = vmatprep.subr.mxu0 0.0
      %512 = vmatpush1.msra.mxu0 0.0
      %513 = vmatprep.subr.mxu0 0.0
      %514 = vmatpush1.msra.mxu0 0.0
      %515 = vmatprep.subr.mxu0 0.0
      %516 = vmatpush1.msra.mxu0 0.0
      %517 = vmatprep.subr.mxu0 0.0
      %518 = vmatpush1.msra.mxu0 0.0
      %519 = vmatprep.subr.mxu0 0.0
      %520 = vmatpush1.msra.mxu0 0.0
      %521 = vmatprep.subr.mxu0 0.0
      %522 = vmatpush1.msra.mxu0 0.0
      %523 = vmatprep.subr.mxu0 0.0
      %524 = vmatpush1.msra.mxu0 0.0
      %525 = vmatprep.subr.mxu0 0.0
      %526 = vmatpush1.msra.mxu0 0.0
      %527 = vmatprep.subr.mxu0 0.0
      %528 = vmatpush1.msra.mxu0 0.0
      %529 = vmatprep.subr.mxu0 0.0
      %530 = vmatpush1.msra.mxu0 0.0
      %531 = vmatprep.subr.mxu0 0.0
      %532 = vmatpush1.msra.mxu0 0.0
      %533 = vmatprep.subr.mxu0 0.0
      %534 = vmatpush1.msra.mxu0 0.0
      %535 = vmatprep.subr.mxu0 0.0
      %536 = vmatpush1.msra.mxu0 0.0
      %537 = vmatprep.subr.mxu0 0.0
      %538 = vmatpush1.msra.mxu0 0.0
      %539 = vmatprep.subr.mxu0 0.0
      %540 = vmatpush1.msra.mxu0 0.0
      %541 = vmatprep.subr.mxu0 0.0
      %542 = vmatpush1.msra.mxu0 0.0
      %543 = vmatprep.subr.mxu0 0.0
      %544 = vmatpush1.msra.mxu0 0.0
      %545 = vmatprep.subr.mxu0 0.0
      %546 = vmatpush1.msra.mxu0 0.0
      %547 = vmatprep.subr.mxu0 0.0
      %548 = vmatpush1.msra.mxu0 0.0
      %549 = vmatprep.subr.mxu0 0.0
      %550 = vmatpush1.msra.mxu0 0.0
      %551 = vmatprep.subr.mxu0 0.0
      %552 = vmatpush1.msra.mxu0 0.0
      %553 = vmatprep.mubr.f32.mxu0 0.0
      %554 = vmatmul.mubr.f32.gmra.mrb[0].mxu0 %v487
      %v555 = vpop.f32.mrb[0].mxu0
      %v556 = vadd.f32 %v483, %v555
      %v557 = vpop.f32.mrb[0].mxu0
      %558 = vdwg.mxu0
      %vm559 = vcmp.ge.f32.partialorder %v556, 0.0
      %v560 = vadd.f32 %v556, 0.5
      %v561 = vxor.u32 %v556, 2147483648
      %v562 = vmul.f32 %v561, 1.442695
      %v563 = vpow.pop %v562
      %v564 = vadd.f32 %v563, 1.0
      %v565 = vrcp.pop %v564
      %v566 = vmul.f32 1.0, %v565
      %v567 = vsel %vm559, %v560, %v566
      %v568 = vld [vmem:[%s359] sm:$0xff]
      %v569 = vsub.f32 %v567, %v568
      %v570 = vmul.f32 %v468, %v569
      %v571 = vadd.f32 %v568, %v570
      %vm572 = vcmask 523264
      %573 = vst.msk [vmem:[%s366] sm:$0xff] %vm572, %v571
      %p574 = scmp.lt.s32.totalorder %s22, 1
      %s575 = scalar_select %p574, %s22, 1
      %p576 = scmp.lt.s32.totalorder %s23, 0
      %s577 = scalar_select %p576, %s23, 0
      %s578 = sadd.s32 %s577, %s575
      %s579 = smul.addr %s578, 8
      %s580 = scalar_lea.vmem %s7, %s579
      // Predicated region
      $region49: #{gruunet_forward.44} parent=47 // pred_check
        %p581 = pneg %p218
      $region50: #{gruunet_forward.44} parent=47 // pred_check_branch
        %583 = sbr.rel (%p581) target = $region52
      $region51: #{gruunet_forward.44} parent=47 // pred_region
        _
      $region52: #{gruunet_forward.44} parent=47 // pred_fallthru
        _
    $region48: #{gruunet_forward.44} parent=5 // pred_fallthru
      _
    %p584 = scmp.le.s32.totalorder 2, %s13
    // Predicated region
    $region53: #{gruunet_forward.44} parent=5 // pred_check
      %p585 = pneg %p584
    $region54: #{gruunet_forward.44} parent=5 // pred_check_branch
      %587 = sbr.rel (%p585) target = $region56
    $region55: #{gruunet_forward.44} parent=5 // pred_region
      %s588 = ssub.s32 %s13, 2
      // Predicated region
      $region57: #{gruunet_forward.44} parent=55 // pred_check
        %p589 = pneg %p224
      $region58: #{gruunet_forward.44} parent=55 // pred_check_branch
        %591 = sbr.rel (%p589) target = $region60
      $region59: #{gruunet_forward.44} parent=55 // pred_region
        %p592 = scmp.lt.s32.totalorder %s24, 1
        %s593 = scalar_select %p592, %s24, 1
        %p594 = scmp.lt.s32.totalorder %s25, 0
        %s595 = scalar_select %p594, %s25, 0
        %s596 = sadd.s32 %s595, %s593
        %s597 = smul.addr %s596, 8
        %s598 = scalar_lea.vmem %s7, %s597
      $region60: #{gruunet_forward.44} parent=55 // pred_fallthru
        _
    $region56: #{gruunet_forward.44} parent=5 // pred_fallthru
      _
  $region6: #{gruunet_forward.44} parent=0 // loop_footer
    %s17 = sadd.s32 1, %s13
  $region7: #{gruunet_forward.44} parent=0 // loop_footer_branch
    %12 = sbr.rel target = $region3
  $region8: #{gruunet_forward.44} parent=0 // loop_exit
    _

// kernel: gruunet_forward.31
$region0: #{gruunet_forward.31}
  #allocation0 [shape = 'u32[]', space=smem, size = 0x4, offset = 0x4, fixed_abs, tag = 'smem constant byte address 0x4 - core index']
  #allocation1 [shape = 'u32[144,128]{1,0:T(1,128)}', space=vmem, size = 0x12000, scoped, tag = 'internal scratch']
  %s0 = inlined_call_operand.vmem [shape: f32[2,81,64], index: 0, kind: input, shape index: {}]
  %s1 = inlined_call_operand.vmem [shape: f32[8,81], index: 1, kind: input, shape index: {}]
  %s2 = inlined_call_operand.vmem [shape: f32[8,1], index: 2, kind: input, shape index: {}]
  %s3 = inlined_call_operand.vmem [shape: f32[2,72,64], index: 3, kind: input, shape index: {}]
  %s4 = inlined_call_operand.vmem [shape: f32[8,72], index: 4, kind: input, shape index: {}]
  %s5 = inlined_call_operand.vmem [shape: f32[8,1], index: 5, kind: input, shape index: {}]
  %s6 = inlined_call_operand.vmem [shape: f32[2,8,64], index: 6, kind: output, shape index: {}]
  %s7 = sld [smem:[#allocation0]]
  $region57: #{gruunet_forward.31} parent=0
    _
  %s9 = ssub.s32 1, %s7
  %s10 = scalar_select 0, %s9, %s7
  loop: start=0, step=1, limit=4
  $region2: #{gruunet_forward.31} parent=0 // loop_pre_header
    _
  $region3: #{gruunet_forward.31} parent=0 // loop_header
    %s12 = sphi 0, %s16
    %p13 = scmp.ge.s32.totalorder %s12, 4
    %s19 = sphi 0, %s31
    %s20 = sphi 0, %s27
    %s21 = sphi 0, %s19
    %s22 = sphi 0, %s20
    %s23 = sphi 0, %s21
    %s24 = sphi 0, %s22
    %s36 = sphi 0, %s38
    %s39 = sphi 0, %s36
    %s40 = sphi 0, %s39
    %s56 = sphi 0, %s40
    %s60 = sphi 0, %s60
    %s62 = sphi 0, %s60
    %s63 = sphi 0, %s62
    %s77 = sphi 0, %s63
    %s81 = sphi 0, %s81
    %s83 = sphi 0, %s81
    %s84 = sphi 0, %s83
    %s98 = sphi 0, %s84
    %s106 = sphi 0, %s108
    %s109 = sphi 0, %s106
    %s110 = sphi 0, %s109
    %s126 = sphi 0, %s110
    %s130 = sphi 0, %s130
    %s132 = sphi 0, %s130
    %s133 = sphi 0, %s132
    %s147 = sphi 0, %s133
    %s151 = sphi 0, %s151
    %s153 = sphi 0, %s151
    %s154 = sphi 0, %s153
    %s168 = sphi 0, %s154
    %s176 = sphi 0, %s178
    %s179 = sphi 0, %s176
    %s180 = sphi 0, %s179
    %s196 = sphi 0, %s180
  $region4: #{gruunet_forward.31} parent=0 // loop_header_branch
    %15 = sbr.rel (%p13) target = $region8
  $region5: #{gruunet_forward.31} parent=0 // loop_body
    %s17 = ssub.s32 %s12, 1
    %s18 = ssub.s32 %s12, 2
    %s25 = sadd.s32 1, %s20
    %p26 = scmp.ge.s32.totalorder %s25, 1
    %s27 = scalar_select %p26, 0, %s25
    %s28 = sadd.s32 1, %s19
    %s29 = scalar_select %p26, %s28, %s19
    %p30 = scmp.ge.s32.totalorder %s29, 2
    %s31 = scalar_select %p30, 0, %s29
    %s32 = ssub.s32 %s19, %s31
    %s33 = ssub.s32 %s20, %s27
    %s34 = sor.u32 %s32, %s33
    %p35 = scmp.eq.s32.totalorder %s34, 0
    %s37 = sadd.s32 %s36, 1
    %s38 = scalar_select %p35, %s36, %s37
    %p41 = pneg %p35
    %p42 = scmp.eq.s32.totalorder %s12, 1
    %p43 = por %p41, %p42
    %p44 = scmp.ne.s32.totalorder %s36, %s39
    %p45 = scmp.eq.s32.totalorder %s12, 0
    %p46 = por %p44, %p45
    %p47 = scmp.ne.s32.totalorder %s36, %s39
    %p48 = scmp.eq.s32.totalorder %s17, 1
    %p49 = por %p47, %p48
    %p50 = scmp.ne.s32.totalorder %s39, %s40
    %p51 = scmp.eq.s32.totalorder %s17, 0
    %p52 = por %p50, %p51
    %p53 = scmp.ne.s32.totalorder %s39, %s40
    %p54 = scmp.eq.s32.totalorder %s18, 1
    %p55 = por %p53, %p54
    %p57 = scmp.ne.s32.totalorder %s40, %s56
    %p58 = scmp.eq.s32.totalorder %s18, 0
    %p59 = por %p57, %p58
    %s61 = sadd.s32 %s60, 1
    %p64 = scmp.eq.s32.totalorder %s12, 1
    %p65 = scmp.ne.s32.totalorder %s60, %s62
    %p66 = scmp.eq.s32.totalorder %s12, 0
    %p67 = por %p65, %p66
    %p68 = scmp.ne.s32.totalorder %s60, %s62
    %p69 = scmp.eq.s32.totalorder %s17, 1
    %p70 = por %p68, %p69
    %p71 = scmp.ne.s32.totalorder %s62, %s63
    %p72 = scmp.eq.s32.totalorder %s17, 0
    %p73 = por %p71, %p72
    %p74 = scmp.ne.s32.totalorder %s62, %s63
    %p75 = scmp.eq.s32.totalorder %s18, 1
    %p76 = por %p74, %p75
    %p78 = scmp.ne.s32.totalorder %s63, %s77
    %p79 = scmp.eq.s32.totalorder %s18, 0
    %p80 = por %p78, %p79
    %s82 = sadd.s32 %s81, 1
    %p85 = scmp.eq.s32.totalorder %s12, 1
    %p86 = scmp.ne.s32.totalorder %s81, %s83
    %p87 = scmp.eq.s32.totalorder %s12, 0
    %p88 = por %p86, %p87
    %p89 = scmp.ne.s32.totalorder %s81, %s83
    %p90 = scmp.eq.s32.totalorder %s17, 1
    %p91 = por %p89, %p90
    %p92 = scmp.ne.s32.totalorder %s83, %s84
    %p93 = scmp.eq.s32.totalorder %s17, 0
    %p94 = por %p92, %p93
    %p95 = scmp.ne.s32.totalorder %s83, %s84
    %p96 = scmp.eq.s32.totalorder %s18, 1
    %p97 = por %p95, %p96
    %p99 = scmp.ne.s32.totalorder %s84, %s98
    %p100 = scmp.eq.s32.totalorder %s18, 0
    %p101 = por %p99, %p100
    %s102 = ssub.s32 %s19, %s31
    %s103 = ssub.s32 %s20, %s27
    %s104 = sor.u32 %s102, %s103
    %p105 = scmp.eq.s32.totalorder %s104, 0
    %s107 = sadd.s32 %s106, 1
    %s108 = scalar_select %p105, %s106, %s107
    %p111 = pneg %p105
    %p112 = scmp.eq.s32.totalorder %s12, 1
    %p113 = por %p111, %p112
    %p114 = scmp.ne.s32.totalorder %s106, %s109
    %p115 = scmp.eq.s32.totalorder %s12, 0
    %p116 = por %p114, %p115
    %p117 = scmp.ne.s32.totalorder %s106, %s109
    %p118 = scmp.eq.s32.totalorder %s17, 1
    %p119 = por %p117, %p118
    %p120 = scmp.ne.s32.totalorder %s109, %s110
    %p121 = scmp.eq.s32.totalorder %s17, 0
    %p122 = por %p120, %p121
    %p123 = scmp.ne.s32.totalorder %s109, %s110
    %p124 = scmp.eq.s32.totalorder %s18, 1
    %p125 = por %p123, %p124
    %p127 = scmp.ne.s32.totalorder %s110, %s126
    %p128 = scmp.eq.s32.totalorder %s18, 0
    %p129 = por %p127, %p128
    %s131 = sadd.s32 %s130, 1
    %p134 = scmp.eq.s32.totalorder %s12, 1
    %p135 = scmp.ne.s32.totalorder %s130, %s132
    %p136 = scmp.eq.s32.totalorder %s12, 0
    %p137 = por %p135, %p136
    %p138 = scmp.ne.s32.totalorder %s130, %s132
    %p139 = scmp.eq.s32.totalorder %s17, 1
    %p140 = por %p138, %p139
    %p141 = scmp.ne.s32.totalorder %s132, %s133
    %p142 = scmp.eq.s32.totalorder %s17, 0
    %p143 = por %p141, %p142
    %p144 = scmp.ne.s32.totalorder %s132, %s133
    %p145 = scmp.eq.s32.totalorder %s18, 1
    %p146 = por %p144, %p145
    %p148 = scmp.ne.s32.totalorder %s133, %s147
    %p149 = scmp.eq.s32.totalorder %s18, 0
    %p150 = por %p148, %p149
    %s152 = sadd.s32 %s151, 1
    %p155 = scmp.eq.s32.totalorder %s12, 1
    %p156 = scmp.ne.s32.totalorder %s151, %s153
    %p157 = scmp.eq.s32.totalorder %s12, 0
    %p158 = por %p156, %p157
    %p159 = scmp.ne.s32.totalorder %s151, %s153
    %p160 = scmp.eq.s32.totalorder %s17, 1
    %p161 = por %p159, %p160
    %p162 = scmp.ne.s32.totalorder %s153, %s154
    %p163 = scmp.eq.s32.totalorder %s17, 0
    %p164 = por %p162, %p163
    %p165 = scmp.ne.s32.totalorder %s153, %s154
    %p166 = scmp.eq.s32.totalorder %s18, 1
    %p167 = por %p165, %p166
    %p169 = scmp.ne.s32.totalorder %s154, %s168
    %p170 = scmp.eq.s32.totalorder %s18, 0
    %p171 = por %p169, %p170
    %s172 = ssub.s32 %s19, %s31
    %s173 = ssub.s32 %s20, %s27
    %s174 = sor.u32 %s172, %s173
    %p175 = scmp.eq.s32.totalorder %s174, 0
    %s177 = sadd.s32 %s176, 1
    %s178 = scalar_select %p175, %s176, %s177
    %p181 = pneg %p175
    %p182 = scmp.eq.s32.totalorder %s12, 1
    %p183 = por %p181, %p182
    %p184 = scmp.ne.s32.totalorder %s176, %s179
    %p185 = scmp.eq.s32.totalorder %s12, 0
    %p186 = por %p184, %p185
    %p187 = scmp.ne.s32.totalorder %s176, %s179
    %p188 = scmp.eq.s32.totalorder %s17, 1
    %p189 = por %p187, %p188
    %p190 = scmp.ne.s32.totalorder %s179, %s180
    %p191 = scmp.eq.s32.totalorder %s17, 0
    %p192 = por %p190, %p191
    %p193 = scmp.ne.s32.totalorder %s179, %s180
    %p194 = scmp.eq.s32.totalorder %s18, 1
    %p195 = por %p193, %p194
    %p197 = scmp.ne.s32.totalorder %s180, %s196
    %p198 = scmp.eq.s32.totalorder %s18, 0
    %p199 = por %p197, %p198
    %p200 = scmp.le.s32.totalorder 1, %s12
    %p201 = scmp.lt.s32.totalorder %s12, 3
    %p202 = pnand %p200, %p201
    %p203 = pneg %p202
    // Predicated region
    $region9: #{gruunet_forward.31} parent=5 // pred_check
      _
    $region10: #{gruunet_forward.31} parent=5 // pred_check_branch
      %205 = sbr.rel (%p202) target = $region12
    $region11: #{gruunet_forward.31} parent=5 // pred_region
      %s206 = ssub.s32 %s12, 1
      // Predicated region
      $region13: #{gruunet_forward.31} parent=11 // pred_check
        %p207 = pneg %p73
      $region14: #{gruunet_forward.31} parent=11 // pred_check_branch
        %209 = sbr.rel (%p207) target = $region16
      $region15: #{gruunet_forward.31} parent=11 // pred_region
        _
      $region16: #{gruunet_forward.31} parent=11 // pred_fallthru
        _
      // Predicated region
      $region17: #{gruunet_forward.31} parent=11 // pred_check
        %p210 = pneg %p94
      $region18: #{gruunet_forward.31} parent=11 // pred_check_branch
        %212 = sbr.rel (%p210) target = $region20
      $region19: #{gruunet_forward.31} parent=11 // pred_region
        _
      $region20: #{gruunet_forward.31} parent=11 // pred_fallthru
        _
      // Predicated region
      $region21: #{gruunet_forward.31} parent=11 // pred_check
        %p213 = pneg %p143
      $region22: #{gruunet_forward.31} parent=11 // pred_check_branch
        %215 = sbr.rel (%p213) target = $region24
      $region23: #{gruunet_forward.31} parent=11 // pred_region
        _
      $region24: #{gruunet_forward.31} parent=11 // pred_fallthru
        _
      // Predicated region
      $region25: #{gruunet_forward.31} parent=11 // pred_check
        %p216 = pneg %p164
      $region26: #{gruunet_forward.31} parent=11 // pred_check_branch
        %218 = sbr.rel (%p216) target = $region28
      $region27: #{gruunet_forward.31} parent=11 // pred_region
        _
      $region28: #{gruunet_forward.31} parent=11 // pred_fallthru
        _
    $region12: #{gruunet_forward.31} parent=5 // pred_fallthru
      _
    %p219 = scmp.lt.s32.totalorder %s12, 2
    // Predicated region
    $region29: #{gruunet_forward.31} parent=5 // pred_check
      %p220 = pneg %p219
    $region30: #{gruunet_forward.31} parent=5 // pred_check_branch
      %222 = sbr.rel (%p220) target = $region32
    $region31: #{gruunet_forward.31} parent=5 // pred_region
      // Predicated region
      $region33: #{gruunet_forward.31} parent=31 // pred_check
        %p223 = pneg %p46
      $region34: #{gruunet_forward.31} parent=31 // pred_check_branch
        %225 = sbr.rel (%p223) target = $region36
      $region35: #{gruunet_forward.31} parent=31 // pred_region
        %p226 = scmp.lt.s32.totalorder %s19, 1
        %s227 = scalar_select %p226, %s19, 1
        %p228 = scmp.lt.s32.totalorder %s20, 0
        %s229 = scalar_select %p228, %s20, 0
        %s230 = smul.addr %s227, 11
        %s231 = sadd.s32 %s229, %s230
        %s232 = smul.addr %s231, 8
        %s233 = scalar_lea.vmem %s0, %s232
      $region36: #{gruunet_forward.31} parent=31 // pred_fallthru
        _
      // Predicated region
      $region37: #{gruunet_forward.31} parent=31 // pred_check
        %p234 = pneg %p116
      $region38: #{gruunet_forward.31} parent=31 // pred_check_branch
        %236 = sbr.rel (%p234) target = $region40
      $region39: #{gruunet_forward.31} parent=31 // pred_region
        %p237 = scmp.lt.s32.totalorder %s19, 1
        %s238 = scalar_select %p237, %s19, 1
        %p239 = scmp.lt.s32.totalorder %s20, 0
        %s240 = scalar_select %p239, %s20, 0
        %s241 = smul.addr %s238, 9
        %s242 = sadd.s32 %s240, %s241
        %s243 = smul.addr %s242, 8
        %s244 = scalar_lea.vmem %s3, %s243
      $region40: #{gruunet_forward.31} parent=31 // pred_fallthru
        _
    $region32: #{gruunet_forward.31} parent=5 // pred_fallthru
      _
    %p245 = scmp.le.s32.totalorder 1, %s12
    %p246 = scmp.lt.s32.totalorder %s12, 3
    %p247 = pnand %p245, %p246
    %p248 = pneg %p247
    // Predicated region
    $region41: #{gruunet_forward.31} parent=5 // pred_check
      _
    $region42: #{gruunet_forward.31} parent=5 // pred_check_branch
      %250 = sbr.rel (%p247) target = $region44
    $region43: #{gruunet_forward.31} parent=5 // pred_region
      %s251 = ssub.s32 %s12, 1
      %p252 = scmp.lt.s32.totalorder %s21, 1
      %s253 = scalar_select %p252, %s21, 1
      %p254 = scmp.lt.s32.totalorder %s22, 0
      %s255 = scalar_select %p254, %s22, 0
      %s256 = smul.addr %s253, 11
      %s257 = sadd.s32 %s255, %s256
      %s258 = smul.addr %s257, 8
      %s259 = scalar_lea.vmem %s0, %s258
      %p260 = pneg %p52
      %p261 = pneg %p49
      %p262 = pneg %p73
      %p263 = pneg %p70
      %p264 = pneg %p94
      %p265 = pneg %p91
      %p266 = scmp.lt.s32.totalorder %s21, 1
      %s267 = scalar_select %p266, %s21, 1
      %p268 = scmp.lt.s32.totalorder %s22, 0
      %s269 = scalar_select %p268, %s22, 0
      %s270 = smul.addr %s267, 9
      %s271 = sadd.s32 %s269, %s270
      %s272 = smul.addr %s271, 8
      %s273 = scalar_lea.vmem %s3, %s272
      %p274 = pneg %p122
      %p275 = pneg %p119
      %p276 = pneg %p143
      %p277 = pneg %p140
      %p278 = pneg %p164
      %p279 = pneg %p161
      %p280 = pneg %p192
      %p281 = pneg %p189
      %p282 = scmp.lt.s32.totalorder %s21, 1
      %s283 = scalar_select %p282, %s21, 1
      %p284 = scmp.lt.s32.totalorder %s22, 0
      %s285 = scalar_select %p284, %s22, 0
      %s286 = sadd.s32 %s285, %s283
      %s287 = smul.addr %s286, 8
      %s288 = scalar_lea.vmem %s6, %s287
      %p289 = scmp.lt.s32.totalorder %s21, 1
      %s290 = scalar_select %p289, %s21, 1
      %p291 = scmp.lt.s32.totalorder %s22, 0
      %s292 = scalar_select %p291, %s22, 0
      %s293 = smul.addr %s290, 11
      %s294 = sadd.s32 %s292, %s293
      %s295 = smul.addr %s294, 8
      %s296 = scalar_lea.vmem %s0, %s295
      %p297 = scmp.lt.s32.totalorder %s21, 1
      %s298 = scalar_select %p297, %s21, 1
      %p299 = scmp.lt.s32.totalorder %s22, 0
      %s300 = scalar_select %p299, %s22, 0
      %s301 = smul.addr %s298, 9
      %s302 = sadd.s32 %s300, %s301
      %s303 = smul.addr %s302, 8
      %s304 = scalar_lea.vmem %s3, %s303
      %p305 = scmp.lt.s32.totalorder %s21, 1
      %s306 = scalar_select %p305, %s21, 1
      %p307 = scmp.lt.s32.totalorder %s22, 0
      %s308 = scalar_select %p307, %s22, 0
      %s309 = sadd.s32 %s308, %s306
      %s310 = smul.addr %s309, 8
      %s311 = scalar_lea.vmem %s6, %s310
      %v312 = vld [vmem:[%s1] sm:$0xff]
      %v313 = vld [vmem:[%s296] sm:$0xff]
      %v314 = vld [vmem:[%s296 + $0x8] sm:$0xff]
      %v315 = vld [vmem:[%s296 + $0x10] sm:$0xff]
      %v316 = vld [vmem:[%s296 + $0x18] sm:$0xff]
      %v317 = vld [vmem:[%s296 + $0x20] sm:$0xff]
      %v318 = vld [vmem:[%s296 + $0x28] sm:$0xff]
      %v319 = vld [vmem:[%s296 + $0x30] sm:$0xff]
      %v320 = vld [vmem:[%s296 + $0x38] sm:$0xff]
      %v321 = vld [vmem:[%s296 + $0x40] sm:$0xff]
      %v322 = vld [vmem:[%s296 + $0x48] sm:$0xff]
      %v323 = vld [vmem:[%s296 + $0x50] sm:$0x1]
      %v324 = vld [vmem:[%s2] sm:$0xff]
      %326 = vset.pattern.permute.xlu0 0
      %327 = vperm.xlu0 %326, %v324
      %v328 = vpop.permute.xlu0 %327
      %vm330 = vcmask 662528
      %v332 = vsel %vm330, %v312, 0
      %vm334 = vcmask 1040384
      %v336 = vsel %vm334, %v323, 0
      %338 = vmatprep.subr.mxu0 0.0
      %339 = vmatpush1.msra.mxu0 %v313
      %340 = vmatprep.subr.mxu0 0.0
      %341 = vmatpush1.msra.mxu0 %v314
      %342 = vmatprep.subr.mxu0 0.0
      %343 = vmatpush1.msra.mxu0 %v315
      %344 = vmatprep.subr.mxu0 0.0
      %345 = vmatpush1.msra.mxu0 %v316
      %346 = vmatprep.subr.mxu0 0.0
      %347 = vmatpush1.msra.mxu0 %v317
      %348 = vmatprep.subr.mxu0 0.0
      %349 = vmatpush1.msra.mxu0 %v318
      %350 = vmatprep.subr.mxu0 0.0
      %351 = vmatpush1.msra.mxu0 %v319
      %352 = vmatprep.subr.mxu0 0.0
      %353 = vmatpush1.msra.mxu0 %v320
      %354 = vmatprep.subr.mxu0 0.0
      %355 = vmatpush1.msra.mxu0 %v321
      %356 = vmatprep.subr.mxu0 0.0
      %357 = vmatpush1.msra.mxu0 %v322
      %358 = vmatprep.subr.mxu0 0.0
      %359 = vmatpush1.msra.mxu0 %v336
      %360 = vmatprep.subr.mxu0 0.0
      %361 = vmatpush1.msra.mxu0 0.0
      %362 = vmatprep.subr.mxu0 0.0
      %363 = vmatpush1.msra.mxu0 0.0
      %364 = vmatprep.subr.mxu0 0.0
      %365 = vmatpush1.msra.mxu0 0.0
      %366 = vmatprep.subr.mxu0 0.0
      %367 = vmatpush1.msra.mxu0 0.0
      %368 = vmatprep.subr.mxu0 0.0
      %369 = vmatpush1.msra.mxu0 0.0
      %370 = vmatprep.subr.mxu0 0.0
      %371 = vmatpush1.msra.mxu0 0.0
      %372 = vmatprep.subr.mxu0 0.0
      %373 = vmatpush1.msra.mxu0 0.0
      %374 = vmatprep.subr.mxu0 0.0
      %375 = vmatpush1.msra.mxu0 0.0
      %376 = vmatprep.subr.mxu0 0.0
      %377 = vmatpush1.msra.mxu0 0.0
      %378 = vmatprep.subr.mxu0 0.0
      %379 = vmatpush1.msra.mxu0 0.0
      %380 = vmatprep.subr.mxu0 0.0
      %381 = vmatpush1.msra.mxu0 0.0
      %382 = vmatprep.subr.mxu0 0.0
      %383 = vmatpush1.msra.mxu0 0.0
      %384 = vmatprep.subr.mxu0 0.0
      %385 = vmatpush1.msra.mxu0 0.0
      %386 = vmatprep.subr.mxu0 0.0
      %387 = vmatpush1.msra.mxu0 0.0
      %388 = vmatprep.subr.mxu0 0.0
      %389 = vmatpush1.msra.mxu0 0.0
      %390 = vmatprep.subr.mxu0 0.0
      %391 = vmatpush1.msra.mxu0 0.0
      %392 = vmatprep.subr.mxu0 0.0
      %393 = vmatpush1.msra.mxu0 0.0
      %394 = vmatprep.subr.mxu0 0.0
      %395 = vmatpush1.msra.mxu0 0.0
      %396 = vmatprep.subr.mxu0 0.0
      %397 = vmatpush1.msra.mxu0 0.0
      %398 = vmatprep.subr.mxu0 0.0
      %399 = vmatpush1.msra.mxu0 0.0
      %400 = vmatprep.subr.mxu0 0.0
      %401 = vmatpush1.msra.mxu0 0.0
      %402 = vmatprep.mubr.f32.mxu0 0.0
      %403 = vmatmul.mubr.f32.gmra.mrb[0].mxu0 %v332
      %v404 = vpop.f32.mrb[0].mxu0
      %v405 = vadd.f32 %v328, %v404
      %v406 = vpop.f32.mrb[0].mxu0
      %407 = vdwg.mxu0
      %v408 = vxor.u32 %v405, 2147483648
      %v409 = vmul.f32 %v408, 1.442695
      %v410 = vpow.pop %v409
      %v411 = vadd.f32 %v410, 1.0
      %v412 = vrcp.pop %v411
      %v413 = vmul.f32 1.0, %v412
      %v414 = vld [vmem:[%s4] sm:$0xff]
      %v415 = vld [vmem:[%s304] sm:$0xff]
      %v416 = vld [vmem:[%s304 + $0x8] sm:$0xff]
      %v417 = vld [vmem:[%s304 + $0x10] sm:$0xff]
      %v418 = vld [vmem:[%s304 + $0x18] sm:$0xff]
      %v419 = vld [vmem:[%s304 + $0x20] sm:$0xff]
      %v420 = vld [vmem:[%s304 + $0x28] sm:$0xff]
      %v421 = vld [vmem:[%s304 + $0x30] sm:$0xff]
      %v422 = vld [vmem:[%s304 + $0x38] sm:$0xff]
      %v423 = vld [vmem:[%s304 + $0x40] sm:$0xff]
      %v424 = vld [vmem:[%s5] sm:$0xff]
      %426 = vset.pattern.permute.xlu0 0
      %427 = vperm.xlu0 %426, %v424
      %v428 = vpop.permute.xlu0 %427
      %vm430 = vcmask 588800
      %v432 = vsel %vm430, %v414, 0
      %434 = vmatprep.subr.mxu0 0.0
      %435 = vmatpush1.msra.mxu0 %v415
      %436 = vmatprep.subr.mxu0 0.0
      %437 = vmatpush1.msra.mxu0 %v416
      %438 = vmatprep.subr.mxu0 0.0
      %439 = vmatpush1.msra.mxu0 %v417
      %440 = vmatprep.subr.mxu0 0.0
      %441 = vmatpush1.msra.mxu0 %v418
      %442 = vmatprep.subr.mxu0 0.0
      %443 = vmatpush1.msra.mxu0 %v419
      %444 = vmatprep.subr.mxu0 0.0
      %445 = vmatpush1.msra.mxu0 %v420
      %446 = vmatprep.subr.mxu0 0.0
      %447 = vmatpush1.msra.mxu0 %v421
      %448 = vmatprep.subr.mxu0 0.0
      %449 = vmatpush1.msra.mxu0 %v422
      %450 = vmatprep.subr.mxu0 0.0
      %451 = vmatpush1.msra.mxu0 %v423
      %452 = vmatprep.subr.mxu0 0.0
      %453 = vmatpush1.msra.mxu0 0.0
      %454 = vmatprep.subr.mxu0 0.0
      %455 = vmatpush1.msra.mxu0 0.0
      %456 = vmatprep.subr.mxu0 0.0
      %457 = vmatpush1.msra.mxu0 0.0
      %458 = vmatprep.subr.mxu0 0.0
      %459 = vmatpush1.msra.mxu0 0.0
      %460 = vmatprep.subr.mxu0 0.0
      %461 = vmatpush1.msra.mxu0 0.0
      %462 = vmatprep.subr.mxu0 0.0
      %463 = vmatpush1.msra.mxu0 0.0
      %464 = vmatprep.subr.mxu0 0.0
      %465 = vmatpush1.msra.mxu0 0.0
      %466 = vmatprep.subr.mxu0 0.0
      %467 = vmatpush1.msra.mxu0 0.0
      %468 = vmatprep.subr.mxu0 0.0
      %469 = vmatpush1.msra.mxu0 0.0
      %470 = vmatprep.subr.mxu0 0.0
      %471 = vmatpush1.msra.mxu0 0.0
      %472 = vmatprep.subr.mxu0 0.0
      %473 = vmatpush1.msra.mxu0 0.0
      %474 = vmatprep.subr.mxu0 0.0
      %475 = vmatpush1.msra.mxu0 0.0
      %476 = vmatprep.subr.mxu0 0.0
      %477 = vmatpush1.msra.mxu0 0.0
      %478 = vmatprep.subr.mxu0 0.0
      %479 = vmatpush1.msra.mxu0 0.0
      %480 = vmatprep.subr.mxu0 0.0
      %481 = vmatpush1.msra.mxu0 0.0
      %482 = vmatprep.subr.mxu0 0.0
      %483 = vmatpush1.msra.mxu0 0.0
      %484 = vmatprep.subr.mxu0 0.0
      %485 = vmatpush1.msra.mxu0 0.0
      %486 = vmatprep.subr.mxu0 0.0
      %487 = vmatpush1.msra.mxu0 0.0
      %488 = vmatprep.subr.mxu0 0.0
      %489 = vmatpush1.msra.mxu0 0.0
      %490 = vmatprep.subr.mxu0 0.0
      %491 = vmatpush1.msra.mxu0 0.0
      %492 = vmatprep.subr.mxu0 0.0
      %493 = vmatpush1.msra.mxu0 0.0
      %494 = vmatprep.subr.mxu0 0.0
      %495 = vmatpush1.msra.mxu0 0.0
      %496 = vmatprep.subr.mxu0 0.0
      %497 = vmatpush1.msra.mxu0 0.0
      %498 = vmatprep.mubr.f32.mxu0 0.0
      %499 = vmatmul.mubr.f32.gmra.mrb[0].mxu0 %v432
      %v500 = vpop.f32.mrb[0].mxu0
      %v501 = vadd.f32 %v428, %v500
      %v502 = vpop.f32.mrb[0].mxu0
      %503 = vdwg.mxu0
      %vm504 = vcmp.ge.f32.partialorder %v501, 0.0
      %v505 = vadd.f32 %v501, 0.5
      %v506 = vxor.u32 %v501, 2147483648
      %v507 = vmul.f32 %v506, 1.442695
      %v508 = vpow.pop %v507
      %v509 = vadd.f32 %v508, 1.0
      %v510 = vrcp.pop %v509
      %v511 = vmul.f32 1.0, %v510
      %v512 = vsel %vm504, %v505, %v511
      %v513 = vmul.f32 %v512, %v413
      %vm514 = vcmask 523264
      %515 = vst.msk [vmem:[%s311] sm:$0xff] %vm514, %v513
      %p516 = scmp.lt.s32.totalorder %s21, 1
      %s517 = scalar_select %p516, %s21, 1
      %p518 = scmp.lt.s32.totalorder %s22, 0
      %s519 = scalar_select %p518, %s22, 0
      %s520 = sadd.s32 %s519, %s517
      %s521 = smul.addr %s520, 8
      %s522 = scalar_lea.vmem %s6, %s521
      // Predicated region
      $region45: #{gruunet_forward.31} parent=43 // pred_check
        %p523 = pneg %p189
      $region46: #{gruunet_forward.31} parent=43 // pred_check_branch
        %525 = sbr.rel (%p523) target = $region48
      $region47: #{gruunet_forward.31} parent=43 // pred_region
        _
      $region48: #{gruunet_forward.31} parent=43 // pred_fallthru
        _
    $region44: #{gruunet_forward.31} parent=5 // pred_fallthru
      _
    %p526 = scmp.le.s32.totalorder 2, %s12
    // Predicated region
    $region49: #{gruunet_forward.31} parent=5 // pred_check
      %p527 = pneg %p526
    $region50: #{gruunet_forward.31} parent=5 // pred_check_branch
      %529 = sbr.rel (%p527) target = $region52
    $region51: #{gruunet_forward.31} parent=5 // pred_region
      %s530 = ssub.s32 %s12, 2
      // Predicated region
      $region53: #{gruunet_forward.31} parent=51 // pred_check
        %p531 = pneg %p195
      $region54: #{gruunet_forward.31} parent=51 // pred_check_branch
        %533 = sbr.rel (%p531) target = $region56
      $region55: #{gruunet_forward.31} parent=51 // pred_region
        %p534 = scmp.lt.s32.totalorder %s23, 1
        %s535 = scalar_select %p534, %s23, 1
        %p536 = scmp.lt.s32.totalorder %s24, 0
        %s537 = scalar_select %p536, %s24, 0
        %s538 = sadd.s32 %s537, %s535
        %s539 = smul.addr %s538, 8
        %s540 = scalar_lea.vmem %s6, %s539
      $region56: #{gruunet_forward.31} parent=51 // pred_fallthru
        _
    $region52: #{gruunet_forward.31} parent=5 // pred_fallthru
      _
  $region6: #{gruunet_forward.31} parent=0 // loop_footer
    %s16 = sadd.s32 1, %s12
  $region7: #{gruunet_forward.31} parent=0 // loop_footer_branch
    %11 = sbr.rel target = $region3
  $region8: #{gruunet_forward.31} parent=0 // loop_exit
    _

// kernel: gruunet_forward.47
$region0: #{gruunet_forward.47}
  #allocation0 [shape = 'u32[]', space=smem, size = 0x4, offset = 0x4, fixed_abs, tag = 'smem constant byte address 0x4 - core index']
  #allocation1 [shape = 'u32[144,128]{1,0:T(1,128)}', space=vmem, size = 0x12000, scoped, tag = 'internal scratch']
  %s0 = inlined_call_operand.vmem [shape: f32[2,16,64], index: 0, kind: input, shape index: {}]
  %s1 = inlined_call_operand.vmem [shape: f32[8,16], index: 1, kind: input, shape index: {}]
  %s2 = inlined_call_operand.vmem [shape: f32[2,8,64], index: 2, kind: output, shape index: {}]
  %s3 = sld [smem:[#allocation0]]
  $region41: #{gruunet_forward.47} parent=0
    _
  %s5 = ssub.s32 1, %s3
  %s6 = scalar_select 0, %s5, %s3
  loop: start=0, step=1, limit=4
  $region2: #{gruunet_forward.47} parent=0 // loop_pre_header
    _
  $region3: #{gruunet_forward.47} parent=0 // loop_header
    %s8 = sphi 0, %s12
    %p9 = scmp.ge.s32.totalorder %s8, 4
    %s15 = sphi 0, %s27
    %s16 = sphi 0, %s23
    %s17 = sphi 0, %s15
    %s18 = sphi 0, %s16
    %s19 = sphi 0, %s17
    %s20 = sphi 0, %s18
    %s32 = sphi 0, %s34
    %s35 = sphi 0, %s32
    %s36 = sphi 0, %s35
    %s52 = sphi 0, %s36
    %s56 = sphi 0, %s56
    %s58 = sphi 0, %s56
    %s59 = sphi 0, %s58
    %s73 = sphi 0, %s59
    %s81 = sphi 0, %s83
    %s84 = sphi 0, %s81
    %s85 = sphi 0, %s84
    %s101 = sphi 0, %s85
  $region4: #{gruunet_forward.47} parent=0 // loop_header_branch
    %11 = sbr.rel (%p9) target = $region8
  $region5: #{gruunet_forward.47} parent=0 // loop_body
    %s13 = ssub.s32 %s8, 1
    %s14 = ssub.s32 %s8, 2
    %s21 = sadd.s32 1, %s16
    %p22 = scmp.ge.s32.totalorder %s21, 1
    %s23 = scalar_select %p22, 0, %s21
    %s24 = sadd.s32 1, %s15
    %s25 = scalar_select %p22, %s24, %s15
    %p26 = scmp.ge.s32.totalorder %s25, 2
    %s27 = scalar_select %p26, 0, %s25
    %s28 = ssub.s32 %s15, %s27
    %s29 = ssub.s32 %s16, %s23
    %s30 = sor.u32 %s28, %s29
    %p31 = scmp.eq.s32.totalorder %s30, 0
    %s33 = sadd.s32 %s32, 1
    %s34 = scalar_select %p31, %s32, %s33
    %p37 = pneg %p31
    %p38 = scmp.eq.s32.totalorder %s8, 1
    %p39 = por %p37, %p38
    %p40 = scmp.ne.s32.totalorder %s32, %s35
    %p41 = scmp.eq.s32.totalorder %s8, 0
    %p42 = por %p40, %p41
    %p43 = scmp.ne.s32.totalorder %s32, %s35
    %p44 = scmp.eq.s32.totalorder %s13, 1
    %p45 = por %p43, %p44
    %p46 = scmp.ne.s32.totalorder %s35, %s36
    %p47 = scmp.eq.s32.totalorder %s13, 0
    %p48 = por %p46, %p47
    %p49 = scmp.ne.s32.totalorder %s35, %s36
    %p50 = scmp.eq.s32.totalorder %s14, 1
    %p51 = por %p49, %p50
    %p53 = scmp.ne.s32.totalorder %s36, %s52
    %p54 = scmp.eq.s32.totalorder %s14, 0
    %p55 = por %p53, %p54
    %s57 = sadd.s32 %s56, 1
    %p60 = scmp.eq.s32.totalorder %s8, 1
    %p61 = scmp.ne.s32.totalorder %s56, %s58
    %p62 = scmp.eq.s32.totalorder %s8, 0
    %p63 = por %p61, %p62
    %p64 = scmp.ne.s32.totalorder %s56, %s58
    %p65 = scmp.eq.s32.totalorder %s13, 1
    %p66 = por %p64, %p65
    %p67 = scmp.ne.s32.totalorder %s58, %s59
    %p68 = scmp.eq.s32.totalorder %s13, 0
    %p69 = por %p67, %p68
    %p70 = scmp.ne.s32.totalorder %s58, %s59
    %p71 = scmp.eq.s32.totalorder %s14, 1
    %p72 = por %p70, %p71
    %p74 = scmp.ne.s32.totalorder %s59, %s73
    %p75 = scmp.eq.s32.totalorder %s14, 0
    %p76 = por %p74, %p75
    %s77 = ssub.s32 %s15, %s27
    %s78 = ssub.s32 %s16, %s23
    %s79 = sor.u32 %s77, %s78
    %p80 = scmp.eq.s32.totalorder %s79, 0
    %s82 = sadd.s32 %s81, 1
    %s83 = scalar_select %p80, %s81, %s82
    %p86 = pneg %p80
    %p87 = scmp.eq.s32.totalorder %s8, 1
    %p88 = por %p86, %p87
    %p89 = scmp.ne.s32.totalorder %s81, %s84
    %p90 = scmp.eq.s32.totalorder %s8, 0
    %p91 = por %p89, %p90
    %p92 = scmp.ne.s32.totalorder %s81, %s84
    %p93 = scmp.eq.s32.totalorder %s13, 1
    %p94 = por %p92, %p93
    %p95 = scmp.ne.s32.totalorder %s84, %s85
    %p96 = scmp.eq.s32.totalorder %s13, 0
    %p97 = por %p95, %p96
    %p98 = scmp.ne.s32.totalorder %s84, %s85
    %p99 = scmp.eq.s32.totalorder %s14, 1
    %p100 = por %p98, %p99
    %p102 = scmp.ne.s32.totalorder %s85, %s101
    %p103 = scmp.eq.s32.totalorder %s14, 0
    %p104 = por %p102, %p103
    %p105 = scmp.le.s32.totalorder 1, %s8
    %p106 = scmp.lt.s32.totalorder %s8, 3
    %p107 = pnand %p105, %p106
    %p108 = pneg %p107
    // Predicated region
    $region9: #{gruunet_forward.47} parent=5 // pred_check
      _
    $region10: #{gruunet_forward.47} parent=5 // pred_check_branch
      %110 = sbr.rel (%p107) target = $region12
    $region11: #{gruunet_forward.47} parent=5 // pred_region
      %s111 = ssub.s32 %s8, 1
      // Predicated region
      $region13: #{gruunet_forward.47} parent=11 // pred_check
        %p112 = pneg %p69
      $region14: #{gruunet_forward.47} parent=11 // pred_check_branch
        %114 = sbr.rel (%p112) target = $region16
      $region15: #{gruunet_forward.47} parent=11 // pred_region
        _
      $region16: #{gruunet_forward.47} parent=11 // pred_fallthru
        _
    $region12: #{gruunet_forward.47} parent=5 // pred_fallthru
      _
    %p115 = scmp.lt.s32.totalorder %s8, 2
    // Predicated region
    $region17: #{gruunet_forward.47} parent=5 // pred_check
      %p116 = pneg %p115
    $region18: #{gruunet_forward.47} parent=5 // pred_check_branch
      %118 = sbr.rel (%p116) target = $region20
    $region19: #{gruunet_forward.47} parent=5 // pred_region
      // Predicated region
      $region21: #{gruunet_forward.47} parent=19 // pred_check
        %p119 = pneg %p42
      $region22: #{gruunet_forward.47} parent=19 // pred_check_branch
        %121 = sbr.rel (%p119) target = $region24
      $region23: #{gruunet_forward.47} parent=19 // pred_region
        %p122 = scmp.lt.s32.totalorder %s15, 1
        %s123 = scalar_select %p122, %s15, 1
        %p124 = scmp.lt.s32.totalorder %s16, 0
        %s125 = scalar_select %p124, %s16, 0
        %s126 = smul.addr %s123, 2
        %s127 = sadd.s32 %s125, %s126
        %s128 = smul.addr %s127, 8
        %s129 = scalar_lea.vmem %s0, %s128
      $region24: #{gruunet_forward.47} parent=19 // pred_fallthru
        _
    $region20: #{gruunet_forward.47} parent=5 // pred_fallthru
      _
    %p130 = scmp.le.s32.totalorder 1, %s8
    %p131 = scmp.lt.s32.totalorder %s8, 3
    %p132 = pnand %p130, %p131
    %p133 = pneg %p132
    // Predicated region
    $region25: #{gruunet_forward.47} parent=5 // pred_check
      _
    $region26: #{gruunet_forward.47} parent=5 // pred_check_branch
      %135 = sbr.rel (%p132) target = $region28
    $region27: #{gruunet_forward.47} parent=5 // pred_region
      %s136 = ssub.s32 %s8, 1
      %p137 = scmp.lt.s32.totalorder %s17, 1
      %s138 = scalar_select %p137, %s17, 1
      %p139 = scmp.lt.s32.totalorder %s18, 0
      %s140 = scalar_select %p139, %s18, 0
      %s141 = smul.addr %s138, 2
      %s142 = sadd.s32 %s140, %s141
      %s143 = smul.addr %s142, 8
      %s144 = scalar_lea.vmem %s0, %s143
      %p145 = pneg %p48
      %p146 = pneg %p45
      %p147 = pneg %p69
      %p148 = pneg %p66
      %p149 = pneg %p97
      %p150 = pneg %p94
      %p151 = scmp.lt.s32.totalorder %s17, 1
      %s152 = scalar_select %p151, %s17, 1
      %p153 = scmp.lt.s32.totalorder %s18, 0
      %s154 = scalar_select %p153, %s18, 0
      %s155 = sadd.s32 %s154, %s152
      %s156 = smul.addr %s155, 8
      %s157 = scalar_lea.vmem %s2, %s156
      %p158 = scmp.lt.s32.totalorder %s17, 1
      %s159 = scalar_select %p158, %s17, 1
      %p160 = scmp.lt.s32.totalorder %s18, 0
      %s161 = scalar_select %p160, %s18, 0
      %s162 = smul.addr %s159, 2
      %s163 = sadd.s32 %s161, %s162
      %s164 = smul.addr %s163, 8
      %s165 = scalar_lea.vmem %s0, %s164
      %p166 = scmp.lt.s32.totalorder %s17, 1
      %s167 = scalar_select %p166, %s17, 1
      %p168 = scmp.lt.s32.totalorder %s18, 0
      %s169 = scalar_select %p168, %s18, 0
      %s170 = sadd.s32 %s169, %s167
      %s171 = smul.addr %s170, 8
      %s172 = scalar_lea.vmem %s2, %s171
      %v173 = vld [vmem:[%s1] sm:$0xff]
      %v174 = vld [vmem:[%s165] sm:$0xff]
      %v175 = vld [vmem:[%s165 + $0x8] sm:$0xff]
      %vm176 = vcmask 130048
      %v178 = vsel %vm176, %v173, 0
      %180 = vmatprep.subr.mxu0 0.0
      %181 = vmatpush1.msra.mxu0 %v174
      %182 = vmatprep.subr.mxu0 0.0
      %183 = vmatpush1.msra.mxu0 %v175
      %184 = vmatprep.subr.mxu0 0.0
      %185 = vmatpush1.msra.mxu0 0.0
      %186 = vmatprep.subr.mxu0 0.0
      %187 = vmatpush1.msra.mxu0 0.0
      %188 = vmatprep.subr.mxu0 0.0
      %189 = vmatpush1.msra.mxu0 0.0
      %190 = vmatprep.subr.mxu0 0.0
      %191 = vmatpush1.msra.mxu0 0.0
      %192 = vmatprep.subr.mxu0 0.0
      %193 = vmatpush1.msra.mxu0 0.0
      %194 = vmatprep.subr.mxu0 0.0
      %195 = vmatpush1.msra.mxu0 0.0
      %196 = vmatprep.subr.mxu0 0.0
      %197 = vmatpush1.msra.mxu0 0.0
      %198 = vmatprep.subr.mxu0 0.0
      %199 = vmatpush1.msra.mxu0 0.0
      %200 = vmatprep.subr.mxu0 0.0
      %201 = vmatpush1.msra.mxu0 0.0
      %202 = vmatprep.subr.mxu0 0.0
      %203 = vmatpush1.msra.mxu0 0.0
      %204 = vmatprep.subr.mxu0 0.0
      %205 = vmatpush1.msra.mxu0 0.0
      %206 = vmatprep.subr.mxu0 0.0
      %207 = vmatpush1.msra.mxu0 0.0
      %208 = vmatprep.subr.mxu0 0.0
      %209 = vmatpush1.msra.mxu0 0.0
      %210 = vmatprep.subr.mxu0 0.0
      %211 = vmatpush1.msra.mxu0 0.0
      %212 = vmatprep.subr.mxu0 0.0
      %213 = vmatpush1.msra.mxu0 0.0
      %214 = vmatprep.subr.mxu0 0.0
      %215 = vmatpush1.msra.mxu0 0.0
      %216 = vmatprep.subr.mxu0 0.0
      %217 = vmatpush1.msra.mxu0 0.0
      %218 = vmatprep.subr.mxu0 0.0
      %219 = vmatpush1.msra.mxu0 0.0
      %220 = vmatprep.subr.mxu0 0.0
      %221 = vmatpush1.msra.mxu0 0.0
      %222 = vmatprep.subr.mxu0 0.0
      %223 = vmatpush1.msra.mxu0 0.0
      %224 = vmatprep.subr.mxu0 0.0
      %225 = vmatpush1.msra.mxu0 0.0
      %226 = vmatprep.subr.mxu0 0.0
      %227 = vmatpush1.msra.mxu0 0.0
      %228 = vmatprep.subr.mxu0 0.0
      %229 = vmatpush1.msra.mxu0 0.0
      %230 = vmatprep.subr.mxu0 0.0
      %231 = vmatpush1.msra.mxu0 0.0
      %232 = vmatprep.subr.mxu0 0.0
      %233 = vmatpush1.msra.mxu0 0.0
      %234 = vmatprep.subr.mxu0 0.0
      %235 = vmatpush1.msra.mxu0 0.0
      %236 = vmatprep.subr.mxu0 0.0
      %237 = vmatpush1.msra.mxu0 0.0
      %238 = vmatprep.subr.mxu0 0.0
      %239 = vmatpush1.msra.mxu0 0.0
      %240 = vmatprep.subr.mxu0 0.0
      %241 = vmatpush1.msra.mxu0 0.0
      %242 = vmatprep.subr.mxu0 0.0
      %243 = vmatpush1.msra.mxu0 0.0
      %244 = vmatprep.mubr.f32.mxu0 0.0
      %245 = vmatmul.mubr.f32.gmra.mrb[0].mxu0 %v178
      %v246 = vpop.f32.mrb[0].mxu0
      %v247 = vadd.f32 0.0, %v246
      %v248 = vpop.f32.mrb[0].mxu0
      %249 = vdwg.mxu0
      %v250 = vmax.f32 %v247, 0.0
      %vm251 = vcmask 523264
      %252 = vst.msk [vmem:[%s172] sm:$0xff] %vm251, %v250
      %p253 = scmp.lt.s32.totalorder %s17, 1
      %s254 = scalar_select %p253, %s17, 1
      %p255 = scmp.lt.s32.totalorder %s18, 0
      %s256 = scalar_select %p255, %s18, 0
      %s257 = sadd.s32 %s256, %s254
      %s258 = smul.addr %s257, 8
      %s259 = scalar_lea.vmem %s2, %s258
      // Predicated region
      $region29: #{gruunet_forward.47} parent=27 // pred_check
        %p260 = pneg %p94
      $region30: #{gruunet_forward.47} parent=27 // pred_check_branch
        %262 = sbr.rel (%p260) target = $region32
      $region31: #{gruunet_forward.47} parent=27 // pred_region
        _
      $region32: #{gruunet_forward.47} parent=27 // pred_fallthru
        _
    $region28: #{gruunet_forward.47} parent=5 // pred_fallthru
      _
    %p263 = scmp.le.s32.totalorder 2, %s8
    // Predicated region
    $region33: #{gruunet_forward.47} parent=5 // pred_check
      %p264 = pneg %p263
    $region34: #{gruunet_forward.47} parent=5 // pred_check_branch
      %266 = sbr.rel (%p264) target = $region36
    $region35: #{gruunet_forward.47} parent=5 // pred_region
      %s267 = ssub.s32 %s8, 2
      // Predicated region
      $region37: #{gruunet_forward.47} parent=35 // pred_check
        %p268 = pneg %p100
      $region38: #{gruunet_forward.47} parent=35 // pred_check_branch
        %270 = sbr.rel (%p268) target = $region40
      $region39: #{gruunet_forward.47} parent=35 // pred_region
        %p271 = scmp.lt.s32.totalorder %s19, 1
        %s272 = scalar_select %p271, %s19, 1
        %p273 = scmp.lt.s32.totalorder %s20, 0
        %s274 = scalar_select %p273, %s20, 0
        %s275 = sadd.s32 %s274, %s272
        %s276 = smul.addr %s275, 8
        %s277 = scalar_lea.vmem %s2, %s276
      $region40: #{gruunet_forward.47} parent=35 // pred_fallthru
        _
    $region36: #{gruunet_forward.47} parent=5 // pred_fallthru
      _
  $region6: #{gruunet_forward.47} parent=0 // loop_footer
    %s12 = sadd.s32 1, %s8
  $region7: #{gruunet_forward.47} parent=0 // loop_footer_branch
    %7 = sbr.rel target = $region3
  $region8: #{gruunet_forward.47} parent=0 // loop_exit
    _

// kernel: gruunet_forward.48
$region0: #{gruunet_forward.48}
  #allocation0 [shape = 'u32[]', space=smem, size = 0x4, offset = 0x4, fixed_abs, tag = 'smem constant byte address 0x4 - core index']
  #allocation1 [shape = 'u32[144,128]{1,0:T(1,128)}', space=vmem, size = 0x12000, scoped, tag = 'internal scratch']
  %s0 = inlined_call_operand.vmem [shape: f32[2,9,8,64], index: 0, kind: input, shape index: {}]
  %s1 = inlined_call_operand.vmem [shape: f32[9,8,1], index: 1, kind: input, shape index: {}]
  %s2 = inlined_call_operand.vmem [shape: f32[2,8,64], index: 2, kind: output, shape index: {}]
  %s3 = sld [smem:[#allocation0]]
  $region41: #{gruunet_forward.48} parent=0
    _
  %s5 = ssub.s32 1, %s3
  %s6 = scalar_select 0, %s5, %s3
  loop: start=0, step=1, limit=4
  $region2: #{gruunet_forward.48} parent=0 // loop_pre_header
    _
  $region3: #{gruunet_forward.48} parent=0 // loop_header
    %s8 = sphi 0, %s12
    %p9 = scmp.ge.s32.totalorder %s8, 4
    %s15 = sphi 0, %s27
    %s16 = sphi 0, %s23
    %s17 = sphi 0, %s15
    %s18 = sphi 0, %s16
    %s19 = sphi 0, %s17
    %s20 = sphi 0, %s18
    %s32 = sphi 0, %s34
    %s35 = sphi 0, %s32
    %s36 = sphi 0, %s35
    %s52 = sphi 0, %s36
    %s56 = sphi 0, %s56
    %s58 = sphi 0, %s56
    %s59 = sphi 0, %s58
    %s73 = sphi 0, %s59
    %s81 = sphi 0, %s83
    %s84 = sphi 0, %s81
    %s85 = sphi 0, %s84
    %s101 = sphi 0, %s85
  $region4: #{gruunet_forward.48} parent=0 // loop_header_branch
    %11 = sbr.rel (%p9) target = $region8
  $region5: #{gruunet_forward.48} parent=0 // loop_body
    %s13 = ssub.s32 %s8, 1
    %s14 = ssub.s32 %s8, 2
    %s21 = sadd.s32 1, %s16
    %p22 = scmp.ge.s32.totalorder %s21, 1
    %s23 = scalar_select %p22, 0, %s21
    %s24 = sadd.s32 1, %s15
    %s25 = scalar_select %p22, %s24, %s15
    %p26 = scmp.ge.s32.totalorder %s25, 2
    %s27 = scalar_select %p26, 0, %s25
    %s28 = ssub.s32 %s15, %s27
    %s29 = ssub.s32 %s16, %s23
    %s30 = sor.u32 %s28, %s29
    %p31 = scmp.eq.s32.totalorder %s30, 0
    %s33 = sadd.s32 %s32, 1
    %s34 = scalar_select %p31, %s32, %s33
    %p37 = pneg %p31
    %p38 = scmp.eq.s32.totalorder %s8, 1
    %p39 = por %p37, %p38
    %p40 = scmp.ne.s32.totalorder %s32, %s35
    %p41 = scmp.eq.s32.totalorder %s8, 0
    %p42 = por %p40, %p41
    %p43 = scmp.ne.s32.totalorder %s32, %s35
    %p44 = scmp.eq.s32.totalorder %s13, 1
    %p45 = por %p43, %p44
    %p46 = scmp.ne.s32.totalorder %s35, %s36
    %p47 = scmp.eq.s32.totalorder %s13, 0
    %p48 = por %p46, %p47
    %p49 = scmp.ne.s32.totalorder %s35, %s36
    %p50 = scmp.eq.s32.totalorder %s14, 1
    %p51 = por %p49, %p50
    %p53 = scmp.ne.s32.totalorder %s36, %s52
    %p54 = scmp.eq.s32.totalorder %s14, 0
    %p55 = por %p53, %p54
    %s57 = sadd.s32 %s56, 1
    %p60 = scmp.eq.s32.totalorder %s8, 1
    %p61 = scmp.ne.s32.totalorder %s56, %s58
    %p62 = scmp.eq.s32.totalorder %s8, 0
    %p63 = por %p61, %p62
    %p64 = scmp.ne.s32.totalorder %s56, %s58
    %p65 = scmp.eq.s32.totalorder %s13, 1
    %p66 = por %p64, %p65
    %p67 = scmp.ne.s32.totalorder %s58, %s59
    %p68 = scmp.eq.s32.totalorder %s13, 0
    %p69 = por %p67, %p68
    %p70 = scmp.ne.s32.totalorder %s58, %s59
    %p71 = scmp.eq.s32.totalorder %s14, 1
    %p72 = por %p70, %p71
    %p74 = scmp.ne.s32.totalorder %s59, %s73
    %p75 = scmp.eq.s32.totalorder %s14, 0
    %p76 = por %p74, %p75
    %s77 = ssub.s32 %s15, %s27
    %s78 = ssub.s32 %s16, %s23
    %s79 = sor.u32 %s77, %s78
    %p80 = scmp.eq.s32.totalorder %s79, 0
    %s82 = sadd.s32 %s81, 1
    %s83 = scalar_select %p80, %s81, %s82
    %p86 = pneg %p80
    %p87 = scmp.eq.s32.totalorder %s8, 1
    %p88 = por %p86, %p87
    %p89 = scmp.ne.s32.totalorder %s81, %s84
    %p90 = scmp.eq.s32.totalorder %s8, 0
    %p91 = por %p89, %p90
    %p92 = scmp.ne.s32.totalorder %s81, %s84
    %p93 = scmp.eq.s32.totalorder %s13, 1
    %p94 = por %p92, %p93
    %p95 = scmp.ne.s32.totalorder %s84, %s85
    %p96 = scmp.eq.s32.totalorder %s13, 0
    %p97 = por %p95, %p96
    %p98 = scmp.ne.s32.totalorder %s84, %s85
    %p99 = scmp.eq.s32.totalorder %s14, 1
    %p100 = por %p98, %p99
    %p102 = scmp.ne.s32.totalorder %s85, %s101
    %p103 = scmp.eq.s32.totalorder %s14, 0
    %p104 = por %p102, %p103
    %p105 = scmp.le.s32.totalorder 1, %s8
    %p106 = scmp.lt.s32.totalorder %s8, 3
    %p107 = pnand %p105, %p106
    %p108 = pneg %p107
    // Predicated region
    $region9: #{gruunet_forward.48} parent=5 // pred_check
      _
    $region10: #{gruunet_forward.48} parent=5 // pred_check_branch
      %110 = sbr.rel (%p107) target = $region12
    $region11: #{gruunet_forward.48} parent=5 // pred_region
      %s111 = ssub.s32 %s8, 1
      // Predicated region
      $region13: #{gruunet_forward.48} parent=11 // pred_check
        %p112 = pneg %p69
      $region14: #{gruunet_forward.48} parent=11 // pred_check_branch
        %114 = sbr.rel (%p112) target = $region16
      $region15: #{gruunet_forward.48} parent=11 // pred_region
        _
      $region16: #{gruunet_forward.48} parent=11 // pred_fallthru
        _
    $region12: #{gruunet_forward.48} parent=5 // pred_fallthru
      _
    %p115 = scmp.lt.s32.totalorder %s8, 2
    // Predicated region
    $region17: #{gruunet_forward.48} parent=5 // pred_check
      %p116 = pneg %p115
    $region18: #{gruunet_forward.48} parent=5 // pred_check_branch
      %118 = sbr.rel (%p116) target = $region20
    $region19: #{gruunet_forward.48} parent=5 // pred_region
      // Predicated region
      $region21: #{gruunet_forward.48} parent=19 // pred_check
        %p119 = pneg %p42
      $region22: #{gruunet_forward.48} parent=19 // pred_check_branch
        %121 = sbr.rel (%p119) target = $region24
      $region23: #{gruunet_forward.48} parent=19 // pred_region
        %p122 = scmp.lt.s32.totalorder %s15, 1
        %s123 = scalar_select %p122, %s15, 1
        %p124 = scmp.lt.s32.totalorder %s16, 0
        %s125 = scalar_select %p124, %s16, 0
        %s126 = smul.addr %s123, 9
        %s127 = sadd.s32 %s125, %s126
        %s128 = smul.addr %s127, 8
        %s129 = scalar_lea.vmem %s0, %s128
      $region24: #{gruunet_forward.48} parent=19 // pred_fallthru
        _
    $region20: #{gruunet_forward.48} parent=5 // pred_fallthru
      _
    %p130 = scmp.le.s32.totalorder 1, %s8
    %p131 = scmp.lt.s32.totalorder %s8, 3
    %p132 = pnand %p130, %p131
    %p133 = pneg %p132
    // Predicated region
    $region25: #{gruunet_forward.48} parent=5 // pred_check
      _
    $region26: #{gruunet_forward.48} parent=5 // pred_check_branch
      %135 = sbr.rel (%p132) target = $region28
    $region27: #{gruunet_forward.48} parent=5 // pred_region
      %s136 = ssub.s32 %s8, 1
      %p137 = scmp.lt.s32.totalorder %s17, 1
      %s138 = scalar_select %p137, %s17, 1
      %p139 = scmp.lt.s32.totalorder %s18, 0
      %s140 = scalar_select %p139, %s18, 0
      %s141 = smul.addr %s138, 9
      %s142 = sadd.s32 %s140, %s141
      %s143 = smul.addr %s142, 8
      %s144 = scalar_lea.vmem %s0, %s143
      %p145 = pneg %p48
      %p146 = pneg %p45
      %p147 = pneg %p69
      %p148 = pneg %p66
      %p149 = pneg %p97
      %p150 = pneg %p94
      %p151 = scmp.lt.s32.totalorder %s17, 1
      %s152 = scalar_select %p151, %s17, 1
      %p153 = scmp.lt.s32.totalorder %s18, 0
      %s154 = scalar_select %p153, %s18, 0
      %s155 = sadd.s32 %s154, %s152
      %s156 = smul.addr %s155, 8
      %s157 = scalar_lea.vmem %s2, %s156
      %p158 = scmp.lt.s32.totalorder %s17, 1
      %s159 = scalar_select %p158, %s17, 1
      %p160 = scmp.lt.s32.totalorder %s18, 0
      %s161 = scalar_select %p160, %s18, 0
      %s162 = smul.addr %s159, 9
      %s163 = sadd.s32 %s161, %s162
      %s164 = smul.addr %s163, 8
      %s165 = scalar_lea.vmem %s0, %s164
      %p166 = scmp.lt.s32.totalorder %s17, 1
      %s167 = scalar_select %p166, %s17, 1
      %p168 = scmp.lt.s32.totalorder %s18, 0
      %s169 = scalar_select %p168, %s18, 0
      %s170 = sadd.s32 %s169, %s167
      %s171 = smul.addr %s170, 8
      %s172 = scalar_lea.vmem %s2, %s171
      %v173 = vld [vmem:[%s1] sm:$0xff]
      %v174 = vld [vmem:[%s165] sm:$0xff]
      %176 = vset.pattern.permute.xlu0 0
      %177 = vperm.xlu0 %176, %v173
      %v178 = vpop.permute.xlu0 %177
      %v180 = vmul.f32 %v178, %v174
      %s181 = scalar_lea.vmem %s1, 8
      %v182 = vld [vmem:[%s181] sm:$0xff]
      %s183 = scalar_lea.vmem %s165, 8
      %v184 = vld [vmem:[%s183] sm:$0xff]
      %186 = vset.pattern.permute.xlu0 0
      %187 = vperm.xlu0 %186, %v182
      %v188 = vpop.permute.xlu0 %187
      %v190 = vmul.f32 %v188, %v184
      %v191 = vadd.f32 %v180, %v190
      %s192 = scalar_lea.vmem %s1, 16
      %v193 = vld [vmem:[%s192] sm:$0xff]
      %s194 = scalar_lea.vmem %s165, 16
      %v195 = vld [vmem:[%s194] sm:$0xff]
      %197 = vset.pattern.permute.xlu0 0
      %198 = vperm.xlu0 %197, %v193
      %v199 = vpop.permute.xlu0 %198
      %v201 = vmul.f32 %v199, %v195
      %v202 = vadd.f32 %v191, %v201
      %s203 = scalar_lea.vmem %s1, 24
      %v204 = vld [vmem:[%s203] sm:$0xff]
      %s205 = scalar_lea.vmem %s165, 24
      %v206 = vld [vmem:[%s205] sm:$0xff]
      %208 = vset.pattern.permute.xlu0 0
      %209 = vperm.xlu0 %208, %v204
      %v210 = vpop.permute.xlu0 %209
      %v212 = vmul.f32 %v210, %v206
      %v213 = vadd.f32 %v202, %v212
      %s214 = scalar_lea.vmem %s1, 32
      %v215 = vld [vmem:[%s214] sm:$0xff]
      %s216 = scalar_lea.vmem %s165, 32
      %v217 = vld [vmem:[%s216] sm:$0xff]
      %219 = vset.pattern.permute.xlu0 0
      %220 = vperm.xlu0 %219, %v215
      %v221 = vpop.permute.xlu0 %220
      %v223 = vmul.f32 %v221, %v217
      %v224 = vadd.f32 %v213, %v223
      %s225 = scalar_lea.vmem %s1, 40
      %v226 = vld [vmem:[%s225] sm:$0xff]
      %s227 = scalar_lea.vmem %s165, 40
      %v228 = vld [vmem:[%s227] sm:$0xff]
      %230 = vset.pattern.permute.xlu0 0
      %231 = vperm.xlu0 %230, %v226
      %v232 = vpop.permute.xlu0 %231
      %v234 = vmul.f32 %v232, %v228
      %v235 = vadd.f32 %v224, %v234
      %s236 = scalar_lea.vmem %s1, 48
      %v237 = vld [vmem:[%s236] sm:$0xff]
      %s238 = scalar_lea.vmem %s165, 48
      %v239 = vld [vmem:[%s238] sm:$0xff]
      %241 = vset.pattern.permute.xlu0 0
      %242 = vperm.xlu0 %241, %v237
      %v243 = vpop.permute.xlu0 %242
      %v245 = vmul.f32 %v243, %v239
      %v246 = vadd.f32 %v235, %v245
      %s247 = scalar_lea.vmem %s1, 56
      %v248 = vld [vmem:[%s247] sm:$0xff]
      %s249 = scalar_lea.vmem %s165, 56
      %v250 = vld [vmem:[%s249] sm:$0xff]
      %252 = vset.pattern.permute.xlu0 0
      %253 = vperm.xlu0 %252, %v248
      %v254 = vpop.permute.xlu0 %253
      %v256 = vmul.f32 %v254, %v250
      %v257 = vadd.f32 %v246, %v256
      %s258 = scalar_lea.vmem %s1, 64
      %v259 = vld [vmem:[%s258] sm:$0xff]
      %s260 = scalar_lea.vmem %s165, 64
      %v261 = vld [vmem:[%s260] sm:$0xff]
      %263 = vset.pattern.permute.xlu0 0
      %264 = vperm.xlu0 %263, %v259
      %v265 = vpop.permute.xlu0 %264
      %v267 = vmul.f32 %v265, %v261
      %v268 = vadd.f32 %v257, %v267
      %v269 = vmax.f32 %v268, 0.0
      %vm270 = vcmask 523264
      %271 = vst.msk [vmem:[%s172] sm:$0xff] %vm270, %v269
      %p272 = scmp.lt.s32.totalorder %s17, 1
      %s273 = scalar_select %p272, %s17, 1
      %p274 = scmp.lt.s32.totalorder %s18, 0
      %s275 = scalar_select %p274, %s18, 0
      %s276 = sadd.s32 %s275, %s273
      %s277 = smul.addr %s276, 8
      %s278 = scalar_lea.vmem %s2, %s277
      // Predicated region
      $region29: #{gruunet_forward.48} parent=27 // pred_check
        %p279 = pneg %p94
      $region30: #{gruunet_forward.48} parent=27 // pred_check_branch
        %281 = sbr.rel (%p279) target = $region32
      $region31: #{gruunet_forward.48} parent=27 // pred_region
        _
      $region32: #{gruunet_forward.48} parent=27 // pred_fallthru
        _
    $region28: #{gruunet_forward.48} parent=5 // pred_fallthru
      _
    %p282 = scmp.le.s32.totalorder 2, %s8
    // Predicated region
    $region33: #{gruunet_forward.48} parent=5 // pred_check
      %p283 = pneg %p282
    $region34: #{gruunet_forward.48} parent=5 // pred_check_branch
      %285 = sbr.rel (%p283) target = $region36
    $region35: #{gruunet_forward.48} parent=5 // pred_region
      %s286 = ssub.s32 %s8, 2
      // Predicated region
      $region37: #{gruunet_forward.48} parent=35 // pred_check
        %p287 = pneg %p100
      $region38: #{gruunet_forward.48} parent=35 // pred_check_branch
        %289 = sbr.rel (%p287) target = $region40
      $region39: #{gruunet_forward.48} parent=35 // pred_region
        %p290 = scmp.lt.s32.totalorder %s19, 1
        %s291 = scalar_select %p290, %s19, 1
        %p292 = scmp.lt.s32.totalorder %s20, 0
        %s293 = scalar_select %p292, %s20, 0
        %s294 = sadd.s32 %s293, %s291
        %s295 = smul.addr %s294, 8
        %s296 = scalar_lea.vmem %s2, %s295
      $region40: #{gruunet_forward.48} parent=35 // pred_fallthru
        _
    $region36: #{gruunet_forward.48} parent=5 // pred_fallthru
      _
  $region6: #{gruunet_forward.48} parent=0 // loop_footer
    %s12 = sadd.s32 1, %s8
  $region7: #{gruunet_forward.48} parent=0 // loop_footer_branch
    %7 = sbr.rel target = $region3
  $region8: #{gruunet_forward.48} parent=0 // loop_exit
    _

// kernel: gruunet_forward.36
$region0: #{gruunet_forward.36}
  #allocation0 [shape = 'u32[]', space=smem, size = 0x4, offset = 0x4, fixed_abs, tag = 'smem constant byte address 0x4 - core index']
  #allocation1 [shape = 'u32[144,128]{1,0:T(1,128)}', space=vmem, size = 0x12000, scoped, tag = 'internal scratch']
  %s0 = inlined_call_operand.vmem [shape: f32[2,72,64], index: 0, kind: input, shape index: {}]
  %s1 = inlined_call_operand.vmem [shape: f32[2,8,64], index: 1, kind: input, shape index: {}]
  %s2 = inlined_call_operand.vmem [shape: f32[8,72], index: 2, kind: input, shape index: {}]
  %s3 = inlined_call_operand.vmem [shape: f32[8,1], index: 3, kind: input, shape index: {}]
  %s4 = inlined_call_operand.vmem [shape: f32[8,8], index: 4, kind: input, shape index: {}]
  %s5 = inlined_call_operand.vmem [shape: f32[8,1], index: 5, kind: input, shape index: {}]
  %s6 = inlined_call_operand.vmem [shape: f32[2,8,64], index: 6, kind: output, shape index: {}]
  %s7 = sld [smem:[#allocation0]]
  $region57: #{gruunet_forward.36} parent=0
    _
  %s9 = ssub.s32 1, %s7
  %s10 = scalar_select 0, %s9, %s7
  loop: start=0, step=1, limit=4
  $region2: #{gruunet_forward.36} parent=0 // loop_pre_header
    _
  $region3: #{gruunet_forward.36} parent=0 // loop_header
    %s12 = sphi 0, %s16
    %p13 = scmp.ge.s32.totalorder %s12, 4
    %s19 = sphi 0, %s31
    %s20 = sphi 0, %s27
    %s21 = sphi 0, %s19
    %s22 = sphi 0, %s20
    %s23 = sphi 0, %s21
    %s24 = sphi 0, %s22
    %s36 = sphi 0, %s38
    %s39 = sphi 0, %s36
    %s40 = sphi 0, %s39
    %s56 = sphi 0, %s40
    %s64 = sphi 0, %s66
    %s67 = sphi 0, %s64
    %s68 = sphi 0, %s67
    %s84 = sphi 0, %s68
    %s88 = sphi 0, %s88
    %s90 = sphi 0, %s88
    %s91 = sphi 0, %s90
    %s105 = sphi 0, %s91
    %s109 = sphi 0, %s109
    %s111 = sphi 0, %s109
    %s112 = sphi 0, %s111
    %s126 = sphi 0, %s112
    %s130 = sphi 0, %s130
    %s132 = sphi 0, %s130
    %s133 = sphi 0, %s132
    %s147 = sphi 0, %s133
    %s151 = sphi 0, %s151
    %s153 = sphi 0, %s151
    %s154 = sphi 0, %s153
    %s168 = sphi 0, %s154
    %s176 = sphi 0, %s178
    %s179 = sphi 0, %s176
    %s180 = sphi 0, %s179
    %s196 = sphi 0, %s180
  $region4: #{gruunet_forward.36} parent=0 // loop_header_branch
    %15 = sbr.rel (%p13) target = $region8
  $region5: #{gruunet_forward.36} parent=0 // loop_body
    %s17 = ssub.s32 %s12, 1
    %s18 = ssub.s32 %s12, 2
    %s25 = sadd.s32 1, %s20
    %p26 = scmp.ge.s32.totalorder %s25, 1
    %s27 = scalar_select %p26, 0, %s25
    %s28 = sadd.s32 1, %s19
    %s29 = scalar_select %p26, %s28, %s19
    %p30 = scmp.ge.s32.totalorder %s29, 2
    %s31 = scalar_select %p30, 0, %s29
    %s32 = ssub.s32 %s19, %s31
    %s33 = ssub.s32 %s20, %s27
    %s34 = sor.u32 %s32, %s33
    %p35 = scmp.eq.s32.totalorder %s34, 0
    %s37 = sadd.s32 %s36, 1
    %s38 = scalar_select %p35, %s36, %s37
    %p41 = pneg %p35
    %p42 = scmp.eq.s32.totalorder %s12, 1
    %p43 = por %p41, %p42
    %p44 = scmp.ne.s32.totalorder %s36, %s39
    %p45 = scmp.eq.s32.totalorder %s12, 0
    %p46 = por %p44, %p45
    %p47 = scmp.ne.s32.totalorder %s36, %s39
    %p48 = scmp.eq.s32.totalorder %s17, 1
    %p49 = por %p47, %p48
    %p50 = scmp.ne.s32.totalorder %s39, %s40
    %p51 = scmp.eq.s32.totalorder %s17, 0
    %p52 = por %p50, %p51
    %p53 = scmp.ne.s32.totalorder %s39, %s40
    %p54 = scmp.eq.s32.totalorder %s18, 1
    %p55 = por %p53, %p54
    %p57 = scmp.ne.s32.totalorder %s40, %s56
    %p58 = scmp.eq.s32.totalorder %s18, 0
    %p59 = por %p57, %p58
    %s60 = ssub.s32 %s19, %s31
    %s61 = ssub.s32 %s20, %s27
    %s62 = sor.u32 %s60, %s61
    %p63 = scmp.eq.s32.totalorder %s62, 0
    %s65 = sadd.s32 %s64, 1
    %s66 = scalar_select %p63, %s64, %s65
    %p69 = pneg %p63
    %p70 = scmp.eq.s32.totalorder %s12, 1
    %p71 = por %p69, %p70
    %p72 = scmp.ne.s32.totalorder %s64, %s67
    %p73 = scmp.eq.s32.totalorder %s12, 0
    %p74 = por %p72, %p73
    %p75 = scmp.ne.s32.totalorder %s64, %s67
    %p76 = scmp.eq.s32.totalorder %s17, 1
    %p77 = por %p75, %p76
    %p78 = scmp.ne.s32.totalorder %s67, %s68
    %p79 = scmp.eq.s32.totalorder %s17, 0
    %p80 = por %p78, %p79
    %p81 = scmp.ne.s32.totalorder %s67, %s68
    %p82 = scmp.eq.s32.totalorder %s18, 1
    %p83 = por %p81, %p82
    %p85 = scmp.ne.s32.totalorder %s68, %s84
    %p86 = scmp.eq.s32.totalorder %s18, 0
    %p87 = por %p85, %p86
    %s89 = sadd.s32 %s88, 1
    %p92 = scmp.eq.s32.totalorder %s12, 1
    %p93 = scmp.ne.s32.totalorder %s88, %s90
    %p94 = scmp.eq.s32.totalorder %s12, 0
    %p95 = por %p93, %p94
    %p96 = scmp.ne.s32.totalorder %s88, %s90
    %p97 = scmp.eq.s32.totalorder %s17, 1
    %p98 = por %p96, %p97
    %p99 = scmp.ne.s32.totalorder %s90, %s91
    %p100 = scmp.eq.s32.totalorder %s17, 0
    %p101 = por %p99, %p100
    %p102 = scmp.ne.s32.totalorder %s90, %s91
    %p103 = scmp.eq.s32.totalorder %s18, 1
    %p104 = por %p102, %p103
    %p106 = scmp.ne.s32.totalorder %s91, %s105
    %p107 = scmp.eq.s32.totalorder %s18, 0
    %p108 = por %p106, %p107
    %s110 = sadd.s32 %s109, 1
    %p113 = scmp.eq.s32.totalorder %s12, 1
    %p114 = scmp.ne.s32.totalorder %s109, %s111
    %p115 = scmp.eq.s32.totalorder %s12, 0
    %p116 = por %p114, %p115
    %p117 = scmp.ne.s32.totalorder %s109, %s111
    %p118 = scmp.eq.s32.totalorder %s17, 1
    %p119 = por %p117, %p118
    %p120 = scmp.ne.s32.totalorder %s111, %s112
    %p121 = scmp.eq.s32.totalorder %s17, 0
    %p122 = por %p120, %p121
    %p123 = scmp.ne.s32.totalorder %s111, %s112
    %p124 = scmp.eq.s32.totalorder %s18, 1
    %p125 = por %p123, %p124
    %p127 = scmp.ne.s32.totalorder %s112, %s126
    %p128 = scmp.eq.s32.totalorder %s18, 0
    %p129 = por %p127, %p128
    %s131 = sadd.s32 %s130, 1
    %p134 = scmp.eq.s32.totalorder %s12, 1
    %p135 = scmp.ne.s32.totalorder %s130, %s132
    %p136 = scmp.eq.s32.totalorder %s12, 0
    %p137 = por %p135, %p136
    %p138 = scmp.ne.s32.totalorder %s130, %s132
    %p139 = scmp.eq.s32.totalorder %s17, 1
    %p140 = por %p138, %p139
    %p141 = scmp.ne.s32.totalorder %s132, %s133
    %p142 = scmp.eq.s32.totalorder %s17, 0
    %p143 = por %p141, %p142
    %p144 = scmp.ne.s32.totalorder %s132, %s133
    %p145 = scmp.eq.s32.totalorder %s18, 1
    %p146 = por %p144, %p145
    %p148 = scmp.ne.s32.totalorder %s133, %s147
    %p149 = scmp.eq.s32.totalorder %s18, 0
    %p150 = por %p148, %p149
    %s152 = sadd.s32 %s151, 1
    %p155 = scmp.eq.s32.totalorder %s12, 1
    %p156 = scmp.ne.s32.totalorder %s151, %s153
    %p157 = scmp.eq.s32.totalorder %s12, 0
    %p158 = por %p156, %p157
    %p159 = scmp.ne.s32.totalorder %s151, %s153
    %p160 = scmp.eq.s32.totalorder %s17, 1
    %p161 = por %p159, %p160
    %p162 = scmp.ne.s32.totalorder %s153, %s154
    %p163 = scmp.eq.s32.totalorder %s17, 0
    %p164 = por %p162, %p163
    %p165 = scmp.ne.s32.totalorder %s153, %s154
    %p166 = scmp.eq.s32.totalorder %s18, 1
    %p167 = por %p165, %p166
    %p169 = scmp.ne.s32.totalorder %s154, %s168
    %p170 = scmp.eq.s32.totalorder %s18, 0
    %p171 = por %p169, %p170
    %s172 = ssub.s32 %s19, %s31
    %s173 = ssub.s32 %s20, %s27
    %s174 = sor.u32 %s172, %s173
    %p175 = scmp.eq.s32.totalorder %s174, 0
    %s177 = sadd.s32 %s176, 1
    %s178 = scalar_select %p175, %s176, %s177
    %p181 = pneg %p175
    %p182 = scmp.eq.s32.totalorder %s12, 1
    %p183 = por %p181, %p182
    %p184 = scmp.ne.s32.totalorder %s176, %s179
    %p185 = scmp.eq.s32.totalorder %s12, 0
    %p186 = por %p184, %p185
    %p187 = scmp.ne.s32.totalorder %s176, %s179
    %p188 = scmp.eq.s32.totalorder %s17, 1
    %p189 = por %p187, %p188
    %p190 = scmp.ne.s32.totalorder %s179, %s180
    %p191 = scmp.eq.s32.totalorder %s17, 0
    %p192 = por %p190, %p191
    %p193 = scmp.ne.s32.totalorder %s179, %s180
    %p194 = scmp.eq.s32.totalorder %s18, 1
    %p195 = por %p193, %p194
    %p197 = scmp.ne.s32.totalorder %s180, %s196
    %p198 = scmp.eq.s32.totalorder %s18, 0
    %p199 = por %p197, %p198
    %p200 = scmp.le.s32.totalorder 1, %s12
    %p201 = scmp.lt.s32.totalorder %s12, 3
    %p202 = pnand %p200, %p201
    %p203 = pneg %p202
    // Predicated region
    $region9: #{gruunet_forward.36} parent=5 // pred_check
      _
    $region10: #{gruunet_forward.36} parent=5 // pred_check_branch
      %205 = sbr.rel (%p202) target = $region12
    $region11: #{gruunet_forward.36} parent=5 // pred_region
      %s206 = ssub.s32 %s12, 1
      // Predicated region
      $region13: #{gruunet_forward.36} parent=11 // pred_check
        %p207 = pneg %p101
      $region14: #{gruunet_forward.36} parent=11 // pred_check_branch
        %209 = sbr.rel (%p207) target = $region16
      $region15: #{gruunet_forward.36} parent=11 // pred_region
        _
      $region16: #{gruunet_forward.36} parent=11 // pred_fallthru
        _
      // Predicated region
      $region17: #{gruunet_forward.36} parent=11 // pred_check
        %p210 = pneg %p122
      $region18: #{gruunet_forward.36} parent=11 // pred_check_branch
        %212 = sbr.rel (%p210) target = $region20
      $region19: #{gruunet_forward.36} parent=11 // pred_region
        _
      $region20: #{gruunet_forward.36} parent=11 // pred_fallthru
        _
      // Predicated region
      $region21: #{gruunet_forward.36} parent=11 // pred_check
        %p213 = pneg %p143
      $region22: #{gruunet_forward.36} parent=11 // pred_check_branch
        %215 = sbr.rel (%p213) target = $region24
      $region23: #{gruunet_forward.36} parent=11 // pred_region
        _
      $region24: #{gruunet_forward.36} parent=11 // pred_fallthru
        _
      // Predicated region
      $region25: #{gruunet_forward.36} parent=11 // pred_check
        %p216 = pneg %p164
      $region26: #{gruunet_forward.36} parent=11 // pred_check_branch
        %218 = sbr.rel (%p216) target = $region28
      $region27: #{gruunet_forward.36} parent=11 // pred_region
        _
      $region28: #{gruunet_forward.36} parent=11 // pred_fallthru
        _
    $region12: #{gruunet_forward.36} parent=5 // pred_fallthru
      _
    %p219 = scmp.lt.s32.totalorder %s12, 2
    // Predicated region
    $region29: #{gruunet_forward.36} parent=5 // pred_check
      %p220 = pneg %p219
    $region30: #{gruunet_forward.36} parent=5 // pred_check_branch
      %222 = sbr.rel (%p220) target = $region32
    $region31: #{gruunet_forward.36} parent=5 // pred_region
      // Predicated region
      $region33: #{gruunet_forward.36} parent=31 // pred_check
        %p223 = pneg %p46
      $region34: #{gruunet_forward.36} parent=31 // pred_check_branch
        %225 = sbr.rel (%p223) target = $region36
      $region35: #{gruunet_forward.36} parent=31 // pred_region
        %p226 = scmp.lt.s32.totalorder %s19, 1
        %s227 = scalar_select %p226, %s19, 1
        %p228 = scmp.lt.s32.totalorder %s20, 0
        %s229 = scalar_select %p228, %s20, 0
        %s230 = smul.addr %s227, 9
        %s231 = sadd.s32 %s229, %s230
        %s232 = smul.addr %s231, 8
        %s233 = scalar_lea.vmem %s0, %s232
      $region36: #{gruunet_forward.36} parent=31 // pred_fallthru
        _
      // Predicated region
      $region37: #{gruunet_forward.36} parent=31 // pred_check
        %p234 = pneg %p74
      $region38: #{gruunet_forward.36} parent=31 // pred_check_branch
        %236 = sbr.rel (%p234) target = $region40
      $region39: #{gruunet_forward.36} parent=31 // pred_region
        %p237 = scmp.lt.s32.totalorder %s19, 1
        %s238 = scalar_select %p237, %s19, 1
        %p239 = scmp.lt.s32.totalorder %s20, 0
        %s240 = scalar_select %p239, %s20, 0
        %s241 = sadd.s32 %s240, %s238
        %s242 = smul.addr %s241, 8
        %s243 = scalar_lea.vmem %s1, %s242
      $region40: #{gruunet_forward.36} parent=31 // pred_fallthru
        _
    $region32: #{gruunet_forward.36} parent=5 // pred_fallthru
      _
    %p244 = scmp.le.s32.totalorder 1, %s12
    %p245 = scmp.lt.s32.totalorder %s12, 3
    %p246 = pnand %p244, %p245
    %p247 = pneg %p246
    // Predicated region
    $region41: #{gruunet_forward.36} parent=5 // pred_check
      _
    $region42: #{gruunet_forward.36} parent=5 // pred_check_branch
      %249 = sbr.rel (%p246) target = $region44
    $region43: #{gruunet_forward.36} parent=5 // pred_region
      %s250 = ssub.s32 %s12, 1
      %p251 = scmp.lt.s32.totalorder %s21, 1
      %s252 = scalar_select %p251, %s21, 1
      %p253 = scmp.lt.s32.totalorder %s22, 0
      %s254 = scalar_select %p253, %s22, 0
      %s255 = smul.addr %s252, 9
      %s256 = sadd.s32 %s254, %s255
      %s257 = smul.addr %s256, 8
      %s258 = scalar_lea.vmem %s0, %s257
      %p259 = pneg %p52
      %p260 = pneg %p49
      %p261 = scmp.lt.s32.totalorder %s21, 1
      %s262 = scalar_select %p261, %s21, 1
      %p263 = scmp.lt.s32.totalorder %s22, 0
      %s264 = scalar_select %p263, %s22, 0
      %s265 = sadd.s32 %s264, %s262
      %s266 = smul.addr %s265, 8
      %s267 = scalar_lea.vmem %s1, %s266
      %p268 = pneg %p80
      %p269 = pneg %p77
      %p270 = pneg %p101
      %p271 = pneg %p98
      %p272 = pneg %p122
      %p273 = pneg %p119
      %p274 = pneg %p143
      %p275 = pneg %p140
      %p276 = pneg %p164
      %p277 = pneg %p161
      %p278 = pneg %p192
      %p279 = pneg %p189
      %p280 = scmp.lt.s32.totalorder %s21, 1
      %s281 = scalar_select %p280, %s21, 1
      %p282 = scmp.lt.s32.totalorder %s22, 0
      %s283 = scalar_select %p282, %s22, 0
      %s284 = sadd.s32 %s283, %s281
      %s285 = smul.addr %s284, 8
      %s286 = scalar_lea.vmem %s6, %s285
      %p287 = scmp.lt.s32.totalorder %s21, 1
      %s288 = scalar_select %p287, %s21, 1
      %p289 = scmp.lt.s32.totalorder %s22, 0
      %s290 = scalar_select %p289, %s22, 0
      %s291 = smul.addr %s288, 9
      %s292 = sadd.s32 %s290, %s291
      %s293 = smul.addr %s292, 8
      %s294 = scalar_lea.vmem %s0, %s293
      %p295 = scmp.lt.s32.totalorder %s21, 1
      %s296 = scalar_select %p295, %s21, 1
      %p297 = scmp.lt.s32.totalorder %s22, 0
      %s298 = scalar_select %p297, %s22, 0
      %s299 = sadd.s32 %s298, %s296
      %s300 = smul.addr %s299, 8
      %s301 = scalar_lea.vmem %s1, %s300
      %p302 = scmp.lt.s32.totalorder %s21, 1
      %s303 = scalar_select %p302, %s21, 1
      %p304 = scmp.lt.s32.totalorder %s22, 0
      %s305 = scalar_select %p304, %s22, 0
      %s306 = sadd.s32 %s305, %s303
      %s307 = smul.addr %s306, 8
      %s308 = scalar_lea.vmem %s6, %s307
      %v309 = vld [vmem:[%s2] sm:$0xff]
      %v310 = vld [vmem:[%s294] sm:$0xff]
      %v311 = vld [vmem:[%s294 + $0x8] sm:$0xff]
      %v312 = vld [vmem:[%s294 + $0x10] sm:$0xff]
      %v313 = vld [vmem:[%s294 + $0x18] sm:$0xff]
      %v314 = vld [vmem:[%s294 + $0x20] sm:$0xff]
      %v315 = vld [vmem:[%s294 + $0x28] sm:$0xff]
      %v316 = vld [vmem:[%s294 + $0x30] sm:$0xff]
      %v317 = vld [vmem:[%s294 + $0x38] sm:$0xff]
      %v318 = vld [vmem:[%s294 + $0x40] sm:$0xff]
      %v319 = vld [vmem:[%s3] sm:$0xff]
      %321 = vset.pattern.permute.xlu0 0
      %322 = vperm.xlu0 %321, %v319
      %v323 = vpop.permute.xlu0 %322
      %vm325 = vcmask 588800
      %v327 = vsel %vm325, %v309, 0
      %329 = vmatprep.subr.mxu0 0.0
      %330 = vmatpush1.msra.mxu0 %v310
      %331 = vmatprep.subr.mxu0 0.0
      %332 = vmatpush1.msra.mxu0 %v311
      %333 = vmatprep.subr.mxu0 0.0
      %334 = vmatpush1.msra.mxu0 %v312
      %335 = vmatprep.subr.mxu0 0.0
      %336 = vmatpush1.msra.mxu0 %v313
      %337 = vmatprep.subr.mxu0 0.0
      %338 = vmatpush1.msra.mxu0 %v314
      %339 = vmatprep.subr.mxu0 0.0
      %340 = vmatpush1.msra.mxu0 %v315
      %341 = vmatprep.subr.mxu0 0.0
      %342 = vmatpush1.msra.mxu0 %v316
      %343 = vmatprep.subr.mxu0 0.0
      %344 = vmatpush1.msra.mxu0 %v317
      %345 = vmatprep.subr.mxu0 0.0
      %346 = vmatpush1.msra.mxu0 %v318
      %347 = vmatprep.subr.mxu0 0.0
      %348 = vmatpush1.msra.mxu0 0.0
      %349 = vmatprep.subr.mxu0 0.0
      %350 = vmatpush1.msra.mxu0 0.0
      %351 = vmatprep.subr.mxu0 0.0
      %352 = vmatpush1.msra.mxu0 0.0
      %353 = vmatprep.subr.mxu0 0.0
      %354 = vmatpush1.msra.mxu0 0.0
      %355 = vmatprep.subr.mxu0 0.0
      %356 = vmatpush1.msra.mxu0 0.0
      %357 = vmatprep.subr.mxu0 0.0
      %358 = vmatpush1.msra.mxu0 0.0
      %359 = vmatprep.subr.mxu0 0.0
      %360 = vmatpush1.msra.mxu0 0.0
      %361 = vmatprep.subr.mxu0 0.0
      %362 = vmatpush1.msra.mxu0 0.0
      %363 = vmatprep.subr.mxu0 0.0
      %364 = vmatpush1.msra.mxu0 0.0
      %365 = vmatprep.subr.mxu0 0.0
      %366 = vmatpush1.msra.mxu0 0.0
      %367 = vmatprep.subr.mxu0 0.0
      %368 = vmatpush1.msra.mxu0 0.0
      %369 = vmatprep.subr.mxu0 0.0
      %370 = vmatpush1.msra.mxu0 0.0
      %371 = vmatprep.subr.mxu0 0.0
      %372 = vmatpush1.msra.mxu0 0.0
      %373 = vmatprep.subr.mxu0 0.0
      %374 = vmatpush1.msra.mxu0 0.0
      %375 = vmatprep.subr.mxu0 0.0
      %376 = vmatpush1.msra.mxu0 0.0
      %377 = vmatprep.subr.mxu0 0.0
      %378 = vmatpush1.msra.mxu0 0.0
      %379 = vmatprep.subr.mxu0 0.0
      %380 = vmatpush1.msra.mxu0 0.0
      %381 = vmatprep.subr.mxu0 0.0
      %382 = vmatpush1.msra.mxu0 0.0
      %383 = vmatprep.subr.mxu0 0.0
      %384 = vmatpush1.msra.mxu0 0.0
      %385 = vmatprep.subr.mxu0 0.0
      %386 = vmatpush1.msra.mxu0 0.0
      %387 = vmatprep.subr.mxu0 0.0
      %388 = vmatpush1.msra.mxu0 0.0
      %389 = vmatprep.subr.mxu0 0.0
      %390 = vmatpush1.msra.mxu0 0.0
      %391 = vmatprep.subr.mxu0 0.0
      %392 = vmatpush1.msra.mxu0 0.0
      %393 = vmatprep.mubr.f32.mxu0 0.0
      %394 = vmatmul.mubr.f32.gmra.mrb[0].mxu0 %v327
      %v395 = vpop.f32.mrb[0].mxu0
      %v396 = vadd.f32 %v323, %v395
      %v397 = vpop.f32.mrb[0].mxu0
      %398 = vdwg.mxu0
      %v399 = vxor.u32 %v396, 2147483648
      %v400 = vmul.f32 %v399, 1.442695
      %v401 = vpow.pop %v400
      %v402 = vadd.f32 %v401, 1.0
      %v403 = vrcp.pop %v402
      %v404 = vmul.f32 1.0, %v403
      %v405 = vld [vmem:[%s4] sm:$0xff]
      %v406 = vld [vmem:[%s301] sm:$0xff]
      %v407 = vld [vmem:[%s5] sm:$0xff]
      %409 = vset.pattern.permute.xlu0 0
      %410 = vperm.xlu0 %409, %v407
      %v411 = vpop.permute.xlu0 %410
      %vm413 = vcmask 64512
      %v415 = vsel %vm413, %v405, 0
      %417 = vmatprep.subr.mxu0 0.0
      %418 = vmatpush1.msra.mxu0 %v406
      %419 = vmatprep.subr.mxu0 0.0
      %420 = vmatpush1.msra.mxu0 0.0
      %421 = vmatprep.subr.mxu0 0.0
      %422 = vmatpush1.msra.mxu0 0.0
      %423 = vmatprep.subr.mxu0 0.0
      %424 = vmatpush1.msra.mxu0 0.0
      %425 = vmatprep.subr.mxu0 0.0
      %426 = vmatpush1.msra.mxu0 0.0
      %427 = vmatprep.subr.mxu0 0.0
      %428 = vmatpush1.msra.mxu0 0.0
      %429 = vmatprep.subr.mxu0 0.0
      %430 = vmatpush1.msra.mxu0 0.0
      %431 = vmatprep.subr.mxu0 0.0
      %432 = vmatpush1.msra.mxu0 0.0
      %433 = vmatprep.subr.mxu0 0.0
      %434 = vmatpush1.msra.mxu0 0.0
      %435 = vmatprep.subr.mxu0 0.0
      %436 = vmatpush1.msra.mxu0 0.0
      %437 = vmatprep.subr.mxu0 0.0
      %438 = vmatpush1.msra.mxu0 0.0
      %439 = vmatprep.subr.mxu0 0.0
      %440 = vmatpush1.msra.mxu0 0.0
      %441 = vmatprep.subr.mxu0 0.0
      %442 = vmatpush1.msra.mxu0 0.0
      %443 = vmatprep.subr.mxu0 0.0
      %444 = vmatpush1.msra.mxu0 0.0
      %445 = vmatprep.subr.mxu0 0.0
      %446 = vmatpush1.msra.mxu0 0.0
      %447 = vmatprep.subr.mxu0 0.0
      %448 = vmatpush1.msra.mxu0 0.0
      %449 = vmatprep.subr.mxu0 0.0
      %450 = vmatpush1.msra.mxu0 0.0
      %451 = vmatprep.subr.mxu0 0.0
      %452 = vmatpush1.msra.mxu0 0.0
      %453 = vmatprep.subr.mxu0 0.0
      %454 = vmatpush1.msra.mxu0 0.0
      %455 = vmatprep.subr.mxu0 0.0
      %456 = vmatpush1.msra.mxu0 0.0
      %457 = vmatprep.subr.mxu0 0.0
      %458 = vmatpush1.msra.mxu0 0.0
      %459 = vmatprep.subr.mxu0 0.0
      %460 = vmatpush1.msra.mxu0 0.0
      %461 = vmatprep.subr.mxu0 0.0
      %462 = vmatpush1.msra.mxu0 0.0
      %463 = vmatprep.subr.mxu0 0.0
      %464 = vmatpush1.msra.mxu0 0.0
      %465 = vmatprep.subr.mxu0 0.0
      %466 = vmatpush1.msra.mxu0 0.0
      %467 = vmatprep.subr.mxu0 0.0
      %468 = vmatpush1.msra.mxu0 0.0
      %469 = vmatprep.subr.mxu0 0.0
      %470 = vmatpush1.msra.mxu0 0.0
      %471 = vmatprep.subr.mxu0 0.0
      %472 = vmatpush1.msra.mxu0 0.0
      %473 = vmatprep.subr.mxu0 0.0
      %474 = vmatpush1.msra.mxu0 0.0
      %475 = vmatprep.subr.mxu0 0.0
      %476 = vmatpush1.msra.mxu0 0.0
      %477 = vmatprep.subr.mxu0 0.0
      %478 = vmatpush1.msra.mxu0 0.0
      %479 = vmatprep.subr.mxu0 0.0
      %480 = vmatpush1.msra.mxu0 0.0
      %481 = vmatprep.mubr.f32.mxu0 0.0
      %482 = vmatmul.mubr.f32.gmra.mrb[0].mxu0 %v415
      %v483 = vpop.f32.mrb[0].mxu0
      %v484 = vadd.f32 %v411, %v483
      %v485 = vpop.f32.mrb[0].mxu0
      %486 = vdwg.mxu0
      %vm487 = vcmp.ge.f32.partialorder %v484, 0.0
      %v488 = vadd.f32 %v484, 0.5
      %v489 = vxor.u32 %v484, 2147483648
      %v490 = vmul.f32 %v489, 1.442695
      %v491 = vpow.pop %v490
      %v492 = vadd.f32 %v491, 1.0
      %v493 = vrcp.pop %v492
      %v494 = vmul.f32 1.0, %v493
      %v495 = vsel %vm487, %v488, %v494
      %v496 = vmul.f32 %v495, %v404
      %vm497 = vcmask 523264
      %498 = vst.msk [vmem:[%s308] sm:$0xff] %vm497, %v496
      %p499 = scmp.lt.s32.totalorder %s21, 1
      %s500 = scalar_select %p499, %s21, 1
      %p501 = scmp.lt.s32.totalorder %s22, 0
      %s502 = scalar_select %p501, %s22, 0
      %s503 = sadd.s32 %s502, %s500
      %s504 = smul.addr %s503, 8
      %s505 = scalar_lea.vmem %s6, %s504
      // Predicated region
      $region45: #{gruunet_forward.36} parent=43 // pred_check
        %p506 = pneg %p189
      $region46: #{gruunet_forward.36} parent=43 // pred_check_branch
        %508 = sbr.rel (%p506) target = $region48
      $region47: #{gruunet_forward.36} parent=43 // pred_region
        _
      $region48: #{gruunet_forward.36} parent=43 // pred_fallthru
        _
    $region44: #{gruunet_forward.36} parent=5 // pred_fallthru
      _
    %p509 = scmp.le.s32.totalorder 2, %s12
    // Predicated region
    $region49: #{gruunet_forward.36} parent=5 // pred_check
      %p510 = pneg %p509
    $region50: #{gruunet_forward.36} parent=5 // pred_check_branch
      %512 = sbr.rel (%p510) target = $region52
    $region51: #{gruunet_forward.36} parent=5 // pred_region
      %s513 = ssub.s32 %s12, 2
      // Predicated region
      $region53: #{gruunet_forward.36} parent=51 // pred_check
        %p514 = pneg %p195
      $region54: #{gruunet_forward.36} parent=51 // pred_check_branch
        %516 = sbr.rel (%p514) target = $region56
      $region55: #{gruunet_forward.36} parent=51 // pred_region
        %p517 = scmp.lt.s32.totalorder %s23, 1
        %s518 = scalar_select %p517, %s23, 1
        %p519 = scmp.lt.s32.totalorder %s24, 0
        %s520 = scalar_select %p519, %s24, 0
        %s521 = sadd.s32 %s520, %s518
        %s522 = smul.addr %s521, 8
        %s523 = scalar_lea.vmem %s6, %s522
      $region56: #{gruunet_forward.36} parent=51 // pred_fallthru
        _
    $region52: #{gruunet_forward.36} parent=5 // pred_fallthru
      _
  $region6: #{gruunet_forward.36} parent=0 // loop_footer
    %s16 = sadd.s32 1, %s12
  $region7: #{gruunet_forward.36} parent=0 // loop_footer_branch
    %11 = sbr.rel target = $region3
  $region8: #{gruunet_forward.36} parent=0 // loop_exit
    _

// kernel: gruunet_forward.49
$region0: #{gruunet_forward.49}
  #allocation0 [shape = 'u32[]', space=smem, size = 0x4, offset = 0x4, fixed_abs, tag = 'smem constant byte address 0x4 - core index']
  #allocation1 [shape = 'u32[144,128]{1,0:T(1,128)}', space=vmem, size = 0x12000, scoped, tag = 'internal scratch']
  %s0 = inlined_call_operand.vmem [shape: f32[2,72,64], index: 0, kind: input, shape index: {}]
  %s1 = inlined_call_operand.vmem [shape: f32[2,8,64], index: 1, kind: input, shape index: {}]
  %s2 = inlined_call_operand.vmem [shape: f32[8,72], index: 2, kind: input, shape index: {}]
  %s3 = inlined_call_operand.vmem [shape: f32[8,1], index: 3, kind: input, shape index: {}]
  %s4 = inlined_call_operand.vmem [shape: f32[8,8], index: 4, kind: input, shape index: {}]
  %s5 = inlined_call_operand.vmem [shape: f32[8,1], index: 5, kind: input, shape index: {}]
  %s6 = inlined_call_operand.vmem [shape: f32[2,8,64], index: 6, kind: input, shape index: {}]
  %s7 = inlined_call_operand.vmem [shape: f32[2,8,64], index: 7, kind: output, shape index: {}]
  %s8 = sld [smem:[#allocation0]]
  $region61: #{gruunet_forward.49} parent=0
    _
  %s10 = ssub.s32 1, %s8
  %s11 = scalar_select 0, %s10, %s8
  loop: start=0, step=1, limit=4
  $region2: #{gruunet_forward.49} parent=0 // loop_pre_header
    _
  $region3: #{gruunet_forward.49} parent=0 // loop_header
    %s13 = sphi 0, %s17
    %p14 = scmp.ge.s32.totalorder %s13, 4
    %s20 = sphi 0, %s32
    %s21 = sphi 0, %s28
    %s22 = sphi 0, %s20
    %s23 = sphi 0, %s21
    %s24 = sphi 0, %s22
    %s25 = sphi 0, %s23
    %s37 = sphi 0, %s39
    %s40 = sphi 0, %s37
    %s41 = sphi 0, %s40
    %s57 = sphi 0, %s41
    %s65 = sphi 0, %s67
    %s68 = sphi 0, %s65
    %s69 = sphi 0, %s68
    %s85 = sphi 0, %s69
    %s89 = sphi 0, %s89
    %s91 = sphi 0, %s89
    %s92 = sphi 0, %s91
    %s106 = sphi 0, %s92
    %s110 = sphi 0, %s110
    %s112 = sphi 0, %s110
    %s113 = sphi 0, %s112
    %s127 = sphi 0, %s113
    %s131 = sphi 0, %s131
    %s133 = sphi 0, %s131
    %s134 = sphi 0, %s133
    %s148 = sphi 0, %s134
    %s152 = sphi 0, %s152
    %s154 = sphi 0, %s152
    %s155 = sphi 0, %s154
    %s169 = sphi 0, %s155
    %s177 = sphi 0, %s179
    %s180 = sphi 0, %s177
    %s181 = sphi 0, %s180
    %s197 = sphi 0, %s181
    %s205 = sphi 0, %s207
    %s208 = sphi 0, %s205
    %s209 = sphi 0, %s208
    %s225 = sphi 0, %s209
  $region4: #{gruunet_forward.49} parent=0 // loop_header_branch
    %16 = sbr.rel (%p14) target = $region8
  $region5: #{gruunet_forward.49} parent=0 // loop_body
    %s18 = ssub.s32 %s13, 1
    %s19 = ssub.s32 %s13, 2
    %s26 = sadd.s32 1, %s21
    %p27 = scmp.ge.s32.totalorder %s26, 1
    %s28 = scalar_select %p27, 0, %s26
    %s29 = sadd.s32 1, %s20
    %s30 = scalar_select %p27, %s29, %s20
    %p31 = scmp.ge.s32.totalorder %s30, 2
    %s32 = scalar_select %p31, 0, %s30
    %s33 = ssub.s32 %s20, %s32
    %s34 = ssub.s32 %s21, %s28
    %s35 = sor.u32 %s33, %s34
    %p36 = scmp.eq.s32.totalorder %s35, 0
    %s38 = sadd.s32 %s37, 1
    %s39 = scalar_select %p36, %s37, %s38
    %p42 = pneg %p36
    %p43 = scmp.eq.s32.totalorder %s13, 1
    %p44 = por %p42, %p43
    %p45 = scmp.ne.s32.totalorder %s37, %s40
    %p46 = scmp.eq.s32.totalorder %s13, 0
    %p47 = por %p45, %p46
    %p48 = scmp.ne.s32.totalorder %s37, %s40
    %p49 = scmp.eq.s32.totalorder %s18, 1
    %p50 = por %p48, %p49
    %p51 = scmp.ne.s32.totalorder %s40, %s41
    %p52 = scmp.eq.s32.totalorder %s18, 0
    %p53 = por %p51, %p52
    %p54 = scmp.ne.s32.totalorder %s40, %s41
    %p55 = scmp.eq.s32.totalorder %s19, 1
    %p56 = por %p54, %p55
    %p58 = scmp.ne.s32.totalorder %s41, %s57
    %p59 = scmp.eq.s32.totalorder %s19, 0
    %p60 = por %p58, %p59
    %s61 = ssub.s32 %s20, %s32
    %s62 = ssub.s32 %s21, %s28
    %s63 = sor.u32 %s61, %s62
    %p64 = scmp.eq.s32.totalorder %s63, 0
    %s66 = sadd.s32 %s65, 1
    %s67 = scalar_select %p64, %s65, %s66
    %p70 = pneg %p64
    %p71 = scmp.eq.s32.totalorder %s13, 1
    %p72 = por %p70, %p71
    %p73 = scmp.ne.s32.totalorder %s65, %s68
    %p74 = scmp.eq.s32.totalorder %s13, 0
    %p75 = por %p73, %p74
    %p76 = scmp.ne.s32.totalorder %s65, %s68
    %p77 = scmp.eq.s32.totalorder %s18, 1
    %p78 = por %p76, %p77
    %p79 = scmp.ne.s32.totalorder %s68, %s69
    %p80 = scmp.eq.s32.totalorder %s18, 0
    %p81 = por %p79, %p80
    %p82 = scmp.ne.s32.totalorder %s68, %s69
    %p83 = scmp.eq.s32.totalorder %s19, 1
    %p84 = por %p82, %p83
    %p86 = scmp.ne.s32.totalorder %s69, %s85
    %p87 = scmp.eq.s32.totalorder %s19, 0
    %p88 = por %p86, %p87
    %s90 = sadd.s32 %s89, 1
    %p93 = scmp.eq.s32.totalorder %s13, 1
    %p94 = scmp.ne.s32.totalorder %s89, %s91
    %p95 = scmp.eq.s32.totalorder %s13, 0
    %p96 = por %p94, %p95
    %p97 = scmp.ne.s32.totalorder %s89, %s91
    %p98 = scmp.eq.s32.totalorder %s18, 1
    %p99 = por %p97, %p98
    %p100 = scmp.ne.s32.totalorder %s91, %s92
    %p101 = scmp.eq.s32.totalorder %s18, 0
    %p102 = por %p100, %p101
    %p103 = scmp.ne.s32.totalorder %s91, %s92
    %p104 = scmp.eq.s32.totalorder %s19, 1
    %p105 = por %p103, %p104
    %p107 = scmp.ne.s32.totalorder %s92, %s106
    %p108 = scmp.eq.s32.totalorder %s19, 0
    %p109 = por %p107, %p108
    %s111 = sadd.s32 %s110, 1
    %p114 = scmp.eq.s32.totalorder %s13, 1
    %p115 = scmp.ne.s32.totalorder %s110, %s112
    %p116 = scmp.eq.s32.totalorder %s13, 0
    %p117 = por %p115, %p116
    %p118 = scmp.ne.s32.totalorder %s110, %s112
    %p119 = scmp.eq.s32.totalorder %s18, 1
    %p120 = por %p118, %p119
    %p121 = scmp.ne.s32.totalorder %s112, %s113
    %p122 = scmp.eq.s32.totalorder %s18, 0
    %p123 = por %p121, %p122
    %p124 = scmp.ne.s32.totalorder %s112, %s113
    %p125 = scmp.eq.s32.totalorder %s19, 1
    %p126 = por %p124, %p125
    %p128 = scmp.ne.s32.totalorder %s113, %s127
    %p129 = scmp.eq.s32.totalorder %s19, 0
    %p130 = por %p128, %p129
    %s132 = sadd.s32 %s131, 1
    %p135 = scmp.eq.s32.totalorder %s13, 1
    %p136 = scmp.ne.s32.totalorder %s131, %s133
    %p137 = scmp.eq.s32.totalorder %s13, 0
    %p138 = por %p136, %p137
    %p139 = scmp.ne.s32.totalorder %s131, %s133
    %p140 = scmp.eq.s32.totalorder %s18, 1
    %p141 = por %p139, %p140
    %p142 = scmp.ne.s32.totalorder %s133, %s134
    %p143 = scmp.eq.s32.totalorder %s18, 0
    %p144 = por %p142, %p143
    %p145 = scmp.ne.s32.totalorder %s133, %s134
    %p146 = scmp.eq.s32.totalorder %s19, 1
    %p147 = por %p145, %p146
    %p149 = scmp.ne.s32.totalorder %s134, %s148
    %p150 = scmp.eq.s32.totalorder %s19, 0
    %p151 = por %p149, %p150
    %s153 = sadd.s32 %s152, 1
    %p156 = scmp.eq.s32.totalorder %s13, 1
    %p157 = scmp.ne.s32.totalorder %s152, %s154
    %p158 = scmp.eq.s32.totalorder %s13, 0
    %p159 = por %p157, %p158
    %p160 = scmp.ne.s32.totalorder %s152, %s154
    %p161 = scmp.eq.s32.totalorder %s18, 1
    %p162 = por %p160, %p161
    %p163 = scmp.ne.s32.totalorder %s154, %s155
    %p164 = scmp.eq.s32.totalorder %s18, 0
    %p165 = por %p163, %p164
    %p166 = scmp.ne.s32.totalorder %s154, %s155
    %p167 = scmp.eq.s32.totalorder %s19, 1
    %p168 = por %p166, %p167
    %p170 = scmp.ne.s32.totalorder %s155, %s169
    %p171 = scmp.eq.s32.totalorder %s19, 0
    %p172 = por %p170, %p171
    %s173 = ssub.s32 %s20, %s32
    %s174 = ssub.s32 %s21, %s28
    %s175 = sor.u32 %s173, %s174
    %p176 = scmp.eq.s32.totalorder %s175, 0
    %s178 = sadd.s32 %s177, 1
    %s179 = scalar_select %p176, %s177, %s178
    %p182 = pneg %p176
    %p183 = scmp.eq.s32.totalorder %s13, 1
    %p184 = por %p182, %p183
    %p185 = scmp.ne.s32.totalorder %s177, %s180
    %p186 = scmp.eq.s32.totalorder %s13, 0
    %p187 = por %p185, %p186
    %p188 = scmp.ne.s32.totalorder %s177, %s180
    %p189 = scmp.eq.s32.totalorder %s18, 1
    %p190 = por %p188, %p189
    %p191 = scmp.ne.s32.totalorder %s180, %s181
    %p192 = scmp.eq.s32.totalorder %s18, 0
    %p193 = por %p191, %p192
    %p194 = scmp.ne.s32.totalorder %s180, %s181
    %p195 = scmp.eq.s32.totalorder %s19, 1
    %p196 = por %p194, %p195
    %p198 = scmp.ne.s32.totalorder %s181, %s197
    %p199 = scmp.eq.s32.totalorder %s19, 0
    %p200 = por %p198, %p199
    %s201 = ssub.s32 %s20, %s32
    %s202 = ssub.s32 %s21, %s28
    %s203 = sor.u32 %s201, %s202
    %p204 = scmp.eq.s32.totalorder %s203, 0
    %s206 = sadd.s32 %s205, 1
    %s207 = scalar_select %p204, %s205, %s206
    %p210 = pneg %p204
    %p211 = scmp.eq.s32.totalorder %s13, 1
    %p212 = por %p210, %p211
    %p213 = scmp.ne.s32.totalorder %s205, %s208
    %p214 = scmp.eq.s32.totalorder %s13, 0
    %p215 = por %p213, %p214
    %p216 = scmp.ne.s32.totalorder %s205, %s208
    %p217 = scmp.eq.s32.totalorder %s18, 1
    %p218 = por %p216, %p217
    %p219 = scmp.ne.s32.totalorder %s208, %s209
    %p220 = scmp.eq.s32.totalorder %s18, 0
    %p221 = por %p219, %p220
    %p222 = scmp.ne.s32.totalorder %s208, %s209
    %p223 = scmp.eq.s32.totalorder %s19, 1
    %p224 = por %p222, %p223
    %p226 = scmp.ne.s32.totalorder %s209, %s225
    %p227 = scmp.eq.s32.totalorder %s19, 0
    %p228 = por %p226, %p227
    %p229 = scmp.le.s32.totalorder 1, %s13
    %p230 = scmp.lt.s32.totalorder %s13, 3
    %p231 = pnand %p229, %p230
    %p232 = pneg %p231
    // Predicated region
    $region9: #{gruunet_forward.49} parent=5 // pred_check
      _
    $region10: #{gruunet_forward.49} parent=5 // pred_check_branch
      %234 = sbr.rel (%p231) target = $region12
    $region11: #{gruunet_forward.49} parent=5 // pred_region
      %s235 = ssub.s32 %s13, 1
      // Predicated region
      $region13: #{gruunet_forward.49} parent=11 // pred_check
        %p236 = pneg %p102
      $region14: #{gruunet_forward.49} parent=11 // pred_check_branch
        %238 = sbr.rel (%p236) target = $region16
      $region15: #{gruunet_forward.49} parent=11 // pred_region
        _
      $region16: #{gruunet_forward.49} parent=11 // pred_fallthru
        _
      // Predicated region
      $region17: #{gruunet_forward.49} parent=11 // pred_check
        %p239 = pneg %p123
      $region18: #{gruunet_forward.49} parent=11 // pred_check_branch
        %241 = sbr.rel (%p239) target = $region20
      $region19: #{gruunet_forward.49} parent=11 // pred_region
        _
      $region20: #{gruunet_forward.49} parent=11 // pred_fallthru
        _
      // Predicated region
      $region21: #{gruunet_forward.49} parent=11 // pred_check
        %p242 = pneg %p144
      $region22: #{gruunet_forward.49} parent=11 // pred_check_branch
        %244 = sbr.rel (%p242) target = $region24
      $region23: #{gruunet_forward.49} parent=11 // pred_region
        _
      $region24: #{gruunet_forward.49} parent=11 // pred_fallthru
        _
      // Predicated region
      $region25: #{gruunet_forward.49} parent=11 // pred_check
        %p245 = pneg %p165
      $region26: #{gruunet_forward.49} parent=11 // pred_check_branch
        %247 = sbr.rel (%p245) target = $region28
      $region27: #{gruunet_forward.49} parent=11 // pred_region
        _
      $region28: #{gruunet_forward.49} parent=11 // pred_fallthru
        _
    $region12: #{gruunet_forward.49} parent=5 // pred_fallthru
      _
    %p248 = scmp.lt.s32.totalorder %s13, 2
    // Predicated region
    $region29: #{gruunet_forward.49} parent=5 // pred_check
      %p249 = pneg %p248
    $region30: #{gruunet_forward.49} parent=5 // pred_check_branch
      %251 = sbr.rel (%p249) target = $region32
    $region31: #{gruunet_forward.49} parent=5 // pred_region
      // Predicated region
      $region33: #{gruunet_forward.49} parent=31 // pred_check
        %p252 = pneg %p47
      $region34: #{gruunet_forward.49} parent=31 // pred_check_branch
        %254 = sbr.rel (%p252) target = $region36
      $region35: #{gruunet_forward.49} parent=31 // pred_region
        %p255 = scmp.lt.s32.totalorder %s20, 1
        %s256 = scalar_select %p255, %s20, 1
        %p257 = scmp.lt.s32.totalorder %s21, 0
        %s258 = scalar_select %p257, %s21, 0
        %s259 = smul.addr %s256, 9
        %s260 = sadd.s32 %s258, %s259
        %s261 = smul.addr %s260, 8
        %s262 = scalar_lea.vmem %s0, %s261
      $region36: #{gruunet_forward.49} parent=31 // pred_fallthru
        _
      // Predicated region
      $region37: #{gruunet_forward.49} parent=31 // pred_check
        %p263 = pneg %p75
      $region38: #{gruunet_forward.49} parent=31 // pred_check_branch
        %265 = sbr.rel (%p263) target = $region40
      $region39: #{gruunet_forward.49} parent=31 // pred_region
        %p266 = scmp.lt.s32.totalorder %s20, 1
        %s267 = scalar_select %p266, %s20, 1
        %p268 = scmp.lt.s32.totalorder %s21, 0
        %s269 = scalar_select %p268, %s21, 0
        %s270 = sadd.s32 %s269, %s267
        %s271 = smul.addr %s270, 8
        %s272 = scalar_lea.vmem %s1, %s271
      $region40: #{gruunet_forward.49} parent=31 // pred_fallthru
        _
      // Predicated region
      $region41: #{gruunet_forward.49} parent=31 // pred_check
        %p273 = pneg %p187
      $region42: #{gruunet_forward.49} parent=31 // pred_check_branch
        %275 = sbr.rel (%p273) target = $region44
      $region43: #{gruunet_forward.49} parent=31 // pred_region
        %p276 = scmp.lt.s32.totalorder %s20, 1
        %s277 = scalar_select %p276, %s20, 1
        %p278 = scmp.lt.s32.totalorder %s21, 0
        %s279 = scalar_select %p278, %s21, 0
        %s280 = sadd.s32 %s279, %s277
        %s281 = smul.addr %s280, 8
        %s282 = scalar_lea.vmem %s6, %s281
      $region44: #{gruunet_forward.49} parent=31 // pred_fallthru
        _
    $region32: #{gruunet_forward.49} parent=5 // pred_fallthru
      _
    %p283 = scmp.le.s32.totalorder 1, %s13
    %p284 = scmp.lt.s32.totalorder %s13, 3
    %p285 = pnand %p283, %p284
    %p286 = pneg %p285
    // Predicated region
    $region45: #{gruunet_forward.49} parent=5 // pred_check
      _
    $region46: #{gruunet_forward.49} parent=5 // pred_check_branch
      %288 = sbr.rel (%p285) target = $region48
    $region47: #{gruunet_forward.49} parent=5 // pred_region
      %s289 = ssub.s32 %s13, 1
      %p290 = scmp.lt.s32.totalorder %s22, 1
      %s291 = scalar_select %p290, %s22, 1
      %p292 = scmp.lt.s32.totalorder %s23, 0
      %s293 = scalar_select %p292, %s23, 0
      %s294 = smul.addr %s291, 9
      %s295 = sadd.s32 %s293, %s294
      %s296 = smul.addr %s295, 8
      %s297 = scalar_lea.vmem %s0, %s296
      %p298 = pneg %p53
      %p299 = pneg %p50
      %p300 = scmp.lt.s32.totalorder %s22, 1
      %s301 = scalar_select %p300, %s22, 1
      %p302 = scmp.lt.s32.totalorder %s23, 0
      %s303 = scalar_select %p302, %s23, 0
      %s304 = sadd.s32 %s303, %s301
      %s305 = smul.addr %s304, 8
      %s306 = scalar_lea.vmem %s1, %s305
      %p307 = pneg %p81
      %p308 = pneg %p78
      %p309 = pneg %p102
      %p310 = pneg %p99
      %p311 = pneg %p123
      %p312 = pneg %p120
      %p313 = pneg %p144
      %p314 = pneg %p141
      %p315 = pneg %p165
      %p316 = pneg %p162
      %p317 = scmp.lt.s32.totalorder %s22, 1
      %s318 = scalar_select %p317, %s22, 1
      %p319 = scmp.lt.s32.totalorder %s23, 0
      %s320 = scalar_select %p319, %s23, 0
      %s321 = sadd.s32 %s320, %s318
      %s322 = smul.addr %s321, 8
      %s323 = scalar_lea.vmem %s6, %s322
      %p324 = pneg %p193
      %p325 = pneg %p190
      %p326 = pneg %p221
      %p327 = pneg %p218
      %p328 = scmp.lt.s32.totalorder %s22, 1
      %s329 = scalar_select %p328, %s22, 1
      %p330 = scmp.lt.s32.totalorder %s23, 0
      %s331 = scalar_select %p330, %s23, 0
      %s332 = sadd.s32 %s331, %s329
      %s333 = smul.addr %s332, 8
      %s334 = scalar_lea.vmem %s7, %s333
      %p335 = scmp.lt.s32.totalorder %s22, 1
      %s336 = scalar_select %p335, %s22, 1
      %p337 = scmp.lt.s32.totalorder %s23, 0
      %s338 = scalar_select %p337, %s23, 0
      %s339 = smul.addr %s336, 9
      %s340 = sadd.s32 %s338, %s339
      %s341 = smul.addr %s340, 8
      %s342 = scalar_lea.vmem %s0, %s341
      %p343 = scmp.lt.s32.totalorder %s22, 1
      %s344 = scalar_select %p343, %s22, 1
      %p345 = scmp.lt.s32.totalorder %s23, 0
      %s346 = scalar_select %p345, %s23, 0
      %s347 = sadd.s32 %s346, %s344
      %s348 = smul.addr %s347, 8
      %s349 = scalar_lea.vmem %s1, %s348
      %p350 = scmp.lt.s32.totalorder %s22, 1
      %s351 = scalar_select %p350, %s22, 1
      %p352 = scmp.lt.s32.totalorder %s23, 0
      %s353 = scalar_select %p352, %s23, 0
      %s354 = sadd.s32 %s353, %s351
      %s355 = smul.addr %s354, 8
      %s356 = scalar_lea.vmem %s6, %s355
      %p357 = scmp.lt.s32.totalorder %s22, 1
      %s358 = scalar_select %p357, %s22, 1
      %p359 = scmp.lt.s32.totalorder %s23, 0
      %s360 = scalar_select %p359, %s23, 0
      %s361 = sadd.s32 %s360, %s358
      %s362 = smul.addr %s361, 8
      %s363 = scalar_lea.vmem %s7, %s362
      %v364 = vld [vmem:[%s2] sm:$0xff]
      %v365 = vld [vmem:[%s342] sm:$0xff]
      %v366 = vld [vmem:[%s342 + $0x8] sm:$0xff]
      %v367 = vld [vmem:[%s342 + $0x10] sm:$0xff]
      %v368 = vld [vmem:[%s342 + $0x18] sm:$0xff]
      %v369 = vld [vmem:[%s342 + $0x20] sm:$0xff]
      %v370 = vld [vmem:[%s342 + $0x28] sm:$0xff]
      %v371 = vld [vmem:[%s342 + $0x30] sm:$0xff]
      %v372 = vld [vmem:[%s342 + $0x38] sm:$0xff]
      %v373 = vld [vmem:[%s342 + $0x40] sm:$0xff]
      %v374 = vld [vmem:[%s3] sm:$0xff]
      %376 = vset.pattern.permute.xlu0 0
      %377 = vperm.xlu0 %376, %v374
      %v378 = vpop.permute.xlu0 %377
      %vm380 = vcmask 588800
      %v382 = vsel %vm380, %v364, 0
      %384 = vmatprep.subr.mxu0 0.0
      %385 = vmatpush1.msra.mxu0 %v365
      %386 = vmatprep.subr.mxu0 0.0
      %387 = vmatpush1.msra.mxu0 %v366
      %388 = vmatprep.subr.mxu0 0.0
      %389 = vmatpush1.msra.mxu0 %v367
      %390 = vmatprep.subr.mxu0 0.0
      %391 = vmatpush1.msra.mxu0 %v368
      %392 = vmatprep.subr.mxu0 0.0
      %393 = vmatpush1.msra.mxu0 %v369
      %394 = vmatprep.subr.mxu0 0.0
      %395 = vmatpush1.msra.mxu0 %v370
      %396 = vmatprep.subr.mxu0 0.0
      %397 = vmatpush1.msra.mxu0 %v371
      %398 = vmatprep.subr.mxu0 0.0
      %399 = vmatpush1.msra.mxu0 %v372
      %400 = vmatprep.subr.mxu0 0.0
      %401 = vmatpush1.msra.mxu0 %v373
      %402 = vmatprep.subr.mxu0 0.0
      %403 = vmatpush1.msra.mxu0 0.0
      %404 = vmatprep.subr.mxu0 0.0
      %405 = vmatpush1.msra.mxu0 0.0
      %406 = vmatprep.subr.mxu0 0.0
      %407 = vmatpush1.msra.mxu0 0.0
      %408 = vmatprep.subr.mxu0 0.0
      %409 = vmatpush1.msra.mxu0 0.0
      %410 = vmatprep.subr.mxu0 0.0
      %411 = vmatpush1.msra.mxu0 0.0
      %412 = vmatprep.subr.mxu0 0.0
      %413 = vmatpush1.msra.mxu0 0.0
      %414 = vmatprep.subr.mxu0 0.0
      %415 = vmatpush1.msra.mxu0 0.0
      %416 = vmatprep.subr.mxu0 0.0
      %417 = vmatpush1.msra.mxu0 0.0
      %418 = vmatprep.subr.mxu0 0.0
      %419 = vmatpush1.msra.mxu0 0.0
      %420 = vmatprep.subr.mxu0 0.0
      %421 = vmatpush1.msra.mxu0 0.0
      %422 = vmatprep.subr.mxu0 0.0
      %423 = vmatpush1.msra.mxu0 0.0
      %424 = vmatprep.subr.mxu0 0.0
      %425 = vmatpush1.msra.mxu0 0.0
      %426 = vmatprep.subr.mxu0 0.0
      %427 = vmatpush1.msra.mxu0 0.0
      %428 = vmatprep.subr.mxu0 0.0
      %429 = vmatpush1.msra.mxu0 0.0
      %430 = vmatprep.subr.mxu0 0.0
      %431 = vmatpush1.msra.mxu0 0.0
      %432 = vmatprep.subr.mxu0 0.0
      %433 = vmatpush1.msra.mxu0 0.0
      %434 = vmatprep.subr.mxu0 0.0
      %435 = vmatpush1.msra.mxu0 0.0
      %436 = vmatprep.subr.mxu0 0.0
      %437 = vmatpush1.msra.mxu0 0.0
      %438 = vmatprep.subr.mxu0 0.0
      %439 = vmatpush1.msra.mxu0 0.0
      %440 = vmatprep.subr.mxu0 0.0
      %441 = vmatpush1.msra.mxu0 0.0
      %442 = vmatprep.subr.mxu0 0.0
      %443 = vmatpush1.msra.mxu0 0.0
      %444 = vmatprep.subr.mxu0 0.0
      %445 = vmatpush1.msra.mxu0 0.0
      %446 = vmatprep.subr.mxu0 0.0
      %447 = vmatpush1.msra.mxu0 0.0
      %448 = vmatprep.mubr.f32.mxu0 0.0
      %449 = vmatmul.mubr.f32.gmra.mrb[0].mxu0 %v382
      %v450 = vpop.f32.mrb[0].mxu0
      %v451 = vadd.f32 %v378, %v450
      %v452 = vpop.f32.mrb[0].mxu0
      %453 = vdwg.mxu0
      %v454 = vxor.u32 %v451, 2147483648
      %v455 = vmul.f32 %v454, 1.442695
      %v456 = vpow.pop %v455
      %v457 = vadd.f32 %v456, 1.0
      %v458 = vrcp.pop %v457
      %v459 = vmul.f32 1.0, %v458
      %v460 = vld [vmem:[%s4] sm:$0xff]
      %v461 = vld [vmem:[%s349] sm:$0xff]
      %v462 = vld [vmem:[%s5] sm:$0xff]
      %464 = vset.pattern.permute.xlu0 0
      %465 = vperm.xlu0 %464, %v462
      %v466 = vpop.permute.xlu0 %465
      %vm468 = vcmask 64512
      %v470 = vsel %vm468, %v460, 0
      %472 = vmatprep.subr.mxu0 0.0
      %473 = vmatpush1.msra.mxu0 %v461
      %474 = vmatprep.subr.mxu0 0.0
      %475 = vmatpush1.msra.mxu0 0.0
      %476 = vmatprep.subr.mxu0 0.0
      %477 = vmatpush1.msra.mxu0 0.0
      %478 = vmatprep.subr.mxu0 0.0
      %479 = vmatpush1.msra.mxu0 0.0
      %480 = vmatprep.subr.mxu0 0.0
      %481 = vmatpush1.msra.mxu0 0.0
      %482 = vmatprep.subr.mxu0 0.0
      %483 = vmatpush1.msra.mxu0 0.0
      %484 = vmatprep.subr.mxu0 0.0
      %485 = vmatpush1.msra.mxu0 0.0
      %486 = vmatprep.subr.mxu0 0.0
      %487 = vmatpush1.msra.mxu0 0.0
      %488 = vmatprep.subr.mxu0 0.0
      %489 = vmatpush1.msra.mxu0 0.0
      %490 = vmatprep.subr.mxu0 0.0
      %491 = vmatpush1.msra.mxu0 0.0
      %492 = vmatprep.subr.mxu0 0.0
      %493 = vmatpush1.msra.mxu0 0.0
      %494 = vmatprep.subr.mxu0 0.0
      %495 = vmatpush1.msra.mxu0 0.0
      %496 = vmatprep.subr.mxu0 0.0
      %497 = vmatpush1.msra.mxu0 0.0
      %498 = vmatprep.subr.mxu0 0.0
      %499 = vmatpush1.msra.mxu0 0.0
      %500 = vmatprep.subr.mxu0 0.0
      %501 = vmatpush1.msra.mxu0 0.0
      %502 = vmatprep.subr.mxu0 0.0
      %503 = vmatpush1.msra.mxu0 0.0
      %504 = vmatprep.subr.mxu0 0.0
      %505 = vmatpush1.msra.mxu0 0.0
      %506 = vmatprep.subr.mxu0 0.0
      %507 = vmatpush1.msra.mxu0 0.0
      %508 = vmatprep.subr.mxu0 0.0
      %509 = vmatpush1.msra.mxu0 0.0
      %510 = vmatprep.subr.mxu0 0.0
      %511 = vmatpush1.msra.mxu0 0.0
      %512 = vmatprep.subr.mxu0 0.0
      %513 = vmatpush1.msra.mxu0 0.0
      %514 = vmatprep.subr.mxu0 0.0
      %515 = vmatpush1.msra.mxu0 0.0
      %516 = vmatprep.subr.mxu0 0.0
      %517 = vmatpush1.msra.mxu0 0.0
      %518 = vmatprep.subr.mxu0 0.0
      %519 = vmatpush1.msra.mxu0 0.0
      %520 = vmatprep.subr.mxu0 0.0
      %521 = vmatpush1.msra.mxu0 0.0
      %522 = vmatprep.subr.mxu0 0.0
      %523 = vmatpush1.msra.mxu0 0.0
      %524 = vmatprep.subr.mxu0 0.0
      %525 = vmatpush1.msra.mxu0 0.0
      %526 = vmatprep.subr.mxu0 0.0
      %527 = vmatpush1.msra.mxu0 0.0
      %528 = vmatprep.subr.mxu0 0.0
      %529 = vmatpush1.msra.mxu0 0.0
      %530 = vmatprep.subr.mxu0 0.0
      %531 = vmatpush1.msra.mxu0 0.0
      %532 = vmatprep.subr.mxu0 0.0
      %533 = vmatpush1.msra.mxu0 0.0
      %534 = vmatprep.subr.mxu0 0.0
      %535 = vmatpush1.msra.mxu0 0.0
      %536 = vmatprep.mubr.f32.mxu0 0.0
      %537 = vmatmul.mubr.f32.gmra.mrb[0].mxu0 %v470
      %v538 = vpop.f32.mrb[0].mxu0
      %v539 = vadd.f32 %v466, %v538
      %v540 = vpop.f32.mrb[0].mxu0
      %541 = vdwg.mxu0
      %vm542 = vcmp.ge.f32.partialorder %v539, 0.0
      %v543 = vadd.f32 %v539, 0.5
      %v544 = vxor.u32 %v539, 2147483648
      %v545 = vmul.f32 %v544, 1.442695
      %v546 = vpow.pop %v545
      %v547 = vadd.f32 %v546, 1.0
      %v548 = vrcp.pop %v547
      %v549 = vmul.f32 1.0, %v548
      %v550 = vsel %vm542, %v543, %v549
      %v551 = vld [vmem:[%s356] sm:$0xff]
      %v552 = vsub.f32 %v550, %v551
      %v553 = vmul.f32 %v459, %v552
      %v554 = vadd.f32 %v551, %v553
      %vm555 = vcmask 523264
      %556 = vst.msk [vmem:[%s363] sm:$0xff] %vm555, %v554
      %p557 = scmp.lt.s32.totalorder %s22, 1
      %s558 = scalar_select %p557, %s22, 1
      %p559 = scmp.lt.s32.totalorder %s23, 0
      %s560 = scalar_select %p559, %s23, 0
      %s561 = sadd.s32 %s560, %s558
      %s562 = smul.addr %s561, 8
      %s563 = scalar_lea.vmem %s7, %s562
      // Predicated region
      $region49: #{gruunet_forward.49} parent=47 // pred_check
        %p564 = pneg %p218
      $region50: #{gruunet_forward.49} parent=47 // pred_check_branch
        %566 = sbr.rel (%p564) target = $region52
      $region51: #{gruunet_forward.49} parent=47 // pred_region
        _
      $region52: #{gruunet_forward.49} parent=47 // pred_fallthru
        _
    $region48: #{gruunet_forward.49} parent=5 // pred_fallthru
      _
    %p567 = scmp.le.s32.totalorder 2, %s13
    // Predicated region
    $region53: #{gruunet_forward.49} parent=5 // pred_check
      %p568 = pneg %p567
    $region54: #{gruunet_forward.49} parent=5 // pred_check_branch
      %570 = sbr.rel (%p568) target = $region56
    $region55: #{gruunet_forward.49} parent=5 // pred_region
      %s571 = ssub.s32 %s13, 2
      // Predicated region
      $region57: #{gruunet_forward.49} parent=55 // pred_check
        %p572 = pneg %p224
      $region58: #{gruunet_forward.49} parent=55 // pred_check_branch
        %574 = sbr.rel (%p572) target = $region60
      $region59: #{gruunet_forward.49} parent=55 // pred_region
        %p575 = scmp.lt.s32.totalorder %s24, 1
        %s576 = scalar_select %p575, %s24, 1
        %p577 = scmp.lt.s32.totalorder %s25, 0
        %s578 = scalar_select %p577, %s25, 0
        %s579 = sadd.s32 %s578, %s576
        %s580 = smul.addr %s579, 8
        %s581 = scalar_lea.vmem %s7, %s580
      $region60: #{gruunet_forward.49} parent=55 // pred_fallthru
        _
    $region56: #{gruunet_forward.49} parent=5 // pred_fallthru
      _
  $region6: #{gruunet_forward.49} parent=0 // loop_footer
    %s17 = sadd.s32 1, %s13
  $region7: #{gruunet_forward.49} parent=0 // loop_footer_branch
    %12 = sbr.rel target = $region3
  $region8: #{gruunet_forward.49} parent=0 // loop_exit
    _

// kernel: gruunet_forward.37
$region0: #{gruunet_forward.37}
  #allocation0 [shape = 'u32[]', space=smem, size = 0x4, offset = 0x4, fixed_abs, tag = 'smem constant byte address 0x4 - core index']
  #allocation1 [shape = 'u32[144,128]{1,0:T(1,128)}', space=vmem, size = 0x12000, scoped, tag = 'internal scratch']
  %s0 = inlined_call_operand.vmem [shape: f32[2,12,256], index: 0, kind: input, shape index: {}]
  %s1 = inlined_call_operand.vmem [shape: f32[8,12], index: 1, kind: input, shape index: {}]
  %s2 = inlined_call_operand.vmem [shape: f32[2,8,256], index: 2, kind: output, shape index: {}]
  %s3 = sld [smem:[#allocation0]]
  $region41: #{gruunet_forward.37} parent=0
    _
  %s5 = ssub.s32 1, %s3
  %s6 = scalar_select 0, %s5, %s3
  loop: start=0, step=1, limit=4
  $region2: #{gruunet_forward.37} parent=0 // loop_pre_header
    _
  $region3: #{gruunet_forward.37} parent=0 // loop_header
    %s8 = sphi 0, %s12
    %p9 = scmp.ge.s32.totalorder %s8, 4
    %s15 = sphi 0, %s27
    %s16 = sphi 0, %s23
    %s17 = sphi 0, %s15
    %s18 = sphi 0, %s16
    %s19 = sphi 0, %s17
    %s20 = sphi 0, %s18
    %s32 = sphi 0, %s34
    %s35 = sphi 0, %s32
    %s36 = sphi 0, %s35
    %s52 = sphi 0, %s36
    %s56 = sphi 0, %s56
    %s58 = sphi 0, %s56
    %s59 = sphi 0, %s58
    %s73 = sphi 0, %s59
    %s81 = sphi 0, %s83
    %s84 = sphi 0, %s81
    %s85 = sphi 0, %s84
    %s101 = sphi 0, %s85
  $region4: #{gruunet_forward.37} parent=0 // loop_header_branch
    %11 = sbr.rel (%p9) target = $region8
  $region5: #{gruunet_forward.37} parent=0 // loop_body
    %s13 = ssub.s32 %s8, 1
    %s14 = ssub.s32 %s8, 2
    %s21 = sadd.s32 1, %s16
    %p22 = scmp.ge.s32.totalorder %s21, 1
    %s23 = scalar_select %p22, 0, %s21
    %s24 = sadd.s32 1, %s15
    %s25 = scalar_select %p22, %s24, %s15
    %p26 = scmp.ge.s32.totalorder %s25, 2
    %s27 = scalar_select %p26, 0, %s25
    %s28 = ssub.s32 %s15, %s27
    %s29 = ssub.s32 %s16, %s23
    %s30 = sor.u32 %s28, %s29
    %p31 = scmp.eq.s32.totalorder %s30, 0
    %s33 = sadd.s32 %s32, 1
    %s34 = scalar_select %p31, %s32, %s33
    %p37 = pneg %p31
    %p38 = scmp.eq.s32.totalorder %s8, 1
    %p39 = por %p37, %p38
    %p40 = scmp.ne.s32.totalorder %s32, %s35
    %p41 = scmp.eq.s32.totalorder %s8, 0
    %p42 = por %p40, %p41
    %p43 = scmp.ne.s32.totalorder %s32, %s35
    %p44 = scmp.eq.s32.totalorder %s13, 1
    %p45 = por %p43, %p44
    %p46 = scmp.ne.s32.totalorder %s35, %s36
    %p47 = scmp.eq.s32.totalorder %s13, 0
    %p48 = por %p46, %p47
    %p49 = scmp.ne.s32.totalorder %s35, %s36
    %p50 = scmp.eq.s32.totalorder %s14, 1
    %p51 = por %p49, %p50
    %p53 = scmp.ne.s32.totalorder %s36, %s52
    %p54 = scmp.eq.s32.totalorder %s14, 0
    %p55 = por %p53, %p54
    %s57 = sadd.s32 %s56, 1
    %p60 = scmp.eq.s32.totalorder %s8, 1
    %p61 = scmp.ne.s32.totalorder %s56, %s58
    %p62 = scmp.eq.s32.totalorder %s8, 0
    %p63 = por %p61, %p62
    %p64 = scmp.ne.s32.totalorder %s56, %s58
    %p65 = scmp.eq.s32.totalorder %s13, 1
    %p66 = por %p64, %p65
    %p67 = scmp.ne.s32.totalorder %s58, %s59
    %p68 = scmp.eq.s32.totalorder %s13, 0
    %p69 = por %p67, %p68
    %p70 = scmp.ne.s32.totalorder %s58, %s59
    %p71 = scmp.eq.s32.totalorder %s14, 1
    %p72 = por %p70, %p71
    %p74 = scmp.ne.s32.totalorder %s59, %s73
    %p75 = scmp.eq.s32.totalorder %s14, 0
    %p76 = por %p74, %p75
    %s77 = ssub.s32 %s15, %s27
    %s78 = ssub.s32 %s16, %s23
    %s79 = sor.u32 %s77, %s78
    %p80 = scmp.eq.s32.totalorder %s79, 0
    %s82 = sadd.s32 %s81, 1
    %s83 = scalar_select %p80, %s81, %s82
    %p86 = pneg %p80
    %p87 = scmp.eq.s32.totalorder %s8, 1
    %p88 = por %p86, %p87
    %p89 = scmp.ne.s32.totalorder %s81, %s84
    %p90 = scmp.eq.s32.totalorder %s8, 0
    %p91 = por %p89, %p90
    %p92 = scmp.ne.s32.totalorder %s81, %s84
    %p93 = scmp.eq.s32.totalorder %s13, 1
    %p94 = por %p92, %p93
    %p95 = scmp.ne.s32.totalorder %s84, %s85
    %p96 = scmp.eq.s32.totalorder %s13, 0
    %p97 = por %p95, %p96
    %p98 = scmp.ne.s32.totalorder %s84, %s85
    %p99 = scmp.eq.s32.totalorder %s14, 1
    %p100 = por %p98, %p99
    %p102 = scmp.ne.s32.totalorder %s85, %s101
    %p103 = scmp.eq.s32.totalorder %s14, 0
    %p104 = por %p102, %p103
    %p105 = scmp.le.s32.totalorder 1, %s8
    %p106 = scmp.lt.s32.totalorder %s8, 3
    %p107 = pnand %p105, %p106
    %p108 = pneg %p107
    // Predicated region
    $region9: #{gruunet_forward.37} parent=5 // pred_check
      _
    $region10: #{gruunet_forward.37} parent=5 // pred_check_branch
      %110 = sbr.rel (%p107) target = $region12
    $region11: #{gruunet_forward.37} parent=5 // pred_region
      %s111 = ssub.s32 %s8, 1
      // Predicated region
      $region13: #{gruunet_forward.37} parent=11 // pred_check
        %p112 = pneg %p69
      $region14: #{gruunet_forward.37} parent=11 // pred_check_branch
        %114 = sbr.rel (%p112) target = $region16
      $region15: #{gruunet_forward.37} parent=11 // pred_region
        _
      $region16: #{gruunet_forward.37} parent=11 // pred_fallthru
        _
    $region12: #{gruunet_forward.37} parent=5 // pred_fallthru
      _
    %p115 = scmp.lt.s32.totalorder %s8, 2
    // Predicated region
    $region17: #{gruunet_forward.37} parent=5 // pred_check
      %p116 = pneg %p115
    $region18: #{gruunet_forward.37} parent=5 // pred_check_branch
      %118 = sbr.rel (%p116) target = $region20
    $region19: #{gruunet_forward.37} parent=5 // pred_region
      // Predicated region
      $region21: #{gruunet_forward.37} parent=19 // pred_check
        %p119 = pneg %p42
      $region22: #{gruunet_forward.37} parent=19 // pred_check_branch
        %121 = sbr.rel (%p119) target = $region24
      $region23: #{gruunet_forward.37} parent=19 // pred_region
        %s122 = smul.u32 2, %s16
        %p123 = scmp.lt.s32.totalorder %s15, 1
        %s124 = scalar_select %p123, %s15, 1
        %p125 = scmp.lt.s32.totalorder %s122, 1
        %s126 = scalar_select %p125, %s122, 1
        %s127 = smul.addr %s124, 4
        %s128 = sadd.s32 %s126, %s127
        %s129 = smul.addr %s128, 8
        %s130 = scalar_lea.vmem %s0, %s129
        %s131 = smul.u32 2, %s16
      $region24: #{gruunet_forward.37} parent=19 // pred_fallthru
        _
    $region20: #{gruunet_forward.37} parent=5 // pred_fallthru
      _
    %p132 = scmp.le.s32.totalorder 1, %s8
    %p133 = scmp.lt.s32.totalorder %s8, 3
    %p134 = pnand %p132, %p133
    %p135 = pneg %p134
    // Predicated region
    $region25: #{gruunet_forward.37} parent=5 // pred_check
      _
    $region26: #{gruunet_forward.37} parent=5 // pred_check_branch
      %137 = sbr.rel (%p134) target = $region28
    $region27: #{gruunet_forward.37} parent=5 // pred_region
      %s138 = ssub.s32 %s8, 1
      %s139 = smul.u32 2, %s18
      %p140 = scmp.lt.s32.totalorder %s17, 1
      %s141 = scalar_select %p140, %s17, 1
      %p142 = scmp.lt.s32.totalorder %s139, 1
      %s143 = scalar_select %p142, %s139, 1
      %s144 = smul.addr %s141, 4
      %s145 = sadd.s32 %s143, %s144
      %s146 = smul.addr %s145, 8
      %s147 = scalar_lea.vmem %s0, %s146
      %p148 = pneg %p48
      %p149 = pneg %p45
      %p150 = pneg %p69
      %p151 = pneg %p66
      %p152 = pneg %p97
      %p153 = pneg %p94
      %s154 = smul.u32 2, %s18
      %p155 = scmp.lt.s32.totalorder %s17, 1
      %s156 = scalar_select %p155, %s17, 1
      %p157 = scmp.lt.s32.totalorder %s154, 1
      %s158 = scalar_select %p157, %s154, 1
      %s159 = smul.addr %s156, 2
      %s160 = sadd.s32 %s158, %s159
      %s161 = smul.addr %s160, 8
      %s162 = scalar_lea.vmem %s2, %s161
      %s163 = smul.u32 2, %s18
      %p164 = scmp.lt.s32.totalorder %s17, 1
      %s165 = scalar_select %p164, %s17, 1
      %p166 = scmp.lt.s32.totalorder %s163, 1
      %s167 = scalar_select %p166, %s163, 1
      %s168 = smul.addr %s165, 4
      %s169 = sadd.s32 %s167, %s168
      %s170 = smul.addr %s169, 8
      %s171 = scalar_lea.vmem %s0, %s170
      %s172 = smul.u32 2, %s18
      %s173 = smul.u32 2, %s18
      %p174 = scmp.lt.s32.totalorder %s17, 1
      %s175 = scalar_select %p174, %s17, 1
      %p176 = scmp.lt.s32.totalorder %s173, 1
      %s177 = scalar_select %p176, %s173, 1
      %s178 = smul.addr %s175, 2
      %s179 = sadd.s32 %s177, %s178
      %s180 = smul.addr %s179, 8
      %s181 = scalar_lea.vmem %s2, %s180
      %s182 = smul.u32 2, %s18
      %v183 = vld [vmem:[%s1] sm:$0xff]
      %v184 = vld [vmem:[%s171] sm:$0xff]
      %v185 = vld [vmem:[%s171 + $0x8] sm:$0xff]
      %v186 = vld [vmem:[%s171 + $0x10] sm:$0xf]
      %v187 = vld [vmem:[%s171 + $0x18] sm:$0xf]
      %vm188 = vcmask 97280
      %v190 = vsel %vm188, %v183, 0
      %vm192 = vcmask 1043456
      %v194 = vsel %vm192, %v186, 0
      %v197 = vsel %vm192, %v187, 0
      %199 = vmatprep.subr.mxu0 %v185
      %200 = vmatpush1.msra.mxu0 %v184
      %201 = vmatprep.subr.mxu0 %v197
      %202 = vmatpush1.msra.mxu0 %v194
      %203 = vmatprep.subr.mxu0 0.0
      %204 = vmatpush1.msra.mxu0 0.0
      %205 = vmatprep.subr.mxu0 0.0
      %206 = vmatpush1.msra.mxu0 0.0
      %207 = vmatprep.subr.mxu0 0.0
      %208 = vmatpush1.msra.mxu0 0.0
      %209 = vmatprep.subr.mxu0 0.0
      %210 = vmatpush1.msra.mxu0 0.0
      %211 = vmatprep.subr.mxu0 0.0
      %212 = vmatpush1.msra.mxu0 0.0
      %213 = vmatprep.subr.mxu0 0.0
      %214 = vmatpush1.msra.mxu0 0.0
      %215 = vmatprep.subr.mxu0 0.0
      %216 = vmatpush1.msra.mxu0 0.0
      %217 = vmatprep.subr.mxu0 0.0
      %218 = vmatpush1.msra.mxu0 0.0
      %219 = vmatprep.subr.mxu0 0.0
      %220 = vmatpush1.msra.mxu0 0.0
      %221 = vmatprep.subr.mxu0 0.0
      %222 = vmatpush1.msra.mxu0 0.0
      %223 = vmatprep.subr.mxu0 0.0
      %224 = vmatpush1.msra.mxu0 0.0
      %225 = vmatprep.subr.mxu0 0.0
      %226 = vmatpush1.msra.mxu0 0.0
      %227 = vmatprep.subr.mxu0 0.0
      %228 = vmatpush1.msra.mxu0 0.0
      %229 = vmatprep.subr.mxu0 0.0
      %230 = vmatpush1.msra.mxu0 0.0
      %231 = vmatprep.subr.mxu0 0.0
      %232 = vmatpush1.msra.mxu0 0.0
      %233 = vmatprep.subr.mxu0 0.0
      %234 = vmatpush1.msra.mxu0 0.0
      %235 = vmatprep.subr.mxu0 0.0
      %236 = vmatpush1.msra.mxu0 0.0
      %237 = vmatprep.subr.mxu0 0.0
      %238 = vmatpush1.msra.mxu0 0.0
      %239 = vmatprep.subr.mxu0 0.0
      %240 = vmatpush1.msra.mxu0 0.0
      %241 = vmatprep.subr.mxu0 0.0
      %242 = vmatpush1.msra.mxu0 0.0
      %243 = vmatprep.subr.mxu0 0.0
      %244 = vmatpush1.msra.mxu0 0.0
      %245 = vmatprep.subr.mxu0 0.0
      %246 = vmatpush1.msra.mxu0 0.0
      %247 = vmatprep.subr.mxu0 0.0
      %248 = vmatpush1.msra.mxu0 0.0
      %249 = vmatprep.subr.mxu0 0.0
      %250 = vmatpush1.msra.mxu0 0.0
      %251 = vmatprep.subr.mxu0 0.0
      %252 = vmatpush1.msra.mxu0 0.0
      %253 = vmatprep.subr.mxu0 0.0
      %254 = vmatpush1.msra.mxu0 0.0
      %255 = vmatprep.subr.mxu0 0.0
      %256 = vmatpush1.msra.mxu0 0.0
      %257 = vmatprep.subr.mxu0 0.0
      %258 = vmatpush1.msra.mxu0 0.0
      %259 = vmatprep.subr.mxu0 0.0
      %260 = vmatpush1.msra.mxu0 0.0
      %261 = vmatprep.subr.mxu0 0.0
      %262 = vmatpush1.msra.mxu0 0.0
      %263 = vmatprep.mubr.f32.mxu0 0.0
      %264 = vmatmul.mubr.f32.gmra.mrb[0].mxu0 %v190
      %v265 = vpop.f32.mrb[0].mxu0
      %v266 = vadd.f32 0.0, %v265
      %v267 = vpop.f32.mrb[0].mxu0
      %v268 = vadd.f32 0.0, %v267
      %269 = vdwg.mxu0
      %v270 = vmax.f32 %v266, 0.0
      %v271 = vmax.f32 %v268, 0.0
      %272 = vst [vmem:[%s181] sm:$0xff] %v270
      %273 = vst [vmem:[%s181 + $0x8] sm:$0xff] %v271
      %s274 = smul.u32 2, %s18
      %p275 = scmp.lt.s32.totalorder %s17, 1
      %s276 = scalar_select %p275, %s17, 1
      %p277 = scmp.lt.s32.totalorder %s274, 1
      %s278 = scalar_select %p277, %s274, 1
      %s279 = smul.addr %s276, 2
      %s280 = sadd.s32 %s278, %s279
      %s281 = smul.addr %s280, 8
      %s282 = scalar_lea.vmem %s2, %s281
      // Predicated region
      $region29: #{gruunet_forward.37} parent=27 // pred_check
        %p283 = pneg %p94
      $region30: #{gruunet_forward.37} parent=27 // pred_check_branch
        %285 = sbr.rel (%p283) target = $region32
      $region31: #{gruunet_forward.37} parent=27 // pred_region
        %s286 = smul.u32 2, %s18
      $region32: #{gruunet_forward.37} parent=27 // pred_fallthru
        _
    $region28: #{gruunet_forward.37} parent=5 // pred_fallthru
      _
    %p287 = scmp.le.s32.totalorder 2, %s8
    // Predicated region
    $region33: #{gruunet_forward.37} parent=5 // pred_check
      %p288 = pneg %p287
    $region34: #{gruunet_forward.37} parent=5 // pred_check_branch
      %290 = sbr.rel (%p288) target = $region36
    $region35: #{gruunet_forward.37} parent=5 // pred_region
      %s291 = ssub.s32 %s8, 2
      // Predicated region
      $region37: #{gruunet_forward.37} parent=35 // pred_check
        %p292 = pneg %p100
      $region38: #{gruunet_forward.37} parent=35 // pred_check_branch
        %294 = sbr.rel (%p292) target = $region40
      $region39: #{gruunet_forward.37} parent=35 // pred_region
        %s295 = smul.u32 2, %s20
        %p296 = scmp.lt.s32.totalorder %s19, 1
        %s297 = scalar_select %p296, %s19, 1
        %p298 = scmp.lt.s32.totalorder %s295, 1
        %s299 = scalar_select %p298, %s295, 1
        %s300 = smul.addr %s297, 2
        %s301 = sadd.s32 %s299, %s300
        %s302 = smul.addr %s301, 8
        %s303 = scalar_lea.vmem %s2, %s302
      $region40: #{gruunet_forward.37} parent=35 // pred_fallthru
        _
    $region36: #{gruunet_forward.37} parent=5 // pred_fallthru
      _
  $region6: #{gruunet_forward.37} parent=0 // loop_footer
    %s12 = sadd.s32 1, %s8
  $region7: #{gruunet_forward.37} parent=0 // loop_footer_branch
    %7 = sbr.rel target = $region3
  $region8: #{gruunet_forward.37} parent=0 // loop_exit
    _

// kernel: gruunet_forward.38
$region0: #{gruunet_forward.38}
  #allocation0 [shape = 'u32[]', space=smem, size = 0x4, offset = 0x4, fixed_abs, tag = 'smem constant byte address 0x4 - core index']
  #allocation1 [shape = 'u32[144,128]{1,0:T(1,128)}', space=vmem, size = 0x12000, scoped, tag = 'internal scratch']
  %s0 = inlined_call_operand.vmem [shape: f32[2,9,8,256], index: 0, kind: input, shape index: {}]
  %s1 = inlined_call_operand.vmem [shape: f32[9,8,1], index: 1, kind: input, shape index: {}]
  %s2 = inlined_call_operand.vmem [shape: f32[2,8,256], index: 2, kind: output, shape index: {}]
  %s3 = sld [smem:[#allocation0]]
  $region41: #{gruunet_forward.38} parent=0
    _
  %s5 = ssub.s32 1, %s3
  %s6 = scalar_select 0, %s5, %s3
  loop: start=0, step=1, limit=4
  $region2: #{gruunet_forward.38} parent=0 // loop_pre_header
    _
  $region3: #{gruunet_forward.38} parent=0 // loop_header
    %s8 = sphi 0, %s12
    %p9 = scmp.ge.s32.totalorder %s8, 4
    %s15 = sphi 0, %s27
    %s16 = sphi 0, %s23
    %s17 = sphi 0, %s15
    %s18 = sphi 0, %s16
    %s19 = sphi 0, %s17
    %s20 = sphi 0, %s18
    %s32 = sphi 0, %s34
    %s35 = sphi 0, %s32
    %s36 = sphi 0, %s35
    %s52 = sphi 0, %s36
    %s56 = sphi 0, %s56
    %s58 = sphi 0, %s56
    %s59 = sphi 0, %s58
    %s73 = sphi 0, %s59
    %s81 = sphi 0, %s83
    %s84 = sphi 0, %s81
    %s85 = sphi 0, %s84
    %s101 = sphi 0, %s85
  $region4: #{gruunet_forward.38} parent=0 // loop_header_branch
    %11 = sbr.rel (%p9) target = $region8
  $region5: #{gruunet_forward.38} parent=0 // loop_body
    %s13 = ssub.s32 %s8, 1
    %s14 = ssub.s32 %s8, 2
    %s21 = sadd.s32 1, %s16
    %p22 = scmp.ge.s32.totalorder %s21, 1
    %s23 = scalar_select %p22, 0, %s21
    %s24 = sadd.s32 1, %s15
    %s25 = scalar_select %p22, %s24, %s15
    %p26 = scmp.ge.s32.totalorder %s25, 2
    %s27 = scalar_select %p26, 0, %s25
    %s28 = ssub.s32 %s15, %s27
    %s29 = ssub.s32 %s16, %s23
    %s30 = sor.u32 %s28, %s29
    %p31 = scmp.eq.s32.totalorder %s30, 0
    %s33 = sadd.s32 %s32, 1
    %s34 = scalar_select %p31, %s32, %s33
    %p37 = pneg %p31
    %p38 = scmp.eq.s32.totalorder %s8, 1
    %p39 = por %p37, %p38
    %p40 = scmp.ne.s32.totalorder %s32, %s35
    %p41 = scmp.eq.s32.totalorder %s8, 0
    %p42 = por %p40, %p41
    %p43 = scmp.ne.s32.totalorder %s32, %s35
    %p44 = scmp.eq.s32.totalorder %s13, 1
    %p45 = por %p43, %p44
    %p46 = scmp.ne.s32.totalorder %s35, %s36
    %p47 = scmp.eq.s32.totalorder %s13, 0
    %p48 = por %p46, %p47
    %p49 = scmp.ne.s32.totalorder %s35, %s36
    %p50 = scmp.eq.s32.totalorder %s14, 1
    %p51 = por %p49, %p50
    %p53 = scmp.ne.s32.totalorder %s36, %s52
    %p54 = scmp.eq.s32.totalorder %s14, 0
    %p55 = por %p53, %p54
    %s57 = sadd.s32 %s56, 1
    %p60 = scmp.eq.s32.totalorder %s8, 1
    %p61 = scmp.ne.s32.totalorder %s56, %s58
    %p62 = scmp.eq.s32.totalorder %s8, 0
    %p63 = por %p61, %p62
    %p64 = scmp.ne.s32.totalorder %s56, %s58
    %p65 = scmp.eq.s32.totalorder %s13, 1
    %p66 = por %p64, %p65
    %p67 = scmp.ne.s32.totalorder %s58, %s59
    %p68 = scmp.eq.s32.totalorder %s13, 0
    %p69 = por %p67, %p68
    %p70 = scmp.ne.s32.totalorder %s58, %s59
    %p71 = scmp.eq.s32.totalorder %s14, 1
    %p72 = por %p70, %p71
    %p74 = scmp.ne.s32.totalorder %s59, %s73
    %p75 = scmp.eq.s32.totalorder %s14, 0
    %p76 = por %p74, %p75
    %s77 = ssub.s32 %s15, %s27
    %s78 = ssub.s32 %s16, %s23
    %s79 = sor.u32 %s77, %s78
    %p80 = scmp.eq.s32.totalorder %s79, 0
    %s82 = sadd.s32 %s81, 1
    %s83 = scalar_select %p80, %s81, %s82
    %p86 = pneg %p80
    %p87 = scmp.eq.s32.totalorder %s8, 1
    %p88 = por %p86, %p87
    %p89 = scmp.ne.s32.totalorder %s81, %s84
    %p90 = scmp.eq.s32.totalorder %s8, 0
    %p91 = por %p89, %p90
    %p92 = scmp.ne.s32.totalorder %s81, %s84
    %p93 = scmp.eq.s32.totalorder %s13, 1
    %p94 = por %p92, %p93
    %p95 = scmp.ne.s32.totalorder %s84, %s85
    %p96 = scmp.eq.s32.totalorder %s13, 0
    %p97 = por %p95, %p96
    %p98 = scmp.ne.s32.totalorder %s84, %s85
    %p99 = scmp.eq.s32.totalorder %s14, 1
    %p100 = por %p98, %p99
    %p102 = scmp.ne.s32.totalorder %s85, %s101
    %p103 = scmp.eq.s32.totalorder %s14, 0
    %p104 = por %p102, %p103
    %p105 = scmp.le.s32.totalorder 1, %s8
    %p106 = scmp.lt.s32.totalorder %s8, 3
    %p107 = pnand %p105, %p106
    %p108 = pneg %p107
    // Predicated region
    $region9: #{gruunet_forward.38} parent=5 // pred_check
      _
    $region10: #{gruunet_forward.38} parent=5 // pred_check_branch
      %110 = sbr.rel (%p107) target = $region12
    $region11: #{gruunet_forward.38} parent=5 // pred_region
      %s111 = ssub.s32 %s8, 1
      // Predicated region
      $region13: #{gruunet_forward.38} parent=11 // pred_check
        %p112 = pneg %p69
      $region14: #{gruunet_forward.38} parent=11 // pred_check_branch
        %114 = sbr.rel (%p112) target = $region16
      $region15: #{gruunet_forward.38} parent=11 // pred_region
        _
      $region16: #{gruunet_forward.38} parent=11 // pred_fallthru
        _
    $region12: #{gruunet_forward.38} parent=5 // pred_fallthru
      _
    %p115 = scmp.lt.s32.totalorder %s8, 2
    // Predicated region
    $region17: #{gruunet_forward.38} parent=5 // pred_check
      %p116 = pneg %p115
    $region18: #{gruunet_forward.38} parent=5 // pred_check_branch
      %118 = sbr.rel (%p116) target = $region20
    $region19: #{gruunet_forward.38} parent=5 // pred_region
      // Predicated region
      $region21: #{gruunet_forward.38} parent=19 // pred_check
        %p119 = pneg %p42
      $region22: #{gruunet_forward.38} parent=19 // pred_check_branch
        %121 = sbr.rel (%p119) target = $region24
      $region23: #{gruunet_forward.38} parent=19 // pred_region
        %s122 = smul.u32 2, %s16
        %p123 = scmp.lt.s32.totalorder %s15, 1
        %s124 = scalar_select %p123, %s15, 1
        %p125 = scmp.lt.s32.totalorder %s122, 1
        %s126 = scalar_select %p125, %s122, 1
        %s127 = smul.addr %s124, 18
        %s128 = sadd.s32 %s126, %s127
        %s129 = smul.addr %s128, 8
        %s130 = scalar_lea.vmem %s0, %s129
        %s131 = smul.u32 2, %s16
      $region24: #{gruunet_forward.38} parent=19 // pred_fallthru
        _
    $region20: #{gruunet_forward.38} parent=5 // pred_fallthru
      _
    %p132 = scmp.le.s32.totalorder 1, %s8
    %p133 = scmp.lt.s32.totalorder %s8, 3
    %p134 = pnand %p132, %p133
    %p135 = pneg %p134
    // Predicated region
    $region25: #{gruunet_forward.38} parent=5 // pred_check
      _
    $region26: #{gruunet_forward.38} parent=5 // pred_check_branch
      %137 = sbr.rel (%p134) target = $region28
    $region27: #{gruunet_forward.38} parent=5 // pred_region
      %s138 = ssub.s32 %s8, 1
      %s139 = smul.u32 2, %s18
      %p140 = scmp.lt.s32.totalorder %s17, 1
      %s141 = scalar_select %p140, %s17, 1
      %p142 = scmp.lt.s32.totalorder %s139, 1
      %s143 = scalar_select %p142, %s139, 1
      %s144 = smul.addr %s141, 18
      %s145 = sadd.s32 %s143, %s144
      %s146 = smul.addr %s145, 8
      %s147 = scalar_lea.vmem %s0, %s146
      %p148 = pneg %p48
      %p149 = pneg %p45
      %p150 = pneg %p69
      %p151 = pneg %p66
      %p152 = pneg %p97
      %p153 = pneg %p94
      %s154 = smul.u32 2, %s18
      %p155 = scmp.lt.s32.totalorder %s17, 1
      %s156 = scalar_select %p155, %s17, 1
      %p157 = scmp.lt.s32.totalorder %s154, 1
      %s158 = scalar_select %p157, %s154, 1
      %s159 = smul.addr %s156, 2
      %s160 = sadd.s32 %s158, %s159
      %s161 = smul.addr %s160, 8
      %s162 = scalar_lea.vmem %s2, %s161
      %s163 = smul.u32 2, %s18
      %p164 = scmp.lt.s32.totalorder %s17, 1
      %s165 = scalar_select %p164, %s17, 1
      %p166 = scmp.lt.s32.totalorder %s163, 1
      %s167 = scalar_select %p166, %s163, 1
      %s168 = smul.addr %s165, 18
      %s169 = sadd.s32 %s167, %s168
      %s170 = smul.addr %s169, 8
      %s171 = scalar_lea.vmem %s0, %s170
      %s172 = smul.u32 2, %s18
      %s173 = smul.u32 2, %s18
      %p174 = scmp.lt.s32.totalorder %s17, 1
      %s175 = scalar_select %p174, %s17, 1
      %p176 = scmp.lt.s32.totalorder %s173, 1
      %s177 = scalar_select %p176, %s173, 1
      %s178 = smul.addr %s175, 2
      %s179 = sadd.s32 %s177, %s178
      %s180 = smul.addr %s179, 8
      %s181 = scalar_lea.vmem %s2, %s180
      %s182 = smul.u32 2, %s18
      %v183 = vld [vmem:[%s1] sm:$0xff]
      %v184 = vld [vmem:[%s171] sm:$0xff]
      %v185 = vld [vmem:[%s171 + $0x8] sm:$0xff]
      %187 = vset.pattern.permute.xlu0 0
      %188 = vperm.xlu0 %187, %v183
      %v189 = vpop.permute.xlu0 %188
      %v191 = vmul.f32 %v189, %v184
      %v192 = vmul.f32 %v189, %v185
      %s193 = scalar_lea.vmem %s1, 8
      %v194 = vld [vmem:[%s193] sm:$0xff]
      %s195 = scalar_lea.vmem %s171, 16
      %v196 = vld [vmem:[%s195] sm:$0xff]
      %v197 = vld [vmem:[%s195 + $0x8] sm:$0xff]
      %199 = vset.pattern.permute.xlu0 0
      %200 = vperm.xlu0 %199, %v194
      %v201 = vpop.permute.xlu0 %200
      %v203 = vmul.f32 %v201, %v196
      %v204 = vmul.f32 %v201, %v197
      %v205 = vadd.f32 %v191, %v203
      %v206 = vadd.f32 %v192, %v204
      %s207 = scalar_lea.vmem %s1, 16
      %v208 = vld [vmem:[%s207] sm:$0xff]
      %s209 = scalar_lea.vmem %s171, 32
      %v210 = vld [vmem:[%s209] sm:$0xff]
      %v211 = vld [vmem:[%s209 + $0x8] sm:$0xff]
      %213 = vset.pattern.permute.xlu0 0
      %214 = vperm.xlu0 %213, %v208
      %v215 = vpop.permute.xlu0 %214
      %v217 = vmul.f32 %v215, %v210
      %v218 = vmul.f32 %v215, %v211
      %v219 = vadd.f32 %v205, %v217
      %v220 = vadd.f32 %v206, %v218
      %s221 = scalar_lea.vmem %s1, 24
      %v222 = vld [vmem:[%s221] sm:$0xff]
      %s223 = scalar_lea.vmem %s171, 48
      %v224 = vld [vmem:[%s223] sm:$0xff]
      %v225 = vld [vmem:[%s223 + $0x8] sm:$0xff]
      %227 = vset.pattern.permute.xlu0 0
      %228 = vperm.xlu0 %227, %v222
      %v229 = vpop.permute.xlu0 %228
      %v231 = vmul.f32 %v229, %v224
      %v232 = vmul.f32 %v229, %v225
      %v233 = vadd.f32 %v219, %v231
      %v234 = vadd.f32 %v220, %v232
      %s235 = scalar_lea.vmem %s1, 32
      %v236 = vld [vmem:[%s235] sm:$0xff]
      %s237 = scalar_lea.vmem %s171, 64
      %v238 = vld [vmem:[%s237] sm:$0xff]
      %v239 = vld [vmem:[%s237 + $0x8] sm:$0xff]
      %241 = vset.pattern.permute.xlu0 0
      %242 = vperm.xlu0 %241, %v236
      %v243 = vpop.permute.xlu0 %242
      %v245 = vmul.f32 %v243, %v238
      %v246 = vmul.f32 %v243, %v239
      %v247 = vadd.f32 %v233, %v245
      %v248 = vadd.f32 %v234, %v246
      %s249 = scalar_lea.vmem %s1, 40
      %v250 = vld [vmem:[%s249] sm:$0xff]
      %s251 = scalar_lea.vmem %s171, 80
      %v252 = vld [vmem:[%s251] sm:$0xff]
      %v253 = vld [vmem:[%s251 + $0x8] sm:$0xff]
      %255 = vset.pattern.permute.xlu0 0
      %256 = vperm.xlu0 %255, %v250
      %v257 = vpop.permute.xlu0 %256
      %v259 = vmul.f32 %v257, %v252
      %v260 = vmul.f32 %v257, %v253
      %v261 = vadd.f32 %v247, %v259
      %v262 = vadd.f32 %v248, %v260
      %s263 = scalar_lea.vmem %s1, 48
      %v264 = vld [vmem:[%s263] sm:$0xff]
      %s265 = scalar_lea.vmem %s171, 96
      %v266 = vld [vmem:[%s265] sm:$0xff]
      %v267 = vld [vmem:[%s265 + $0x8] sm:$0xff]
      %269 = vset.pattern.permute.xlu0 0
      %270 = vperm.xlu0 %269, %v264
      %v271 = vpop.permute.xlu0 %270
      %v273 = vmul.f32 %v271, %v266
      %v274 = vmul.f32 %v271, %v267
      %v275 = vadd.f32 %v261, %v273
      %v276 = vadd.f32 %v262, %v274
      %s277 = scalar_lea.vmem %s1, 56
      %v278 = vld [vmem:[%s277] sm:$0xff]
      %s279 = scalar_lea.vmem %s171, 112
      %v280 = vld [vmem:[%s279] sm:$0xff]
      %v281 = vld [vmem:[%s279 + $0x8] sm:$0xff]
      %283 = vset.pattern.permute.xlu0 0
      %284 = vperm.xlu0 %283, %v278
      %v285 = vpop.permute.xlu0 %284
      %v287 = vmul.f32 %v285, %v280
      %v288 = vmul.f32 %v285, %v281
      %v289 = vadd.f32 %v275, %v287
      %v290 = vadd.f32 %v276, %v288
      %s291 = scalar_lea.vmem %s1, 64
      %v292 = vld [vmem:[%s291] sm:$0xff]
      %s293 = scalar_lea.vmem %s171, 128
      %v294 = vld [vmem:[%s293] sm:$0xff]
      %v295 = vld [vmem:[%s293 + $0x8] sm:$0xff]
      %297 = vset.pattern.permute.xlu0 0
      %298 = vperm.xlu0 %297, %v292
      %v299 = vpop.permute.xlu0 %298
      %v301 = vmul.f32 %v299, %v294
      %v302 = vmul.f32 %v299, %v295
      %v303 = vadd.f32 %v289, %v301
      %v304 = vadd.f32 %v290, %v302
      %v305 = vmax.f32 %v303, 0.0
      %v306 = vmax.f32 %v304, 0.0
      %307 = vst [vmem:[%s181] sm:$0xff] %v305
      %308 = vst [vmem:[%s181 + $0x8] sm:$0xff] %v306
      %s309 = smul.u32 2, %s18
      %p310 = scmp.lt.s32.totalorder %s17, 1
      %s311 = scalar_select %p310, %s17, 1
      %p312 = scmp.lt.s32.totalorder %s309, 1
      %s313 = scalar_select %p312, %s309, 1
      %s314 = smul.addr %s311, 2
      %s315 = sadd.s32 %s313, %s314
      %s316 = smul.addr %s315, 8
      %s317 = scalar_lea.vmem %s2, %s316
      // Predicated region
      $region29: #{gruunet_forward.38} parent=27 // pred_check
        %p318 = pneg %p94
      $region30: #{gruunet_forward.38} parent=27 // pred_check_branch
        %320 = sbr.rel (%p318) target = $region32
      $region31: #{gruunet_forward.38} parent=27 // pred_region
        %s321 = smul.u32 2, %s18
      $region32: #{gruunet_forward.38} parent=27 // pred_fallthru
        _
    $region28: #{gruunet_forward.38} parent=5 // pred_fallthru
      _
    %p322 = scmp.le.s32.totalorder 2, %s8
    // Predicated region
    $region33: #{gruunet_forward.38} parent=5 // pred_check
      %p323 = pneg %p322
    $region34: #{gruunet_forward.38} parent=5 // pred_check_branch
      %325 = sbr.rel (%p323) target = $region36
    $region35: #{gruunet_forward.38} parent=5 // pred_region
      %s326 = ssub.s32 %s8, 2
      // Predicated region
      $region37: #{gruunet_forward.38} parent=35 // pred_check
        %p327 = pneg %p100
      $region38: #{gruunet_forward.38} parent=35 // pred_check_branch
        %329 = sbr.rel (%p327) target = $region40
      $region39: #{gruunet_forward.38} parent=35 // pred_region
        %s330 = smul.u32 2, %s20
        %p331 = scmp.lt.s32.totalorder %s19, 1
        %s332 = scalar_select %p331, %s19, 1
        %p333 = scmp.lt.s32.totalorder %s330, 1
        %s334 = scalar_select %p333, %s330, 1
        %s335 = smul.addr %s332, 2
        %s336 = sadd.s32 %s334, %s335
        %s337 = smul.addr %s336, 8
        %s338 = scalar_lea.vmem %s2, %s337
      $region40: #{gruunet_forward.38} parent=35 // pred_fallthru
        _
    $region36: #{gruunet_forward.38} parent=5 // pred_fallthru
      _
  $region6: #{gruunet_forward.38} parent=0 // loop_footer
    %s12 = sadd.s32 1, %s8
  $region7: #{gruunet_forward.38} parent=0 // loop_footer_branch
    %7 = sbr.rel target = $region3
  $region8: #{gruunet_forward.38} parent=0 // loop_exit
    _

// kernel: gruunet_forward.39
$region0: #{gruunet_forward.39}
  #allocation0 [shape = 'u32[]', space=smem, size = 0x4, offset = 0x4, fixed_abs, tag = 'smem constant byte address 0x4 - core index']
  #allocation1 [shape = 'u32[144,128]{1,0:T(1,128)}', space=vmem, size = 0x12000, scoped, tag = 'internal scratch']
  %s0 = inlined_call_operand.vmem [shape: f32[2,72,256], index: 0, kind: input, shape index: {}]
  %s1 = inlined_call_operand.vmem [shape: f32[2,8,256], index: 1, kind: input, shape index: {}]
  %s2 = inlined_call_operand.vmem [shape: f32[4,72], index: 2, kind: input, shape index: {}]
  %s3 = inlined_call_operand.vmem [shape: f32[4,1], index: 3, kind: input, shape index: {}]
  %s4 = inlined_call_operand.vmem [shape: f32[4,8], index: 4, kind: input, shape index: {}]
  %s5 = inlined_call_operand.vmem [shape: f32[4,1], index: 5, kind: input, shape index: {}]
  %s6 = inlined_call_operand.vmem [shape: f32[2,4,256], index: 6, kind: output, shape index: {}]
  %s7 = sld [smem:[#allocation0]]
  $region57: #{gruunet_forward.39} parent=0
    _
  %s9 = ssub.s32 1, %s7
  %s10 = scalar_select 0, %s9, %s7
  loop: start=0, step=1, limit=4
  $region2: #{gruunet_forward.39} parent=0 // loop_pre_header
    _
  $region3: #{gruunet_forward.39} parent=0 // loop_header
    %s12 = sphi 0, %s16
    %p13 = scmp.ge.s32.totalorder %s12, 4
    %s19 = sphi 0, %s31
    %s20 = sphi 0, %s27
    %s21 = sphi 0, %s19
    %s22 = sphi 0, %s20
    %s23 = sphi 0, %s21
    %s24 = sphi 0, %s22
    %s36 = sphi 0, %s38
    %s39 = sphi 0, %s36
    %s40 = sphi 0, %s39
    %s56 = sphi 0, %s40
    %s64 = sphi 0, %s66
    %s67 = sphi 0, %s64
    %s68 = sphi 0, %s67
    %s84 = sphi 0, %s68
    %s88 = sphi 0, %s88
    %s90 = sphi 0, %s88
    %s91 = sphi 0, %s90
    %s105 = sphi 0, %s91
    %s109 = sphi 0, %s109
    %s111 = sphi 0, %s109
    %s112 = sphi 0, %s111
    %s126 = sphi 0, %s112
    %s130 = sphi 0, %s130
    %s132 = sphi 0, %s130
    %s133 = sphi 0, %s132
    %s147 = sphi 0, %s133
    %s151 = sphi 0, %s151
    %s153 = sphi 0, %s151
    %s154 = sphi 0, %s153
    %s168 = sphi 0, %s154
    %s176 = sphi 0, %s178
    %s179 = sphi 0, %s176
    %s180 = sphi 0, %s179
    %s196 = sphi 0, %s180
  $region4: #{gruunet_forward.39} parent=0 // loop_header_branch
    %15 = sbr.rel (%p13) target = $region8
  $region5: #{gruunet_forward.39} parent=0 // loop_body
    %s17 = ssub.s32 %s12, 1
    %s18 = ssub.s32 %s12, 2
    %s25 = sadd.s32 1, %s20
    %p26 = scmp.ge.s32.totalorder %s25, 1
    %s27 = scalar_select %p26, 0, %s25
    %s28 = sadd.s32 1, %s19
    %s29 = scalar_select %p26, %s28, %s19
    %p30 = scmp.ge.s32.totalorder %s29, 2
    %s31 = scalar_select %p30, 0, %s29
    %s32 = ssub.s32 %s19, %s31
    %s33 = ssub.s32 %s20, %s27
    %s34 = sor.u32 %s32, %s33
    %p35 = scmp.eq.s32.totalorder %s34, 0
    %s37 = sadd.s32 %s36, 1
    %s38 = scalar_select %p35, %s36, %s37
    %p41 = pneg %p35
    %p42 = scmp.eq.s32.totalorder %s12, 1
    %p43 = por %p41, %p42
    %p44 = scmp.ne.s32.totalorder %s36, %s39
    %p45 = scmp.eq.s32.totalorder %s12, 0
    %p46 = por %p44, %p45
    %p47 = scmp.ne.s32.totalorder %s36, %s39
    %p48 = scmp.eq.s32.totalorder %s17, 1
    %p49 = por %p47, %p48
    %p50 = scmp.ne.s32.totalorder %s39, %s40
    %p51 = scmp.eq.s32.totalorder %s17, 0
    %p52 = por %p50, %p51
    %p53 = scmp.ne.s32.totalorder %s39, %s40
    %p54 = scmp.eq.s32.totalorder %s18, 1
    %p55 = por %p53, %p54
    %p57 = scmp.ne.s32.totalorder %s40, %s56
    %p58 = scmp.eq.s32.totalorder %s18, 0
    %p59 = por %p57, %p58
    %s60 = ssub.s32 %s19, %s31
    %s61 = ssub.s32 %s20, %s27
    %s62 = sor.u32 %s60, %s61
    %p63 = scmp.eq.s32.totalorder %s62, 0
    %s65 = sadd.s32 %s64, 1
    %s66 = scalar_select %p63, %s64, %s65
    %p69 = pneg %p63
    %p70 = scmp.eq.s32.totalorder %s12, 1
    %p71 = por %p69, %p70
    %p72 = scmp.ne.s32.totalorder %s64, %s67
    %p73 = scmp.eq.s32.totalorder %s12, 0
    %p74 = por %p72, %p73
    %p75 = scmp.ne.s32.totalorder %s64, %s67
    %p76 = scmp.eq.s32.totalorder %s17, 1
    %p77 = por %p75, %p76
    %p78 = scmp.ne.s32.totalorder %s67, %s68
    %p79 = scmp.eq.s32.totalorder %s17, 0
    %p80 = por %p78, %p79
    %p81 = scmp.ne.s32.totalorder %s67, %s68
    %p82 = scmp.eq.s32.totalorder %s18, 1
    %p83 = por %p81, %p82
    %p85 = scmp.ne.s32.totalorder %s68, %s84
    %p86 = scmp.eq.s32.totalorder %s18, 0
    %p87 = por %p85, %p86
    %s89 = sadd.s32 %s88, 1
    %p92 = scmp.eq.s32.totalorder %s12, 1
    %p93 = scmp.ne.s32.totalorder %s88, %s90
    %p94 = scmp.eq.s32.totalorder %s12, 0
    %p95 = por %p93, %p94
    %p96 = scmp.ne.s32.totalorder %s88, %s90
    %p97 = scmp.eq.s32.totalorder %s17, 1
    %p98 = por %p96, %p97
    %p99 = scmp.ne.s32.totalorder %s90, %s91
    %p100 = scmp.eq.s32.totalorder %s17, 0
    %p101 = por %p99, %p100
    %p102 = scmp.ne.s32.totalorder %s90, %s91
    %p103 = scmp.eq.s32.totalorder %s18, 1
    %p104 = por %p102, %p103
    %p106 = scmp.ne.s32.totalorder %s91, %s105
    %p107 = scmp.eq.s32.totalorder %s18, 0
    %p108 = por %p106, %p107
    %s110 = sadd.s32 %s109, 1
    %p113 = scmp.eq.s32.totalorder %s12, 1
    %p114 = scmp.ne.s32.totalorder %s109, %s111
    %p115 = scmp.eq.s32.totalorder %s12, 0
    %p116 = por %p114, %p115
    %p117 = scmp.ne.s32.totalorder %s109, %s111
    %p118 = scmp.eq.s32.totalorder %s17, 1
    %p119 = por %p117, %p118
    %p120 = scmp.ne.s32.totalorder %s111, %s112
    %p121 = scmp.eq.s32.totalorder %s17, 0
    %p122 = por %p120, %p121
    %p123 = scmp.ne.s32.totalorder %s111, %s112
    %p124 = scmp.eq.s32.totalorder %s18, 1
    %p125 = por %p123, %p124
    %p127 = scmp.ne.s32.totalorder %s112, %s126
    %p128 = scmp.eq.s32.totalorder %s18, 0
    %p129 = por %p127, %p128
    %s131 = sadd.s32 %s130, 1
    %p134 = scmp.eq.s32.totalorder %s12, 1
    %p135 = scmp.ne.s32.totalorder %s130, %s132
    %p136 = scmp.eq.s32.totalorder %s12, 0
    %p137 = por %p135, %p136
    %p138 = scmp.ne.s32.totalorder %s130, %s132
    %p139 = scmp.eq.s32.totalorder %s17, 1
    %p140 = por %p138, %p139
    %p141 = scmp.ne.s32.totalorder %s132, %s133
    %p142 = scmp.eq.s32.totalorder %s17, 0
    %p143 = por %p141, %p142
    %p144 = scmp.ne.s32.totalorder %s132, %s133
    %p145 = scmp.eq.s32.totalorder %s18, 1
    %p146 = por %p144, %p145
    %p148 = scmp.ne.s32.totalorder %s133, %s147
    %p149 = scmp.eq.s32.totalorder %s18, 0
    %p150 = por %p148, %p149
    %s152 = sadd.s32 %s151, 1
    %p155 = scmp.eq.s32.totalorder %s12, 1
    %p156 = scmp.ne.s32.totalorder %s151, %s153
    %p157 = scmp.eq.s32.totalorder %s12, 0
    %p158 = por %p156, %p157
    %p159 = scmp.ne.s32.totalorder %s151, %s153
    %p160 = scmp.eq.s32.totalorder %s17, 1
    %p161 = por %p159, %p160
    %p162 = scmp.ne.s32.totalorder %s153, %s154
    %p163 = scmp.eq.s32.totalorder %s17, 0
    %p164 = por %p162, %p163
    %p165 = scmp.ne.s32.totalorder %s153, %s154
    %p166 = scmp.eq.s32.totalorder %s18, 1
    %p167 = por %p165, %p166
    %p169 = scmp.ne.s32.totalorder %s154, %s168
    %p170 = scmp.eq.s32.totalorder %s18, 0
    %p171 = por %p169, %p170
    %s172 = ssub.s32 %s19, %s31
    %s173 = ssub.s32 %s20, %s27
    %s174 = sor.u32 %s172, %s173
    %p175 = scmp.eq.s32.totalorder %s174, 0
    %s177 = sadd.s32 %s176, 1
    %s178 = scalar_select %p175, %s176, %s177
    %p181 = pneg %p175
    %p182 = scmp.eq.s32.totalorder %s12, 1
    %p183 = por %p181, %p182
    %p184 = scmp.ne.s32.totalorder %s176, %s179
    %p185 = scmp.eq.s32.totalorder %s12, 0
    %p186 = por %p184, %p185
    %p187 = scmp.ne.s32.totalorder %s176, %s179
    %p188 = scmp.eq.s32.totalorder %s17, 1
    %p189 = por %p187, %p188
    %p190 = scmp.ne.s32.totalorder %s179, %s180
    %p191 = scmp.eq.s32.totalorder %s17, 0
    %p192 = por %p190, %p191
    %p193 = scmp.ne.s32.totalorder %s179, %s180
    %p194 = scmp.eq.s32.totalorder %s18, 1
    %p195 = por %p193, %p194
    %p197 = scmp.ne.s32.totalorder %s180, %s196
    %p198 = scmp.eq.s32.totalorder %s18, 0
    %p199 = por %p197, %p198
    %p200 = scmp.le.s32.totalorder 1, %s12
    %p201 = scmp.lt.s32.totalorder %s12, 3
    %p202 = pnand %p200, %p201
    %p203 = pneg %p202
    // Predicated region
    $region9: #{gruunet_forward.39} parent=5 // pred_check
      _
    $region10: #{gruunet_forward.39} parent=5 // pred_check_branch
      %205 = sbr.rel (%p202) target = $region12
    $region11: #{gruunet_forward.39} parent=5 // pred_region
      %s206 = ssub.s32 %s12, 1
      // Predicated region
      $region13: #{gruunet_forward.39} parent=11 // pred_check
        %p207 = pneg %p101
      $region14: #{gruunet_forward.39} parent=11 // pred_check_branch
        %209 = sbr.rel (%p207) target = $region16
      $region15: #{gruunet_forward.39} parent=11 // pred_region
        _
      $region16: #{gruunet_forward.39} parent=11 // pred_fallthru
        _
      // Predicated region
      $region17: #{gruunet_forward.39} parent=11 // pred_check
        %p210 = pneg %p122
      $region18: #{gruunet_forward.39} parent=11 // pred_check_branch
        %212 = sbr.rel (%p210) target = $region20
      $region19: #{gruunet_forward.39} parent=11 // pred_region
        _
      $region20: #{gruunet_forward.39} parent=11 // pred_fallthru
        _
      // Predicated region
      $region21: #{gruunet_forward.39} parent=11 // pred_check
        %p213 = pneg %p143
      $region22: #{gruunet_forward.39} parent=11 // pred_check_branch
        %215 = sbr.rel (%p213) target = $region24
      $region23: #{gruunet_forward.39} parent=11 // pred_region
        _
      $region24: #{gruunet_forward.39} parent=11 // pred_fallthru
        _
      // Predicated region
      $region25: #{gruunet_forward.39} parent=11 // pred_check
        %p216 = pneg %p164
      $region26: #{gruunet_forward.39} parent=11 // pred_check_branch
        %218 = sbr.rel (%p216) target = $region28
      $region27: #{gruunet_forward.39} parent=11 // pred_region
        _
      $region28: #{gruunet_forward.39} parent=11 // pred_fallthru
        _
    $region12: #{gruunet_forward.39} parent=5 // pred_fallthru
      _
    %p219 = scmp.lt.s32.totalorder %s12, 2
    // Predicated region
    $region29: #{gruunet_forward.39} parent=5 // pred_check
      %p220 = pneg %p219
    $region30: #{gruunet_forward.39} parent=5 // pred_check_branch
      %222 = sbr.rel (%p220) target = $region32
    $region31: #{gruunet_forward.39} parent=5 // pred_region
      // Predicated region
      $region33: #{gruunet_forward.39} parent=31 // pred_check
        %p223 = pneg %p46
      $region34: #{gruunet_forward.39} parent=31 // pred_check_branch
        %225 = sbr.rel (%p223) target = $region36
      $region35: #{gruunet_forward.39} parent=31 // pred_region
        %s226 = smul.u32 2, %s20
        %p227 = scmp.lt.s32.totalorder %s19, 1
        %s228 = scalar_select %p227, %s19, 1
        %p229 = scmp.lt.s32.totalorder %s226, 1
        %s230 = scalar_select %p229, %s226, 1
        %s231 = smul.addr %s228, 18
        %s232 = sadd.s32 %s230, %s231
        %s233 = smul.addr %s232, 8
        %s234 = scalar_lea.vmem %s0, %s233
        %s235 = smul.u32 2, %s20
      $region36: #{gruunet_forward.39} parent=31 // pred_fallthru
        _
      // Predicated region
      $region37: #{gruunet_forward.39} parent=31 // pred_check
        %p236 = pneg %p74
      $region38: #{gruunet_forward.39} parent=31 // pred_check_branch
        %238 = sbr.rel (%p236) target = $region40
      $region39: #{gruunet_forward.39} parent=31 // pred_region
        %s239 = smul.u32 2, %s20
        %p240 = scmp.lt.s32.totalorder %s19, 1
        %s241 = scalar_select %p240, %s19, 1
        %p242 = scmp.lt.s32.totalorder %s239, 1
        %s243 = scalar_select %p242, %s239, 1
        %s244 = smul.addr %s241, 2
        %s245 = sadd.s32 %s243, %s244
        %s246 = smul.addr %s245, 8
        %s247 = scalar_lea.vmem %s1, %s246
        %s248 = smul.u32 2, %s20
      $region40: #{gruunet_forward.39} parent=31 // pred_fallthru
        _
    $region32: #{gruunet_forward.39} parent=5 // pred_fallthru
      _
    %p249 = scmp.le.s32.totalorder 1, %s12
    %p250 = scmp.lt.s32.totalorder %s12, 3
    %p251 = pnand %p249, %p250
    %p252 = pneg %p251
    // Predicated region
    $region41: #{gruunet_forward.39} parent=5 // pred_check
      _
    $region42: #{gruunet_forward.39} parent=5 // pred_check_branch
      %254 = sbr.rel (%p251) target = $region44
    $region43: #{gruunet_forward.39} parent=5 // pred_region
      %s255 = ssub.s32 %s12, 1
      %s256 = smul.u32 2, %s22
      %p257 = scmp.lt.s32.totalorder %s21, 1
      %s258 = scalar_select %p257, %s21, 1
      %p259 = scmp.lt.s32.totalorder %s256, 1
      %s260 = scalar_select %p259, %s256, 1
      %s261 = smul.addr %s258, 18
      %s262 = sadd.s32 %s260, %s261
      %s263 = smul.addr %s262, 8
      %s264 = scalar_lea.vmem %s0, %s263
      %p265 = pneg %p52
      %p266 = pneg %p49
      %s267 = smul.u32 2, %s22
      %p268 = scmp.lt.s32.totalorder %s21, 1
      %s269 = scalar_select %p268, %s21, 1
      %p270 = scmp.lt.s32.totalorder %s267, 1
      %s271 = scalar_select %p270, %s267, 1
      %s272 = smul.addr %s269, 2
      %s273 = sadd.s32 %s271, %s272
      %s274 = smul.addr %s273, 8
      %s275 = scalar_lea.vmem %s1, %s274
      %p276 = pneg %p80
      %p277 = pneg %p77
      %p278 = pneg %p101
      %p279 = pneg %p98
      %p280 = pneg %p122
      %p281 = pneg %p119
      %p282 = pneg %p143
      %p283 = pneg %p140
      %p284 = pneg %p164
      %p285 = pneg %p161
      %p286 = pneg %p192
      %p287 = pneg %p189
      %s288 = smul.u32 2, %s22
      %p289 = scmp.lt.s32.totalorder %s21, 1
      %s290 = scalar_select %p289, %s21, 1
      %p291 = scmp.lt.s32.totalorder %s288, 1
      %s292 = scalar_select %p291, %s288, 1
      %s293 = smul.addr %s290, 2
      %s294 = sadd.s32 %s292, %s293
      %s295 = smul.addr %s294, 4
      %s296 = scalar_lea.vmem %s6, %s295
      %s297 = smul.u32 2, %s22
      %p298 = scmp.lt.s32.totalorder %s21, 1
      %s299 = scalar_select %p298, %s21, 1
      %p300 = scmp.lt.s32.totalorder %s297, 1
      %s301 = scalar_select %p300, %s297, 1
      %s302 = smul.addr %s299, 18
      %s303 = sadd.s32 %s301, %s302
      %s304 = smul.addr %s303, 8
      %s305 = scalar_lea.vmem %s0, %s304
      %s306 = smul.u32 2, %s22
      %s307 = smul.u32 2, %s22
      %p308 = scmp.lt.s32.totalorder %s21, 1
      %s309 = scalar_select %p308, %s21, 1
      %p310 = scmp.lt.s32.totalorder %s307, 1
      %s311 = scalar_select %p310, %s307, 1
      %s312 = smul.addr %s309, 2
      %s313 = sadd.s32 %s311, %s312
      %s314 = smul.addr %s313, 8
      %s315 = scalar_lea.vmem %s1, %s314
      %s316 = smul.u32 2, %s22
      %s317 = smul.u32 2, %s22
      %p318 = scmp.lt.s32.totalorder %s21, 1
      %s319 = scalar_select %p318, %s21, 1
      %p320 = scmp.lt.s32.totalorder %s317, 1
      %s321 = scalar_select %p320, %s317, 1
      %s322 = smul.addr %s319, 2
      %s323 = sadd.s32 %s321, %s322
      %s324 = smul.addr %s323, 4
      %s325 = scalar_lea.vmem %s6, %s324
      %s326 = smul.u32 2, %s22
      %v327 = vld [vmem:[%s2] sm:$0xf]
      %v328 = vld [vmem:[%s305] sm:$0xff]
      %v329 = vld [vmem:[%s305 + $0x8] sm:$0xff]
      %v330 = vld [vmem:[%s305 + $0x10] sm:$0xff]
      %v331 = vld [vmem:[%s305 + $0x18] sm:$0xff]
      %v332 = vld [vmem:[%s305 + $0x20] sm:$0xff]
      %v333 = vld [vmem:[%s305 + $0x28] sm:$0xff]
      %v334 = vld [vmem:[%s305 + $0x30] sm:$0xff]
      %v335 = vld [vmem:[%s305 + $0x38] sm:$0xff]
      %v336 = vld [vmem:[%s305 + $0x40] sm:$0xff]
      %v337 = vld [vmem:[%s305 + $0x48] sm:$0xff]
      %v338 = vld [vmem:[%s305 + $0x50] sm:$0xff]
      %v339 = vld [vmem:[%s305 + $0x58] sm:$0xff]
      %v340 = vld [vmem:[%s305 + $0x60] sm:$0xff]
      %v341 = vld [vmem:[%s305 + $0x68] sm:$0xff]
      %v342 = vld [vmem:[%s305 + $0x70] sm:$0xff]
      %v343 = vld [vmem:[%s305 + $0x78] sm:$0xff]
      %v344 = vld [vmem:[%s305 + $0x80] sm:$0xff]
      %v345 = vld [vmem:[%s305 + $0x88] sm:$0xff]
      %v346 = vld [vmem:[%s3] sm:$0xf]
      %348 = vset.pattern.permute.xlu0 0
      %349 = vperm.xlu0 %348, %v346
      %v350 = vpop.permute.xlu0 %349
      %vm352 = vcmask 588800
      %v354 = vsel %vm352, %v327, 0
      %356 = vmatprep.subr.mxu0 %v329
      %357 = vmatpush1.msra.mxu0 %v328
      %358 = vmatprep.subr.mxu0 %v331
      %359 = vmatpush1.msra.mxu0 %v330
      %360 = vmatprep.subr.mxu0 %v333
      %361 = vmatpush1.msra.mxu0 %v332
      %362 = vmatprep.subr.mxu0 %v335
      %363 = vmatpush1.msra.mxu0 %v334
      %364 = vmatprep.subr.mxu0 %v337
      %365 = vmatpush1.msra.mxu0 %v336
      %366 = vmatprep.subr.mxu0 %v339
      %367 = vmatpush1.msra.mxu0 %v338
      %368 = vmatprep.subr.mxu0 %v341
      %369 = vmatpush1.msra.mxu0 %v340
      %370 = vmatprep.subr.mxu0 %v343
      %371 = vmatpush1.msra.mxu0 %v342
      %372 = vmatprep.subr.mxu0 %v345
      %373 = vmatpush1.msra.mxu0 %v344
      %374 = vmatprep.subr.mxu0 0.0
      %375 = vmatpush1.msra.mxu0 0.0
      %376 = vmatprep.subr.mxu0 0.0
      %377 = vmatpush1.msra.mxu0 0.0
      %378 = vmatprep.subr.mxu0 0.0
      %379 = vmatpush1.msra.mxu0 0.0
      %380 = vmatprep.subr.mxu0 0.0
      %381 = vmatpush1.msra.mxu0 0.0
      %382 = vmatprep.subr.mxu0 0.0
      %383 = vmatpush1.msra.mxu0 0.0
      %384 = vmatprep.subr.mxu0 0.0
      %385 = vmatpush1.msra.mxu0 0.0
      %386 = vmatprep.subr.mxu0 0.0
      %387 = vmatpush1.msra.mxu0 0.0
      %388 = vmatprep.subr.mxu0 0.0
      %389 = vmatpush1.msra.mxu0 0.0
      %390 = vmatprep.subr.mxu0 0.0
      %391 = vmatpush1.msra.mxu0 0.0
      %392 = vmatprep.subr.mxu0 0.0
      %393 = vmatpush1.msra.mxu0 0.0
      %394 = vmatprep.subr.mxu0 0.0
      %395 = vmatpush1.msra.mxu0 0.0
      %396 = vmatprep.subr.mxu0 0.0
      %397 = vmatpush1.msra.mxu0 0.0
      %398 = vmatprep.subr.mxu0 0.0
      %399 = vmatpush1.msra.mxu0 0.0
      %400 = vmatprep.subr.mxu0 0.0
      %401 = vmatpush1.msra.mxu0 0.0
      %402 = vmatprep.subr.mxu0 0.0
      %403 = vmatpush1.msra.mxu0 0.0
      %404 = vmatprep.subr.mxu0 0.0
      %405 = vmatpush1.msra.mxu0 0.0
      %406 = vmatprep.subr.mxu0 0.0
      %407 = vmatpush1.msra.mxu0 0.0
      %408 = vmatprep.subr.mxu0 0.0
      %409 = vmatpush1.msra.mxu0 0.0
      %410 = vmatprep.subr.mxu0 0.0
      %411 = vmatpush1.msra.mxu0 0.0
      %412 = vmatprep.subr.mxu0 0.0
      %413 = vmatpush1.msra.mxu0 0.0
      %414 = vmatprep.subr.mxu0 0.0
      %415 = vmatpush1.msra.mxu0 0.0
      %416 = vmatprep.subr.mxu0 0.0
      %417 = vmatpush1.msra.mxu0 0.0
      %418 = vmatprep.subr.mxu0 0.0
      %419 = vmatpush1.msra.mxu0 0.0
      %420 = vmatprep.mubr.f32.mxu0 0.0
      %421 = vmatmul.mubr.f32.gmra.mrb[0].mxu0 %v354
      %v422 = vpop.f32.mrb[0].mxu0
      %v423 = vadd.f32 %v350, %v422
      %v424 = vpop.f32.mrb[0].mxu0
      %v425 = vadd.f32 %v350, %v424
      %426 = vdwg.mxu0
      %v427 = vxor.u32 %v423, 2147483648
      %v428 = vxor.u32 %v425, 2147483648
      %v429 = vmul.f32 %v427, 1.442695
      %v430 = vpow.pop %v429
      %v431 = vmul.f32 %v428, 1.442695
      %v432 = vpow.pop %v431
      %v433 = vadd.f32 %v430, 1.0
      %v434 = vadd.f32 %v432, 1.0
      %v435 = vrcp.pop %v433
      %v436 = vmul.f32 1.0, %v435
      %v437 = vrcp.pop %v434
      %v438 = vmul.f32 1.0, %v437
      %v439 = vld [vmem:[%s4] sm:$0xf]
      %v440 = vld [vmem:[%s315] sm:$0xff]
      %v441 = vld [vmem:[%s315 + $0x8] sm:$0xff]
      %v442 = vld [vmem:[%s5] sm:$0xf]
      %444 = vset.pattern.permute.xlu0 0
      %445 = vperm.xlu0 %444, %v442
      %v446 = vpop.permute.xlu0 %445
      %vm448 = vcmask 64512
      %v450 = vsel %vm448, %v439, 0
      %452 = vmatprep.subr.mxu0 %v441
      %453 = vmatpush1.msra.mxu0 %v440
      %454 = vmatprep.subr.mxu0 0.0
      %455 = vmatpush1.msra.mxu0 0.0
      %456 = vmatprep.subr.mxu0 0.0
      %457 = vmatpush1.msra.mxu0 0.0
      %458 = vmatprep.subr.mxu0 0.0
      %459 = vmatpush1.msra.mxu0 0.0
      %460 = vmatprep.subr.mxu0 0.0
      %461 = vmatpush1.msra.mxu0 0.0
      %462 = vmatprep.subr.mxu0 0.0
      %463 = vmatpush1.msra.mxu0 0.0
      %464 = vmatprep.subr.mxu0 0.0
      %465 = vmatpush1.msra.mxu0 0.0
      %466 = vmatprep.subr.mxu0 0.0
      %467 = vmatpush1.msra.mxu0 0.0
      %468 = vmatprep.subr.mxu0 0.0
      %469 = vmatpush1.msra.mxu0 0.0
      %470 = vmatprep.subr.mxu0 0.0
      %471 = vmatpush1.msra.mxu0 0.0
      %472 = vmatprep.subr.mxu0 0.0
      %473 = vmatpush1.msra.mxu0 0.0
      %474 = vmatprep.subr.mxu0 0.0
      %475 = vmatpush1.msra.mxu0 0.0
      %476 = vmatprep.subr.mxu0 0.0
      %477 = vmatpush1.msra.mxu0 0.0
      %478 = vmatprep.subr.mxu0 0.0
      %479 = vmatpush1.msra.mxu0 0.0
      %480 = vmatprep.subr.mxu0 0.0
      %481 = vmatpush1.msra.mxu0 0.0
      %482 = vmatprep.subr.mxu0 0.0
      %483 = vmatpush1.msra.mxu0 0.0
      %484 = vmatprep.subr.mxu0 0.0
      %485 = vmatpush1.msra.mxu0 0.0
      %486 = vmatprep.subr.mxu0 0.0
      %487 = vmatpush1.msra.mxu0 0.0
      %488 = vmatprep.subr.mxu0 0.0
      %489 = vmatpush1.msra.mxu0 0.0
      %490 = vmatprep.subr.mxu0 0.0
      %491 = vmatpush1.msra.mxu0 0.0
      %492 = vmatprep.subr.mxu0 0.0
      %493 = vmatpush1.msra.mxu0 0.0
      %494 = vmatprep.subr.mxu0 0.0
      %495 = vmatpush1.msra.mxu0 0.0
      %496 = vmatprep.subr.mxu0 0.0
      %497 = vmatpush1.msra.mxu0 0.0
      %498 = vmatprep.subr.mxu0 0.0
      %499 = vmatpush1.msra.mxu0 0.0
      %500 = vmatprep.subr.mxu0 0.0
      %501 = vmatpush1.msra.mxu0 0.0
      %502 = vmatprep.subr.mxu0 0.0
      %503 = vmatpush1.msra.mxu0 0.0
      %504 = vmatprep.subr.mxu0 0.0
      %505 = vmatpush1.msra.mxu0 0.0
      %506 = vmatprep.subr.mxu0 0.0
      %507 = vmatpush1.msra.mxu0 0.0
      %508 = vmatprep.subr.mxu0 0.0
      %509 = vmatpush1.msra.mxu0 0.0
      %510 = vmatprep.subr.mxu0 0.0
      %511 = vmatpush1.msra.mxu0 0.0
      %512 = vmatprep.subr.mxu0 0.0
      %513 = vmatpush1.msra.mxu0 0.0
      %514 = vmatprep.subr.mxu0 0.0
      %515 = vmatpush1.msra.mxu0 0.0
      %516 = vmatprep.mubr.f32.mxu0 0.0
      %517 = vmatmul.mubr.f32.gmra.mrb[0].mxu0 %v450
      %v518 = vpop.f32.mrb[0].mxu0
      %v519 = vadd.f32 %v446, %v518
      %v520 = vpop.f32.mrb[0].mxu0
      %v521 = vadd.f32 %v446, %v520
      %522 = vdwg.mxu0
      %vm523 = vcmp.ge.f32.partialorder %v519, 0.0
      %vm524 = vcmp.ge.f32.partialorder %v521, 0.0
      %v525 = vadd.f32 %v519, 0.5
      %v526 = vadd.f32 %v521, 0.5
      %v527 = vxor.u32 %v519, 2147483648
      %v528 = vxor.u32 %v521, 2147483648
      %v529 = vmul.f32 %v527, 1.442695
      %v530 = vpow.pop %v529
      %v531 = vmul.f32 %v528, 1.442695
      %v532 = vpow.pop %v531
      %v533 = vadd.f32 %v530, 1.0
      %v534 = vadd.f32 %v532, 1.0
      %v535 = vrcp.pop %v533
      %v536 = vmul.f32 1.0, %v535
      %v537 = vrcp.pop %v534
      %v538 = vmul.f32 1.0, %v537
      %v539 = vsel %vm523, %v525, %v536
      %v540 = vsel %vm524, %v526, %v538
      %v541 = vmul.f32 %v539, %v436
      %v542 = vmul.f32 %v540, %v438
      %v545 = vcombine.low %v541, %v542
      %547 = vst [vmem:[%s325] sm:$0xff] %v545
      %s548 = smul.u32 2, %s22
      %p549 = scmp.lt.s32.totalorder %s21, 1
      %s550 = scalar_select %p549, %s21, 1
      %p551 = scmp.lt.s32.totalorder %s548, 1
      %s552 = scalar_select %p551, %s548, 1
      %s553 = smul.addr %s550, 2
      %s554 = sadd.s32 %s552, %s553
      %s555 = smul.addr %s554, 4
      %s556 = scalar_lea.vmem %s6, %s555
      // Predicated region
      $region45: #{gruunet_forward.39} parent=43 // pred_check
        %p557 = pneg %p189
      $region46: #{gruunet_forward.39} parent=43 // pred_check_branch
        %559 = sbr.rel (%p557) target = $region48
      $region47: #{gruunet_forward.39} parent=43 // pred_region
        %s560 = smul.u32 2, %s22
      $region48: #{gruunet_forward.39} parent=43 // pred_fallthru
        _
    $region44: #{gruunet_forward.39} parent=5 // pred_fallthru
      _
    %p561 = scmp.le.s32.totalorder 2, %s12
    // Predicated region
    $region49: #{gruunet_forward.39} parent=5 // pred_check
      %p562 = pneg %p561
    $region50: #{gruunet_forward.39} parent=5 // pred_check_branch
      %564 = sbr.rel (%p562) target = $region52
    $region51: #{gruunet_forward.39} parent=5 // pred_region
      %s565 = ssub.s32 %s12, 2
      // Predicated region
      $region53: #{gruunet_forward.39} parent=51 // pred_check
        %p566 = pneg %p195
      $region54: #{gruunet_forward.39} parent=51 // pred_check_branch
        %568 = sbr.rel (%p566) target = $region56
      $region55: #{gruunet_forward.39} parent=51 // pred_region
        %s569 = smul.u32 2, %s24
        %p570 = scmp.lt.s32.totalorder %s23, 1
        %s571 = scalar_select %p570, %s23, 1
        %p572 = scmp.lt.s32.totalorder %s569, 1
        %s573 = scalar_select %p572, %s569, 1
        %s574 = smul.addr %s571, 2
        %s575 = sadd.s32 %s573, %s574
        %s576 = smul.addr %s575, 4
        %s577 = scalar_lea.vmem %s6, %s576
      $region56: #{gruunet_forward.39} parent=51 // pred_fallthru
        _
    $region52: #{gruunet_forward.39} parent=5 // pred_fallthru
      _
  $region6: #{gruunet_forward.39} parent=0 // loop_footer
    %s16 = sadd.s32 1, %s12
  $region7: #{gruunet_forward.39} parent=0 // loop_footer_branch
    %11 = sbr.rel target = $region3
  $region8: #{gruunet_forward.39} parent=0 // loop_exit
    _

// kernel: gruunet_forward.52
$region0: #{gruunet_forward.52}
  #allocation0 [shape = 'u32[]', space=smem, size = 0x4, offset = 0x4, fixed_abs, tag = 'smem constant byte address 0x4 - core index']
  #allocation1 [shape = 'u32[144,128]{1,0:T(1,128)}', space=vmem, size = 0x12000, scoped, tag = 'internal scratch']
  %s0 = inlined_call_operand.vmem [shape: f32[2,72,256], index: 0, kind: input, shape index: {}]
  %s1 = inlined_call_operand.vmem [shape: f32[2,8,256], index: 1, kind: input, shape index: {}]
  %s2 = inlined_call_operand.vmem [shape: f32[4,72], index: 2, kind: input, shape index: {}]
  %s3 = inlined_call_operand.vmem [shape: f32[4,1], index: 3, kind: input, shape index: {}]
  %s4 = inlined_call_operand.vmem [shape: f32[4,8], index: 4, kind: input, shape index: {}]
  %s5 = inlined_call_operand.vmem [shape: f32[4,1], index: 5, kind: input, shape index: {}]
  %s6 = inlined_call_operand.vmem [shape: f32[2,4,256], index: 6, kind: input, shape index: {}]
  %s7 = inlined_call_operand.vmem [shape: f32[2,4,256], index: 7, kind: output, shape index: {}]
  %s8 = sld [smem:[#allocation0]]
  $region61: #{gruunet_forward.52} parent=0
    _
  %s10 = ssub.s32 1, %s8
  %s11 = scalar_select 0, %s10, %s8
  loop: start=0, step=1, limit=4
  $region2: #{gruunet_forward.52} parent=0 // loop_pre_header
    _
  $region3: #{gruunet_forward.52} parent=0 // loop_header
    %s13 = sphi 0, %s17
    %p14 = scmp.ge.s32.totalorder %s13, 4
    %s20 = sphi 0, %s32
    %s21 = sphi 0, %s28
    %s22 = sphi 0, %s20
    %s23 = sphi 0, %s21
    %s24 = sphi 0, %s22
    %s25 = sphi 0, %s23
    %s37 = sphi 0, %s39
    %s40 = sphi 0, %s37
    %s41 = sphi 0, %s40
    %s57 = sphi 0, %s41
    %s65 = sphi 0, %s67
    %s68 = sphi 0, %s65
    %s69 = sphi 0, %s68
    %s85 = sphi 0, %s69
    %s89 = sphi 0, %s89
    %s91 = sphi 0, %s89
    %s92 = sphi 0, %s91
    %s106 = sphi 0, %s92
    %s110 = sphi 0, %s110
    %s112 = sphi 0, %s110
    %s113 = sphi 0, %s112
    %s127 = sphi 0, %s113
    %s131 = sphi 0, %s131
    %s133 = sphi 0, %s131
    %s134 = sphi 0, %s133
    %s148 = sphi 0, %s134
    %s152 = sphi 0, %s152
    %s154 = sphi 0, %s152
    %s155 = sphi 0, %s154
    %s169 = sphi 0, %s155
    %s177 = sphi 0, %s179
    %s180 = sphi 0, %s177
    %s181 = sphi 0, %s180
    %s197 = sphi 0, %s181
    %s205 = sphi 0, %s207
    %s208 = sphi 0, %s205
    %s209 = sphi 0, %s208
    %s225 = sphi 0, %s209
  $region4: #{gruunet_forward.52} parent=0 // loop_header_branch
    %16 = sbr.rel (%p14) target = $region8
  $region5: #{gruunet_forward.52} parent=0 // loop_body
    %s18 = ssub.s32 %s13, 1
    %s19 = ssub.s32 %s13, 2
    %s26 = sadd.s32 1, %s21
    %p27 = scmp.ge.s32.totalorder %s26, 1
    %s28 = scalar_select %p27, 0, %s26
    %s29 = sadd.s32 1, %s20
    %s30 = scalar_select %p27, %s29, %s20
    %p31 = scmp.ge.s32.totalorder %s30, 2
    %s32 = scalar_select %p31, 0, %s30
    %s33 = ssub.s32 %s20, %s32
    %s34 = ssub.s32 %s21, %s28
    %s35 = sor.u32 %s33, %s34
    %p36 = scmp.eq.s32.totalorder %s35, 0
    %s38 = sadd.s32 %s37, 1
    %s39 = scalar_select %p36, %s37, %s38
    %p42 = pneg %p36
    %p43 = scmp.eq.s32.totalorder %s13, 1
    %p44 = por %p42, %p43
    %p45 = scmp.ne.s32.totalorder %s37, %s40
    %p46 = scmp.eq.s32.totalorder %s13, 0
    %p47 = por %p45, %p46
    %p48 = scmp.ne.s32.totalorder %s37, %s40
    %p49 = scmp.eq.s32.totalorder %s18, 1
    %p50 = por %p48, %p49
    %p51 = scmp.ne.s32.totalorder %s40, %s41
    %p52 = scmp.eq.s32.totalorder %s18, 0
    %p53 = por %p51, %p52
    %p54 = scmp.ne.s32.totalorder %s40, %s41
    %p55 = scmp.eq.s32.totalorder %s19, 1
    %p56 = por %p54, %p55
    %p58 = scmp.ne.s32.totalorder %s41, %s57
    %p59 = scmp.eq.s32.totalorder %s19, 0
    %p60 = por %p58, %p59
    %s61 = ssub.s32 %s20, %s32
    %s62 = ssub.s32 %s21, %s28
    %s63 = sor.u32 %s61, %s62
    %p64 = scmp.eq.s32.totalorder %s63, 0
    %s66 = sadd.s32 %s65, 1
    %s67 = scalar_select %p64, %s65, %s66
    %p70 = pneg %p64
    %p71 = scmp.eq.s32.totalorder %s13, 1
    %p72 = por %p70, %p71
    %p73 = scmp.ne.s32.totalorder %s65, %s68
    %p74 = scmp.eq.s32.totalorder %s13, 0
    %p75 = por %p73, %p74
    %p76 = scmp.ne.s32.totalorder %s65, %s68
    %p77 = scmp.eq.s32.totalorder %s18, 1
    %p78 = por %p76, %p77
    %p79 = scmp.ne.s32.totalorder %s68, %s69
    %p80 = scmp.eq.s32.totalorder %s18, 0
    %p81 = por %p79, %p80
    %p82 = scmp.ne.s32.totalorder %s68, %s69
    %p83 = scmp.eq.s32.totalorder %s19, 1
    %p84 = por %p82, %p83
    %p86 = scmp.ne.s32.totalorder %s69, %s85
    %p87 = scmp.eq.s32.totalorder %s19, 0
    %p88 = por %p86, %p87
    %s90 = sadd.s32 %s89, 1
    %p93 = scmp.eq.s32.totalorder %s13, 1
    %p94 = scmp.ne.s32.totalorder %s89, %s91
    %p95 = scmp.eq.s32.totalorder %s13, 0
    %p96 = por %p94, %p95
    %p97 = scmp.ne.s32.totalorder %s89, %s91
    %p98 = scmp.eq.s32.totalorder %s18, 1
    %p99 = por %p97, %p98
    %p100 = scmp.ne.s32.totalorder %s91, %s92
    %p101 = scmp.eq.s32.totalorder %s18, 0
    %p102 = por %p100, %p101
    %p103 = scmp.ne.s32.totalorder %s91, %s92
    %p104 = scmp.eq.s32.totalorder %s19, 1
    %p105 = por %p103, %p104
    %p107 = scmp.ne.s32.totalorder %s92, %s106
    %p108 = scmp.eq.s32.totalorder %s19, 0
    %p109 = por %p107, %p108
    %s111 = sadd.s32 %s110, 1
    %p114 = scmp.eq.s32.totalorder %s13, 1
    %p115 = scmp.ne.s32.totalorder %s110, %s112
    %p116 = scmp.eq.s32.totalorder %s13, 0
    %p117 = por %p115, %p116
    %p118 = scmp.ne.s32.totalorder %s110, %s112
    %p119 = scmp.eq.s32.totalorder %s18, 1
    %p120 = por %p118, %p119
    %p121 = scmp.ne.s32.totalorder %s112, %s113
    %p122 = scmp.eq.s32.totalorder %s18, 0
    %p123 = por %p121, %p122
    %p124 = scmp.ne.s32.totalorder %s112, %s113
    %p125 = scmp.eq.s32.totalorder %s19, 1
    %p126 = por %p124, %p125
    %p128 = scmp.ne.s32.totalorder %s113, %s127
    %p129 = scmp.eq.s32.totalorder %s19, 0
    %p130 = por %p128, %p129
    %s132 = sadd.s32 %s131, 1
    %p135 = scmp.eq.s32.totalorder %s13, 1
    %p136 = scmp.ne.s32.totalorder %s131, %s133
    %p137 = scmp.eq.s32.totalorder %s13, 0
    %p138 = por %p136, %p137
    %p139 = scmp.ne.s32.totalorder %s131, %s133
    %p140 = scmp.eq.s32.totalorder %s18, 1
    %p141 = por %p139, %p140
    %p142 = scmp.ne.s32.totalorder %s133, %s134
    %p143 = scmp.eq.s32.totalorder %s18, 0
    %p144 = por %p142, %p143
    %p145 = scmp.ne.s32.totalorder %s133, %s134
    %p146 = scmp.eq.s32.totalorder %s19, 1
    %p147 = por %p145, %p146
    %p149 = scmp.ne.s32.totalorder %s134, %s148
    %p150 = scmp.eq.s32.totalorder %s19, 0
    %p151 = por %p149, %p150
    %s153 = sadd.s32 %s152, 1
    %p156 = scmp.eq.s32.totalorder %s13, 1
    %p157 = scmp.ne.s32.totalorder %s152, %s154
    %p158 = scmp.eq.s32.totalorder %s13, 0
    %p159 = por %p157, %p158
    %p160 = scmp.ne.s32.totalorder %s152, %s154
    %p161 = scmp.eq.s32.totalorder %s18, 1
    %p162 = por %p160, %p161
    %p163 = scmp.ne.s32.totalorder %s154, %s155
    %p164 = scmp.eq.s32.totalorder %s18, 0
    %p165 = por %p163, %p164
    %p166 = scmp.ne.s32.totalorder %s154, %s155
    %p167 = scmp.eq.s32.totalorder %s19, 1
    %p168 = por %p166, %p167
    %p170 = scmp.ne.s32.totalorder %s155, %s169
    %p171 = scmp.eq.s32.totalorder %s19, 0
    %p172 = por %p170, %p171
    %s173 = ssub.s32 %s20, %s32
    %s174 = ssub.s32 %s21, %s28
    %s175 = sor.u32 %s173, %s174
    %p176 = scmp.eq.s32.totalorder %s175, 0
    %s178 = sadd.s32 %s177, 1
    %s179 = scalar_select %p176, %s177, %s178
    %p182 = pneg %p176
    %p183 = scmp.eq.s32.totalorder %s13, 1
    %p184 = por %p182, %p183
    %p185 = scmp.ne.s32.totalorder %s177, %s180
    %p186 = scmp.eq.s32.totalorder %s13, 0
    %p187 = por %p185, %p186
    %p188 = scmp.ne.s32.totalorder %s177, %s180
    %p189 = scmp.eq.s32.totalorder %s18, 1
    %p190 = por %p188, %p189
    %p191 = scmp.ne.s32.totalorder %s180, %s181
    %p192 = scmp.eq.s32.totalorder %s18, 0
    %p193 = por %p191, %p192
    %p194 = scmp.ne.s32.totalorder %s180, %s181
    %p195 = scmp.eq.s32.totalorder %s19, 1
    %p196 = por %p194, %p195
    %p198 = scmp.ne.s32.totalorder %s181, %s197
    %p199 = scmp.eq.s32.totalorder %s19, 0
    %p200 = por %p198, %p199
    %s201 = ssub.s32 %s20, %s32
    %s202 = ssub.s32 %s21, %s28
    %s203 = sor.u32 %s201, %s202
    %p204 = scmp.eq.s32.totalorder %s203, 0
    %s206 = sadd.s32 %s205, 1
    %s207 = scalar_select %p204, %s205, %s206
    %p210 = pneg %p204
    %p211 = scmp.eq.s32.totalorder %s13, 1
    %p212 = por %p210, %p211
    %p213 = scmp.ne.s32.totalorder %s205, %s208
    %p214 = scmp.eq.s32.totalorder %s13, 0
    %p215 = por %p213, %p214
    %p216 = scmp.ne.s32.totalorder %s205, %s208
    %p217 = scmp.eq.s32.totalorder %s18, 1
    %p218 = por %p216, %p217
    %p219 = scmp.ne.s32.totalorder %s208, %s209
    %p220 = scmp.eq.s32.totalorder %s18, 0
    %p221 = por %p219, %p220
    %p222 = scmp.ne.s32.totalorder %s208, %s209
    %p223 = scmp.eq.s32.totalorder %s19, 1
    %p224 = por %p222, %p223
    %p226 = scmp.ne.s32.totalorder %s209, %s225
    %p227 = scmp.eq.s32.totalorder %s19, 0
    %p228 = por %p226, %p227
    %p229 = scmp.le.s32.totalorder 1, %s13
    %p230 = scmp.lt.s32.totalorder %s13, 3
    %p231 = pnand %p229, %p230
    %p232 = pneg %p231
    // Predicated region
    $region9: #{gruunet_forward.52} parent=5 // pred_check
      _
    $region10: #{gruunet_forward.52} parent=5 // pred_check_branch
      %234 = sbr.rel (%p231) target = $region12
    $region11: #{gruunet_forward.52} parent=5 // pred_region
      %s235 = ssub.s32 %s13, 1
      // Predicated region
      $region13: #{gruunet_forward.52} parent=11 // pred_check
        %p236 = pneg %p102
      $region14: #{gruunet_forward.52} parent=11 // pred_check_branch
        %238 = sbr.rel (%p236) target = $region16
      $region15: #{gruunet_forward.52} parent=11 // pred_region
        _
      $region16: #{gruunet_forward.52} parent=11 // pred_fallthru
        _
      // Predicated region
      $region17: #{gruunet_forward.52} parent=11 // pred_check
        %p239 = pneg %p123
      $region18: #{gruunet_forward.52} parent=11 // pred_check_branch
        %241 = sbr.rel (%p239) target = $region20
      $region19: #{gruunet_forward.52} parent=11 // pred_region
        _
      $region20: #{gruunet_forward.52} parent=11 // pred_fallthru
        _
      // Predicated region
      $region21: #{gruunet_forward.52} parent=11 // pred_check
        %p242 = pneg %p144
      $region22: #{gruunet_forward.52} parent=11 // pred_check_branch
        %244 = sbr.rel (%p242) target = $region24
      $region23: #{gruunet_forward.52} parent=11 // pred_region
        _
      $region24: #{gruunet_forward.52} parent=11 // pred_fallthru
        _
      // Predicated region
      $region25: #{gruunet_forward.52} parent=11 // pred_check
        %p245 = pneg %p165
      $region26: #{gruunet_forward.52} parent=11 // pred_check_branch
        %247 = sbr.rel (%p245) target = $region28
      $region27: #{gruunet_forward.52} parent=11 // pred_region
        _
      $region28: #{gruunet_forward.52} parent=11 // pred_fallthru
        _
    $region12: #{gruunet_forward.52} parent=5 // pred_fallthru
      _
    %p248 = scmp.lt.s32.totalorder %s13, 2
    // Predicated region
    $region29: #{gruunet_forward.52} parent=5 // pred_check
      %p249 = pneg %p248
    $region30: #{gruunet_forward.52} parent=5 // pred_check_branch
      %251 = sbr.rel (%p249) target = $region32
    $region31: #{gruunet_forward.52} parent=5 // pred_region
      // Predicated region
      $region33: #{gruunet_forward.52} parent=31 // pred_check
        %p252 = pneg %p47
      $region34: #{gruunet_forward.52} parent=31 // pred_check_branch
        %254 = sbr.rel (%p252) target = $region36
      $region35: #{gruunet_forward.52} parent=31 // pred_region
        %s255 = smul.u32 2, %s21
        %p256 = scmp.lt.s32.totalorder %s20, 1
        %s257 = scalar_select %p256, %s20, 1
        %p258 = scmp.lt.s32.totalorder %s255, 1
        %s259 = scalar_select %p258, %s255, 1
        %s260 = smul.addr %s257, 18
        %s261 = sadd.s32 %s259, %s260
        %s262 = smul.addr %s261, 8
        %s263 = scalar_lea.vmem %s0, %s262
        %s264 = smul.u32 2, %s21
      $region36: #{gruunet_forward.52} parent=31 // pred_fallthru
        _
      // Predicated region
      $region37: #{gruunet_forward.52} parent=31 // pred_check
        %p265 = pneg %p75
      $region38: #{gruunet_forward.52} parent=31 // pred_check_branch
        %267 = sbr.rel (%p265) target = $region40
      $region39: #{gruunet_forward.52} parent=31 // pred_region
        %s268 = smul.u32 2, %s21
        %p269 = scmp.lt.s32.totalorder %s20, 1
        %s270 = scalar_select %p269, %s20, 1
        %p271 = scmp.lt.s32.totalorder %s268, 1
        %s272 = scalar_select %p271, %s268, 1
        %s273 = smul.addr %s270, 2
        %s274 = sadd.s32 %s272, %s273
        %s275 = smul.addr %s274, 8
        %s276 = scalar_lea.vmem %s1, %s275
        %s277 = smul.u32 2, %s21
      $region40: #{gruunet_forward.52} parent=31 // pred_fallthru
        _
      // Predicated region
      $region41: #{gruunet_forward.52} parent=31 // pred_check
        %p278 = pneg %p187
      $region42: #{gruunet_forward.52} parent=31 // pred_check_branch
        %280 = sbr.rel (%p278) target = $region44
      $region43: #{gruunet_forward.52} parent=31 // pred_region
        %s281 = smul.u32 2, %s21
        %p282 = scmp.lt.s32.totalorder %s20, 1
        %s283 = scalar_select %p282, %s20, 1
        %p284 = scmp.lt.s32.totalorder %s281, 1
        %s285 = scalar_select %p284, %s281, 1
        %s286 = smul.addr %s283, 2
        %s287 = sadd.s32 %s285, %s286
        %s288 = smul.addr %s287, 4
        %s289 = scalar_lea.vmem %s6, %s288
        %s290 = smul.u32 2, %s21
      $region44: #{gruunet_forward.52} parent=31 // pred_fallthru
        _
    $region32: #{gruunet_forward.52} parent=5 // pred_fallthru
      _
    %p291 = scmp.le.s32.totalorder 1, %s13
    %p292 = scmp.lt.s32.totalorder %s13, 3
    %p293 = pnand %p291, %p292
    %p294 = pneg %p293
    // Predicated region
    $region45: #{gruunet_forward.52} parent=5 // pred_check
      _
    $region46: #{gruunet_forward.52} parent=5 // pred_check_branch
      %296 = sbr.rel (%p293) target = $region48
    $region47: #{gruunet_forward.52} parent=5 // pred_region
      %s297 = ssub.s32 %s13, 1
      %s298 = smul.u32 2, %s23
      %p299 = scmp.lt.s32.totalorder %s22, 1
      %s300 = scalar_select %p299, %s22, 1
      %p301 = scmp.lt.s32.totalorder %s298, 1
      %s302 = scalar_select %p301, %s298, 1
      %s303 = smul.addr %s300, 18
      %s304 = sadd.s32 %s302, %s303
      %s305 = smul.addr %s304, 8
      %s306 = scalar_lea.vmem %s0, %s305
      %p307 = pneg %p53
      %p308 = pneg %p50
      %s309 = smul.u32 2, %s23
      %p310 = scmp.lt.s32.totalorder %s22, 1
      %s311 = scalar_select %p310, %s22, 1
      %p312 = scmp.lt.s32.totalorder %s309, 1
      %s313 = scalar_select %p312, %s309, 1
      %s314 = smul.addr %s311, 2
      %s315 = sadd.s32 %s313, %s314
      %s316 = smul.addr %s315, 8
      %s317 = scalar_lea.vmem %s1, %s316
      %p318 = pneg %p81
      %p319 = pneg %p78
      %p320 = pneg %p102
      %p321 = pneg %p99
      %p322 = pneg %p123
      %p323 = pneg %p120
      %p324 = pneg %p144
      %p325 = pneg %p141
      %p326 = pneg %p165
      %p327 = pneg %p162
      %s328 = smul.u32 2, %s23
      %p329 = scmp.lt.s32.totalorder %s22, 1
      %s330 = scalar_select %p329, %s22, 1
      %p331 = scmp.lt.s32.totalorder %s328, 1
      %s332 = scalar_select %p331, %s328, 1
      %s333 = smul.addr %s330, 2
      %s334 = sadd.s32 %s332, %s333
      %s335 = smul.addr %s334, 4
      %s336 = scalar_lea.vmem %s6, %s335
      %p337 = pneg %p193
      %p338 = pneg %p190
      %p339 = pneg %p221
      %p340 = pneg %p218
      %s341 = smul.u32 2, %s23
      %p342 = scmp.lt.s32.totalorder %s22, 1
      %s343 = scalar_select %p342, %s22, 1
      %p344 = scmp.lt.s32.totalorder %s341, 1
      %s345 = scalar_select %p344, %s341, 1
      %s346 = smul.addr %s343, 2
      %s347 = sadd.s32 %s345, %s346
      %s348 = smul.addr %s347, 4
      %s349 = scalar_lea.vmem %s7, %s348
      %s350 = smul.u32 2, %s23
      %p351 = scmp.lt.s32.totalorder %s22, 1
      %s352 = scalar_select %p351, %s22, 1
      %p353 = scmp.lt.s32.totalorder %s350, 1
      %s354 = scalar_select %p353, %s350, 1
      %s355 = smul.addr %s352, 18
      %s356 = sadd.s32 %s354, %s355
      %s357 = smul.addr %s356, 8
      %s358 = scalar_lea.vmem %s0, %s357
      %s359 = smul.u32 2, %s23
      %s360 = smul.u32 2, %s23
      %p361 = scmp.lt.s32.totalorder %s22, 1
      %s362 = scalar_select %p361, %s22, 1
      %p363 = scmp.lt.s32.totalorder %s360, 1
      %s364 = scalar_select %p363, %s360, 1
      %s365 = smul.addr %s362, 2
      %s366 = sadd.s32 %s364, %s365
      %s367 = smul.addr %s366, 8
      %s368 = scalar_lea.vmem %s1, %s367
      %s369 = smul.u32 2, %s23
      %s370 = smul.u32 2, %s23
      %p371 = scmp.lt.s32.totalorder %s22, 1
      %s372 = scalar_select %p371, %s22, 1
      %p373 = scmp.lt.s32.totalorder %s370, 1
      %s374 = scalar_select %p373, %s370, 1
      %s375 = smul.addr %s372, 2
      %s376 = sadd.s32 %s374, %s375
      %s377 = smul.addr %s376, 4
      %s378 = scalar_lea.vmem %s6, %s377
      %s379 = smul.u32 2, %s23
      %s380 = smul.u32 2, %s23
      %p381 = scmp.lt.s32.totalorder %s22, 1
      %s382 = scalar_select %p381, %s22, 1
      %p383 = scmp.lt.s32.totalorder %s380, 1
      %s384 = scalar_select %p383, %s380, 1
      %s385 = smul.addr %s382, 2
      %s386 = sadd.s32 %s384, %s385
      %s387 = smul.addr %s386, 4
      %s388 = scalar_lea.vmem %s7, %s387
      %s389 = smul.u32 2, %s23
      %v390 = vld [vmem:[%s2] sm:$0xf]
      %v391 = vld [vmem:[%s358] sm:$0xff]
      %v392 = vld [vmem:[%s358 + $0x8] sm:$0xff]
      %v393 = vld [vmem:[%s358 + $0x10] sm:$0xff]
      %v394 = vld [vmem:[%s358 + $0x18] sm:$0xff]
      %v395 = vld [vmem:[%s358 + $0x20] sm:$0xff]
      %v396 = vld [vmem:[%s358 + $0x28] sm:$0xff]
      %v397 = vld [vmem:[%s358 + $0x30] sm:$0xff]
      %v398 = vld [vmem:[%s358 + $0x38] sm:$0xff]
      %v399 = vld [vmem:[%s358 + $0x40] sm:$0xff]
      %v400 = vld [vmem:[%s358 + $0x48] sm:$0xff]
      %v401 = vld [vmem:[%s358 + $0x50] sm:$0xff]
      %v402 = vld [vmem:[%s358 + $0x58] sm:$0xff]
      %v403 = vld [vmem:[%s358 + $0x60] sm:$0xff]
      %v404 = vld [vmem:[%s358 + $0x68] sm:$0xff]
      %v405 = vld [vmem:[%s358 + $0x70] sm:$0xff]
      %v406 = vld [vmem:[%s358 + $0x78] sm:$0xff]
      %v407 = vld [vmem:[%s358 + $0x80] sm:$0xff]
      %v408 = vld [vmem:[%s358 + $0x88] sm:$0xff]
      %v409 = vld [vmem:[%s3] sm:$0xf]
      %411 = vset.pattern.permute.xlu0 0
      %412 = vperm.xlu0 %411, %v409
      %v413 = vpop.permute.xlu0 %412
      %vm415 = vcmask 588800
      %v417 = vsel %vm415, %v390, 0
      %419 = vmatprep.subr.mxu0 %v392
      %420 = vmatpush1.msra.mxu0 %v391
      %421 = vmatprep.subr.mxu0 %v394
      %422 = vmatpush1.msra.mxu0 %v393
      %423 = vmatprep.subr.mxu0 %v396
      %424 = vmatpush1.msra.mxu0 %v395
      %425 = vmatprep.subr.mxu0 %v398
      %426 = vmatpush1.msra.mxu0 %v397
      %427 = vmatprep.subr.mxu0 %v400
      %428 = vmatpush1.msra.mxu0 %v399
      %429 = vmatprep.subr.mxu0 %v402
      %430 = vmatpush1.msra.mxu0 %v401
      %431 = vmatprep.subr.mxu0 %v404
      %432 = vmatpush1.msra.mxu0 %v403
      %433 = vmatprep.subr.mxu0 %v406
      %434 = vmatpush1.msra.mxu0 %v405
      %435 = vmatprep.subr.mxu0 %v408
      %436 = vmatpush1.msra.mxu0 %v407
      %437 = vmatprep.subr.mxu0 0.0
      %438 = vmatpush1.msra.mxu0 0.0
      %439 = vmatprep.subr.mxu0 0.0
      %440 = vmatpush1.msra.mxu0 0.0
      %441 = vmatprep.subr.mxu0 0.0
      %442 = vmatpush1.msra.mxu0 0.0
      %443 = vmatprep.subr.mxu0 0.0
      %444 = vmatpush1.msra.mxu0 0.0
      %445 = vmatprep.subr.mxu0 0.0
      %446 = vmatpush1.msra.mxu0 0.0
      %447 = vmatprep.subr.mxu0 0.0
      %448 = vmatpush1.msra.mxu0 0.0
      %449 = vmatprep.subr.mxu0 0.0
      %450 = vmatpush1.msra.mxu0 0.0
      %451 = vmatprep.subr.mxu0 0.0
      %452 = vmatpush1.msra.mxu0 0.0
      %453 = vmatprep.subr.mxu0 0.0
      %454 = vmatpush1.msra.mxu0 0.0
      %455 = vmatprep.subr.mxu0 0.0
      %456 = vmatpush1.msra.mxu0 0.0
      %457 = vmatprep.subr.mxu0 0.0
      %458 = vmatpush1.msra.mxu0 0.0
      %459 = vmatprep.subr.mxu0 0.0
      %460 = vmatpush1.msra.mxu0 0.0
      %461 = vmatprep.subr.mxu0 0.0
      %462 = vmatpush1.msra.mxu0 0.0
      %463 = vmatprep.subr.mxu0 0.0
      %464 = vmatpush1.msra.mxu0 0.0
      %465 = vmatprep.subr.mxu0 0.0
      %466 = vmatpush1.msra.mxu0 0.0
      %467 = vmatprep.subr.mxu0 0.0
      %468 = vmatpush1.msra.mxu0 0.0
      %469 = vmatprep.subr.mxu0 0.0
      %470 = vmatpush1.msra.mxu0 0.0
      %471 = vmatprep.subr.mxu0 0.0
      %472 = vmatpush1.msra.mxu0 0.0
      %473 = vmatprep.subr.mxu0 0.0
      %474 = vmatpush1.msra.mxu0 0.0
      %475 = vmatprep.subr.mxu0 0.0
      %476 = vmatpush1.msra.mxu0 0.0
      %477 = vmatprep.subr.mxu0 0.0
      %478 = vmatpush1.msra.mxu0 0.0
      %479 = vmatprep.subr.mxu0 0.0
      %480 = vmatpush1.msra.mxu0 0.0
      %481 = vmatprep.subr.mxu0 0.0
      %482 = vmatpush1.msra.mxu0 0.0
      %483 = vmatprep.mubr.f32.mxu0 0.0
      %484 = vmatmul.mubr.f32.gmra.mrb[0].mxu0 %v417
      %v485 = vpop.f32.mrb[0].mxu0
      %v486 = vadd.f32 %v413, %v485
      %v487 = vpop.f32.mrb[0].mxu0
      %v488 = vadd.f32 %v413, %v487
      %489 = vdwg.mxu0
      %v490 = vxor.u32 %v486, 2147483648
      %v491 = vxor.u32 %v488, 2147483648
      %v492 = vmul.f32 %v490, 1.442695
      %v493 = vpow.pop %v492
      %v494 = vmul.f32 %v491, 1.442695
      %v495 = vpow.pop %v494
      %v496 = vadd.f32 %v493, 1.0
      %v497 = vadd.f32 %v495, 1.0
      %v498 = vrcp.pop %v496
      %v499 = vmul.f32 1.0, %v498
      %v500 = vrcp.pop %v497
      %v501 = vmul.f32 1.0, %v500
      %v502 = vld [vmem:[%s4] sm:$0xf]
      %v503 = vld [vmem:[%s368] sm:$0xff]
      %v504 = vld [vmem:[%s368 + $0x8] sm:$0xff]
      %v505 = vld [vmem:[%s5] sm:$0xf]
      %507 = vset.pattern.permute.xlu0 0
      %508 = vperm.xlu0 %507, %v505
      %v509 = vpop.permute.xlu0 %508
      %vm511 = vcmask 64512
      %v513 = vsel %vm511, %v502, 0
      %515 = vmatprep.subr.mxu0 %v504
      %516 = vmatpush1.msra.mxu0 %v503
      %517 = vmatprep.subr.mxu0 0.0
      %518 = vmatpush1.msra.mxu0 0.0
      %519 = vmatprep.subr.mxu0 0.0
      %520 = vmatpush1.msra.mxu0 0.0
      %521 = vmatprep.subr.mxu0 0.0
      %522 = vmatpush1.msra.mxu0 0.0
      %523 = vmatprep.subr.mxu0 0.0
      %524 = vmatpush1.msra.mxu0 0.0
      %525 = vmatprep.subr.mxu0 0.0
      %526 = vmatpush1.msra.mxu0 0.0
      %527 = vmatprep.subr.mxu0 0.0
      %528 = vmatpush1.msra.mxu0 0.0
      %529 = vmatprep.subr.mxu0 0.0
      %530 = vmatpush1.msra.mxu0 0.0
      %531 = vmatprep.subr.mxu0 0.0
      %532 = vmatpush1.msra.mxu0 0.0
      %533 = vmatprep.subr.mxu0 0.0
      %534 = vmatpush1.msra.mxu0 0.0
      %535 = vmatprep.subr.mxu0 0.0
      %536 = vmatpush1.msra.mxu0 0.0
      %537 = vmatprep.subr.mxu0 0.0
      %538 = vmatpush1.msra.mxu0 0.0
      %539 = vmatprep.subr.mxu0 0.0
      %540 = vmatpush1.msra.mxu0 0.0
      %541 = vmatprep.subr.mxu0 0.0
      %542 = vmatpush1.msra.mxu0 0.0
      %543 = vmatprep.subr.mxu0 0.0
      %544 = vmatpush1.msra.mxu0 0.0
      %545 = vmatprep.subr.mxu0 0.0
      %546 = vmatpush1.msra.mxu0 0.0
      %547 = vmatprep.subr.mxu0 0.0
      %548 = vmatpush1.msra.mxu0 0.0
      %549 = vmatprep.subr.mxu0 0.0
      %550 = vmatpush1.msra.mxu0 0.0
      %551 = vmatprep.subr.mxu0 0.0
      %552 = vmatpush1.msra.mxu0 0.0
      %553 = vmatprep.subr.mxu0 0.0
      %554 = vmatpush1.msra.mxu0 0.0
      %555 = vmatprep.subr.mxu0 0.0
      %556 = vmatpush1.msra.mxu0 0.0
      %557 = vmatprep.subr.mxu0 0.0
      %558 = vmatpush1.msra.mxu0 0.0
      %559 = vmatprep.subr.mxu0 0.0
      %560 = vmatpush1.msra.mxu0 0.0
      %561 = vmatprep.subr.mxu0 0.0
      %562 = vmatpush1.msra.mxu0 0.0
      %563 = vmatprep.subr.mxu0 0.0
      %564 = vmatpush1.msra.mxu0 0.0
      %565 = vmatprep.subr.mxu0 0.0
      %566 = vmatpush1.msra.mxu0 0.0
      %567 = vmatprep.subr.mxu0 0.0
      %568 = vmatpush1.msra.mxu0 0.0
      %569 = vmatprep.subr.mxu0 0.0
      %570 = vmatpush1.msra.mxu0 0.0
      %571 = vmatprep.subr.mxu0 0.0
      %572 = vmatpush1.msra.mxu0 0.0
      %573 = vmatprep.subr.mxu0 0.0
      %574 = vmatpush1.msra.mxu0 0.0
      %575 = vmatprep.subr.mxu0 0.0
      %576 = vmatpush1.msra.mxu0 0.0
      %577 = vmatprep.subr.mxu0 0.0
      %578 = vmatpush1.msra.mxu0 0.0
      %579 = vmatprep.mubr.f32.mxu0 0.0
      %580 = vmatmul.mubr.f32.gmra.mrb[0].mxu0 %v513
      %v581 = vpop.f32.mrb[0].mxu0
      %v582 = vadd.f32 %v509, %v581
      %v583 = vpop.f32.mrb[0].mxu0
      %v584 = vadd.f32 %v509, %v583
      %585 = vdwg.mxu0
      %vm586 = vcmp.ge.f32.partialorder %v582, 0.0
      %vm587 = vcmp.ge.f32.partialorder %v584, 0.0
      %v588 = vadd.f32 %v582, 0.5
      %v589 = vadd.f32 %v584, 0.5
      %v590 = vxor.u32 %v582, 2147483648
      %v591 = vxor.u32 %v584, 2147483648
      %v592 = vmul.f32 %v590, 1.442695
      %v593 = vpow.pop %v592
      %v594 = vmul.f32 %v591, 1.442695
      %v595 = vpow.pop %v594
      %v596 = vadd.f32 %v593, 1.0
      %v597 = vadd.f32 %v595, 1.0
      %v598 = vrcp.pop %v596
      %v599 = vmul.f32 1.0, %v598
      %v600 = vrcp.pop %v597
      %v601 = vmul.f32 1.0, %v600
      %v602 = vsel %vm586, %v588, %v599
      %v603 = vsel %vm587, %v589, %v601
      %v604 = vld [vmem:[%s378] sm:$0xff]
      %v606 = vcombine.high %v604, %v604
      %v608 = vsub.f32 %v602, %v604
      %v609 = vsub.f32 %v603, %v606
      %v610 = vmul.f32 %v499, %v608
      %v611 = vmul.f32 %v501, %v609
      %v614 = vcombine.low %v610, %v611
      %v616 = vadd.f32 %v604, %v614
      %617 = vst [vmem:[%s388] sm:$0xff] %v616
      %s618 = smul.u32 2, %s23
      %p619 = scmp.lt.s32.totalorder %s22, 1
      %s620 = scalar_select %p619, %s22, 1
      %p621 = scmp.lt.s32.totalorder %s618, 1
      %s622 = scalar_select %p621, %s618, 1
      %s623 = smul.addr %s620, 2
      %s624 = sadd.s32 %s622, %s623
      %s625 = smul.addr %s624, 4
      %s626 = scalar_lea.vmem %s7, %s625
      // Predicated region
      $region49: #{gruunet_forward.52} parent=47 // pred_check
        %p627 = pneg %p218
      $region50: #{gruunet_forward.52} parent=47 // pred_check_branch
        %629 = sbr.rel (%p627) target = $region52
      $region51: #{gruunet_forward.52} parent=47 // pred_region
        %s630 = smul.u32 2, %s23
      $region52: #{gruunet_forward.52} parent=47 // pred_fallthru
        _
    $region48: #{gruunet_forward.52} parent=5 // pred_fallthru
      _
    %p631 = scmp.le.s32.totalorder 2, %s13
    // Predicated region
    $region53: #{gruunet_forward.52} parent=5 // pred_check
      %p632 = pneg %p631
    $region54: #{gruunet_forward.52} parent=5 // pred_check_branch
      %634 = sbr.rel (%p632) target = $region56
    $region55: #{gruunet_forward.52} parent=5 // pred_region
      %s635 = ssub.s32 %s13, 2
      // Predicated region
      $region57: #{gruunet_forward.52} parent=55 // pred_check
        %p636 = pneg %p224
      $region58: #{gruunet_forward.52} parent=55 // pred_check_branch
        %638 = sbr.rel (%p636) target = $region60
      $region59: #{gruunet_forward.52} parent=55 // pred_region
        %s639 = smul.u32 2, %s25
        %p640 = scmp.lt.s32.totalorder %s24, 1
        %s641 = scalar_select %p640, %s24, 1
        %p642 = scmp.lt.s32.totalorder %s639, 1
        %s643 = scalar_select %p642, %s639, 1
        %s644 = smul.addr %s641, 2
        %s645 = sadd.s32 %s643, %s644
        %s646 = smul.addr %s645, 4
        %s647 = scalar_lea.vmem %s7, %s646
      $region60: #{gruunet_forward.52} parent=55 // pred_fallthru
        _
    $region56: #{gruunet_forward.52} parent=5 // pred_fallthru
      _
  $region6: #{gruunet_forward.52} parent=0 // loop_footer
    %s17 = sadd.s32 1, %s13
  $region7: #{gruunet_forward.52} parent=0 // loop_footer_branch
    %12 = sbr.rel target = $region3
  $region8: #{gruunet_forward.52} parent=0 // loop_exit
    _

// kernel: gruunet_forward.53
$region0: #{gruunet_forward.53}
  #allocation0 [shape = 'u32[]', space=smem, size = 0x4, offset = 0x4, fixed_abs, tag = 'smem constant byte address 0x4 - core index']
  #allocation1 [shape = 'u32[144,128]{1,0:T(1,128)}', space=vmem, size = 0x12000, scoped, tag = 'internal scratch']
  %s0 = inlined_call_operand.vmem [shape: f32[2,2,4,256], index: 0, kind: input, shape index: {}]
  %s1 = inlined_call_operand.vmem [shape: f32[2,2,36,256], index: 1, kind: input, shape index: {}]
  %s2 = inlined_call_operand.vmem [shape: f32[4,36], index: 2, kind: input, shape index: {}]
  %s3 = inlined_call_operand.vmem [shape: f32[4,1], index: 3, kind: input, shape index: {}]
  %s4 = inlined_call_operand.vmem [shape: f32[2,4,256], index: 4, kind: output, shape index: {}]
  %s5 = sld [smem:[#allocation0]]
  $region49: #{gruunet_forward.53} parent=0
    _
  %s7 = ssub.s32 1, %s5
  %s8 = scalar_select 0, %s7, %s5
  loop: start=0, step=1, limit=4
  $region2: #{gruunet_forward.53} parent=0 // loop_pre_header
    _
  $region3: #{gruunet_forward.53} parent=0 // loop_header
    %s10 = sphi 0, %s14
    %p11 = scmp.ge.s32.totalorder %s10, 4
    %s17 = sphi 0, %s29
    %s18 = sphi 0, %s25
    %s19 = sphi 0, %s17
    %s20 = sphi 0, %s18
    %s21 = sphi 0, %s19
    %s22 = sphi 0, %s20
    %s34 = sphi 0, %s36
    %s37 = sphi 0, %s34
    %s38 = sphi 0, %s37
    %s54 = sphi 0, %s38
    %s62 = sphi 0, %s64
    %s65 = sphi 0, %s62
    %s66 = sphi 0, %s65
    %s82 = sphi 0, %s66
    %s86 = sphi 0, %s86
    %s88 = sphi 0, %s86
    %s89 = sphi 0, %s88
    %s103 = sphi 0, %s89
    %s107 = sphi 0, %s107
    %s109 = sphi 0, %s107
    %s110 = sphi 0, %s109
    %s124 = sphi 0, %s110
    %s132 = sphi 0, %s134
    %s135 = sphi 0, %s132
    %s136 = sphi 0, %s135
    %s152 = sphi 0, %s136
  $region4: #{gruunet_forward.53} parent=0 // loop_header_branch
    %13 = sbr.rel (%p11) target = $region8
  $region5: #{gruunet_forward.53} parent=0 // loop_body
    %s15 = ssub.s32 %s10, 1
    %s16 = ssub.s32 %s10, 2
    %s23 = sadd.s32 1, %s18
    %p24 = scmp.ge.s32.totalorder %s23, 1
    %s25 = scalar_select %p24, 0, %s23
    %s26 = sadd.s32 1, %s17
    %s27 = scalar_select %p24, %s26, %s17
    %p28 = scmp.ge.s32.totalorder %s27, 2
    %s29 = scalar_select %p28, 0, %s27
    %s30 = ssub.s32 %s17, %s29
    %s31 = ssub.s32 %s18, %s25
    %s32 = sor.u32 %s30, %s31
    %p33 = scmp.eq.s32.totalorder %s32, 0
    %s35 = sadd.s32 %s34, 1
    %s36 = scalar_select %p33, %s34, %s35
    %p39 = pneg %p33
    %p40 = scmp.eq.s32.totalorder %s10, 1
    %p41 = por %p39, %p40
    %p42 = scmp.ne.s32.totalorder %s34, %s37
    %p43 = scmp.eq.s32.totalorder %s10, 0
    %p44 = por %p42, %p43
    %p45 = scmp.ne.s32.totalorder %s34, %s37
    %p46 = scmp.eq.s32.totalorder %s15, 1
    %p47 = por %p45, %p46
    %p48 = scmp.ne.s32.totalorder %s37, %s38
    %p49 = scmp.eq.s32.totalorder %s15, 0
    %p50 = por %p48, %p49
    %p51 = scmp.ne.s32.totalorder %s37, %s38
    %p52 = scmp.eq.s32.totalorder %s16, 1
    %p53 = por %p51, %p52
    %p55 = scmp.ne.s32.totalorder %s38, %s54
    %p56 = scmp.eq.s32.totalorder %s16, 0
    %p57 = por %p55, %p56
    %s58 = ssub.s32 %s17, %s29
    %s59 = ssub.s32 %s18, %s25
    %s60 = sor.u32 %s58, %s59
    %p61 = scmp.eq.s32.totalorder %s60, 0
    %s63 = sadd.s32 %s62, 1
    %s64 = scalar_select %p61, %s62, %s63
    %p67 = pneg %p61
    %p68 = scmp.eq.s32.totalorder %s10, 1
    %p69 = por %p67, %p68
    %p70 = scmp.ne.s32.totalorder %s62, %s65
    %p71 = scmp.eq.s32.totalorder %s10, 0
    %p72 = por %p70, %p71
    %p73 = scmp.ne.s32.totalorder %s62, %s65
    %p74 = scmp.eq.s32.totalorder %s15, 1
    %p75 = por %p73, %p74
    %p76 = scmp.ne.s32.totalorder %s65, %s66
    %p77 = scmp.eq.s32.totalorder %s15, 0
    %p78 = por %p76, %p77
    %p79 = scmp.ne.s32.totalorder %s65, %s66
    %p80 = scmp.eq.s32.totalorder %s16, 1
    %p81 = por %p79, %p80
    %p83 = scmp.ne.s32.totalorder %s66, %s82
    %p84 = scmp.eq.s32.totalorder %s16, 0
    %p85 = por %p83, %p84
    %s87 = sadd.s32 %s86, 1
    %p90 = scmp.eq.s32.totalorder %s10, 1
    %p91 = scmp.ne.s32.totalorder %s86, %s88
    %p92 = scmp.eq.s32.totalorder %s10, 0
    %p93 = por %p91, %p92
    %p94 = scmp.ne.s32.totalorder %s86, %s88
    %p95 = scmp.eq.s32.totalorder %s15, 1
    %p96 = por %p94, %p95
    %p97 = scmp.ne.s32.totalorder %s88, %s89
    %p98 = scmp.eq.s32.totalorder %s15, 0
    %p99 = por %p97, %p98
    %p100 = scmp.ne.s32.totalorder %s88, %s89
    %p101 = scmp.eq.s32.totalorder %s16, 1
    %p102 = por %p100, %p101
    %p104 = scmp.ne.s32.totalorder %s89, %s103
    %p105 = scmp.eq.s32.totalorder %s16, 0
    %p106 = por %p104, %p105
    %s108 = sadd.s32 %s107, 1
    %p111 = scmp.eq.s32.totalorder %s10, 1
    %p112 = scmp.ne.s32.totalorder %s107, %s109
    %p113 = scmp.eq.s32.totalorder %s10, 0
    %p114 = por %p112, %p113
    %p115 = scmp.ne.s32.totalorder %s107, %s109
    %p116 = scmp.eq.s32.totalorder %s15, 1
    %p117 = por %p115, %p116
    %p118 = scmp.ne.s32.totalorder %s109, %s110
    %p119 = scmp.eq.s32.totalorder %s15, 0
    %p120 = por %p118, %p119
    %p121 = scmp.ne.s32.totalorder %s109, %s110
    %p122 = scmp.eq.s32.totalorder %s16, 1
    %p123 = por %p121, %p122
    %p125 = scmp.ne.s32.totalorder %s110, %s124
    %p126 = scmp.eq.s32.totalorder %s16, 0
    %p127 = por %p125, %p126
    %s128 = ssub.s32 %s17, %s29
    %s129 = ssub.s32 %s18, %s25
    %s130 = sor.u32 %s128, %s129
    %p131 = scmp.eq.s32.totalorder %s130, 0
    %s133 = sadd.s32 %s132, 1
    %s134 = scalar_select %p131, %s132, %s133
    %p137 = pneg %p131
    %p138 = scmp.eq.s32.totalorder %s10, 1
    %p139 = por %p137, %p138
    %p140 = scmp.ne.s32.totalorder %s132, %s135
    %p141 = scmp.eq.s32.totalorder %s10, 0
    %p142 = por %p140, %p141
    %p143 = scmp.ne.s32.totalorder %s132, %s135
    %p144 = scmp.eq.s32.totalorder %s15, 1
    %p145 = por %p143, %p144
    %p146 = scmp.ne.s32.totalorder %s135, %s136
    %p147 = scmp.eq.s32.totalorder %s15, 0
    %p148 = por %p146, %p147
    %p149 = scmp.ne.s32.totalorder %s135, %s136
    %p150 = scmp.eq.s32.totalorder %s16, 1
    %p151 = por %p149, %p150
    %p153 = scmp.ne.s32.totalorder %s136, %s152
    %p154 = scmp.eq.s32.totalorder %s16, 0
    %p155 = por %p153, %p154
    %p156 = scmp.le.s32.totalorder 1, %s10
    %p157 = scmp.lt.s32.totalorder %s10, 3
    %p158 = pnand %p156, %p157
    %p159 = pneg %p158
    // Predicated region
    $region9: #{gruunet_forward.53} parent=5 // pred_check
      _
    $region10: #{gruunet_forward.53} parent=5 // pred_check_branch
      %161 = sbr.rel (%p158) target = $region12
    $region11: #{gruunet_forward.53} parent=5 // pred_region
      %s162 = ssub.s32 %s10, 1
      // Predicated region
      $region13: #{gruunet_forward.53} parent=11 // pred_check
        %p163 = pneg %p99
      $region14: #{gruunet_forward.53} parent=11 // pred_check_branch
        %165 = sbr.rel (%p163) target = $region16
      $region15: #{gruunet_forward.53} parent=11 // pred_region
        _
      $region16: #{gruunet_forward.53} parent=11 // pred_fallthru
        _
      // Predicated region
      $region17: #{gruunet_forward.53} parent=11 // pred_check
        %p166 = pneg %p120
      $region18: #{gruunet_forward.53} parent=11 // pred_check_branch
        %168 = sbr.rel (%p166) target = $region20
      $region19: #{gruunet_forward.53} parent=11 // pred_region
        _
      $region20: #{gruunet_forward.53} parent=11 // pred_fallthru
        _
    $region12: #{gruunet_forward.53} parent=5 // pred_fallthru
      _
    %p169 = scmp.lt.s32.totalorder %s10, 2
    // Predicated region
    $region21: #{gruunet_forward.53} parent=5 // pred_check
      %p170 = pneg %p169
    $region22: #{gruunet_forward.53} parent=5 // pred_check_branch
      %172 = sbr.rel (%p170) target = $region24
    $region23: #{gruunet_forward.53} parent=5 // pred_region
      // Predicated region
      $region25: #{gruunet_forward.53} parent=23 // pred_check
        %p173 = pneg %p44
      $region26: #{gruunet_forward.53} parent=23 // pred_check_branch
        %175 = sbr.rel (%p173) target = $region28
      $region27: #{gruunet_forward.53} parent=23 // pred_region
        %s176 = smul.u32 2, %s18
        %p177 = scmp.lt.s32.totalorder %s17, 1
        %s178 = scalar_select %p177, %s17, 1
        %p179 = scmp.lt.s32.totalorder %s176, 1
        %s180 = scalar_select %p179, %s176, 1
        %s181 = smul.addr %s178, 4
        %s182 = sadd.s32 %s180, %s181
        %s183 = smul.addr %s182, 4
        %s184 = scalar_lea.vmem %s0, %s183
        %s185 = smul.u32 2, %s18
      $region28: #{gruunet_forward.53} parent=23 // pred_fallthru
        _
      // Predicated region
      $region29: #{gruunet_forward.53} parent=23 // pred_check
        %p186 = pneg %p72
      $region30: #{gruunet_forward.53} parent=23 // pred_check_branch
        %188 = sbr.rel (%p186) target = $region32
      $region31: #{gruunet_forward.53} parent=23 // pred_region
        %s189 = smul.u32 2, %s18
        %p190 = scmp.lt.s32.totalorder %s17, 1
        %s191 = scalar_select %p190, %s17, 1
        %p192 = scmp.lt.s32.totalorder %s189, 1
        %s193 = scalar_select %p192, %s189, 1
        %s194 = smul.addr %s191, 20
        %s195 = sadd.s32 %s193, %s194
        %s196 = smul.addr %s195, 8
        %s197 = scalar_lea.vmem %s1, %s196
        %s198 = smul.u32 2, %s18
      $region32: #{gruunet_forward.53} parent=23 // pred_fallthru
        _
    $region24: #{gruunet_forward.53} parent=5 // pred_fallthru
      _
    %p199 = scmp.le.s32.totalorder 1, %s10
    %p200 = scmp.lt.s32.totalorder %s10, 3
    %p201 = pnand %p199, %p200
    %p202 = pneg %p201
    // Predicated region
    $region33: #{gruunet_forward.53} parent=5 // pred_check
      _
    $region34: #{gruunet_forward.53} parent=5 // pred_check_branch
      %204 = sbr.rel (%p201) target = $region36
    $region35: #{gruunet_forward.53} parent=5 // pred_region
      %s205 = ssub.s32 %s10, 1
      %s206 = smul.u32 2, %s20
      %p207 = scmp.lt.s32.totalorder %s19, 1
      %s208 = scalar_select %p207, %s19, 1
      %p209 = scmp.lt.s32.totalorder %s206, 1
      %s210 = scalar_select %p209, %s206, 1
      %s211 = smul.addr %s208, 4
      %s212 = sadd.s32 %s210, %s211
      %s213 = smul.addr %s212, 4
      %s214 = scalar_lea.vmem %s0, %s213
      %p215 = pneg %p50
      %p216 = pneg %p47
      %s217 = smul.u32 2, %s20
      %p218 = scmp.lt.s32.totalorder %s19, 1
      %s219 = scalar_select %p218, %s19, 1
      %p220 = scmp.lt.s32.totalorder %s217, 1
      %s221 = scalar_select %p220, %s217, 1
      %s222 = smul.addr %s219, 20
      %s223 = sadd.s32 %s221, %s222
      %s224 = smul.addr %s223, 8
      %s225 = scalar_lea.vmem %s1, %s224
      %p226 = pneg %p78
      %p227 = pneg %p75
      %p228 = pneg %p99
      %p229 = pneg %p96
      %p230 = pneg %p120
      %p231 = pneg %p117
      %p232 = pneg %p148
      %p233 = pneg %p145
      %s234 = smul.u32 2, %s20
      %p235 = scmp.lt.s32.totalorder %s19, 1
      %s236 = scalar_select %p235, %s19, 1
      %p237 = scmp.lt.s32.totalorder %s234, 1
      %s238 = scalar_select %p237, %s234, 1
      %s239 = smul.addr %s236, 2
      %s240 = sadd.s32 %s238, %s239
      %s241 = smul.addr %s240, 4
      %s242 = scalar_lea.vmem %s4, %s241
      %s243 = smul.u32 2, %s20
      %p244 = scmp.lt.s32.totalorder %s19, 1
      %s245 = scalar_select %p244, %s19, 1
      %p246 = scmp.lt.s32.totalorder %s243, 1
      %s247 = scalar_select %p246, %s243, 1
      %s248 = smul.addr %s245, 4
      %s249 = sadd.s32 %s247, %s248
      %s250 = smul.addr %s249, 4
      %s251 = scalar_lea.vmem %s0, %s250
      %s252 = smul.u32 2, %s20
      %s253 = smul.u32 2, %s20
      %p254 = scmp.lt.s32.totalorder %s19, 1
      %s255 = scalar_select %p254, %s19, 1
      %p256 = scmp.lt.s32.totalorder %s253, 1
      %s257 = scalar_select %p256, %s253, 1
      %s258 = smul.addr %s255, 20
      %s259 = sadd.s32 %s257, %s258
      %s260 = smul.addr %s259, 8
      %s261 = scalar_lea.vmem %s1, %s260
      %s262 = smul.u32 2, %s20
      %s263 = smul.u32 2, %s20
      %p264 = scmp.lt.s32.totalorder %s19, 1
      %s265 = scalar_select %p264, %s19, 1
      %p266 = scmp.lt.s32.totalorder %s263, 1
      %s267 = scalar_select %p266, %s263, 1
      %s268 = smul.addr %s265, 2
      %s269 = sadd.s32 %s267, %s268
      %s270 = smul.addr %s269, 4
      %s271 = scalar_lea.vmem %s4, %s270
      %s272 = smul.u32 2, %s20
      %v273 = vld [vmem:[%s2] sm:$0xf]
      %v274 = vld [vmem:[%s261] sm:$0xff]
      %v275 = vld [vmem:[%s261 + $0x8] sm:$0xff]
      %v276 = vld [vmem:[%s261 + $0x10] sm:$0xff]
      %v277 = vld [vmem:[%s261 + $0x18] sm:$0xff]
      %v278 = vld [vmem:[%s261 + $0x20] sm:$0xff]
      %v279 = vld [vmem:[%s261 + $0x28] sm:$0xff]
      %v280 = vld [vmem:[%s261 + $0x30] sm:$0xff]
      %v281 = vld [vmem:[%s261 + $0x38] sm:$0xff]
      %v282 = vld [vmem:[%s261 + $0x40] sm:$0xf]
      %v283 = vld [vmem:[%s261 + $0x48] sm:$0xf]
      %v284 = vld [vmem:[%s3] sm:$0xf]
      %286 = vset.pattern.permute.xlu0 0
      %287 = vperm.xlu0 %286, %v284
      %v288 = vpop.permute.xlu0 %287
      %vm290 = vcmask 293888
      %v292 = vsel %vm290, %v273, 0
      %vm294 = vcmask 1043456
      %v296 = vsel %vm294, %v282, 0
      %v299 = vsel %vm294, %v283, 0
      %301 = vmatprep.subr.mxu0 %v275
      %302 = vmatpush1.msra.mxu0 %v274
      %303 = vmatprep.subr.mxu0 %v277
      %304 = vmatpush1.msra.mxu0 %v276
      %305 = vmatprep.subr.mxu0 %v279
      %306 = vmatpush1.msra.mxu0 %v278
      %307 = vmatprep.subr.mxu0 %v281
      %308 = vmatpush1.msra.mxu0 %v280
      %309 = vmatprep.subr.mxu0 %v299
      %310 = vmatpush1.msra.mxu0 %v296
      %311 = vmatprep.subr.mxu0 0.0
      %312 = vmatpush1.msra.mxu0 0.0
      %313 = vmatprep.subr.mxu0 0.0
      %314 = vmatpush1.msra.mxu0 0.0
      %315 = vmatprep.subr.mxu0 0.0
      %316 = vmatpush1.msra.mxu0 0.0
      %317 = vmatprep.subr.mxu0 0.0
      %318 = vmatpush1.msra.mxu0 0.0
      %319 = vmatprep.subr.mxu0 0.0
      %320 = vmatpush1.msra.mxu0 0.0
      %321 = vmatprep.subr.mxu0 0.0
      %322 = vmatpush1.msra.mxu0 0.0
      %323 = vmatprep.subr.mxu0 0.0
      %324 = vmatpush1.msra.mxu0 0.0
      %325 = vmatprep.subr.mxu0 0.0
      %326 = vmatpush1.msra.mxu0 0.0
      %327 = vmatprep.subr.mxu0 0.0
      %328 = vmatpush1.msra.mxu0 0.0
      %329 = vmatprep.subr.mxu0 0.0
      %330 = vmatpush1.msra.mxu0 0.0
      %331 = vmatprep.subr.mxu0 0.0
      %332 = vmatpush1.msra.mxu0 0.0
      %333 = vmatprep.subr.mxu0 0.0
      %334 = vmatpush1.msra.mxu0 0.0
      %335 = vmatprep.subr.mxu0 0.0
      %336 = vmatpush1.msra.mxu0 0.0
      %337 = vmatprep.subr.mxu0 0.0
      %338 = vmatpush1.msra.mxu0 0.0
      %339 = vmatprep.subr.mxu0 0.0
      %340 = vmatpush1.msra.mxu0 0.0
      %341 = vmatprep.subr.mxu0 0.0
      %342 = vmatpush1.msra.mxu0 0.0
      %343 = vmatprep.subr.mxu0 0.0
      %344 = vmatpush1.msra.mxu0 0.0
      %345 = vmatprep.subr.mxu0 0.0
      %346 = vmatpush1.msra.mxu0 0.0
      %347 = vmatprep.subr.mxu0 0.0
      %348 = vmatpush1.msra.mxu0 0.0
      %349 = vmatprep.subr.mxu0 0.0
      %350 = vmatpush1.msra.mxu0 0.0
      %351 = vmatprep.subr.mxu0 0.0
      %352 = vmatpush1.msra.mxu0 0.0
      %353 = vmatprep.subr.mxu0 0.0
      %354 = vmatpush1.msra.mxu0 0.0
      %355 = vmatprep.subr.mxu0 0.0
      %356 = vmatpush1.msra.mxu0 0.0
      %357 = vmatprep.subr.mxu0 0.0
      %358 = vmatpush1.msra.mxu0 0.0
      %359 = vmatprep.subr.mxu0 0.0
      %360 = vmatpush1.msra.mxu0 0.0
      %361 = vmatprep.subr.mxu0 0.0
      %362 = vmatpush1.msra.mxu0 0.0
      %363 = vmatprep.subr.mxu0 0.0
      %364 = vmatpush1.msra.mxu0 0.0
      %365 = vmatprep.mubr.f32.mxu0 0.0
      %366 = vmatmul.mubr.f32.gmra.mrb[0].mxu0 %v292
      %v367 = vpop.f32.mrb[0].mxu0
      %v368 = vadd.f32 %v288, %v367
      %v369 = vpop.f32.mrb[0].mxu0
      %v370 = vadd.f32 %v288, %v369
      %371 = vdwg.mxu0
      %s372 = scalar_lea.vmem %s261, 80
      %v373 = vld [vmem:[%s372] sm:$0xff]
      %v374 = vld [vmem:[%s372 + $0x8] sm:$0xff]
      %v375 = vld [vmem:[%s372 + $0x10] sm:$0xff]
      %v376 = vld [vmem:[%s372 + $0x18] sm:$0xff]
      %v377 = vld [vmem:[%s372 + $0x20] sm:$0xff]
      %v378 = vld [vmem:[%s372 + $0x28] sm:$0xff]
      %v379 = vld [vmem:[%s372 + $0x30] sm:$0xff]
      %v380 = vld [vmem:[%s372 + $0x38] sm:$0xff]
      %v381 = vld [vmem:[%s372 + $0x40] sm:$0xf]
      %v382 = vld [vmem:[%s372 + $0x48] sm:$0xf]
      %v384 = vsel %vm294, %v381, 0
      %v387 = vsel %vm294, %v382, 0
      %389 = vmatprep.subr.mxu0 %v374
      %390 = vmatpush1.msra.mxu0 %v373
      %391 = vmatprep.subr.mxu0 %v376
      %392 = vmatpush1.msra.mxu0 %v375
      %393 = vmatprep.subr.mxu0 %v378
      %394 = vmatpush1.msra.mxu0 %v377
      %395 = vmatprep.subr.mxu0 %v380
      %396 = vmatpush1.msra.mxu0 %v379
      %397 = vmatprep.subr.mxu0 %v387
      %398 = vmatpush1.msra.mxu0 %v384
      %399 = vmatprep.subr.mxu0 0.0
      %400 = vmatpush1.msra.mxu0 0.0
      %401 = vmatprep.subr.mxu0 0.0
      %402 = vmatpush1.msra.mxu0 0.0
      %403 = vmatprep.subr.mxu0 0.0
      %404 = vmatpush1.msra.mxu0 0.0
      %405 = vmatprep.subr.mxu0 0.0
      %406 = vmatpush1.msra.mxu0 0.0
      %407 = vmatprep.subr.mxu0 0.0
      %408 = vmatpush1.msra.mxu0 0.0
      %409 = vmatprep.subr.mxu0 0.0
      %410 = vmatpush1.msra.mxu0 0.0
      %411 = vmatprep.subr.mxu0 0.0
      %412 = vmatpush1.msra.mxu0 0.0
      %413 = vmatprep.subr.mxu0 0.0
      %414 = vmatpush1.msra.mxu0 0.0
      %415 = vmatprep.subr.mxu0 0.0
      %416 = vmatpush1.msra.mxu0 0.0
      %417 = vmatprep.subr.mxu0 0.0
      %418 = vmatpush1.msra.mxu0 0.0
      %419 = vmatprep.subr.mxu0 0.0
      %420 = vmatpush1.msra.mxu0 0.0
      %421 = vmatprep.subr.mxu0 0.0
      %422 = vmatpush1.msra.mxu0 0.0
      %423 = vmatprep.subr.mxu0 0.0
      %424 = vmatpush1.msra.mxu0 0.0
      %425 = vmatprep.subr.mxu0 0.0
      %426 = vmatpush1.msra.mxu0 0.0
      %427 = vmatprep.subr.mxu0 0.0
      %428 = vmatpush1.msra.mxu0 0.0
      %429 = vmatprep.subr.mxu0 0.0
      %430 = vmatpush1.msra.mxu0 0.0
      %431 = vmatprep.subr.mxu0 0.0
      %432 = vmatpush1.msra.mxu0 0.0
      %433 = vmatprep.subr.mxu0 0.0
      %434 = vmatpush1.msra.mxu0 0.0
      %435 = vmatprep.subr.mxu0 0.0
      %436 = vmatpush1.msra.mxu0 0.0
      %437 = vmatprep.subr.mxu0 0.0
      %438 = vmatpush1.msra.mxu0 0.0
      %439 = vmatprep.subr.mxu0 0.0
      %440 = vmatpush1.msra.mxu0 0.0
      %441 = vmatprep.subr.mxu0 0.0
      %442 = vmatpush1.msra.mxu0 0.0
      %443 = vmatprep.subr.mxu0 0.0
      %444 = vmatpush1.msra.mxu0 0.0
      %445 = vmatprep.subr.mxu0 0.0
      %446 = vmatpush1.msra.mxu0 0.0
      %447 = vmatprep.subr.mxu0 0.0
      %448 = vmatpush1.msra.mxu0 0.0
      %449 = vmatprep.subr.mxu0 0.0
      %450 = vmatpush1.msra.mxu0 0.0
      %451 = vmatprep.subr.mxu0 0.0
      %452 = vmatpush1.msra.mxu0 0.0
      %453 = vmatprep.mubr.f32.mxu0 0.0
      %454 = vmatmul.mubr.f32.gmra.mrb[0].mxu0 %v292
      %v455 = vpop.f32.mrb[0].mxu0
      %v456 = vadd.f32 %v288, %v455
      %v457 = vpop.f32.mrb[0].mxu0
      %v458 = vadd.f32 %v288, %v457
      %459 = vdwg.mxu0
      %v460 = vmax.f32 %v368, %v456
      %v461 = vmax.f32 %v370, %v458
      %v462 = vsub.f32 %v368, %v460
      %v463 = vsub.f32 %v370, %v461
      %v464 = vmul.f32 %v462, 1.442695
      %v465 = vpow.pop %v464
      %v466 = vmul.f32 %v463, 1.442695
      %v467 = vpow.pop %v466
      %v468 = vsub.f32 %v456, %v460
      %v469 = vsub.f32 %v458, %v461
      %v470 = vmul.f32 %v468, 1.442695
      %v471 = vpow.pop %v470
      %v472 = vmul.f32 %v469, 1.442695
      %v473 = vpow.pop %v472
      %v474 = vadd.f32 %v465, %v471
      %v475 = vadd.f32 %v467, %v473
      %v476 = vld [vmem:[%s251] sm:$0xff]
      %v479 = vcombine.low %v465, %v467
      %v481 = vmul.f32 %v476, %v479
      %s482 = scalar_lea.vmem %s251, 8
      %v483 = vld [vmem:[%s482] sm:$0xff]
      %v486 = vcombine.low %v471, %v473
      %v488 = vmul.f32 %v483, %v486
      %v489 = vadd.f32 %v481, %v488
      %v492 = vcombine.low %v474, %v475
      %v494 = vrcp.pop %v492
      %v495 = vmul.f32 %v489, %v494
      %496 = vst [vmem:[%s271] sm:$0xff] %v495
      %s497 = smul.u32 2, %s20
      %p498 = scmp.lt.s32.totalorder %s19, 1
      %s499 = scalar_select %p498, %s19, 1
      %p500 = scmp.lt.s32.totalorder %s497, 1
      %s501 = scalar_select %p500, %s497, 1
      %s502 = smul.addr %s499, 2
      %s503 = sadd.s32 %s501, %s502
      %s504 = smul.addr %s503, 4
      %s505 = scalar_lea.vmem %s4, %s504
      // Predicated region
      $region37: #{gruunet_forward.53} parent=35 // pred_check
        %p506 = pneg %p145
      $region38: #{gruunet_forward.53} parent=35 // pred_check_branch
        %508 = sbr.rel (%p506) target = $region40
      $region39: #{gruunet_forward.53} parent=35 // pred_region
        %s509 = smul.u32 2, %s20
      $region40: #{gruunet_forward.53} parent=35 // pred_fallthru
        _
    $region36: #{gruunet_forward.53} parent=5 // pred_fallthru
      _
    %p510 = scmp.le.s32.totalorder 2, %s10
    // Predicated region
    $region41: #{gruunet_forward.53} parent=5 // pred_check
      %p511 = pneg %p510
    $region42: #{gruunet_forward.53} parent=5 // pred_check_branch
      %513 = sbr.rel (%p511) target = $region44
    $region43: #{gruunet_forward.53} parent=5 // pred_region
      %s514 = ssub.s32 %s10, 2
      // Predicated region
      $region45: #{gruunet_forward.53} parent=43 // pred_check
        %p515 = pneg %p151
      $region46: #{gruunet_forward.53} parent=43 // pred_check_branch
        %517 = sbr.rel (%p515) target = $region48
      $region47: #{gruunet_forward.53} parent=43 // pred_region
        %s518 = smul.u32 2, %s22
        %p519 = scmp.lt.s32.totalorder %s21, 1
        %s520 = scalar_select %p519, %s21, 1
        %p521 = scmp.lt.s32.totalorder %s518, 1
        %s522 = scalar_select %p521, %s518, 1
        %s523 = smul.addr %s520, 2
        %s524 = sadd.s32 %s522, %s523
        %s525 = smul.addr %s524, 4
        %s526 = scalar_lea.vmem %s4, %s525
      $region48: #{gruunet_forward.53} parent=43 // pred_fallthru
        _
    $region44: #{gruunet_forward.53} parent=5 // pred_fallthru
      _
  $region6: #{gruunet_forward.53} parent=0 // loop_footer
    %s14 = sadd.s32 1, %s10
  $region7: #{gruunet_forward.53} parent=0 // loop_footer_branch
    %9 = sbr.rel target = $region3
  $region8: #{gruunet_forward.53} parent=0 // loop_exit
    _

</llo_original>
